<compile_context>
chip_gen: v7x
topology: tpu7x:2x2x1
jax: 0.10.0
libtpu: 0.0.40
codegen_flags: <defaults>
</compile_context>

<pallas_src>
import jax
import jax.numpy as jnp
from jax.experimental import pallas as pl
from jax.experimental.pallas import tpu as pltpu

CIN = 1025
CIN_MAIN = 1024          # MXU-friendly bulk of the contraction
CIN_TAIL = CIN - CIN_MAIN
COUT = 4096
KSIZE = 3
PAD = 1


def conv1d_kernel(xm_ref, xl_ref, wm_ref, wl_ref, b_ref, o_ref):
    # xm_ref: (K, BL, 1024)      shifted tap windows, channels 0..1023
    # xl_ref: (K, BL, 1)         shifted tap windows, channel 1024
    # wm_ref: (K, 1024, co_tile) weights, channels 0..1023
    # wl_ref: (K, 1, co_tile)    weights, channel 1024
    # b_ref : (1, co_tile)
    # o_ref : (BL, co_tile)      lane-dense output tile
    acc = jnp.zeros(o_ref.shape, jnp.float32)
    for k in range(KSIZE):                                   # static, unrolled taps
        acc += jnp.dot(xm_ref[k], wm_ref[k],
                       preferred_element_type=jnp.float32)   # MXU
        acc += xl_ref[k] * wl_ref[k]                         # rank-1 fixup (VPU)
    o_ref[...] = acc + b_ref[...]                            # bias broadcast


def cnn_model_forward(x, weight, bias, *, co_tile=1024):
    """x: (B, 1025, L) f32; weight: (4096, 1025, 3); bias: (4096,)
    returns (B, 4096 * L) f32, matching CNNModel.forward."""
    B, Cin, L = x.shape
    assert Cin == CIN
    assert COUT % co_tile == 0 and co_tile % 128 == 0
    BL = B * L

    # ---- JAX-side layout plumbing (cheap vs. the 50 MB weight stream) ----
    # Zero-pad length and pre-stack the 3 shifted tap windows in (row, Cin) order.
    x_pad = jnp.pad(x, ((0, 0), (0, 0), (PAD, PAD)))                      # (B, Cin, L+2)
    taps = jnp.stack([x_pad[:, :, k:k + L] for k in range(KSIZE)], 0)     # (K, B, Cin, L)
    x_taps = taps.transpose(0, 1, 3, 2).reshape(KSIZE, BL, CIN)           # (K, BL, Cin)
    x_main = x_taps[:, :, :CIN_MAIN]                                      # (K, BL, 1024)
    x_last = x_taps[:, :, CIN_MAIN:]                                      # (K, BL, 1)

    # Weights as (K, Cin, Cout) so the matmul output is lane-dense in Cout.
    w_t = jnp.transpose(weight, (2, 1, 0))                                # (K, Cin, Cout)
    w_main = w_t[:, :CIN_MAIN, :]                                         # (K, 1024, Cout)
    w_last = w_t[:, CIN_MAIN:, :]                                         # (K, 1, Cout)
    b2 = bias.reshape(1, COUT)

    out = pl.pallas_call(
        conv1d_kernel,
        out_shape=jax.ShapeDtypeStruct((BL, COUT), jnp.float32),
        grid_spec=pltpu.PrefetchScalarGridSpec(
            num_scalar_prefetch=0,
            grid=(COUT // co_tile,),                # single pass over the weights
            in_specs=[
                # activations: constant block index -> DMA'd once, stays resident
                pl.BlockSpec((KSIZE, BL, CIN_MAIN), lambda j: (0, 0, 0)),
                pl.BlockSpec((KSIZE, BL, CIN_TAIL), lambda j: (0, 0, 0)),
                # weights: one tile per grid step, streamed exactly once
                pl.BlockSpec((KSIZE, CIN_MAIN, co_tile), lambda j: (0, 0, j)),
                pl.BlockSpec((KSIZE, CIN_TAIL, co_tile), lambda j: (0, 0, j)),
                pl.BlockSpec((1, co_tile), lambda j: (0, j)),
            ],
            out_specs=pl.BlockSpec((BL, co_tile), lambda j: (0, j)),
        ),
        compiler_params=pltpu.CompilerParams(
            dimension_semantics=("parallel",),      # megacore shards the weight tiles
            vmem_limit_bytes=48 << 20,              # fits v7x's 64 MiB VMEM with headroom
        ),
    )(x_main, x_last, w_main, w_last, b2)

    # (BL, Cout) -> (B, Cout, L) -> flatten: identical order to PyTorch .view(B, -1)
    out = out.reshape(B, L, COUT).transpose(0, 2, 1)
    return out.reshape(B, -1)


def reference_forward(x, weight, bias):
    out = jax.lax.conv_general_dilated(
        x, weight,
        window_strides=(1,), padding=((PAD, PAD),),
        dimension_numbers=("NCH", "OIH", "NCH"),
        precision=jax.lax.Precision.HIGHEST,
    )
    out = out + bias[None, :, None]
    return out.reshape(x.shape[0], -1)


if __name__ == "__main__":
    key = jax.random.PRNGKey(0)
    kx, kw, kb = jax.random.split(key, 3)

    B, L = 2, 8                                    # small spatial/seq length
    x = jax.random.normal(kx, (B, CIN, L), dtype=jnp.float32)
    # Deterministic synthetic params (shapes per nn.Conv1d(1025, 4096, 3)).
    weight = jax.random.normal(kw, (COUT, CIN, KSIZE), dtype=jnp.float32) * 0.02
    bias = jax.random.normal(kb, (COUT,), dtype=jnp.float32) * 0.02

    fwd = jax.jit(cnn_model_forward)
    y = jax.block_until_ready(fwd(x, weight, bias))

    y_ref = jax.block_until_ready(reference_forward(x, weight, bias))
    assert y.shape == (B, COUT * L), y.shape
    # Kernel uses default (single-pass bf16) MXU precision; compare against the
    # f32 HIGHEST reference with a tolerance that covers bf16 input rounding.
    assert jnp.allclose(y, y_ref, rtol=2e-2, atol=2e-2), float(
        jnp.max(jnp.abs(y - y_ref)))

    print("KERNEL_OK")
</pallas_src>

<mosaic_0001>
module attributes {stable_mosaic.version = 11 : i64} {
  func.func @conv1d_kernel(%arg0: i32, %arg1: memref<3x16x1024xf32, #tpu.memory_space<vmem>>, %arg2: memref<3x16x1xf32, #tpu.memory_space<vmem>>, %arg3: memref<3x1024x1024xf32, #tpu.memory_space<vmem>>, %arg4: memref<3x1x1024xf32, #tpu.memory_space<vmem>>, %arg5: memref<1x1024xf32, #tpu.memory_space<vmem>>, %arg6: memref<16x1024xf32, #tpu.memory_space<vmem>>) attributes {dimension_semantics = [#tpu.dimension_semantics<parallel>], iteration_bounds = array<i64: 4>, scalar_prefetch = 0 : i64, scratch_operands = 0 : i64, tpu.core_type = #tpu.core_type<tc>, window_params = [{pipeline_mode = #tpu.pipeline_mode<synchronous>, transform_indices = @transform_0, window_bounds = array<i64: 3, 16, 1024>}, {pipeline_mode = #tpu.pipeline_mode<synchronous>, transform_indices = @transform_1, window_bounds = array<i64: 3, 16, 1>}, {transform_indices = @transform_2, window_bounds = array<i64: 3, 1024, 1024>}, {transform_indices = @transform_3, window_bounds = array<i64: 3, 1, 1024>}, {transform_indices = @transform_4, window_bounds = array<i64: 1, 1024>}, {transform_indices = @transform_5, window_bounds = array<i64: 16, 1024>}]} {
    %cst = arith.constant 0.000000e+00 : f32
    %0 = vector.broadcast %cst : f32 to vector<16x1024xf32>
    %c0 = arith.constant 0 : index
    %c0_0 = arith.constant 0 : index
    %c0_1 = arith.constant 0 : index
    %1 = vector.load %arg1[%c0, %c0_0, %c0_1] : memref<3x16x1024xf32, #tpu.memory_space<vmem>>, vector<1x16x1024xf32>
    %2 = vector.shape_cast %1 : vector<1x16x1024xf32> to vector<16x1024xf32>
    %c0_2 = arith.constant 0 : index
    %c0_3 = arith.constant 0 : index
    %c0_4 = arith.constant 0 : index
    %3 = vector.load %arg3[%c0_2, %c0_3, %c0_4] : memref<3x1024x1024xf32, #tpu.memory_space<vmem>>, vector<1x1024x1024xf32>
    %4 = vector.shape_cast %3 : vector<1x1024x1024xf32> to vector<1024x1024xf32>
    %cst_5 = arith.constant dense<0.000000e+00> : vector<16x1024xf32>
    %5 = tpu.matmul %2, %4, %cst_5 {dimension_numbers = #tpu.dot_dimension_numbers<[1], [0], [0], [1], [0, 0, 1, 1], [], []>} : vector<16x1024xf32>, vector<1024x1024xf32>, vector<16x1024xf32> -> vector<16x1024xf32>
    %6 = arith.addf %0, %5 : vector<16x1024xf32>
    %c0_6 = arith.constant 0 : index
    %c0_7 = arith.constant 0 : index
    %c0_8 = arith.constant 0 : index
    %7 = vector.load %arg2[%c0_6, %c0_7, %c0_8] : memref<3x16x1xf32, #tpu.memory_space<vmem>>, vector<1x16x1xf32>
    %8 = vector.shape_cast %7 : vector<1x16x1xf32> to vector<16x1xf32>
    %c0_9 = arith.constant 0 : index
    %c0_10 = arith.constant 0 : index
    %c0_11 = arith.constant 0 : index
    %9 = vector.load %arg4[%c0_9, %c0_10, %c0_11] : memref<3x1x1024xf32, #tpu.memory_space<vmem>>, vector<1x1x1024xf32>
    %10 = vector.shape_cast %9 : vector<1x1x1024xf32> to vector<1x1024xf32>
    %11 = vector.broadcast %8 : vector<16x1xf32> to vector<16x1024xf32>
    %12 = vector.broadcast %10 : vector<1x1024xf32> to vector<16x1024xf32>
    %13 = arith.mulf %11, %12 : vector<16x1024xf32>
    %14 = arith.addf %6, %13 : vector<16x1024xf32>
    %c1 = arith.constant 1 : index
    %c0_12 = arith.constant 0 : index
    %c0_13 = arith.constant 0 : index
    %15 = vector.load %arg1[%c1, %c0_12, %c0_13] : memref<3x16x1024xf32, #tpu.memory_space<vmem>>, vector<1x16x1024xf32>
    %16 = vector.shape_cast %15 : vector<1x16x1024xf32> to vector<16x1024xf32>
    %c1_14 = arith.constant 1 : index
    %c0_15 = arith.constant 0 : index
    %c0_16 = arith.constant 0 : index
    %17 = vector.load %arg3[%c1_14, %c0_15, %c0_16] : memref<3x1024x1024xf32, #tpu.memory_space<vmem>>, vector<1x1024x1024xf32>
    %18 = vector.shape_cast %17 : vector<1x1024x1024xf32> to vector<1024x1024xf32>
    %cst_17 = arith.constant dense<0.000000e+00> : vector<16x1024xf32>
    %19 = tpu.matmul %16, %18, %cst_17 {dimension_numbers = #tpu.dot_dimension_numbers<[1], [0], [0], [1], [0, 0, 1, 1], [], []>} : vector<16x1024xf32>, vector<1024x1024xf32>, vector<16x1024xf32> -> vector<16x1024xf32>
    %20 = arith.addf %14, %19 : vector<16x1024xf32>
    %c1_18 = arith.constant 1 : index
    %c0_19 = arith.constant 0 : index
    %c0_20 = arith.constant 0 : index
    %21 = vector.load %arg2[%c1_18, %c0_19, %c0_20] : memref<3x16x1xf32, #tpu.memory_space<vmem>>, vector<1x16x1xf32>
    %22 = vector.shape_cast %21 : vector<1x16x1xf32> to vector<16x1xf32>
    %c1_21 = arith.constant 1 : index
    %c0_22 = arith.constant 0 : index
    %c0_23 = arith.constant 0 : index
    %23 = vector.load %arg4[%c1_21, %c0_22, %c0_23] : memref<3x1x1024xf32, #tpu.memory_space<vmem>>, vector<1x1x1024xf32>
    %24 = vector.shape_cast %23 : vector<1x1x1024xf32> to vector<1x1024xf32>
    %25 = vector.broadcast %22 : vector<16x1xf32> to vector<16x1024xf32>
    %26 = vector.broadcast %24 : vector<1x1024xf32> to vector<16x1024xf32>
    %27 = arith.mulf %25, %26 : vector<16x1024xf32>
    %28 = arith.addf %20, %27 : vector<16x1024xf32>
    %c2 = arith.constant 2 : index
    %c0_24 = arith.constant 0 : index
    %c0_25 = arith.constant 0 : index
    %29 = vector.load %arg1[%c2, %c0_24, %c0_25] : memref<3x16x1024xf32, #tpu.memory_space<vmem>>, vector<1x16x1024xf32>
    %30 = vector.shape_cast %29 : vector<1x16x1024xf32> to vector<16x1024xf32>
    %c2_26 = arith.constant 2 : index
    %c0_27 = arith.constant 0 : index
    %c0_28 = arith.constant 0 : index
    %31 = vector.load %arg3[%c2_26, %c0_27, %c0_28] : memref<3x1024x1024xf32, #tpu.memory_space<vmem>>, vector<1x1024x1024xf32>
    %32 = vector.shape_cast %31 : vector<1x1024x1024xf32> to vector<1024x1024xf32>
    %cst_29 = arith.constant dense<0.000000e+00> : vector<16x1024xf32>
    %33 = tpu.matmul %30, %32, %cst_29 {dimension_numbers = #tpu.dot_dimension_numbers<[1], [0], [0], [1], [0, 0, 1, 1], [], []>} : vector<16x1024xf32>, vector<1024x1024xf32>, vector<16x1024xf32> -> vector<16x1024xf32>
    %34 = arith.addf %28, %33 : vector<16x1024xf32>
    %c2_30 = arith.constant 2 : index
    %c0_31 = arith.constant 0 : index
    %c0_32 = arith.constant 0 : index
    %35 = vector.load %arg2[%c2_30, %c0_31, %c0_32] : memref<3x16x1xf32, #tpu.memory_space<vmem>>, vector<1x16x1xf32>
    %36 = vector.shape_cast %35 : vector<1x16x1xf32> to vector<16x1xf32>
    %c2_33 = arith.constant 2 : index
    %c0_34 = arith.constant 0 : index
    %c0_35 = arith.constant 0 : index
    %37 = vector.load %arg4[%c2_33, %c0_34, %c0_35] : memref<3x1x1024xf32, #tpu.memory_space<vmem>>, vector<1x1x1024xf32>
    %38 = vector.shape_cast %37 : vector<1x1x1024xf32> to vector<1x1024xf32>
    %39 = vector.broadcast %36 : vector<16x1xf32> to vector<16x1024xf32>
    %40 = vector.broadcast %38 : vector<1x1024xf32> to vector<16x1024xf32>
    %41 = arith.mulf %39, %40 : vector<16x1024xf32>
    %42 = arith.addf %34, %41 : vector<16x1024xf32>
    %c0_36 = arith.constant 0 : index
    %c0_37 = arith.constant 0 : index
    %43 = vector.load %arg5[%c0_36, %c0_37] : memref<1x1024xf32, #tpu.memory_space<vmem>>, vector<1x1024xf32>
    %44 = vector.broadcast %43 : vector<1x1024xf32> to vector<16x1024xf32>
    %45 = arith.addf %42, %44 : vector<16x1024xf32>
    %c0_38 = arith.constant 0 : index
    %c0_39 = arith.constant 0 : index
    %46 = vector.load %arg6[%c0_38, %c0_39] : memref<16x1024xf32, #tpu.memory_space<vmem>>, vector<16x1024xf32>
    tpu.vector_store %arg6[%c0_38, %c0_39], %45 {strides = array<i32>} : memref<16x1024xf32, #tpu.memory_space<vmem>>, vector<16x1024xf32>,
    return
  }
  func.func @transform_0(%arg0: i32) -> (i32, i32, i32) {
    %c0_i32 = arith.constant 0 : i32
    %c0_i32_0 = arith.constant 0 : i32
    %c0_i32_1 = arith.constant 0 : i32
    %c0_i32_2 = arith.constant 0 : i32
    return %c0_i32, %c0_i32_0, %c0_i32_1 : i32, i32, i32
  }
  func.func @transform_1(%arg0: i32) -> (i32, i32, i32) {
    %c0_i32 = arith.constant 0 : i32
    %c0_i32_0 = arith.constant 0 : i32
    %c0_i32_1 = arith.constant 0 : i32
    %c0_i32_2 = arith.constant 0 : i32
    return %c0_i32, %c0_i32_0, %c0_i32_1 : i32, i32, i32
  }
  func.func @transform_2(%arg0: i32) -> (i32, i32, i32) {
    %c0_i32 = arith.constant 0 : i32
    %c0_i32_0 = arith.constant 0 : i32
    %c0_i32_1 = arith.constant 0 : i32
    return %c0_i32, %c0_i32_0, %arg0 : i32, i32, i32
  }
  func.func @transform_3(%arg0: i32) -> (i32, i32, i32) {
    %c0_i32 = arith.constant 0 : i32
    %c0_i32_0 = arith.constant 0 : i32
    %c0_i32_1 = arith.constant 0 : i32
    return %c0_i32, %c0_i32_0, %arg0 : i32, i32, i32
  }
  func.func @transform_4(%arg0: i32) -> (i32, i32) {
    %c0_i32 = arith.constant 0 : i32
    %c0_i32_0 = arith.constant 0 : i32
    return %c0_i32, %arg0 : i32, i32
  }
  func.func @transform_5(%arg0: i32) -> (i32, i32) {
    %c0_i32 = arith.constant 0 : i32
    %c0_i32_0 = arith.constant 0 : i32
    return %c0_i32, %arg0 : i32, i32
  }
}

</mosaic_0001>

<llo_original>
// kernel: cnn_model_forward.1
$region0: #{cnn_model_forward.1}
  #allocation0 [shape = 'u32[]', space=smem, size = 0x4, offset = 0x4, fixed_abs, tag = 'smem constant byte address 0x4 - core index']
  #allocation1 [shape = 'u32[144,128]{1,0:T(1,128)}', space=vmem, size = 0x12000, scoped, tag = 'internal scratch']
  %s0 = inlined_call_operand.vmem [shape: f32[3,16,1024], index: 0, kind: input, shape index: {}]
  %s1 = inlined_call_operand.vmem [shape: f32[3,16,1], index: 1, kind: input, shape index: {}]
  %s2 = inlined_call_operand.hbm [shape: f32[3,1024,4096], index: 2, kind: input, shape index: {}]
  %s3 = inlined_call_operand.vmem [shape: f32[3,1,4096], index: 3, kind: input, shape index: {}]
  %s4 = inlined_call_operand.vmem [shape: f32[1,4096], index: 4, kind: input, shape index: {}]
  %s5 = inlined_call_operand.vmem [shape: f32[16,4096], index: 5, kind: output, shape index: {}]
  %s6 = sld [smem:[#allocation0]]
  $region114: #{cnn_model_forward.1} parent=0
    _
  %s8 = ssub.s32 1, %s6
  %s9 = scalar_select 0, %s8, %s6
  $region1: #{cnn_model_forward.1} parent=0
    #allocation2 [shape = 'u8[25165824]{0}', space=vmem, size = 0x1800000, scoped, tag = 'input window, operand 2']
    #allocation3 [shape = 's32[2]{0}', space=sflag, size = 0x8, scoped, tag = 'scoped memory for cnn_model_forward.1']
    #allocation4 [shape = 'u8[24576]{0}', space=vmem, size = 0x6000, scoped, tag = 'input window, operand 3']
    #allocation5 [shape = 'u8[131072]{0}', space=vmem, size = 0x20000, scoped, tag = 'output window, operand 0']
    %10 = vsyncpa [#allocation3], 0
    %s11 = scalar_lea.sflag [#allocation3], 1
    %12 = vsyncpa %s11, 0
    loop: start=0, step=1, limit=6
    $region2: #{cnn_model_forward.1} parent=1 // loop_pre_header
      _
    $region3: #{cnn_model_forward.1} parent=1 // loop_header
      %s14 = sphi 0, %s18
      %p15 = scmp.ge.s32.totalorder %s14, 6
      %s22 = sphi 0, %s22
      %s24 = sphi 0, %s22
      %s25 = sphi 0, %s24
      %s39 = sphi 0, %s25
      %s43 = sphi 0, %s43
      %s45 = sphi 0, %s43
      %s46 = sphi 0, %s45
      %s60 = sphi 0, %s46
      %s66 = sphi 0, %s68
      %s69 = sphi 0, %s66
      %s70 = sphi 0, %s69
      %s86 = sphi 0, %s70
      %s92 = sphi 0, %s94
      %s95 = sphi 0, %s92
      %s96 = sphi 0, %s95
      %s112 = sphi 0, %s96
      %s118 = sphi 0, %s120
      %s121 = sphi 0, %s118
      %s122 = sphi 0, %s121
      %s138 = sphi 0, %s122
      %s144 = sphi 0, %s146
      %s147 = sphi 0, %s144
      %s148 = sphi 0, %s147
      %s164 = sphi 0, %s148
    $region4: #{cnn_model_forward.1} parent=1 // loop_header_branch
      %17 = sbr.rel (%p15) target = $region8
    $region5: #{cnn_model_forward.1} parent=1 // loop_body
      %s19 = ssub.s32 %s14, 1
      %s20 = ssub.s32 %s14, 2
      %s21 = sadd.s32 %s14, 1
      %s23 = sadd.s32 %s22, 1
      %p26 = scmp.eq.s32.totalorder %s14, 3
      %p27 = scmp.ne.s32.totalorder %s22, %s24
      %p28 = scmp.eq.s32.totalorder %s14, 0
      %p29 = por %p27, %p28
      %p30 = scmp.ne.s32.totalorder %s22, %s24
      %p31 = scmp.eq.s32.totalorder %s19, 3
      %p32 = por %p30, %p31
      %p33 = scmp.ne.s32.totalorder %s24, %s25
      %p34 = scmp.eq.s32.totalorder %s19, 0
      %p35 = por %p33, %p34
      %p36 = scmp.ne.s32.totalorder %s24, %s25
      %p37 = scmp.eq.s32.totalorder %s20, 3
      %p38 = por %p36, %p37
      %p40 = scmp.ne.s32.totalorder %s25, %s39
      %p41 = scmp.eq.s32.totalorder %s20, 0
      %p42 = por %p40, %p41
      %s44 = sadd.s32 %s43, 1
      %p47 = scmp.eq.s32.totalorder %s14, 3
      %p48 = scmp.ne.s32.totalorder %s43, %s45
      %p49 = scmp.eq.s32.totalorder %s14, 0
      %p50 = por %p48, %p49
      %p51 = scmp.ne.s32.totalorder %s43, %s45
      %p52 = scmp.eq.s32.totalorder %s19, 3
      %p53 = por %p51, %p52
      %p54 = scmp.ne.s32.totalorder %s45, %s46
      %p55 = scmp.eq.s32.totalorder %s19, 0
      %p56 = por %p54, %p55
      %p57 = scmp.ne.s32.totalorder %s45, %s46
      %p58 = scmp.eq.s32.totalorder %s20, 3
      %p59 = por %p57, %p58
      %p61 = scmp.ne.s32.totalorder %s46, %s60
      %p62 = scmp.eq.s32.totalorder %s20, 0
      %p63 = por %p61, %p62
      %s64 = ssub.s32 %s14, %s21
      %p65 = scmp.eq.s32.totalorder %s64, 0
      %s67 = sadd.s32 %s66, 1
      %s68 = scalar_select %p65, %s66, %s67
      %p71 = pneg %p65
      %p72 = scmp.eq.s32.totalorder %s14, 3
      %p73 = por %p71, %p72
      %p74 = scmp.ne.s32.totalorder %s66, %s69
      %p75 = scmp.eq.s32.totalorder %s14, 0
      %p76 = por %p74, %p75
      %p77 = scmp.ne.s32.totalorder %s66, %s69
      %p78 = scmp.eq.s32.totalorder %s19, 3
      %p79 = por %p77, %p78
      %p80 = scmp.ne.s32.totalorder %s69, %s70
      %p81 = scmp.eq.s32.totalorder %s19, 0
      %p82 = por %p80, %p81
      %p83 = scmp.ne.s32.totalorder %s69, %s70
      %p84 = scmp.eq.s32.totalorder %s20, 3
      %p85 = por %p83, %p84
      %p87 = scmp.ne.s32.totalorder %s70, %s86
      %p88 = scmp.eq.s32.totalorder %s20, 0
      %p89 = por %p87, %p88
      %s90 = ssub.s32 %s14, %s21
      %p91 = scmp.eq.s32.totalorder %s90, 0
      %s93 = sadd.s32 %s92, 1
      %s94 = scalar_select %p91, %s92, %s93
      %p97 = pneg %p91
      %p98 = scmp.eq.s32.totalorder %s14, 3
      %p99 = por %p97, %p98
      %p100 = scmp.ne.s32.totalorder %s92, %s95
      %p101 = scmp.eq.s32.totalorder %s14, 0
      %p102 = por %p100, %p101
      %p103 = scmp.ne.s32.totalorder %s92, %s95
      %p104 = scmp.eq.s32.totalorder %s19, 3
      %p105 = por %p103, %p104
      %p106 = scmp.ne.s32.totalorder %s95, %s96
      %p107 = scmp.eq.s32.totalorder %s19, 0
      %p108 = por %p106, %p107
      %p109 = scmp.ne.s32.totalorder %s95, %s96
      %p110 = scmp.eq.s32.totalorder %s20, 3
      %p111 = por %p109, %p110
      %p113 = scmp.ne.s32.totalorder %s96, %s112
      %p114 = scmp.eq.s32.totalorder %s20, 0
      %p115 = por %p113, %p114
      %s116 = ssub.s32 %s14, %s21
      %p117 = scmp.eq.s32.totalorder %s116, 0
      %s119 = sadd.s32 %s118, 1
      %s120 = scalar_select %p117, %s118, %s119
      %p123 = pneg %p117
      %p124 = scmp.eq.s32.totalorder %s14, 3
      %p125 = por %p123, %p124
      %p126 = scmp.ne.s32.totalorder %s118, %s121
      %p127 = scmp.eq.s32.totalorder %s14, 0
      %p128 = por %p126, %p127
      %p129 = scmp.ne.s32.totalorder %s118, %s121
      %p130 = scmp.eq.s32.totalorder %s19, 3
      %p131 = por %p129, %p130
      %p132 = scmp.ne.s32.totalorder %s121, %s122
      %p133 = scmp.eq.s32.totalorder %s19, 0
      %p134 = por %p132, %p133
      %p135 = scmp.ne.s32.totalorder %s121, %s122
      %p136 = scmp.eq.s32.totalorder %s20, 3
      %p137 = por %p135, %p136
      %p139 = scmp.ne.s32.totalorder %s122, %s138
      %p140 = scmp.eq.s32.totalorder %s20, 0
      %p141 = por %p139, %p140
      %s142 = ssub.s32 %s14, %s21
      %p143 = scmp.eq.s32.totalorder %s142, 0
      %s145 = sadd.s32 %s144, 1
      %s146 = scalar_select %p143, %s144, %s145
      %p149 = pneg %p143
      %p150 = scmp.eq.s32.totalorder %s14, 3
      %p151 = por %p149, %p150
      %p152 = scmp.ne.s32.totalorder %s144, %s147
      %p153 = scmp.eq.s32.totalorder %s14, 0
      %p154 = por %p152, %p153
      %p155 = scmp.ne.s32.totalorder %s144, %s147
      %p156 = scmp.eq.s32.totalorder %s19, 3
      %p157 = por %p155, %p156
      %p158 = scmp.ne.s32.totalorder %s147, %s148
      %p159 = scmp.eq.s32.totalorder %s19, 0
      %p160 = por %p158, %p159
      %p161 = scmp.ne.s32.totalorder %s147, %s148
      %p162 = scmp.eq.s32.totalorder %s20, 3
      %p163 = por %p161, %p162
      %p165 = scmp.ne.s32.totalorder %s148, %s164
      %p166 = scmp.eq.s32.totalorder %s20, 0
      %p167 = por %p165, %p166
      %p168 = scmp.le.s32.totalorder 1, %s14
      %p169 = scmp.lt.s32.totalorder %s14, 5
      %p170 = pnand %p168, %p169
      %p171 = pneg %p170
      // Predicated region
      $region9: #{cnn_model_forward.1} parent=5 // pred_check
        _
      $region10: #{cnn_model_forward.1} parent=5 // pred_check_branch
        %173 = sbr.rel (%p170) target = $region12
      $region11: #{cnn_model_forward.1} parent=5 // pred_region
        %s174 = ssub.s32 %s14, 1
        // Predicated region
        $region13: #{cnn_model_forward.1} parent=11 // pred_check
          %p175 = pneg %p35
        $region14: #{cnn_model_forward.1} parent=11 // pred_check_branch
          %177 = sbr.rel (%p175) target = $region16
        $region15: #{cnn_model_forward.1} parent=11 // pred_region
          _
        $region16: #{cnn_model_forward.1} parent=11 // pred_fallthru
          _
        // Predicated region
        $region17: #{cnn_model_forward.1} parent=11 // pred_check
          %p178 = pneg %p56
        $region18: #{cnn_model_forward.1} parent=11 // pred_check_branch
          %180 = sbr.rel (%p178) target = $region20
        $region19: #{cnn_model_forward.1} parent=11 // pred_region
          _
        $region20: #{cnn_model_forward.1} parent=11 // pred_fallthru
          _
      $region12: #{cnn_model_forward.1} parent=5 // pred_fallthru
        _
      %p181 = scmp.lt.s32.totalorder %s14, 4
      // Predicated region
      $region21: #{cnn_model_forward.1} parent=5 // pred_check
        %p182 = pneg %p181
      $region22: #{cnn_model_forward.1} parent=5 // pred_check_branch
        %184 = sbr.rel (%p182) target = $region24
      $region23: #{cnn_model_forward.1} parent=5 // pred_region
        // Predicated region
        $region25: #{cnn_model_forward.1} parent=23 // pred_check
          %p185 = pneg %p76
        $region26: #{cnn_model_forward.1} parent=23 // pred_check_branch
          %187 = sbr.rel (%p185) target = $region28
        $region27: #{cnn_model_forward.1} parent=23 // pred_region
          %s188 = sand.u32 %s66, 1
          %s189 = scalar_lea.sflag [#allocation3], %s188
          %s190 = sand.u32 %s66, 1
          %s191 = smul.addr %s190, 24576
          %s192 = scalar_lea.vmem [#allocation2], %s191
          %s193 = smul.u32 8, %s14
          %s195 = ssub.s32 393216, 393216
          %196 = vsyncadd %s189, %s195
          %s197 = smul.addr %s193, 128
          %s198 = scalar_lea.hbm %s2, %s197
          %s199 = sshll.u32 %s192, 4
          %s200 = int_to_ptr.vmem [resolvable:$true] %s199
          %205 = dma.hbm_to_vmem [thread:$0]  %s198, 393216, %s200, %s189, 4096, 1024, 64
        $region28: #{cnn_model_forward.1} parent=23 // pred_fallthru
          _
        // Predicated region
        $region29: #{cnn_model_forward.1} parent=23 // pred_check
          %p206 = pneg %p102
        $region30: #{cnn_model_forward.1} parent=23 // pred_check_branch
          %208 = sbr.rel (%p206) target = $region32
        $region31: #{cnn_model_forward.1} parent=23 // pred_region
          %s209 = sand.u32 %s92, 1
          %s210 = sand.u32 %s92, 1
          %s211 = smul.addr %s210, 24
          %s212 = scalar_lea.vmem [#allocation4], %s211
          %s213 = smul.u32 8, %s14
          %s214 = scalar_lea.vmem %s3, %s213
          // Predicated region
          $region33: #{cnn_model_forward.1} parent=31 // pred_check
            _
          $region34: #{cnn_model_forward.1} parent=31 // pred_check_branch
            %216 = sbr.rel (0) target = $region36
          $region35: #{cnn_model_forward.1} parent=31 // pred_region
            // Predicated region
            $region37: #{cnn_model_forward.1} parent=35 // pred_check
              _
            $region38: #{cnn_model_forward.1} parent=35 // pred_check_branch
              %218 = sbr.rel (0) target = $region40
            $region39: #{cnn_model_forward.1} parent=35 // pred_region
              // Predicated region
              $region52: #{cnn_model_forward.1} parent=39 // pred_check
                _
              $region53: #{cnn_model_forward.1} parent=39 // pred_check_branch
                %237 = sbr.rel (0) target = $region55
              $region54: #{cnn_model_forward.1} parent=39 // pred_region
                loop: start=0, step=1, limit=1
                $region56: #{cnn_model_forward.1} parent=54 // loop_pre_header
                  _
                $region57: #{cnn_model_forward.1} parent=54 // loop_header
                  %s239 = sphi 0, %s243
                  %p240 = scmp.ge.s32.totalorder %s239, 1
                  %s244 = sphi %s214, %s214
                  %s245 = sphi %s212, %s212
                $region58: #{cnn_model_forward.1} parent=54 // loop_header_branch
                  %242 = sbr.rel (%p240) target = $region62
                $region59: #{cnn_model_forward.1} parent=54 // loop_body
                  %v246 = vld [vmem:[%s244] sm:$0xff]
                  %247 = vst [vmem:[%s245] sm:$0xff] %v246
                  %v248 = vld [vmem:[%s244 + $0x20] sm:$0xff]
                  %249 = vst [vmem:[%s245 + $0x8] sm:$0xff] %v248
                  %v250 = vld [vmem:[%s244 + $0x40] sm:$0xff]
                  %251 = vst [vmem:[%s245 + $0x10] sm:$0xff] %v250
                $region60: #{cnn_model_forward.1} parent=54 // loop_footer
                  %s243 = sadd.s32 1, %s239
                $region61: #{cnn_model_forward.1} parent=54 // loop_footer_branch
                  %238 = sbr.rel target = $region57
                $region62: #{cnn_model_forward.1} parent=54 // loop_exit
                  _
              $region55: #{cnn_model_forward.1} parent=39 // pred_fallthru
                _
              // Predicated region
              $region63: #{cnn_model_forward.1} parent=39 // pred_check
                _
              $region64: #{cnn_model_forward.1} parent=39 // pred_check_branch
                %253 = sbr.rel target = $region66
              $region65: #{cnn_model_forward.1} parent=39 // pred_region
                _
              $region66: #{cnn_model_forward.1} parent=39 // pred_fallthru
                _
            $region40: #{cnn_model_forward.1} parent=35 // pred_fallthru
              _
            // Predicated region
            $region41: #{cnn_model_forward.1} parent=35 // pred_check
              _
            $region42: #{cnn_model_forward.1} parent=35 // pred_check_branch
              %220 = sbr.rel target = $region44
            $region43: #{cnn_model_forward.1} parent=35 // pred_region
              loop: start=0, step=1, limit=1
              $region45: #{cnn_model_forward.1} parent=43 // loop_pre_header
                _
              $region46: #{cnn_model_forward.1} parent=43 // loop_header
                %s223 = sphi 0, %s227
                %p224 = scmp.ge.s32.totalorder %s223, 1
                %s228 = sphi %s214, %s214
                %s229 = sphi %s212, %s212
              $region47: #{cnn_model_forward.1} parent=43 // loop_header_branch
                %226 = sbr.rel (%p224) target = $region51
              $region48: #{cnn_model_forward.1} parent=43 // loop_body
                %v230 = vld [vmem:[%s228] sm:$0xff]
                %231 = vst [vmem:[%s229] sm:$0xff] %v230
                %v232 = vld [vmem:[%s228 + $0x20] sm:$0xff]
                %233 = vst [vmem:[%s229 + $0x8] sm:$0xff] %v232
                %v234 = vld [vmem:[%s228 + $0x40] sm:$0xff]
                %235 = vst [vmem:[%s229 + $0x10] sm:$0xff] %v234
              $region49: #{cnn_model_forward.1} parent=43 // loop_footer
                %s227 = sadd.s32 1, %s223
              $region50: #{cnn_model_forward.1} parent=43 // loop_footer_branch
                %222 = sbr.rel target = $region46
              $region51: #{cnn_model_forward.1} parent=43 // loop_exit
                _
            $region44: #{cnn_model_forward.1} parent=35 // pred_fallthru
              _
          $region36: #{cnn_model_forward.1} parent=31 // pred_fallthru
            _
          %254 = vnop
        $region32: #{cnn_model_forward.1} parent=23 // pred_fallthru
          _
        // Predicated region
        $region67: #{cnn_model_forward.1} parent=23 // pred_check
          %p255 = pneg %p128
        $region68: #{cnn_model_forward.1} parent=23 // pred_check_branch
          %257 = sbr.rel (%p255) target = $region70
        $region69: #{cnn_model_forward.1} parent=23 // pred_region
          %s258 = smul.u32 8, %s14
          %p259 = scmp.lt.s32.totalorder %s258, 31
          %s260 = scalar_select %p259, %s258, 31
          %s261 = scalar_lea.vmem %s4, %s260
          %s262 = smul.u32 8, %s14
        $region70: #{cnn_model_forward.1} parent=23 // pred_fallthru
          _
      $region24: #{cnn_model_forward.1} parent=5 // pred_fallthru
        _
      %p263 = scmp.le.s32.totalorder 1, %s14
      %p264 = scmp.lt.s32.totalorder %s14, 5
      %p265 = pnand %p263, %p264
      %p266 = pneg %p265
      // Predicated region
      $region71: #{cnn_model_forward.1} parent=5 // pred_check
        _
      $region72: #{cnn_model_forward.1} parent=5 // pred_check_branch
        %268 = sbr.rel (%p265) target = $region74
      $region73: #{cnn_model_forward.1} parent=5 // pred_region
        %s269 = ssub.s32 %s14, 1
        %s270 = sand.u32 %s69, 1
        %s271 = scalar_lea.sflag [#allocation3], %s270
        %s272 = sand.u32 %s69, 1
        %s273 = smul.addr %s272, 24576
        %s274 = scalar_lea.vmem [#allocation2], %s273
        // Predicated region
        $region75: #{cnn_model_forward.1} parent=73 // pred_check
          %p275 = pneg %p82
        $region76: #{cnn_model_forward.1} parent=73 // pred_check_branch
          %277 = sbr.rel (%p275) target = $region78
        $region77: #{cnn_model_forward.1} parent=73 // pred_region
          %278 = dma.done %s271, 393216
        $region78: #{cnn_model_forward.1} parent=73 // pred_fallthru
          _
        %s279 = sand.u32 %s95, 1
        %s280 = sand.u32 %s95, 1
        %s281 = smul.addr %s280, 24
        %s282 = scalar_lea.vmem [#allocation4], %s281
        // Predicated region
        $region79: #{cnn_model_forward.1} parent=73 // pred_check
          %p283 = pneg %p108
        $region80: #{cnn_model_forward.1} parent=73 // pred_check_branch
          %285 = sbr.rel (%p283) target = $region82
        $region81: #{cnn_model_forward.1} parent=73 // pred_region
          _
        $region82: #{cnn_model_forward.1} parent=73 // pred_fallthru
          _
        %p286 = pneg %p35
        %p287 = pneg %p32
        %p288 = pneg %p56
        %p289 = pneg %p53
        %s290 = sand.u32 %s69, 1
        %s291 = scalar_lea.sflag [#allocation3], %s290
        %s292 = sand.u32 %s69, 1
        %s293 = smul.addr %s292, 24576
        %s294 = scalar_lea.vmem [#allocation2], %s293
        %p295 = pneg %p82
        %p296 = pneg %p79
        %s297 = sand.u32 %s95, 1
        %s298 = sand.u32 %s95, 1
        %s299 = smul.addr %s298, 24
        %s300 = scalar_lea.vmem [#allocation4], %s299
        %p301 = pneg %p108
        %p302 = pneg %p105
        %s303 = smul.u32 8, %s19
        %p304 = scmp.lt.s32.totalorder %s303, 31
        %s305 = scalar_select %p304, %s303, 31
        %s306 = scalar_lea.vmem %s4, %s305
        %p307 = pneg %p134
        %p308 = pneg %p131
        %p309 = pneg %p160
        %p310 = pneg %p157
        %s311 = sand.u32 %s147, 1
        %s312 = sand.u32 %s147, 1
        %s313 = smul.addr %s312, 128
        %s314 = scalar_lea.vmem [#allocation5], %s313
        %s315 = smul.u32 8, %s19
        %s316 = smul.u32 8, %s19
        %s317 = smul.u32 8, %s19
        %p318 = scmp.lt.s32.totalorder %s317, 31
        %s319 = scalar_select %p318, %s317, 31
        %s320 = scalar_lea.vmem %s4, %s319
        %s321 = smul.u32 8, %s19
        %s322 = smul.u32 8, %s19
        %v323 = vld [vmem:[%s0] sm:$0xff]
        %v324 = vld [vmem:[%s0 + $0x8] sm:$0xff]
        %v325 = vld [vmem:[%s0 + $0x10] sm:$0xff]
        %v326 = vld [vmem:[%s0 + $0x18] sm:$0xff]
        %v327 = vld [vmem:[%s0 + $0x20] sm:$0xff]
        %v328 = vld [vmem:[%s0 + $0x28] sm:$0xff]
        %v329 = vld [vmem:[%s0 + $0x30] sm:$0xff]
        %v330 = vld [vmem:[%s0 + $0x38] sm:$0xff]
        %v331 = vld [vmem:[%s0 + $0x40] sm:$0xff]
        %v332 = vld [vmem:[%s0 + $0x48] sm:$0xff]
        %v333 = vld [vmem:[%s0 + $0x50] sm:$0xff]
        %v334 = vld [vmem:[%s0 + $0x58] sm:$0xff]
        %v335 = vld [vmem:[%s0 + $0x60] sm:$0xff]
        %v336 = vld [vmem:[%s0 + $0x68] sm:$0xff]
        %v337 = vld [vmem:[%s0 + $0x70] sm:$0xff]
        %v338 = vld [vmem:[%s0 + $0x78] sm:$0xff]
        %v339 = vld [vmem:[%s274] sm:$0xff]
        %v340 = vld [vmem:[%s274 + $0x8] sm:$0xff]
        %v341 = vld [vmem:[%s274 + $0x10] sm:$0xff]
        %v342 = vld [vmem:[%s274 + $0x18] sm:$0xff]
        %v343 = vld [vmem:[%s274 + $0x20] sm:$0xff]
        %v344 = vld [vmem:[%s274 + $0x28] sm:$0xff]
        %v345 = vld [vmem:[%s274 + $0x30] sm:$0xff]
        %v346 = vld [vmem:[%s274 + $0x38] sm:$0xff]
        %v347 = vld [vmem:[%s274 + $0x40] sm:$0xff]
        %v348 = vld [vmem:[%s274 + $0x48] sm:$0xff]
        %v349 = vld [vmem:[%s274 + $0x50] sm:$0xff]
        %v350 = vld [vmem:[%s274 + $0x58] sm:$0xff]
        %v351 = vld [vmem:[%s274 + $0x60] sm:$0xff]
        %v352 = vld [vmem:[%s274 + $0x68] sm:$0xff]
        %v353 = vld [vmem:[%s274 + $0x70] sm:$0xff]
        %v354 = vld [vmem:[%s274 + $0x78] sm:$0xff]
        %v355 = vld [vmem:[%s274 + $0x80] sm:$0xff]
        %v356 = vld [vmem:[%s274 + $0x88] sm:$0xff]
        %v357 = vld [vmem:[%s274 + $0x90] sm:$0xff]
        %v358 = vld [vmem:[%s274 + $0x98] sm:$0xff]
        %v359 = vld [vmem:[%s274 + $0xa0] sm:$0xff]
        %v360 = vld [vmem:[%s274 + $0xa8] sm:$0xff]
        %v361 = vld [vmem:[%s274 + $0xb0] sm:$0xff]
        %v362 = vld [vmem:[%s274 + $0xb8] sm:$0xff]
        %v363 = vld [vmem:[%s274 + $0xc0] sm:$0xff]
        %v364 = vld [vmem:[%s274 + $0xc8] sm:$0xff]
        %v365 = vld [vmem:[%s274 + $0xd0] sm:$0xff]
        %v366 = vld [vmem:[%s274 + $0xd8] sm:$0xff]
        %v367 = vld [vmem:[%s274 + $0xe0] sm:$0xff]
        %v368 = vld [vmem:[%s274 + $0xe8] sm:$0xff]
        %v369 = vld [vmem:[%s274 + $0xf0] sm:$0xff]
        %v370 = vld [vmem:[%s274 + $0xf8] sm:$0xff]
        %v371 = vld [vmem:[%s274 + $0x100] sm:$0xff]
        %v372 = vld [vmem:[%s274 + $0x108] sm:$0xff]
        %v373 = vld [vmem:[%s274 + $0x110] sm:$0xff]
        %v374 = vld [vmem:[%s274 + $0x118] sm:$0xff]
        %v375 = vld [vmem:[%s274 + $0x120] sm:$0xff]
        %v376 = vld [vmem:[%s274 + $0x128] sm:$0xff]
        %v377 = vld [vmem:[%s274 + $0x130] sm:$0xff]
        %v378 = vld [vmem:[%s274 + $0x138] sm:$0xff]
        %v379 = vld [vmem:[%s274 + $0x140] sm:$0xff]
        %v380 = vld [vmem:[%s274 + $0x148] sm:$0xff]
        %v381 = vld [vmem:[%s274 + $0x150] sm:$0xff]
        %v382 = vld [vmem:[%s274 + $0x158] sm:$0xff]
        %v383 = vld [vmem:[%s274 + $0x160] sm:$0xff]
        %v384 = vld [vmem:[%s274 + $0x168] sm:$0xff]
        %v385 = vld [vmem:[%s274 + $0x170] sm:$0xff]
        %v386 = vld [vmem:[%s274 + $0x178] sm:$0xff]
        %v387 = vld [vmem:[%s274 + $0x180] sm:$0xff]
        %v388 = vld [vmem:[%s274 + $0x188] sm:$0xff]
        %v389 = vld [vmem:[%s274 + $0x190] sm:$0xff]
        %v390 = vld [vmem:[%s274 + $0x198] sm:$0xff]
        %v391 = vld [vmem:[%s274 + $0x1a0] sm:$0xff]
        %v392 = vld [vmem:[%s274 + $0x1a8] sm:$0xff]
        %v393 = vld [vmem:[%s274 + $0x1b0] sm:$0xff]
        %v394 = vld [vmem:[%s274 + $0x1b8] sm:$0xff]
        %v395 = vld [vmem:[%s274 + $0x1c0] sm:$0xff]
        %v396 = vld [vmem:[%s274 + $0x1c8] sm:$0xff]
        %v397 = vld [vmem:[%s274 + $0x1d0] sm:$0xff]
        %v398 = vld [vmem:[%s274 + $0x1d8] sm:$0xff]
        %v399 = vld [vmem:[%s274 + $0x1e0] sm:$0xff]
        %v400 = vld [vmem:[%s274 + $0x1e8] sm:$0xff]
        %v401 = vld [vmem:[%s274 + $0x1f0] sm:$0xff]
        %v402 = vld [vmem:[%s274 + $0x1f8] sm:$0xff]
        %v403 = vld [vmem:[%s274 + $0x200] sm:$0xff]
        %v404 = vld [vmem:[%s274 + $0x208] sm:$0xff]
        %v405 = vld [vmem:[%s274 + $0x210] sm:$0xff]
        %v406 = vld [vmem:[%s274 + $0x218] sm:$0xff]
        %v407 = vld [vmem:[%s274 + $0x220] sm:$0xff]
        %v408 = vld [vmem:[%s274 + $0x228] sm:$0xff]
        %v409 = vld [vmem:[%s274 + $0x230] sm:$0xff]
        %v410 = vld [vmem:[%s274 + $0x238] sm:$0xff]
        %v411 = vld [vmem:[%s274 + $0x240] sm:$0xff]
        %v412 = vld [vmem:[%s274 + $0x248] sm:$0xff]
        %v413 = vld [vmem:[%s274 + $0x250] sm:$0xff]
        %v414 = vld [vmem:[%s274 + $0x258] sm:$0xff]
        %v415 = vld [vmem:[%s274 + $0x260] sm:$0xff]
        %v416 = vld [vmem:[%s274 + $0x268] sm:$0xff]
        %v417 = vld [vmem:[%s274 + $0x270] sm:$0xff]
        %v418 = vld [vmem:[%s274 + $0x278] sm:$0xff]
        %v419 = vld [vmem:[%s274 + $0x280] sm:$0xff]
        %v420 = vld [vmem:[%s274 + $0x288] sm:$0xff]
        %v421 = vld [vmem:[%s274 + $0x290] sm:$0xff]
        %v422 = vld [vmem:[%s274 + $0x298] sm:$0xff]
        %v423 = vld [vmem:[%s274 + $0x2a0] sm:$0xff]
        %v424 = vld [vmem:[%s274 + $0x2a8] sm:$0xff]
        %v425 = vld [vmem:[%s274 + $0x2b0] sm:$0xff]
        %v426 = vld [vmem:[%s274 + $0x2b8] sm:$0xff]
        %v427 = vld [vmem:[%s274 + $0x2c0] sm:$0xff]
        %v428 = vld [vmem:[%s274 + $0x2c8] sm:$0xff]
        %v429 = vld [vmem:[%s274 + $0x2d0] sm:$0xff]
        %v430 = vld [vmem:[%s274 + $0x2d8] sm:$0xff]
        %v431 = vld [vmem:[%s274 + $0x2e0] sm:$0xff]
        %v432 = vld [vmem:[%s274 + $0x2e8] sm:$0xff]
        %v433 = vld [vmem:[%s274 + $0x2f0] sm:$0xff]
        %v434 = vld [vmem:[%s274 + $0x2f8] sm:$0xff]
        %v435 = vld [vmem:[%s274 + $0x300] sm:$0xff]
        %v436 = vld [vmem:[%s274 + $0x308] sm:$0xff]
        %v437 = vld [vmem:[%s274 + $0x310] sm:$0xff]
        %v438 = vld [vmem:[%s274 + $0x318] sm:$0xff]
        %v439 = vld [vmem:[%s274 + $0x320] sm:$0xff]
        %v440 = vld [vmem:[%s274 + $0x328] sm:$0xff]
        %v441 = vld [vmem:[%s274 + $0x330] sm:$0xff]
        %v442 = vld [vmem:[%s274 + $0x338] sm:$0xff]
        %v443 = vld [vmem:[%s274 + $0x340] sm:$0xff]
        %v444 = vld [vmem:[%s274 + $0x348] sm:$0xff]
        %v445 = vld [vmem:[%s274 + $0x350] sm:$0xff]
        %v446 = vld [vmem:[%s274 + $0x358] sm:$0xff]
        %v447 = vld [vmem:[%s274 + $0x360] sm:$0xff]
        %v448 = vld [vmem:[%s274 + $0x368] sm:$0xff]
        %v449 = vld [vmem:[%s274 + $0x370] sm:$0xff]
        %v450 = vld [vmem:[%s274 + $0x378] sm:$0xff]
        %v451 = vld [vmem:[%s274 + $0x380] sm:$0xff]
        %v452 = vld [vmem:[%s274 + $0x388] sm:$0xff]
        %v453 = vld [vmem:[%s274 + $0x390] sm:$0xff]
        %v454 = vld [vmem:[%s274 + $0x398] sm:$0xff]
        %v455 = vld [vmem:[%s274 + $0x3a0] sm:$0xff]
        %v456 = vld [vmem:[%s274 + $0x3a8] sm:$0xff]
        %v457 = vld [vmem:[%s274 + $0x3b0] sm:$0xff]
        %v458 = vld [vmem:[%s274 + $0x3b8] sm:$0xff]
        %v459 = vld [vmem:[%s274 + $0x3c0] sm:$0xff]
        %v460 = vld [vmem:[%s274 + $0x3c8] sm:$0xff]
        %v461 = vld [vmem:[%s274 + $0x3d0] sm:$0xff]
        %v462 = vld [vmem:[%s274 + $0x3d8] sm:$0xff]
        %v463 = vld [vmem:[%s274 + $0x3e0] sm:$0xff]
        %v464 = vld [vmem:[%s274 + $0x3e8] sm:$0xff]
        %v465 = vld [vmem:[%s274 + $0x3f0] sm:$0xff]
        %v466 = vld [vmem:[%s274 + $0x3f8] sm:$0xff]
        %v467 = vld [vmem:[%s274 + $0x400] sm:$0xff]
        %v468 = vld [vmem:[%s274 + $0x408] sm:$0xff]
        %v469 = vld [vmem:[%s274 + $0x410] sm:$0xff]
        %v470 = vld [vmem:[%s274 + $0x418] sm:$0xff]
        %v471 = vld [vmem:[%s274 + $0x420] sm:$0xff]
        %v472 = vld [vmem:[%s274 + $0x428] sm:$0xff]
        %v473 = vld [vmem:[%s274 + $0x430] sm:$0xff]
        %v474 = vld [vmem:[%s274 + $0x438] sm:$0xff]
        %v475 = vld [vmem:[%s274 + $0x440] sm:$0xff]
        %v476 = vld [vmem:[%s274 + $0x448] sm:$0xff]
        %v477 = vld [vmem:[%s274 + $0x450] sm:$0xff]
        %v478 = vld [vmem:[%s274 + $0x458] sm:$0xff]
        %v479 = vld [vmem:[%s274 + $0x460] sm:$0xff]
        %v480 = vld [vmem:[%s274 + $0x468] sm:$0xff]
        %v481 = vld [vmem:[%s274 + $0x470] sm:$0xff]
        %v482 = vld [vmem:[%s274 + $0x478] sm:$0xff]
        %v483 = vld [vmem:[%s274 + $0x480] sm:$0xff]
        %v484 = vld [vmem:[%s274 + $0x488] sm:$0xff]
        %v485 = vld [vmem:[%s274 + $0x490] sm:$0xff]
        %v486 = vld [vmem:[%s274 + $0x498] sm:$0xff]
        %v487 = vld [vmem:[%s274 + $0x4a0] sm:$0xff]
        %v488 = vld [vmem:[%s274 + $0x4a8] sm:$0xff]
        %v489 = vld [vmem:[%s274 + $0x4b0] sm:$0xff]
        %v490 = vld [vmem:[%s274 + $0x4b8] sm:$0xff]
        %v491 = vld [vmem:[%s274 + $0x4c0] sm:$0xff]
        %v492 = vld [vmem:[%s274 + $0x4c8] sm:$0xff]
        %v493 = vld [vmem:[%s274 + $0x4d0] sm:$0xff]
        %v494 = vld [vmem:[%s274 + $0x4d8] sm:$0xff]
        %v495 = vld [vmem:[%s274 + $0x4e0] sm:$0xff]
        %v496 = vld [vmem:[%s274 + $0x4e8] sm:$0xff]
        %v497 = vld [vmem:[%s274 + $0x4f0] sm:$0xff]
        %v498 = vld [vmem:[%s274 + $0x4f8] sm:$0xff]
        %v499 = vld [vmem:[%s274 + $0x500] sm:$0xff]
        %v500 = vld [vmem:[%s274 + $0x508] sm:$0xff]
        %v501 = vld [vmem:[%s274 + $0x510] sm:$0xff]
        %v502 = vld [vmem:[%s274 + $0x518] sm:$0xff]
        %v503 = vld [vmem:[%s274 + $0x520] sm:$0xff]
        %v504 = vld [vmem:[%s274 + $0x528] sm:$0xff]
        %v505 = vld [vmem:[%s274 + $0x530] sm:$0xff]
        %v506 = vld [vmem:[%s274 + $0x538] sm:$0xff]
        %v507 = vld [vmem:[%s274 + $0x540] sm:$0xff]
        %v508 = vld [vmem:[%s274 + $0x548] sm:$0xff]
        %v509 = vld [vmem:[%s274 + $0x550] sm:$0xff]
        %v510 = vld [vmem:[%s274 + $0x558] sm:$0xff]
        %v511 = vld [vmem:[%s274 + $0x560] sm:$0xff]
        %v512 = vld [vmem:[%s274 + $0x568] sm:$0xff]
        %v513 = vld [vmem:[%s274 + $0x570] sm:$0xff]
        %v514 = vld [vmem:[%s274 + $0x578] sm:$0xff]
        %v515 = vld [vmem:[%s274 + $0x580] sm:$0xff]
        %v516 = vld [vmem:[%s274 + $0x588] sm:$0xff]
        %v517 = vld [vmem:[%s274 + $0x590] sm:$0xff]
        %v518 = vld [vmem:[%s274 + $0x598] sm:$0xff]
        %v519 = vld [vmem:[%s274 + $0x5a0] sm:$0xff]
        %v520 = vld [vmem:[%s274 + $0x5a8] sm:$0xff]
        %v521 = vld [vmem:[%s274 + $0x5b0] sm:$0xff]
        %v522 = vld [vmem:[%s274 + $0x5b8] sm:$0xff]
        %v523 = vld [vmem:[%s274 + $0x5c0] sm:$0xff]
        %v524 = vld [vmem:[%s274 + $0x5c8] sm:$0xff]
        %v525 = vld [vmem:[%s274 + $0x5d0] sm:$0xff]
        %v526 = vld [vmem:[%s274 + $0x5d8] sm:$0xff]
        %v527 = vld [vmem:[%s274 + $0x5e0] sm:$0xff]
        %v528 = vld [vmem:[%s274 + $0x5e8] sm:$0xff]
        %v529 = vld [vmem:[%s274 + $0x5f0] sm:$0xff]
        %v530 = vld [vmem:[%s274 + $0x5f8] sm:$0xff]
        %v531 = vld [vmem:[%s274 + $0x600] sm:$0xff]
        %v532 = vld [vmem:[%s274 + $0x608] sm:$0xff]
        %v533 = vld [vmem:[%s274 + $0x610] sm:$0xff]
        %v534 = vld [vmem:[%s274 + $0x618] sm:$0xff]
        %v535 = vld [vmem:[%s274 + $0x620] sm:$0xff]
        %v536 = vld [vmem:[%s274 + $0x628] sm:$0xff]
        %v537 = vld [vmem:[%s274 + $0x630] sm:$0xff]
        %v538 = vld [vmem:[%s274 + $0x638] sm:$0xff]
        %v539 = vld [vmem:[%s274 + $0x640] sm:$0xff]
        %v540 = vld [vmem:[%s274 + $0x648] sm:$0xff]
        %v541 = vld [vmem:[%s274 + $0x650] sm:$0xff]
        %v542 = vld [vmem:[%s274 + $0x658] sm:$0xff]
        %v543 = vld [vmem:[%s274 + $0x660] sm:$0xff]
        %v544 = vld [vmem:[%s274 + $0x668] sm:$0xff]
        %v545 = vld [vmem:[%s274 + $0x670] sm:$0xff]
        %v546 = vld [vmem:[%s274 + $0x678] sm:$0xff]
        %v547 = vld [vmem:[%s274 + $0x680] sm:$0xff]
        %v548 = vld [vmem:[%s274 + $0x688] sm:$0xff]
        %v549 = vld [vmem:[%s274 + $0x690] sm:$0xff]
        %v550 = vld [vmem:[%s274 + $0x698] sm:$0xff]
        %v551 = vld [vmem:[%s274 + $0x6a0] sm:$0xff]
        %v552 = vld [vmem:[%s274 + $0x6a8] sm:$0xff]
        %v553 = vld [vmem:[%s274 + $0x6b0] sm:$0xff]
        %v554 = vld [vmem:[%s274 + $0x6b8] sm:$0xff]
        %v555 = vld [vmem:[%s274 + $0x6c0] sm:$0xff]
        %v556 = vld [vmem:[%s274 + $0x6c8] sm:$0xff]
        %v557 = vld [vmem:[%s274 + $0x6d0] sm:$0xff]
        %v558 = vld [vmem:[%s274 + $0x6d8] sm:$0xff]
        %v559 = vld [vmem:[%s274 + $0x6e0] sm:$0xff]
        %v560 = vld [vmem:[%s274 + $0x6e8] sm:$0xff]
        %v561 = vld [vmem:[%s274 + $0x6f0] sm:$0xff]
        %v562 = vld [vmem:[%s274 + $0x6f8] sm:$0xff]
        %v563 = vld [vmem:[%s274 + $0x700] sm:$0xff]
        %v564 = vld [vmem:[%s274 + $0x708] sm:$0xff]
        %v565 = vld [vmem:[%s274 + $0x710] sm:$0xff]
        %v566 = vld [vmem:[%s274 + $0x718] sm:$0xff]
        %v567 = vld [vmem:[%s274 + $0x720] sm:$0xff]
        %v568 = vld [vmem:[%s274 + $0x728] sm:$0xff]
        %v569 = vld [vmem:[%s274 + $0x730] sm:$0xff]
        %v570 = vld [vmem:[%s274 + $0x738] sm:$0xff]
        %v571 = vld [vmem:[%s274 + $0x740] sm:$0xff]
        %v572 = vld [vmem:[%s274 + $0x748] sm:$0xff]
        %v573 = vld [vmem:[%s274 + $0x750] sm:$0xff]
        %v574 = vld [vmem:[%s274 + $0x758] sm:$0xff]
        %v575 = vld [vmem:[%s274 + $0x760] sm:$0xff]
        %v576 = vld [vmem:[%s274 + $0x768] sm:$0xff]
        %v577 = vld [vmem:[%s274 + $0x770] sm:$0xff]
        %v578 = vld [vmem:[%s274 + $0x778] sm:$0xff]
        %v579 = vld [vmem:[%s274 + $0x780] sm:$0xff]
        %v580 = vld [vmem:[%s274 + $0x788] sm:$0xff]
        %v581 = vld [vmem:[%s274 + $0x790] sm:$0xff]
        %v582 = vld [vmem:[%s274 + $0x798] sm:$0xff]
        %v583 = vld [vmem:[%s274 + $0x7a0] sm:$0xff]
        %v584 = vld [vmem:[%s274 + $0x7a8] sm:$0xff]
        %v585 = vld [vmem:[%s274 + $0x7b0] sm:$0xff]
        %v586 = vld [vmem:[%s274 + $0x7b8] sm:$0xff]
        %v587 = vld [vmem:[%s274 + $0x7c0] sm:$0xff]
        %v588 = vld [vmem:[%s274 + $0x7c8] sm:$0xff]
        %v589 = vld [vmem:[%s274 + $0x7d0] sm:$0xff]
        %v590 = vld [vmem:[%s274 + $0x7d8] sm:$0xff]
        %v591 = vld [vmem:[%s274 + $0x7e0] sm:$0xff]
        %v592 = vld [vmem:[%s274 + $0x7e8] sm:$0xff]
        %v593 = vld [vmem:[%s274 + $0x7f0] sm:$0xff]
        %v594 = vld [vmem:[%s274 + $0x7f8] sm:$0xff]
        %v595 = vld [vmem:[%s274 + $0x800] sm:$0xff]
        %v596 = vld [vmem:[%s274 + $0x808] sm:$0xff]
        %v597 = vld [vmem:[%s274 + $0x810] sm:$0xff]
        %v598 = vld [vmem:[%s274 + $0x818] sm:$0xff]
        %v599 = vld [vmem:[%s274 + $0x820] sm:$0xff]
        %v600 = vld [vmem:[%s274 + $0x828] sm:$0xff]
        %v601 = vld [vmem:[%s274 + $0x830] sm:$0xff]
        %v602 = vld [vmem:[%s274 + $0x838] sm:$0xff]
        %v603 = vld [vmem:[%s274 + $0x840] sm:$0xff]
        %v604 = vld [vmem:[%s274 + $0x848] sm:$0xff]
        %v605 = vld [vmem:[%s274 + $0x850] sm:$0xff]
        %v606 = vld [vmem:[%s274 + $0x858] sm:$0xff]
        %v607 = vld [vmem:[%s274 + $0x860] sm:$0xff]
        %v608 = vld [vmem:[%s274 + $0x868] sm:$0xff]
        %v609 = vld [vmem:[%s274 + $0x870] sm:$0xff]
        %v610 = vld [vmem:[%s274 + $0x878] sm:$0xff]
        %v611 = vld [vmem:[%s274 + $0x880] sm:$0xff]
        %v612 = vld [vmem:[%s274 + $0x888] sm:$0xff]
        %v613 = vld [vmem:[%s274 + $0x890] sm:$0xff]
        %v614 = vld [vmem:[%s274 + $0x898] sm:$0xff]
        %v615 = vld [vmem:[%s274 + $0x8a0] sm:$0xff]
        %v616 = vld [vmem:[%s274 + $0x8a8] sm:$0xff]
        %v617 = vld [vmem:[%s274 + $0x8b0] sm:$0xff]
        %v618 = vld [vmem:[%s274 + $0x8b8] sm:$0xff]
        %v619 = vld [vmem:[%s274 + $0x8c0] sm:$0xff]
        %v620 = vld [vmem:[%s274 + $0x8c8] sm:$0xff]
        %v621 = vld [vmem:[%s274 + $0x8d0] sm:$0xff]
        %v622 = vld [vmem:[%s274 + $0x8d8] sm:$0xff]
        %v623 = vld [vmem:[%s274 + $0x8e0] sm:$0xff]
        %v624 = vld [vmem:[%s274 + $0x8e8] sm:$0xff]
        %v625 = vld [vmem:[%s274 + $0x8f0] sm:$0xff]
        %v626 = vld [vmem:[%s274 + $0x8f8] sm:$0xff]
        %v627 = vld [vmem:[%s274 + $0x900] sm:$0xff]
        %v628 = vld [vmem:[%s274 + $0x908] sm:$0xff]
        %v629 = vld [vmem:[%s274 + $0x910] sm:$0xff]
        %v630 = vld [vmem:[%s274 + $0x918] sm:$0xff]
        %v631 = vld [vmem:[%s274 + $0x920] sm:$0xff]
        %v632 = vld [vmem:[%s274 + $0x928] sm:$0xff]
        %v633 = vld [vmem:[%s274 + $0x930] sm:$0xff]
        %v634 = vld [vmem:[%s274 + $0x938] sm:$0xff]
        %v635 = vld [vmem:[%s274 + $0x940] sm:$0xff]
        %v636 = vld [vmem:[%s274 + $0x948] sm:$0xff]
        %v637 = vld [vmem:[%s274 + $0x950] sm:$0xff]
        %v638 = vld [vmem:[%s274 + $0x958] sm:$0xff]
        %v639 = vld [vmem:[%s274 + $0x960] sm:$0xff]
        %v640 = vld [vmem:[%s274 + $0x968] sm:$0xff]
        %v641 = vld [vmem:[%s274 + $0x970] sm:$0xff]
        %v642 = vld [vmem:[%s274 + $0x978] sm:$0xff]
        %v643 = vld [vmem:[%s274 + $0x980] sm:$0xff]
        %v644 = vld [vmem:[%s274 + $0x988] sm:$0xff]
        %v645 = vld [vmem:[%s274 + $0x990] sm:$0xff]
        %v646 = vld [vmem:[%s274 + $0x998] sm:$0xff]
        %v647 = vld [vmem:[%s274 + $0x9a0] sm:$0xff]
        %v648 = vld [vmem:[%s274 + $0x9a8] sm:$0xff]
        %v649 = vld [vmem:[%s274 + $0x9b0] sm:$0xff]
        %v650 = vld [vmem:[%s274 + $0x9b8] sm:$0xff]
        %v651 = vld [vmem:[%s274 + $0x9c0] sm:$0xff]
        %v652 = vld [vmem:[%s274 + $0x9c8] sm:$0xff]
        %v653 = vld [vmem:[%s274 + $0x9d0] sm:$0xff]
        %v654 = vld [vmem:[%s274 + $0x9d8] sm:$0xff]
        %v655 = vld [vmem:[%s274 + $0x9e0] sm:$0xff]
        %v656 = vld [vmem:[%s274 + $0x9e8] sm:$0xff]
        %v657 = vld [vmem:[%s274 + $0x9f0] sm:$0xff]
        %v658 = vld [vmem:[%s274 + $0x9f8] sm:$0xff]
        %v659 = vld [vmem:[%s274 + $0xa00] sm:$0xff]
        %v660 = vld [vmem:[%s274 + $0xa08] sm:$0xff]
        %v661 = vld [vmem:[%s274 + $0xa10] sm:$0xff]
        %v662 = vld [vmem:[%s274 + $0xa18] sm:$0xff]
        %v663 = vld [vmem:[%s274 + $0xa20] sm:$0xff]
        %v664 = vld [vmem:[%s274 + $0xa28] sm:$0xff]
        %v665 = vld [vmem:[%s274 + $0xa30] sm:$0xff]
        %v666 = vld [vmem:[%s274 + $0xa38] sm:$0xff]
        %v667 = vld [vmem:[%s274 + $0xa40] sm:$0xff]
        %v668 = vld [vmem:[%s274 + $0xa48] sm:$0xff]
        %v669 = vld [vmem:[%s274 + $0xa50] sm:$0xff]
        %v670 = vld [vmem:[%s274 + $0xa58] sm:$0xff]
        %v671 = vld [vmem:[%s274 + $0xa60] sm:$0xff]
        %v672 = vld [vmem:[%s274 + $0xa68] sm:$0xff]
        %v673 = vld [vmem:[%s274 + $0xa70] sm:$0xff]
        %v674 = vld [vmem:[%s274 + $0xa78] sm:$0xff]
        %v675 = vld [vmem:[%s274 + $0xa80] sm:$0xff]
        %v676 = vld [vmem:[%s274 + $0xa88] sm:$0xff]
        %v677 = vld [vmem:[%s274 + $0xa90] sm:$0xff]
        %v678 = vld [vmem:[%s274 + $0xa98] sm:$0xff]
        %v679 = vld [vmem:[%s274 + $0xaa0] sm:$0xff]
        %v680 = vld [vmem:[%s274 + $0xaa8] sm:$0xff]
        %v681 = vld [vmem:[%s274 + $0xab0] sm:$0xff]
        %v682 = vld [vmem:[%s274 + $0xab8] sm:$0xff]
        %v683 = vld [vmem:[%s274 + $0xac0] sm:$0xff]
        %v684 = vld [vmem:[%s274 + $0xac8] sm:$0xff]
        %v685 = vld [vmem:[%s274 + $0xad0] sm:$0xff]
        %v686 = vld [vmem:[%s274 + $0xad8] sm:$0xff]
        %v687 = vld [vmem:[%s274 + $0xae0] sm:$0xff]
        %v688 = vld [vmem:[%s274 + $0xae8] sm:$0xff]
        %v689 = vld [vmem:[%s274 + $0xaf0] sm:$0xff]
        %v690 = vld [vmem:[%s274 + $0xaf8] sm:$0xff]
        %v691 = vld [vmem:[%s274 + $0xb00] sm:$0xff]
        %v692 = vld [vmem:[%s274 + $0xb08] sm:$0xff]
        %v693 = vld [vmem:[%s274 + $0xb10] sm:$0xff]
        %v694 = vld [vmem:[%s274 + $0xb18] sm:$0xff]
        %v695 = vld [vmem:[%s274 + $0xb20] sm:$0xff]
        %v696 = vld [vmem:[%s274 + $0xb28] sm:$0xff]
        %v697 = vld [vmem:[%s274 + $0xb30] sm:$0xff]
        %v698 = vld [vmem:[%s274 + $0xb38] sm:$0xff]
        %v699 = vld [vmem:[%s274 + $0xb40] sm:$0xff]
        %v700 = vld [vmem:[%s274 + $0xb48] sm:$0xff]
        %v701 = vld [vmem:[%s274 + $0xb50] sm:$0xff]
        %v702 = vld [vmem:[%s274 + $0xb58] sm:$0xff]
        %v703 = vld [vmem:[%s274 + $0xb60] sm:$0xff]
        %v704 = vld [vmem:[%s274 + $0xb68] sm:$0xff]
        %v705 = vld [vmem:[%s274 + $0xb70] sm:$0xff]
        %v706 = vld [vmem:[%s274 + $0xb78] sm:$0xff]
        %v707 = vld [vmem:[%s274 + $0xb80] sm:$0xff]
        %v708 = vld [vmem:[%s274 + $0xb88] sm:$0xff]
        %v709 = vld [vmem:[%s274 + $0xb90] sm:$0xff]
        %v710 = vld [vmem:[%s274 + $0xb98] sm:$0xff]
        %v711 = vld [vmem:[%s274 + $0xba0] sm:$0xff]
        %v712 = vld [vmem:[%s274 + $0xba8] sm:$0xff]
        %v713 = vld [vmem:[%s274 + $0xbb0] sm:$0xff]
        %v714 = vld [vmem:[%s274 + $0xbb8] sm:$0xff]
        %v715 = vld [vmem:[%s274 + $0xbc0] sm:$0xff]
        %v716 = vld [vmem:[%s274 + $0xbc8] sm:$0xff]
        %v717 = vld [vmem:[%s274 + $0xbd0] sm:$0xff]
        %v718 = vld [vmem:[%s274 + $0xbd8] sm:$0xff]
        %v719 = vld [vmem:[%s274 + $0xbe0] sm:$0xff]
        %v720 = vld [vmem:[%s274 + $0xbe8] sm:$0xff]
        %v721 = vld [vmem:[%s274 + $0xbf0] sm:$0xff]
        %v722 = vld [vmem:[%s274 + $0xbf8] sm:$0xff]
        %v723 = vld [vmem:[%s274 + $0xc00] sm:$0xff]
        %v724 = vld [vmem:[%s274 + $0xc08] sm:$0xff]
        %v725 = vld [vmem:[%s274 + $0xc10] sm:$0xff]
        %v726 = vld [vmem:[%s274 + $0xc18] sm:$0xff]
        %v727 = vld [vmem:[%s274 + $0xc20] sm:$0xff]
        %v728 = vld [vmem:[%s274 + $0xc28] sm:$0xff]
        %v729 = vld [vmem:[%s274 + $0xc30] sm:$0xff]
        %v730 = vld [vmem:[%s274 + $0xc38] sm:$0xff]
        %v731 = vld [vmem:[%s274 + $0xc40] sm:$0xff]
        %v732 = vld [vmem:[%s274 + $0xc48] sm:$0xff]
        %v733 = vld [vmem:[%s274 + $0xc50] sm:$0xff]
        %v734 = vld [vmem:[%s274 + $0xc58] sm:$0xff]
        %v735 = vld [vmem:[%s274 + $0xc60] sm:$0xff]
        %v736 = vld [vmem:[%s274 + $0xc68] sm:$0xff]
        %v737 = vld [vmem:[%s274 + $0xc70] sm:$0xff]
        %v738 = vld [vmem:[%s274 + $0xc78] sm:$0xff]
        %v739 = vld [vmem:[%s274 + $0xc80] sm:$0xff]
        %v740 = vld [vmem:[%s274 + $0xc88] sm:$0xff]
        %v741 = vld [vmem:[%s274 + $0xc90] sm:$0xff]
        %v742 = vld [vmem:[%s274 + $0xc98] sm:$0xff]
        %v743 = vld [vmem:[%s274 + $0xca0] sm:$0xff]
        %v744 = vld [vmem:[%s274 + $0xca8] sm:$0xff]
        %v745 = vld [vmem:[%s274 + $0xcb0] sm:$0xff]
        %v746 = vld [vmem:[%s274 + $0xcb8] sm:$0xff]
        %v747 = vld [vmem:[%s274 + $0xcc0] sm:$0xff]
        %v748 = vld [vmem:[%s274 + $0xcc8] sm:$0xff]
        %v749 = vld [vmem:[%s274 + $0xcd0] sm:$0xff]
        %v750 = vld [vmem:[%s274 + $0xcd8] sm:$0xff]
        %v751 = vld [vmem:[%s274 + $0xce0] sm:$0xff]
        %v752 = vld [vmem:[%s274 + $0xce8] sm:$0xff]
        %v753 = vld [vmem:[%s274 + $0xcf0] sm:$0xff]
        %v754 = vld [vmem:[%s274 + $0xcf8] sm:$0xff]
        %v755 = vld [vmem:[%s274 + $0xd00] sm:$0xff]
        %v756 = vld [vmem:[%s274 + $0xd08] sm:$0xff]
        %v757 = vld [vmem:[%s274 + $0xd10] sm:$0xff]
        %v758 = vld [vmem:[%s274 + $0xd18] sm:$0xff]
        %v759 = vld [vmem:[%s274 + $0xd20] sm:$0xff]
        %v760 = vld [vmem:[%s274 + $0xd28] sm:$0xff]
        %v761 = vld [vmem:[%s274 + $0xd30] sm:$0xff]
        %v762 = vld [vmem:[%s274 + $0xd38] sm:$0xff]
        %v763 = vld [vmem:[%s274 + $0xd40] sm:$0xff]
        %v764 = vld [vmem:[%s274 + $0xd48] sm:$0xff]
        %v765 = vld [vmem:[%s274 + $0xd50] sm:$0xff]
        %v766 = vld [vmem:[%s274 + $0xd58] sm:$0xff]
        %v767 = vld [vmem:[%s274 + $0xd60] sm:$0xff]
        %v768 = vld [vmem:[%s274 + $0xd68] sm:$0xff]
        %v769 = vld [vmem:[%s274 + $0xd70] sm:$0xff]
        %v770 = vld [vmem:[%s274 + $0xd78] sm:$0xff]
        %v771 = vld [vmem:[%s274 + $0xd80] sm:$0xff]
        %v772 = vld [vmem:[%s274 + $0xd88] sm:$0xff]
        %v773 = vld [vmem:[%s274 + $0xd90] sm:$0xff]
        %v774 = vld [vmem:[%s274 + $0xd98] sm:$0xff]
        %v775 = vld [vmem:[%s274 + $0xda0] sm:$0xff]
        %v776 = vld [vmem:[%s274 + $0xda8] sm:$0xff]
        %v777 = vld [vmem:[%s274 + $0xdb0] sm:$0xff]
        %v778 = vld [vmem:[%s274 + $0xdb8] sm:$0xff]
        %v779 = vld [vmem:[%s274 + $0xdc0] sm:$0xff]
        %v780 = vld [vmem:[%s274 + $0xdc8] sm:$0xff]
        %v781 = vld [vmem:[%s274 + $0xdd0] sm:$0xff]
        %v782 = vld [vmem:[%s274 + $0xdd8] sm:$0xff]
        %v783 = vld [vmem:[%s274 + $0xde0] sm:$0xff]
        %v784 = vld [vmem:[%s274 + $0xde8] sm:$0xff]
        %v785 = vld [vmem:[%s274 + $0xdf0] sm:$0xff]
        %v786 = vld [vmem:[%s274 + $0xdf8] sm:$0xff]
        %v787 = vld [vmem:[%s274 + $0xe00] sm:$0xff]
        %v788 = vld [vmem:[%s274 + $0xe08] sm:$0xff]
        %v789 = vld [vmem:[%s274 + $0xe10] sm:$0xff]
        %v790 = vld [vmem:[%s274 + $0xe18] sm:$0xff]
        %v791 = vld [vmem:[%s274 + $0xe20] sm:$0xff]
        %v792 = vld [vmem:[%s274 + $0xe28] sm:$0xff]
        %v793 = vld [vmem:[%s274 + $0xe30] sm:$0xff]
        %v794 = vld [vmem:[%s274 + $0xe38] sm:$0xff]
        %v795 = vld [vmem:[%s274 + $0xe40] sm:$0xff]
        %v796 = vld [vmem:[%s274 + $0xe48] sm:$0xff]
        %v797 = vld [vmem:[%s274 + $0xe50] sm:$0xff]
        %v798 = vld [vmem:[%s274 + $0xe58] sm:$0xff]
        %v799 = vld [vmem:[%s274 + $0xe60] sm:$0xff]
        %v800 = vld [vmem:[%s274 + $0xe68] sm:$0xff]
        %v801 = vld [vmem:[%s274 + $0xe70] sm:$0xff]
        %v802 = vld [vmem:[%s274 + $0xe78] sm:$0xff]
        %v803 = vld [vmem:[%s274 + $0xe80] sm:$0xff]
        %v804 = vld [vmem:[%s274 + $0xe88] sm:$0xff]
        %v805 = vld [vmem:[%s274 + $0xe90] sm:$0xff]
        %v806 = vld [vmem:[%s274 + $0xe98] sm:$0xff]
        %v807 = vld [vmem:[%s274 + $0xea0] sm:$0xff]
        %v808 = vld [vmem:[%s274 + $0xea8] sm:$0xff]
        %v809 = vld [vmem:[%s274 + $0xeb0] sm:$0xff]
        %v810 = vld [vmem:[%s274 + $0xeb8] sm:$0xff]
        %v811 = vld [vmem:[%s274 + $0xec0] sm:$0xff]
        %v812 = vld [vmem:[%s274 + $0xec8] sm:$0xff]
        %v813 = vld [vmem:[%s274 + $0xed0] sm:$0xff]
        %v814 = vld [vmem:[%s274 + $0xed8] sm:$0xff]
        %v815 = vld [vmem:[%s274 + $0xee0] sm:$0xff]
        %v816 = vld [vmem:[%s274 + $0xee8] sm:$0xff]
        %v817 = vld [vmem:[%s274 + $0xef0] sm:$0xff]
        %v818 = vld [vmem:[%s274 + $0xef8] sm:$0xff]
        %v819 = vld [vmem:[%s274 + $0xf00] sm:$0xff]
        %v820 = vld [vmem:[%s274 + $0xf08] sm:$0xff]
        %v821 = vld [vmem:[%s274 + $0xf10] sm:$0xff]
        %v822 = vld [vmem:[%s274 + $0xf18] sm:$0xff]
        %v823 = vld [vmem:[%s274 + $0xf20] sm:$0xff]
        %v824 = vld [vmem:[%s274 + $0xf28] sm:$0xff]
        %v825 = vld [vmem:[%s274 + $0xf30] sm:$0xff]
        %v826 = vld [vmem:[%s274 + $0xf38] sm:$0xff]
        %v827 = vld [vmem:[%s274 + $0xf40] sm:$0xff]
        %v828 = vld [vmem:[%s274 + $0xf48] sm:$0xff]
        %v829 = vld [vmem:[%s274 + $0xf50] sm:$0xff]
        %v830 = vld [vmem:[%s274 + $0xf58] sm:$0xff]
        %v831 = vld [vmem:[%s274 + $0xf60] sm:$0xff]
        %v832 = vld [vmem:[%s274 + $0xf68] sm:$0xff]
        %v833 = vld [vmem:[%s274 + $0xf70] sm:$0xff]
        %v834 = vld [vmem:[%s274 + $0xf78] sm:$0xff]
        %v835 = vld [vmem:[%s274 + $0xf80] sm:$0xff]
        %v836 = vld [vmem:[%s274 + $0xf88] sm:$0xff]
        %v837 = vld [vmem:[%s274 + $0xf90] sm:$0xff]
        %v838 = vld [vmem:[%s274 + $0xf98] sm:$0xff]
        %v839 = vld [vmem:[%s274 + $0xfa0] sm:$0xff]
        %v840 = vld [vmem:[%s274 + $0xfa8] sm:$0xff]
        %v841 = vld [vmem:[%s274 + $0xfb0] sm:$0xff]
        %v842 = vld [vmem:[%s274 + $0xfb8] sm:$0xff]
        %v843 = vld [vmem:[%s274 + $0xfc0] sm:$0xff]
        %v844 = vld [vmem:[%s274 + $0xfc8] sm:$0xff]
        %v845 = vld [vmem:[%s274 + $0xfd0] sm:$0xff]
        %v846 = vld [vmem:[%s274 + $0xfd8] sm:$0xff]
        %v847 = vld [vmem:[%s274 + $0xfe0] sm:$0xff]
        %v848 = vld [vmem:[%s274 + $0xfe8] sm:$0xff]
        %v849 = vld [vmem:[%s274 + $0xff0] sm:$0xff]
        %v850 = vld [vmem:[%s274 + $0xff8] sm:$0xff]
        %v851 = vld [vmem:[%s274 + $0x1000] sm:$0xff]
        %v852 = vld [vmem:[%s274 + $0x1008] sm:$0xff]
        %v853 = vld [vmem:[%s274 + $0x1010] sm:$0xff]
        %v854 = vld [vmem:[%s274 + $0x1018] sm:$0xff]
        %v855 = vld [vmem:[%s274 + $0x1020] sm:$0xff]
        %v856 = vld [vmem:[%s274 + $0x1028] sm:$0xff]
        %v857 = vld [vmem:[%s274 + $0x1030] sm:$0xff]
        %v858 = vld [vmem:[%s274 + $0x1038] sm:$0xff]
        %v859 = vld [vmem:[%s274 + $0x1040] sm:$0xff]
        %v860 = vld [vmem:[%s274 + $0x1048] sm:$0xff]
        %v861 = vld [vmem:[%s274 + $0x1050] sm:$0xff]
        %v862 = vld [vmem:[%s274 + $0x1058] sm:$0xff]
        %v863 = vld [vmem:[%s274 + $0x1060] sm:$0xff]
        %v864 = vld [vmem:[%s274 + $0x1068] sm:$0xff]
        %v865 = vld [vmem:[%s274 + $0x1070] sm:$0xff]
        %v866 = vld [vmem:[%s274 + $0x1078] sm:$0xff]
        %v867 = vld [vmem:[%s274 + $0x1080] sm:$0xff]
        %v868 = vld [vmem:[%s274 + $0x1088] sm:$0xff]
        %v869 = vld [vmem:[%s274 + $0x1090] sm:$0xff]
        %v870 = vld [vmem:[%s274 + $0x1098] sm:$0xff]
        %v871 = vld [vmem:[%s274 + $0x10a0] sm:$0xff]
        %v872 = vld [vmem:[%s274 + $0x10a8] sm:$0xff]
        %v873 = vld [vmem:[%s274 + $0x10b0] sm:$0xff]
        %v874 = vld [vmem:[%s274 + $0x10b8] sm:$0xff]
        %v875 = vld [vmem:[%s274 + $0x10c0] sm:$0xff]
        %v876 = vld [vmem:[%s274 + $0x10c8] sm:$0xff]
        %v877 = vld [vmem:[%s274 + $0x10d0] sm:$0xff]
        %v878 = vld [vmem:[%s274 + $0x10d8] sm:$0xff]
        %v879 = vld [vmem:[%s274 + $0x10e0] sm:$0xff]
        %v880 = vld [vmem:[%s274 + $0x10e8] sm:$0xff]
        %v881 = vld [vmem:[%s274 + $0x10f0] sm:$0xff]
        %v882 = vld [vmem:[%s274 + $0x10f8] sm:$0xff]
        %v883 = vld [vmem:[%s274 + $0x1100] sm:$0xff]
        %v884 = vld [vmem:[%s274 + $0x1108] sm:$0xff]
        %v885 = vld [vmem:[%s274 + $0x1110] sm:$0xff]
        %v886 = vld [vmem:[%s274 + $0x1118] sm:$0xff]
        %v887 = vld [vmem:[%s274 + $0x1120] sm:$0xff]
        %v888 = vld [vmem:[%s274 + $0x1128] sm:$0xff]
        %v889 = vld [vmem:[%s274 + $0x1130] sm:$0xff]
        %v890 = vld [vmem:[%s274 + $0x1138] sm:$0xff]
        %v891 = vld [vmem:[%s274 + $0x1140] sm:$0xff]
        %v892 = vld [vmem:[%s274 + $0x1148] sm:$0xff]
        %v893 = vld [vmem:[%s274 + $0x1150] sm:$0xff]
        %v894 = vld [vmem:[%s274 + $0x1158] sm:$0xff]
        %v895 = vld [vmem:[%s274 + $0x1160] sm:$0xff]
        %v896 = vld [vmem:[%s274 + $0x1168] sm:$0xff]
        %v897 = vld [vmem:[%s274 + $0x1170] sm:$0xff]
        %v898 = vld [vmem:[%s274 + $0x1178] sm:$0xff]
        %v899 = vld [vmem:[%s274 + $0x1180] sm:$0xff]
        %v900 = vld [vmem:[%s274 + $0x1188] sm:$0xff]
        %v901 = vld [vmem:[%s274 + $0x1190] sm:$0xff]
        %v902 = vld [vmem:[%s274 + $0x1198] sm:$0xff]
        %v903 = vld [vmem:[%s274 + $0x11a0] sm:$0xff]
        %v904 = vld [vmem:[%s274 + $0x11a8] sm:$0xff]
        %v905 = vld [vmem:[%s274 + $0x11b0] sm:$0xff]
        %v906 = vld [vmem:[%s274 + $0x11b8] sm:$0xff]
        %v907 = vld [vmem:[%s274 + $0x11c0] sm:$0xff]
        %v908 = vld [vmem:[%s274 + $0x11c8] sm:$0xff]
        %v909 = vld [vmem:[%s274 + $0x11d0] sm:$0xff]
        %v910 = vld [vmem:[%s274 + $0x11d8] sm:$0xff]
        %v911 = vld [vmem:[%s274 + $0x11e0] sm:$0xff]
        %v912 = vld [vmem:[%s274 + $0x11e8] sm:$0xff]
        %v913 = vld [vmem:[%s274 + $0x11f0] sm:$0xff]
        %v914 = vld [vmem:[%s274 + $0x11f8] sm:$0xff]
        %v915 = vld [vmem:[%s274 + $0x1200] sm:$0xff]
        %v916 = vld [vmem:[%s274 + $0x1208] sm:$0xff]
        %v917 = vld [vmem:[%s274 + $0x1210] sm:$0xff]
        %v918 = vld [vmem:[%s274 + $0x1218] sm:$0xff]
        %v919 = vld [vmem:[%s274 + $0x1220] sm:$0xff]
        %v920 = vld [vmem:[%s274 + $0x1228] sm:$0xff]
        %v921 = vld [vmem:[%s274 + $0x1230] sm:$0xff]
        %v922 = vld [vmem:[%s274 + $0x1238] sm:$0xff]
        %v923 = vld [vmem:[%s274 + $0x1240] sm:$0xff]
        %v924 = vld [vmem:[%s274 + $0x1248] sm:$0xff]
        %v925 = vld [vmem:[%s274 + $0x1250] sm:$0xff]
        %v926 = vld [vmem:[%s274 + $0x1258] sm:$0xff]
        %v927 = vld [vmem:[%s274 + $0x1260] sm:$0xff]
        %v928 = vld [vmem:[%s274 + $0x1268] sm:$0xff]
        %v929 = vld [vmem:[%s274 + $0x1270] sm:$0xff]
        %v930 = vld [vmem:[%s274 + $0x1278] sm:$0xff]
        %v931 = vld [vmem:[%s274 + $0x1280] sm:$0xff]
        %v932 = vld [vmem:[%s274 + $0x1288] sm:$0xff]
        %v933 = vld [vmem:[%s274 + $0x1290] sm:$0xff]
        %v934 = vld [vmem:[%s274 + $0x1298] sm:$0xff]
        %v935 = vld [vmem:[%s274 + $0x12a0] sm:$0xff]
        %v936 = vld [vmem:[%s274 + $0x12a8] sm:$0xff]
        %v937 = vld [vmem:[%s274 + $0x12b0] sm:$0xff]
        %v938 = vld [vmem:[%s274 + $0x12b8] sm:$0xff]
        %v939 = vld [vmem:[%s274 + $0x12c0] sm:$0xff]
        %v940 = vld [vmem:[%s274 + $0x12c8] sm:$0xff]
        %v941 = vld [vmem:[%s274 + $0x12d0] sm:$0xff]
        %v942 = vld [vmem:[%s274 + $0x12d8] sm:$0xff]
        %v943 = vld [vmem:[%s274 + $0x12e0] sm:$0xff]
        %v944 = vld [vmem:[%s274 + $0x12e8] sm:$0xff]
        %v945 = vld [vmem:[%s274 + $0x12f0] sm:$0xff]
        %v946 = vld [vmem:[%s274 + $0x12f8] sm:$0xff]
        %v947 = vld [vmem:[%s274 + $0x1300] sm:$0xff]
        %v948 = vld [vmem:[%s274 + $0x1308] sm:$0xff]
        %v949 = vld [vmem:[%s274 + $0x1310] sm:$0xff]
        %v950 = vld [vmem:[%s274 + $0x1318] sm:$0xff]
        %v951 = vld [vmem:[%s274 + $0x1320] sm:$0xff]
        %v952 = vld [vmem:[%s274 + $0x1328] sm:$0xff]
        %v953 = vld [vmem:[%s274 + $0x1330] sm:$0xff]
        %v954 = vld [vmem:[%s274 + $0x1338] sm:$0xff]
        %v955 = vld [vmem:[%s274 + $0x1340] sm:$0xff]
        %v956 = vld [vmem:[%s274 + $0x1348] sm:$0xff]
        %v957 = vld [vmem:[%s274 + $0x1350] sm:$0xff]
        %v958 = vld [vmem:[%s274 + $0x1358] sm:$0xff]
        %v959 = vld [vmem:[%s274 + $0x1360] sm:$0xff]
        %v960 = vld [vmem:[%s274 + $0x1368] sm:$0xff]
        %v961 = vld [vmem:[%s274 + $0x1370] sm:$0xff]
        %v962 = vld [vmem:[%s274 + $0x1378] sm:$0xff]
        %v963 = vld [vmem:[%s274 + $0x1380] sm:$0xff]
        %v964 = vld [vmem:[%s274 + $0x1388] sm:$0xff]
        %v965 = vld [vmem:[%s274 + $0x1390] sm:$0xff]
        %v966 = vld [vmem:[%s274 + $0x1398] sm:$0xff]
        %v967 = vld [vmem:[%s274 + $0x13a0] sm:$0xff]
        %v968 = vld [vmem:[%s274 + $0x13a8] sm:$0xff]
        %v969 = vld [vmem:[%s274 + $0x13b0] sm:$0xff]
        %v970 = vld [vmem:[%s274 + $0x13b8] sm:$0xff]
        %v971 = vld [vmem:[%s274 + $0x13c0] sm:$0xff]
        %v972 = vld [vmem:[%s274 + $0x13c8] sm:$0xff]
        %v973 = vld [vmem:[%s274 + $0x13d0] sm:$0xff]
        %v974 = vld [vmem:[%s274 + $0x13d8] sm:$0xff]
        %v975 = vld [vmem:[%s274 + $0x13e0] sm:$0xff]
        %v976 = vld [vmem:[%s274 + $0x13e8] sm:$0xff]
        %v977 = vld [vmem:[%s274 + $0x13f0] sm:$0xff]
        %v978 = vld [vmem:[%s274 + $0x13f8] sm:$0xff]
        %v979 = vld [vmem:[%s274 + $0x1400] sm:$0xff]
        %v980 = vld [vmem:[%s274 + $0x1408] sm:$0xff]
        %v981 = vld [vmem:[%s274 + $0x1410] sm:$0xff]
        %v982 = vld [vmem:[%s274 + $0x1418] sm:$0xff]
        %v983 = vld [vmem:[%s274 + $0x1420] sm:$0xff]
        %v984 = vld [vmem:[%s274 + $0x1428] sm:$0xff]
        %v985 = vld [vmem:[%s274 + $0x1430] sm:$0xff]
        %v986 = vld [vmem:[%s274 + $0x1438] sm:$0xff]
        %v987 = vld [vmem:[%s274 + $0x1440] sm:$0xff]
        %v988 = vld [vmem:[%s274 + $0x1448] sm:$0xff]
        %v989 = vld [vmem:[%s274 + $0x1450] sm:$0xff]
        %v990 = vld [vmem:[%s274 + $0x1458] sm:$0xff]
        %v991 = vld [vmem:[%s274 + $0x1460] sm:$0xff]
        %v992 = vld [vmem:[%s274 + $0x1468] sm:$0xff]
        %v993 = vld [vmem:[%s274 + $0x1470] sm:$0xff]
        %v994 = vld [vmem:[%s274 + $0x1478] sm:$0xff]
        %v995 = vld [vmem:[%s274 + $0x1480] sm:$0xff]
        %v996 = vld [vmem:[%s274 + $0x1488] sm:$0xff]
        %v997 = vld [vmem:[%s274 + $0x1490] sm:$0xff]
        %v998 = vld [vmem:[%s274 + $0x1498] sm:$0xff]
        %v999 = vld [vmem:[%s274 + $0x14a0] sm:$0xff]
        %v1000 = vld [vmem:[%s274 + $0x14a8] sm:$0xff]
        %v1001 = vld [vmem:[%s274 + $0x14b0] sm:$0xff]
        %v1002 = vld [vmem:[%s274 + $0x14b8] sm:$0xff]
        %v1003 = vld [vmem:[%s274 + $0x14c0] sm:$0xff]
        %v1004 = vld [vmem:[%s274 + $0x14c8] sm:$0xff]
        %v1005 = vld [vmem:[%s274 + $0x14d0] sm:$0xff]
        %v1006 = vld [vmem:[%s274 + $0x14d8] sm:$0xff]
        %v1007 = vld [vmem:[%s274 + $0x14e0] sm:$0xff]
        %v1008 = vld [vmem:[%s274 + $0x14e8] sm:$0xff]
        %v1009 = vld [vmem:[%s274 + $0x14f0] sm:$0xff]
        %v1010 = vld [vmem:[%s274 + $0x14f8] sm:$0xff]
        %v1011 = vld [vmem:[%s274 + $0x1500] sm:$0xff]
        %v1012 = vld [vmem:[%s274 + $0x1508] sm:$0xff]
        %v1013 = vld [vmem:[%s274 + $0x1510] sm:$0xff]
        %v1014 = vld [vmem:[%s274 + $0x1518] sm:$0xff]
        %v1015 = vld [vmem:[%s274 + $0x1520] sm:$0xff]
        %v1016 = vld [vmem:[%s274 + $0x1528] sm:$0xff]
        %v1017 = vld [vmem:[%s274 + $0x1530] sm:$0xff]
        %v1018 = vld [vmem:[%s274 + $0x1538] sm:$0xff]
        %v1019 = vld [vmem:[%s274 + $0x1540] sm:$0xff]
        %v1020 = vld [vmem:[%s274 + $0x1548] sm:$0xff]
        %v1021 = vld [vmem:[%s274 + $0x1550] sm:$0xff]
        %v1022 = vld [vmem:[%s274 + $0x1558] sm:$0xff]
        %v1023 = vld [vmem:[%s274 + $0x1560] sm:$0xff]
        %v1024 = vld [vmem:[%s274 + $0x1568] sm:$0xff]
        %v1025 = vld [vmem:[%s274 + $0x1570] sm:$0xff]
        %v1026 = vld [vmem:[%s274 + $0x1578] sm:$0xff]
        %v1027 = vld [vmem:[%s274 + $0x1580] sm:$0xff]
        %v1028 = vld [vmem:[%s274 + $0x1588] sm:$0xff]
        %v1029 = vld [vmem:[%s274 + $0x1590] sm:$0xff]
        %v1030 = vld [vmem:[%s274 + $0x1598] sm:$0xff]
        %v1031 = vld [vmem:[%s274 + $0x15a0] sm:$0xff]
        %v1032 = vld [vmem:[%s274 + $0x15a8] sm:$0xff]
        %v1033 = vld [vmem:[%s274 + $0x15b0] sm:$0xff]
        %v1034 = vld [vmem:[%s274 + $0x15b8] sm:$0xff]
        %v1035 = vld [vmem:[%s274 + $0x15c0] sm:$0xff]
        %v1036 = vld [vmem:[%s274 + $0x15c8] sm:$0xff]
        %v1037 = vld [vmem:[%s274 + $0x15d0] sm:$0xff]
        %v1038 = vld [vmem:[%s274 + $0x15d8] sm:$0xff]
        %v1039 = vld [vmem:[%s274 + $0x15e0] sm:$0xff]
        %v1040 = vld [vmem:[%s274 + $0x15e8] sm:$0xff]
        %v1041 = vld [vmem:[%s274 + $0x15f0] sm:$0xff]
        %v1042 = vld [vmem:[%s274 + $0x15f8] sm:$0xff]
        %v1043 = vld [vmem:[%s274 + $0x1600] sm:$0xff]
        %v1044 = vld [vmem:[%s274 + $0x1608] sm:$0xff]
        %v1045 = vld [vmem:[%s274 + $0x1610] sm:$0xff]
        %v1046 = vld [vmem:[%s274 + $0x1618] sm:$0xff]
        %v1047 = vld [vmem:[%s274 + $0x1620] sm:$0xff]
        %v1048 = vld [vmem:[%s274 + $0x1628] sm:$0xff]
        %v1049 = vld [vmem:[%s274 + $0x1630] sm:$0xff]
        %v1050 = vld [vmem:[%s274 + $0x1638] sm:$0xff]
        %v1051 = vld [vmem:[%s274 + $0x1640] sm:$0xff]
        %v1052 = vld [vmem:[%s274 + $0x1648] sm:$0xff]
        %v1053 = vld [vmem:[%s274 + $0x1650] sm:$0xff]
        %v1054 = vld [vmem:[%s274 + $0x1658] sm:$0xff]
        %v1055 = vld [vmem:[%s274 + $0x1660] sm:$0xff]
        %v1056 = vld [vmem:[%s274 + $0x1668] sm:$0xff]
        %v1057 = vld [vmem:[%s274 + $0x1670] sm:$0xff]
        %v1058 = vld [vmem:[%s274 + $0x1678] sm:$0xff]
        %v1059 = vld [vmem:[%s274 + $0x1680] sm:$0xff]
        %v1060 = vld [vmem:[%s274 + $0x1688] sm:$0xff]
        %v1061 = vld [vmem:[%s274 + $0x1690] sm:$0xff]
        %v1062 = vld [vmem:[%s274 + $0x1698] sm:$0xff]
        %v1063 = vld [vmem:[%s274 + $0x16a0] sm:$0xff]
        %v1064 = vld [vmem:[%s274 + $0x16a8] sm:$0xff]
        %v1065 = vld [vmem:[%s274 + $0x16b0] sm:$0xff]
        %v1066 = vld [vmem:[%s274 + $0x16b8] sm:$0xff]
        %v1067 = vld [vmem:[%s274 + $0x16c0] sm:$0xff]
        %v1068 = vld [vmem:[%s274 + $0x16c8] sm:$0xff]
        %v1069 = vld [vmem:[%s274 + $0x16d0] sm:$0xff]
        %v1070 = vld [vmem:[%s274 + $0x16d8] sm:$0xff]
        %v1071 = vld [vmem:[%s274 + $0x16e0] sm:$0xff]
        %v1072 = vld [vmem:[%s274 + $0x16e8] sm:$0xff]
        %v1073 = vld [vmem:[%s274 + $0x16f0] sm:$0xff]
        %v1074 = vld [vmem:[%s274 + $0x16f8] sm:$0xff]
        %v1075 = vld [vmem:[%s274 + $0x1700] sm:$0xff]
        %v1076 = vld [vmem:[%s274 + $0x1708] sm:$0xff]
        %v1077 = vld [vmem:[%s274 + $0x1710] sm:$0xff]
        %v1078 = vld [vmem:[%s274 + $0x1718] sm:$0xff]
        %v1079 = vld [vmem:[%s274 + $0x1720] sm:$0xff]
        %v1080 = vld [vmem:[%s274 + $0x1728] sm:$0xff]
        %v1081 = vld [vmem:[%s274 + $0x1730] sm:$0xff]
        %v1082 = vld [vmem:[%s274 + $0x1738] sm:$0xff]
        %v1083 = vld [vmem:[%s274 + $0x1740] sm:$0xff]
        %v1084 = vld [vmem:[%s274 + $0x1748] sm:$0xff]
        %v1085 = vld [vmem:[%s274 + $0x1750] sm:$0xff]
        %v1086 = vld [vmem:[%s274 + $0x1758] sm:$0xff]
        %v1087 = vld [vmem:[%s274 + $0x1760] sm:$0xff]
        %v1088 = vld [vmem:[%s274 + $0x1768] sm:$0xff]
        %v1089 = vld [vmem:[%s274 + $0x1770] sm:$0xff]
        %v1090 = vld [vmem:[%s274 + $0x1778] sm:$0xff]
        %v1091 = vld [vmem:[%s274 + $0x1780] sm:$0xff]
        %v1092 = vld [vmem:[%s274 + $0x1788] sm:$0xff]
        %v1093 = vld [vmem:[%s274 + $0x1790] sm:$0xff]
        %v1094 = vld [vmem:[%s274 + $0x1798] sm:$0xff]
        %v1095 = vld [vmem:[%s274 + $0x17a0] sm:$0xff]
        %v1096 = vld [vmem:[%s274 + $0x17a8] sm:$0xff]
        %v1097 = vld [vmem:[%s274 + $0x17b0] sm:$0xff]
        %v1098 = vld [vmem:[%s274 + $0x17b8] sm:$0xff]
        %v1099 = vld [vmem:[%s274 + $0x17c0] sm:$0xff]
        %v1100 = vld [vmem:[%s274 + $0x17c8] sm:$0xff]
        %v1101 = vld [vmem:[%s274 + $0x17d0] sm:$0xff]
        %v1102 = vld [vmem:[%s274 + $0x17d8] sm:$0xff]
        %v1103 = vld [vmem:[%s274 + $0x17e0] sm:$0xff]
        %v1104 = vld [vmem:[%s274 + $0x17e8] sm:$0xff]
        %v1105 = vld [vmem:[%s274 + $0x17f0] sm:$0xff]
        %v1106 = vld [vmem:[%s274 + $0x17f8] sm:$0xff]
        %v1107 = vld [vmem:[%s274 + $0x1800] sm:$0xff]
        %v1108 = vld [vmem:[%s274 + $0x1808] sm:$0xff]
        %v1109 = vld [vmem:[%s274 + $0x1810] sm:$0xff]
        %v1110 = vld [vmem:[%s274 + $0x1818] sm:$0xff]
        %v1111 = vld [vmem:[%s274 + $0x1820] sm:$0xff]
        %v1112 = vld [vmem:[%s274 + $0x1828] sm:$0xff]
        %v1113 = vld [vmem:[%s274 + $0x1830] sm:$0xff]
        %v1114 = vld [vmem:[%s274 + $0x1838] sm:$0xff]
        %v1115 = vld [vmem:[%s274 + $0x1840] sm:$0xff]
        %v1116 = vld [vmem:[%s274 + $0x1848] sm:$0xff]
        %v1117 = vld [vmem:[%s274 + $0x1850] sm:$0xff]
        %v1118 = vld [vmem:[%s274 + $0x1858] sm:$0xff]
        %v1119 = vld [vmem:[%s274 + $0x1860] sm:$0xff]
        %v1120 = vld [vmem:[%s274 + $0x1868] sm:$0xff]
        %v1121 = vld [vmem:[%s274 + $0x1870] sm:$0xff]
        %v1122 = vld [vmem:[%s274 + $0x1878] sm:$0xff]
        %v1123 = vld [vmem:[%s274 + $0x1880] sm:$0xff]
        %v1124 = vld [vmem:[%s274 + $0x1888] sm:$0xff]
        %v1125 = vld [vmem:[%s274 + $0x1890] sm:$0xff]
        %v1126 = vld [vmem:[%s274 + $0x1898] sm:$0xff]
        %v1127 = vld [vmem:[%s274 + $0x18a0] sm:$0xff]
        %v1128 = vld [vmem:[%s274 + $0x18a8] sm:$0xff]
        %v1129 = vld [vmem:[%s274 + $0x18b0] sm:$0xff]
        %v1130 = vld [vmem:[%s274 + $0x18b8] sm:$0xff]
        %v1131 = vld [vmem:[%s274 + $0x18c0] sm:$0xff]
        %v1132 = vld [vmem:[%s274 + $0x18c8] sm:$0xff]
        %v1133 = vld [vmem:[%s274 + $0x18d0] sm:$0xff]
        %v1134 = vld [vmem:[%s274 + $0x18d8] sm:$0xff]
        %v1135 = vld [vmem:[%s274 + $0x18e0] sm:$0xff]
        %v1136 = vld [vmem:[%s274 + $0x18e8] sm:$0xff]
        %v1137 = vld [vmem:[%s274 + $0x18f0] sm:$0xff]
        %v1138 = vld [vmem:[%s274 + $0x18f8] sm:$0xff]
        %v1139 = vld [vmem:[%s274 + $0x1900] sm:$0xff]
        %v1140 = vld [vmem:[%s274 + $0x1908] sm:$0xff]
        %v1141 = vld [vmem:[%s274 + $0x1910] sm:$0xff]
        %v1142 = vld [vmem:[%s274 + $0x1918] sm:$0xff]
        %v1143 = vld [vmem:[%s274 + $0x1920] sm:$0xff]
        %v1144 = vld [vmem:[%s274 + $0x1928] sm:$0xff]
        %v1145 = vld [vmem:[%s274 + $0x1930] sm:$0xff]
        %v1146 = vld [vmem:[%s274 + $0x1938] sm:$0xff]
        %v1147 = vld [vmem:[%s274 + $0x1940] sm:$0xff]
        %v1148 = vld [vmem:[%s274 + $0x1948] sm:$0xff]
        %v1149 = vld [vmem:[%s274 + $0x1950] sm:$0xff]
        %v1150 = vld [vmem:[%s274 + $0x1958] sm:$0xff]
        %v1151 = vld [vmem:[%s274 + $0x1960] sm:$0xff]
        %v1152 = vld [vmem:[%s274 + $0x1968] sm:$0xff]
        %v1153 = vld [vmem:[%s274 + $0x1970] sm:$0xff]
        %v1154 = vld [vmem:[%s274 + $0x1978] sm:$0xff]
        %v1155 = vld [vmem:[%s274 + $0x1980] sm:$0xff]
        %v1156 = vld [vmem:[%s274 + $0x1988] sm:$0xff]
        %v1157 = vld [vmem:[%s274 + $0x1990] sm:$0xff]
        %v1158 = vld [vmem:[%s274 + $0x1998] sm:$0xff]
        %v1159 = vld [vmem:[%s274 + $0x19a0] sm:$0xff]
        %v1160 = vld [vmem:[%s274 + $0x19a8] sm:$0xff]
        %v1161 = vld [vmem:[%s274 + $0x19b0] sm:$0xff]
        %v1162 = vld [vmem:[%s274 + $0x19b8] sm:$0xff]
        %v1163 = vld [vmem:[%s274 + $0x19c0] sm:$0xff]
        %v1164 = vld [vmem:[%s274 + $0x19c8] sm:$0xff]
        %v1165 = vld [vmem:[%s274 + $0x19d0] sm:$0xff]
        %v1166 = vld [vmem:[%s274 + $0x19d8] sm:$0xff]
        %v1167 = vld [vmem:[%s274 + $0x19e0] sm:$0xff]
        %v1168 = vld [vmem:[%s274 + $0x19e8] sm:$0xff]
        %v1169 = vld [vmem:[%s274 + $0x19f0] sm:$0xff]
        %v1170 = vld [vmem:[%s274 + $0x19f8] sm:$0xff]
        %v1171 = vld [vmem:[%s274 + $0x1a00] sm:$0xff]
        %v1172 = vld [vmem:[%s274 + $0x1a08] sm:$0xff]
        %v1173 = vld [vmem:[%s274 + $0x1a10] sm:$0xff]
        %v1174 = vld [vmem:[%s274 + $0x1a18] sm:$0xff]
        %v1175 = vld [vmem:[%s274 + $0x1a20] sm:$0xff]
        %v1176 = vld [vmem:[%s274 + $0x1a28] sm:$0xff]
        %v1177 = vld [vmem:[%s274 + $0x1a30] sm:$0xff]
        %v1178 = vld [vmem:[%s274 + $0x1a38] sm:$0xff]
        %v1179 = vld [vmem:[%s274 + $0x1a40] sm:$0xff]
        %v1180 = vld [vmem:[%s274 + $0x1a48] sm:$0xff]
        %v1181 = vld [vmem:[%s274 + $0x1a50] sm:$0xff]
        %v1182 = vld [vmem:[%s274 + $0x1a58] sm:$0xff]
        %v1183 = vld [vmem:[%s274 + $0x1a60] sm:$0xff]
        %v1184 = vld [vmem:[%s274 + $0x1a68] sm:$0xff]
        %v1185 = vld [vmem:[%s274 + $0x1a70] sm:$0xff]
        %v1186 = vld [vmem:[%s274 + $0x1a78] sm:$0xff]
        %v1187 = vld [vmem:[%s274 + $0x1a80] sm:$0xff]
        %v1188 = vld [vmem:[%s274 + $0x1a88] sm:$0xff]
        %v1189 = vld [vmem:[%s274 + $0x1a90] sm:$0xff]
        %v1190 = vld [vmem:[%s274 + $0x1a98] sm:$0xff]
        %v1191 = vld [vmem:[%s274 + $0x1aa0] sm:$0xff]
        %v1192 = vld [vmem:[%s274 + $0x1aa8] sm:$0xff]
        %v1193 = vld [vmem:[%s274 + $0x1ab0] sm:$0xff]
        %v1194 = vld [vmem:[%s274 + $0x1ab8] sm:$0xff]
        %v1195 = vld [vmem:[%s274 + $0x1ac0] sm:$0xff]
        %v1196 = vld [vmem:[%s274 + $0x1ac8] sm:$0xff]
        %v1197 = vld [vmem:[%s274 + $0x1ad0] sm:$0xff]
        %v1198 = vld [vmem:[%s274 + $0x1ad8] sm:$0xff]
        %v1199 = vld [vmem:[%s274 + $0x1ae0] sm:$0xff]
        %v1200 = vld [vmem:[%s274 + $0x1ae8] sm:$0xff]
        %v1201 = vld [vmem:[%s274 + $0x1af0] sm:$0xff]
        %v1202 = vld [vmem:[%s274 + $0x1af8] sm:$0xff]
        %v1203 = vld [vmem:[%s274 + $0x1b00] sm:$0xff]
        %v1204 = vld [vmem:[%s274 + $0x1b08] sm:$0xff]
        %v1205 = vld [vmem:[%s274 + $0x1b10] sm:$0xff]
        %v1206 = vld [vmem:[%s274 + $0x1b18] sm:$0xff]
        %v1207 = vld [vmem:[%s274 + $0x1b20] sm:$0xff]
        %v1208 = vld [vmem:[%s274 + $0x1b28] sm:$0xff]
        %v1209 = vld [vmem:[%s274 + $0x1b30] sm:$0xff]
        %v1210 = vld [vmem:[%s274 + $0x1b38] sm:$0xff]
        %v1211 = vld [vmem:[%s274 + $0x1b40] sm:$0xff]
        %v1212 = vld [vmem:[%s274 + $0x1b48] sm:$0xff]
        %v1213 = vld [vmem:[%s274 + $0x1b50] sm:$0xff]
        %v1214 = vld [vmem:[%s274 + $0x1b58] sm:$0xff]
        %v1215 = vld [vmem:[%s274 + $0x1b60] sm:$0xff]
        %v1216 = vld [vmem:[%s274 + $0x1b68] sm:$0xff]
        %v1217 = vld [vmem:[%s274 + $0x1b70] sm:$0xff]
        %v1218 = vld [vmem:[%s274 + $0x1b78] sm:$0xff]
        %v1219 = vld [vmem:[%s274 + $0x1b80] sm:$0xff]
        %v1220 = vld [vmem:[%s274 + $0x1b88] sm:$0xff]
        %v1221 = vld [vmem:[%s274 + $0x1b90] sm:$0xff]
        %v1222 = vld [vmem:[%s274 + $0x1b98] sm:$0xff]
        %v1223 = vld [vmem:[%s274 + $0x1ba0] sm:$0xff]
        %v1224 = vld [vmem:[%s274 + $0x1ba8] sm:$0xff]
        %v1225 = vld [vmem:[%s274 + $0x1bb0] sm:$0xff]
        %v1226 = vld [vmem:[%s274 + $0x1bb8] sm:$0xff]
        %v1227 = vld [vmem:[%s274 + $0x1bc0] sm:$0xff]
        %v1228 = vld [vmem:[%s274 + $0x1bc8] sm:$0xff]
        %v1229 = vld [vmem:[%s274 + $0x1bd0] sm:$0xff]
        %v1230 = vld [vmem:[%s274 + $0x1bd8] sm:$0xff]
        %v1231 = vld [vmem:[%s274 + $0x1be0] sm:$0xff]
        %v1232 = vld [vmem:[%s274 + $0x1be8] sm:$0xff]
        %v1233 = vld [vmem:[%s274 + $0x1bf0] sm:$0xff]
        %v1234 = vld [vmem:[%s274 + $0x1bf8] sm:$0xff]
        %v1235 = vld [vmem:[%s274 + $0x1c00] sm:$0xff]
        %v1236 = vld [vmem:[%s274 + $0x1c08] sm:$0xff]
        %v1237 = vld [vmem:[%s274 + $0x1c10] sm:$0xff]
        %v1238 = vld [vmem:[%s274 + $0x1c18] sm:$0xff]
        %v1239 = vld [vmem:[%s274 + $0x1c20] sm:$0xff]
        %v1240 = vld [vmem:[%s274 + $0x1c28] sm:$0xff]
        %v1241 = vld [vmem:[%s274 + $0x1c30] sm:$0xff]
        %v1242 = vld [vmem:[%s274 + $0x1c38] sm:$0xff]
        %v1243 = vld [vmem:[%s274 + $0x1c40] sm:$0xff]
        %v1244 = vld [vmem:[%s274 + $0x1c48] sm:$0xff]
        %v1245 = vld [vmem:[%s274 + $0x1c50] sm:$0xff]
        %v1246 = vld [vmem:[%s274 + $0x1c58] sm:$0xff]
        %v1247 = vld [vmem:[%s274 + $0x1c60] sm:$0xff]
        %v1248 = vld [vmem:[%s274 + $0x1c68] sm:$0xff]
        %v1249 = vld [vmem:[%s274 + $0x1c70] sm:$0xff]
        %v1250 = vld [vmem:[%s274 + $0x1c78] sm:$0xff]
        %v1251 = vld [vmem:[%s274 + $0x1c80] sm:$0xff]
        %v1252 = vld [vmem:[%s274 + $0x1c88] sm:$0xff]
        %v1253 = vld [vmem:[%s274 + $0x1c90] sm:$0xff]
        %v1254 = vld [vmem:[%s274 + $0x1c98] sm:$0xff]
        %v1255 = vld [vmem:[%s274 + $0x1ca0] sm:$0xff]
        %v1256 = vld [vmem:[%s274 + $0x1ca8] sm:$0xff]
        %v1257 = vld [vmem:[%s274 + $0x1cb0] sm:$0xff]
        %v1258 = vld [vmem:[%s274 + $0x1cb8] sm:$0xff]
        %v1259 = vld [vmem:[%s274 + $0x1cc0] sm:$0xff]
        %v1260 = vld [vmem:[%s274 + $0x1cc8] sm:$0xff]
        %v1261 = vld [vmem:[%s274 + $0x1cd0] sm:$0xff]
        %v1262 = vld [vmem:[%s274 + $0x1cd8] sm:$0xff]
        %v1263 = vld [vmem:[%s274 + $0x1ce0] sm:$0xff]
        %v1264 = vld [vmem:[%s274 + $0x1ce8] sm:$0xff]
        %v1265 = vld [vmem:[%s274 + $0x1cf0] sm:$0xff]
        %v1266 = vld [vmem:[%s274 + $0x1cf8] sm:$0xff]
        %v1267 = vld [vmem:[%s274 + $0x1d00] sm:$0xff]
        %v1268 = vld [vmem:[%s274 + $0x1d08] sm:$0xff]
        %v1269 = vld [vmem:[%s274 + $0x1d10] sm:$0xff]
        %v1270 = vld [vmem:[%s274 + $0x1d18] sm:$0xff]
        %v1271 = vld [vmem:[%s274 + $0x1d20] sm:$0xff]
        %v1272 = vld [vmem:[%s274 + $0x1d28] sm:$0xff]
        %v1273 = vld [vmem:[%s274 + $0x1d30] sm:$0xff]
        %v1274 = vld [vmem:[%s274 + $0x1d38] sm:$0xff]
        %v1275 = vld [vmem:[%s274 + $0x1d40] sm:$0xff]
        %v1276 = vld [vmem:[%s274 + $0x1d48] sm:$0xff]
        %v1277 = vld [vmem:[%s274 + $0x1d50] sm:$0xff]
        %v1278 = vld [vmem:[%s274 + $0x1d58] sm:$0xff]
        %v1279 = vld [vmem:[%s274 + $0x1d60] sm:$0xff]
        %v1280 = vld [vmem:[%s274 + $0x1d68] sm:$0xff]
        %v1281 = vld [vmem:[%s274 + $0x1d70] sm:$0xff]
        %v1282 = vld [vmem:[%s274 + $0x1d78] sm:$0xff]
        %v1283 = vld [vmem:[%s274 + $0x1d80] sm:$0xff]
        %v1284 = vld [vmem:[%s274 + $0x1d88] sm:$0xff]
        %v1285 = vld [vmem:[%s274 + $0x1d90] sm:$0xff]
        %v1286 = vld [vmem:[%s274 + $0x1d98] sm:$0xff]
        %v1287 = vld [vmem:[%s274 + $0x1da0] sm:$0xff]
        %v1288 = vld [vmem:[%s274 + $0x1da8] sm:$0xff]
        %v1289 = vld [vmem:[%s274 + $0x1db0] sm:$0xff]
        %v1290 = vld [vmem:[%s274 + $0x1db8] sm:$0xff]
        %v1291 = vld [vmem:[%s274 + $0x1dc0] sm:$0xff]
        %v1292 = vld [vmem:[%s274 + $0x1dc8] sm:$0xff]
        %v1293 = vld [vmem:[%s274 + $0x1dd0] sm:$0xff]
        %v1294 = vld [vmem:[%s274 + $0x1dd8] sm:$0xff]
        %v1295 = vld [vmem:[%s274 + $0x1de0] sm:$0xff]
        %v1296 = vld [vmem:[%s274 + $0x1de8] sm:$0xff]
        %v1297 = vld [vmem:[%s274 + $0x1df0] sm:$0xff]
        %v1298 = vld [vmem:[%s274 + $0x1df8] sm:$0xff]
        %v1299 = vld [vmem:[%s274 + $0x1e00] sm:$0xff]
        %v1300 = vld [vmem:[%s274 + $0x1e08] sm:$0xff]
        %v1301 = vld [vmem:[%s274 + $0x1e10] sm:$0xff]
        %v1302 = vld [vmem:[%s274 + $0x1e18] sm:$0xff]
        %v1303 = vld [vmem:[%s274 + $0x1e20] sm:$0xff]
        %v1304 = vld [vmem:[%s274 + $0x1e28] sm:$0xff]
        %v1305 = vld [vmem:[%s274 + $0x1e30] sm:$0xff]
        %v1306 = vld [vmem:[%s274 + $0x1e38] sm:$0xff]
        %v1307 = vld [vmem:[%s274 + $0x1e40] sm:$0xff]
        %v1308 = vld [vmem:[%s274 + $0x1e48] sm:$0xff]
        %v1309 = vld [vmem:[%s274 + $0x1e50] sm:$0xff]
        %v1310 = vld [vmem:[%s274 + $0x1e58] sm:$0xff]
        %v1311 = vld [vmem:[%s274 + $0x1e60] sm:$0xff]
        %v1312 = vld [vmem:[%s274 + $0x1e68] sm:$0xff]
        %v1313 = vld [vmem:[%s274 + $0x1e70] sm:$0xff]
        %v1314 = vld [vmem:[%s274 + $0x1e78] sm:$0xff]
        %v1315 = vld [vmem:[%s274 + $0x1e80] sm:$0xff]
        %v1316 = vld [vmem:[%s274 + $0x1e88] sm:$0xff]
        %v1317 = vld [vmem:[%s274 + $0x1e90] sm:$0xff]
        %v1318 = vld [vmem:[%s274 + $0x1e98] sm:$0xff]
        %v1319 = vld [vmem:[%s274 + $0x1ea0] sm:$0xff]
        %v1320 = vld [vmem:[%s274 + $0x1ea8] sm:$0xff]
        %v1321 = vld [vmem:[%s274 + $0x1eb0] sm:$0xff]
        %v1322 = vld [vmem:[%s274 + $0x1eb8] sm:$0xff]
        %v1323 = vld [vmem:[%s274 + $0x1ec0] sm:$0xff]
        %v1324 = vld [vmem:[%s274 + $0x1ec8] sm:$0xff]
        %v1325 = vld [vmem:[%s274 + $0x1ed0] sm:$0xff]
        %v1326 = vld [vmem:[%s274 + $0x1ed8] sm:$0xff]
        %v1327 = vld [vmem:[%s274 + $0x1ee0] sm:$0xff]
        %v1328 = vld [vmem:[%s274 + $0x1ee8] sm:$0xff]
        %v1329 = vld [vmem:[%s274 + $0x1ef0] sm:$0xff]
        %v1330 = vld [vmem:[%s274 + $0x1ef8] sm:$0xff]
        %v1331 = vld [vmem:[%s274 + $0x1f00] sm:$0xff]
        %v1332 = vld [vmem:[%s274 + $0x1f08] sm:$0xff]
        %v1333 = vld [vmem:[%s274 + $0x1f10] sm:$0xff]
        %v1334 = vld [vmem:[%s274 + $0x1f18] sm:$0xff]
        %v1335 = vld [vmem:[%s274 + $0x1f20] sm:$0xff]
        %v1336 = vld [vmem:[%s274 + $0x1f28] sm:$0xff]
        %v1337 = vld [vmem:[%s274 + $0x1f30] sm:$0xff]
        %v1338 = vld [vmem:[%s274 + $0x1f38] sm:$0xff]
        %v1339 = vld [vmem:[%s274 + $0x1f40] sm:$0xff]
        %v1340 = vld [vmem:[%s274 + $0x1f48] sm:$0xff]
        %v1341 = vld [vmem:[%s274 + $0x1f50] sm:$0xff]
        %v1342 = vld [vmem:[%s274 + $0x1f58] sm:$0xff]
        %v1343 = vld [vmem:[%s274 + $0x1f60] sm:$0xff]
        %v1344 = vld [vmem:[%s274 + $0x1f68] sm:$0xff]
        %v1345 = vld [vmem:[%s274 + $0x1f70] sm:$0xff]
        %v1346 = vld [vmem:[%s274 + $0x1f78] sm:$0xff]
        %v1347 = vld [vmem:[%s274 + $0x1f80] sm:$0xff]
        %v1348 = vld [vmem:[%s274 + $0x1f88] sm:$0xff]
        %v1349 = vld [vmem:[%s274 + $0x1f90] sm:$0xff]
        %v1350 = vld [vmem:[%s274 + $0x1f98] sm:$0xff]
        %v1351 = vld [vmem:[%s274 + $0x1fa0] sm:$0xff]
        %v1352 = vld [vmem:[%s274 + $0x1fa8] sm:$0xff]
        %v1353 = vld [vmem:[%s274 + $0x1fb0] sm:$0xff]
        %v1354 = vld [vmem:[%s274 + $0x1fb8] sm:$0xff]
        %v1355 = vld [vmem:[%s274 + $0x1fc0] sm:$0xff]
        %v1356 = vld [vmem:[%s274 + $0x1fc8] sm:$0xff]
        %v1357 = vld [vmem:[%s274 + $0x1fd0] sm:$0xff]
        %v1358 = vld [vmem:[%s274 + $0x1fd8] sm:$0xff]
        %v1359 = vld [vmem:[%s274 + $0x1fe0] sm:$0xff]
        %v1360 = vld [vmem:[%s274 + $0x1fe8] sm:$0xff]
        %v1361 = vld [vmem:[%s274 + $0x1ff0] sm:$0xff]
        %v1362 = vld [vmem:[%s274 + $0x1ff8] sm:$0xff]
        %v1363 = vld [vmem:[%s1] sm:$0xff]
        %v1364 = vld [vmem:[%s1 + $0x8] sm:$0xff]
        %v1365 = vld [vmem:[%s282] sm:$0xff]
        %1367 = vset.pattern.permute.xlu0 0
        %1368 = vperm.xlu0 %1367, %v1363
        %v1369 = vpop.permute.xlu0 %1368
        %1372 = vset.pattern.permute.xlu0 0
        %1373 = vperm.xlu0 %1372, %v1364
        %v1374 = vpop.permute.xlu0 %1373
        %v1377 = vlaneseq
        %v1378 = vshrl.u32 %v1377, 7
        %v1379 = vsub.s32 0, %v1378
        %v1380 = vrot.slane %v1365, %v1379
        %v1381 = vlaneseq
        %v1382 = vshrl.u32 %v1381, 7
        %v1383 = vsub.s32 1, %v1382
        %v1384 = vrot.slane %v1365, %v1383
        %v1385 = vlaneseq
        %v1386 = vshrl.u32 %v1385, 7
        %v1387 = vsub.s32 2, %v1386
        %v1388 = vrot.slane %v1365, %v1387
        %v1389 = vlaneseq
        %v1390 = vshrl.u32 %v1389, 7
        %v1391 = vsub.s32 3, %v1390
        %v1392 = vrot.slane %v1365, %v1391
        %v1393 = vlaneseq
        %v1394 = vshrl.u32 %v1393, 7
        %v1395 = vsub.s32 4, %v1394
        %v1396 = vrot.slane %v1365, %v1395
        %v1397 = vlaneseq
        %v1398 = vshrl.u32 %v1397, 7
        %v1399 = vsub.s32 5, %v1398
        %v1400 = vrot.slane %v1365, %v1399
        %v1401 = vlaneseq
        %v1402 = vshrl.u32 %v1401, 7
        %v1403 = vsub.s32 6, %v1402
        %v1404 = vrot.slane %v1365, %v1403
        %v1405 = vlaneseq
        %v1406 = vshrl.u32 %v1405, 7
        %v1407 = vsub.s32 7, %v1406
        %v1408 = vrot.slane %v1365, %v1407
        %v1417 = vmul.f32 %v1369, %v1380
        %v1418 = vmul.f32 %v1369, %v1384
        %v1419 = vmul.f32 %v1369, %v1388
        %v1420 = vmul.f32 %v1369, %v1392
        %v1421 = vmul.f32 %v1369, %v1396
        %v1422 = vmul.f32 %v1369, %v1400
        %v1423 = vmul.f32 %v1369, %v1404
        %v1424 = vmul.f32 %v1369, %v1408
        %v1425 = vmul.f32 %v1374, %v1380
        %v1426 = vmul.f32 %v1374, %v1384
        %v1427 = vmul.f32 %v1374, %v1388
        %v1428 = vmul.f32 %v1374, %v1392
        %v1429 = vmul.f32 %v1374, %v1396
        %v1430 = vmul.f32 %v1374, %v1400
        %v1431 = vmul.f32 %v1374, %v1404
        %v1432 = vmul.f32 %v1374, %v1408
        %1433 = vmatprep.subr.mxu0 %v340
        %1434 = vmatpush1.msra.mxu0 %v339
        %1435 = vmatprep.subr.mxu0 %v348
        %1436 = vmatpush1.msra.mxu0 %v347
        %1437 = vmatprep.subr.mxu0 %v356
        %1438 = vmatpush1.msra.mxu0 %v355
        %1439 = vmatprep.subr.mxu0 %v364
        %1440 = vmatpush1.msra.mxu0 %v363
        %1441 = vmatprep.subr.mxu0 %v372
        %1442 = vmatpush1.msra.mxu0 %v371
        %1443 = vmatprep.subr.mxu0 %v380
        %1444 = vmatpush1.msra.mxu0 %v379
        %1445 = vmatprep.subr.mxu0 %v388
        %1446 = vmatpush1.msra.mxu0 %v387
        %1447 = vmatprep.subr.mxu0 %v396
        %1448 = vmatpush1.msra.mxu0 %v395
        %1449 = vmatprep.subr.mxu0 %v404
        %1450 = vmatpush1.msra.mxu0 %v403
        %1451 = vmatprep.subr.mxu0 %v412
        %1452 = vmatpush1.msra.mxu0 %v411
        %1453 = vmatprep.subr.mxu0 %v420
        %1454 = vmatpush1.msra.mxu0 %v419
        %1455 = vmatprep.subr.mxu0 %v428
        %1456 = vmatpush1.msra.mxu0 %v427
        %1457 = vmatprep.subr.mxu0 %v436
        %1458 = vmatpush1.msra.mxu0 %v435
        %1459 = vmatprep.subr.mxu0 %v444
        %1460 = vmatpush1.msra.mxu0 %v443
        %1461 = vmatprep.subr.mxu0 %v452
        %1462 = vmatpush1.msra.mxu0 %v451
        %1463 = vmatprep.subr.mxu0 %v460
        %1464 = vmatpush1.msra.mxu0 %v459
        %1465 = vmatprep.subr.mxu0 %v468
        %1466 = vmatpush1.msra.mxu0 %v467
        %1467 = vmatprep.subr.mxu0 %v476
        %1468 = vmatpush1.msra.mxu0 %v475
        %1469 = vmatprep.subr.mxu0 %v484
        %1470 = vmatpush1.msra.mxu0 %v483
        %1471 = vmatprep.subr.mxu0 %v492
        %1472 = vmatpush1.msra.mxu0 %v491
        %1473 = vmatprep.subr.mxu0 %v500
        %1474 = vmatpush1.msra.mxu0 %v499
        %1475 = vmatprep.subr.mxu0 %v508
        %1476 = vmatpush1.msra.mxu0 %v507
        %1477 = vmatprep.subr.mxu0 %v516
        %1478 = vmatpush1.msra.mxu0 %v515
        %1479 = vmatprep.subr.mxu0 %v524
        %1480 = vmatpush1.msra.mxu0 %v523
        %1481 = vmatprep.subr.mxu0 %v532
        %1482 = vmatpush1.msra.mxu0 %v531
        %1483 = vmatprep.subr.mxu0 %v540
        %1484 = vmatpush1.msra.mxu0 %v539
        %1485 = vmatprep.subr.mxu0 %v548
        %1486 = vmatpush1.msra.mxu0 %v547
        %1487 = vmatprep.subr.mxu0 %v556
        %1488 = vmatpush1.msra.mxu0 %v555
        %1489 = vmatprep.subr.mxu0 %v564
        %1490 = vmatpush1.msra.mxu0 %v563
        %1491 = vmatprep.subr.mxu0 %v572
        %1492 = vmatpush1.msra.mxu0 %v571
        %1493 = vmatprep.subr.mxu0 %v580
        %1494 = vmatpush1.msra.mxu0 %v579
        %1495 = vmatprep.subr.mxu0 %v588
        %1496 = vmatpush1.msra.mxu0 %v587
        %1497 = vmatprep.mubr.f32.mxu0 %v324
        %1498 = vmatmul.mubr.f32.gmra.mrb[0].mxu0 %v323
        %v1499 = vpop.f32.mrb[0].mxu0
        %v1500 = vadd.f32 %v1417, %v1499
        %v1501 = vpop.f32.mrb[0].mxu0
        %v1502 = vadd.f32 %v1418, %v1501
        %1503 = vmatprep.mubr.f32.mxu0 %v332
        %1504 = vmatmul.mubr.f32.gmra.mrb[0].mxu0 %v331
        %v1505 = vpop.f32.mrb[0].mxu0
        %v1506 = vadd.f32 %v1425, %v1505
        %v1507 = vpop.f32.mrb[0].mxu0
        %v1508 = vadd.f32 %v1426, %v1507
        %1509 = vdwg.mxu0
        %1510 = vmatprep.subr.mxu0 %v596
        %1511 = vmatpush1.msra.mxu0 %v595
        %1512 = vmatprep.subr.mxu0 %v604
        %1513 = vmatpush1.msra.mxu0 %v603
        %1514 = vmatprep.subr.mxu0 %v612
        %1515 = vmatpush1.msra.mxu0 %v611
        %1516 = vmatprep.subr.mxu0 %v620
        %1517 = vmatpush1.msra.mxu0 %v619
        %1518 = vmatprep.subr.mxu0 %v628
        %1519 = vmatpush1.msra.mxu0 %v627
        %1520 = vmatprep.subr.mxu0 %v636
        %1521 = vmatpush1.msra.mxu0 %v635
        %1522 = vmatprep.subr.mxu0 %v644
        %1523 = vmatpush1.msra.mxu0 %v643
        %1524 = vmatprep.subr.mxu0 %v652
        %1525 = vmatpush1.msra.mxu0 %v651
        %1526 = vmatprep.subr.mxu0 %v660
        %1527 = vmatpush1.msra.mxu0 %v659
        %1528 = vmatprep.subr.mxu0 %v668
        %1529 = vmatpush1.msra.mxu0 %v667
        %1530 = vmatprep.subr.mxu0 %v676
        %1531 = vmatpush1.msra.mxu0 %v675
        %1532 = vmatprep.subr.mxu0 %v684
        %1533 = vmatpush1.msra.mxu0 %v683
        %1534 = vmatprep.subr.mxu0 %v692
        %1535 = vmatpush1.msra.mxu0 %v691
        %1536 = vmatprep.subr.mxu0 %v700
        %1537 = vmatpush1.msra.mxu0 %v699
        %1538 = vmatprep.subr.mxu0 %v708
        %1539 = vmatpush1.msra.mxu0 %v707
        %1540 = vmatprep.subr.mxu0 %v716
        %1541 = vmatpush1.msra.mxu0 %v715
        %1542 = vmatprep.subr.mxu0 %v724
        %1543 = vmatpush1.msra.mxu0 %v723
        %1544 = vmatprep.subr.mxu0 %v732
        %1545 = vmatpush1.msra.mxu0 %v731
        %1546 = vmatprep.subr.mxu0 %v740
        %1547 = vmatpush1.msra.mxu0 %v739
        %1548 = vmatprep.subr.mxu0 %v748
        %1549 = vmatpush1.msra.mxu0 %v747
        %1550 = vmatprep.subr.mxu0 %v756
        %1551 = vmatpush1.msra.mxu0 %v755
        %1552 = vmatprep.subr.mxu0 %v764
        %1553 = vmatpush1.msra.mxu0 %v763
        %1554 = vmatprep.subr.mxu0 %v772
        %1555 = vmatpush1.msra.mxu0 %v771
        %1556 = vmatprep.subr.mxu0 %v780
        %1557 = vmatpush1.msra.mxu0 %v779
        %1558 = vmatprep.subr.mxu0 %v788
        %1559 = vmatpush1.msra.mxu0 %v787
        %1560 = vmatprep.subr.mxu0 %v796
        %1561 = vmatpush1.msra.mxu0 %v795
        %1562 = vmatprep.subr.mxu0 %v804
        %1563 = vmatpush1.msra.mxu0 %v803
        %1564 = vmatprep.subr.mxu0 %v812
        %1565 = vmatpush1.msra.mxu0 %v811
        %1566 = vmatprep.subr.mxu0 %v820
        %1567 = vmatpush1.msra.mxu0 %v819
        %1568 = vmatprep.subr.mxu0 %v828
        %1569 = vmatpush1.msra.mxu0 %v827
        %1570 = vmatprep.subr.mxu0 %v836
        %1571 = vmatpush1.msra.mxu0 %v835
        %1572 = vmatprep.subr.mxu0 %v844
        %1573 = vmatpush1.msra.mxu0 %v843
        %1574 = vmatprep.mubr.f32.mxu0 %v326
        %1575 = vmatmul.mubr.f32.gmra.mrb[0].mxu0 %v325
        %v1576 = vpop.f32.mrb[0].mxu0
        %v1577 = vadd.f32 %v1500, %v1576
        %v1578 = vpop.f32.mrb[0].mxu0
        %v1579 = vadd.f32 %v1502, %v1578
        %1580 = vmatprep.mubr.f32.mxu0 %v334
        %1581 = vmatmul.mubr.f32.gmra.mrb[0].mxu0 %v333
        %v1582 = vpop.f32.mrb[0].mxu0
        %v1583 = vadd.f32 %v1506, %v1582
        %v1584 = vpop.f32.mrb[0].mxu0
        %v1585 = vadd.f32 %v1508, %v1584
        %1586 = vdwg.mxu0
        %1587 = vmatprep.subr.mxu0 %v852
        %1588 = vmatpush1.msra.mxu0 %v851
        %1589 = vmatprep.subr.mxu0 %v860
        %1590 = vmatpush1.msra.mxu0 %v859
        %1591 = vmatprep.subr.mxu0 %v868
        %1592 = vmatpush1.msra.mxu0 %v867
        %1593 = vmatprep.subr.mxu0 %v876
        %1594 = vmatpush1.msra.mxu0 %v875
        %1595 = vmatprep.subr.mxu0 %v884
        %1596 = vmatpush1.msra.mxu0 %v883
        %1597 = vmatprep.subr.mxu0 %v892
        %1598 = vmatpush1.msra.mxu0 %v891
        %1599 = vmatprep.subr.mxu0 %v900
        %1600 = vmatpush1.msra.mxu0 %v899
        %1601 = vmatprep.subr.mxu0 %v908
        %1602 = vmatpush1.msra.mxu0 %v907
        %1603 = vmatprep.subr.mxu0 %v916
        %1604 = vmatpush1.msra.mxu0 %v915
        %1605 = vmatprep.subr.mxu0 %v924
        %1606 = vmatpush1.msra.mxu0 %v923
        %1607 = vmatprep.subr.mxu0 %v932
        %1608 = vmatpush1.msra.mxu0 %v931
        %1609 = vmatprep.subr.mxu0 %v940
        %1610 = vmatpush1.msra.mxu0 %v939
        %1611 = vmatprep.subr.mxu0 %v948
        %1612 = vmatpush1.msra.mxu0 %v947
        %1613 = vmatprep.subr.mxu0 %v956
        %1614 = vmatpush1.msra.mxu0 %v955
        %1615 = vmatprep.subr.mxu0 %v964
        %1616 = vmatpush1.msra.mxu0 %v963
        %1617 = vmatprep.subr.mxu0 %v972
        %1618 = vmatpush1.msra.mxu0 %v971
        %1619 = vmatprep.subr.mxu0 %v980
        %1620 = vmatpush1.msra.mxu0 %v979
        %1621 = vmatprep.subr.mxu0 %v988
        %1622 = vmatpush1.msra.mxu0 %v987
        %1623 = vmatprep.subr.mxu0 %v996
        %1624 = vmatpush1.msra.mxu0 %v995
        %1625 = vmatprep.subr.mxu0 %v1004
        %1626 = vmatpush1.msra.mxu0 %v1003
        %1627 = vmatprep.subr.mxu0 %v1012
        %1628 = vmatpush1.msra.mxu0 %v1011
        %1629 = vmatprep.subr.mxu0 %v1020
        %1630 = vmatpush1.msra.mxu0 %v1019
        %1631 = vmatprep.subr.mxu0 %v1028
        %1632 = vmatpush1.msra.mxu0 %v1027
        %1633 = vmatprep.subr.mxu0 %v1036
        %1634 = vmatpush1.msra.mxu0 %v1035
        %1635 = vmatprep.subr.mxu0 %v1044
        %1636 = vmatpush1.msra.mxu0 %v1043
        %1637 = vmatprep.subr.mxu0 %v1052
        %1638 = vmatpush1.msra.mxu0 %v1051
        %1639 = vmatprep.subr.mxu0 %v1060
        %1640 = vmatpush1.msra.mxu0 %v1059
        %1641 = vmatprep.subr.mxu0 %v1068
        %1642 = vmatpush1.msra.mxu0 %v1067
        %1643 = vmatprep.subr.mxu0 %v1076
        %1644 = vmatpush1.msra.mxu0 %v1075
        %1645 = vmatprep.subr.mxu0 %v1084
        %1646 = vmatpush1.msra.mxu0 %v1083
        %1647 = vmatprep.subr.mxu0 %v1092
        %1648 = vmatpush1.msra.mxu0 %v1091
        %1649 = vmatprep.subr.mxu0 %v1100
        %1650 = vmatpush1.msra.mxu0 %v1099
        %1651 = vmatprep.mubr.f32.mxu0 %v328
        %1652 = vmatmul.mubr.f32.gmra.mrb[0].mxu0 %v327
        %v1653 = vpop.f32.mrb[0].mxu0
        %v1654 = vadd.f32 %v1577, %v1653
        %v1655 = vpop.f32.mrb[0].mxu0
        %v1656 = vadd.f32 %v1579, %v1655
        %1657 = vmatprep.mubr.f32.mxu0 %v336
        %1658 = vmatmul.mubr.f32.gmra.mrb[0].mxu0 %v335
        %v1659 = vpop.f32.mrb[0].mxu0
        %v1660 = vadd.f32 %v1583, %v1659
        %v1661 = vpop.f32.mrb[0].mxu0
        %v1662 = vadd.f32 %v1585, %v1661
        %1663 = vdwg.mxu0
        %1664 = vmatprep.subr.mxu0 %v1108
        %1665 = vmatpush1.msra.mxu0 %v1107
        %1666 = vmatprep.subr.mxu0 %v1116
        %1667 = vmatpush1.msra.mxu0 %v1115
        %1668 = vmatprep.subr.mxu0 %v1124
        %1669 = vmatpush1.msra.mxu0 %v1123
        %1670 = vmatprep.subr.mxu0 %v1132
        %1671 = vmatpush1.msra.mxu0 %v1131
        %1672 = vmatprep.subr.mxu0 %v1140
        %1673 = vmatpush1.msra.mxu0 %v1139
        %1674 = vmatprep.subr.mxu0 %v1148
        %1675 = vmatpush1.msra.mxu0 %v1147
        %1676 = vmatprep.subr.mxu0 %v1156
        %1677 = vmatpush1.msra.mxu0 %v1155
        %1678 = vmatprep.subr.mxu0 %v1164
        %1679 = vmatpush1.msra.mxu0 %v1163
        %1680 = vmatprep.subr.mxu0 %v1172
        %1681 = vmatpush1.msra.mxu0 %v1171
        %1682 = vmatprep.subr.mxu0 %v1180
        %1683 = vmatpush1.msra.mxu0 %v1179
        %1684 = vmatprep.subr.mxu0 %v1188
        %1685 = vmatpush1.msra.mxu0 %v1187
        %1686 = vmatprep.subr.mxu0 %v1196
        %1687 = vmatpush1.msra.mxu0 %v1195
        %1688 = vmatprep.subr.mxu0 %v1204
        %1689 = vmatpush1.msra.mxu0 %v1203
        %1690 = vmatprep.subr.mxu0 %v1212
        %1691 = vmatpush1.msra.mxu0 %v1211
        %1692 = vmatprep.subr.mxu0 %v1220
        %1693 = vmatpush1.msra.mxu0 %v1219
        %1694 = vmatprep.subr.mxu0 %v1228
        %1695 = vmatpush1.msra.mxu0 %v1227
        %1696 = vmatprep.subr.mxu0 %v1236
        %1697 = vmatpush1.msra.mxu0 %v1235
        %1698 = vmatprep.subr.mxu0 %v1244
        %1699 = vmatpush1.msra.mxu0 %v1243
        %1700 = vmatprep.subr.mxu0 %v1252
        %1701 = vmatpush1.msra.mxu0 %v1251
        %1702 = vmatprep.subr.mxu0 %v1260
        %1703 = vmatpush1.msra.mxu0 %v1259
        %1704 = vmatprep.subr.mxu0 %v1268
        %1705 = vmatpush1.msra.mxu0 %v1267
        %1706 = vmatprep.subr.mxu0 %v1276
        %1707 = vmatpush1.msra.mxu0 %v1275
        %1708 = vmatprep.subr.mxu0 %v1284
        %1709 = vmatpush1.msra.mxu0 %v1283
        %1710 = vmatprep.subr.mxu0 %v1292
        %1711 = vmatpush1.msra.mxu0 %v1291
        %1712 = vmatprep.subr.mxu0 %v1300
        %1713 = vmatpush1.msra.mxu0 %v1299
        %1714 = vmatprep.subr.mxu0 %v1308
        %1715 = vmatpush1.msra.mxu0 %v1307
        %1716 = vmatprep.subr.mxu0 %v1316
        %1717 = vmatpush1.msra.mxu0 %v1315
        %1718 = vmatprep.subr.mxu0 %v1324
        %1719 = vmatpush1.msra.mxu0 %v1323
        %1720 = vmatprep.subr.mxu0 %v1332
        %1721 = vmatpush1.msra.mxu0 %v1331
        %1722 = vmatprep.subr.mxu0 %v1340
        %1723 = vmatpush1.msra.mxu0 %v1339
        %1724 = vmatprep.subr.mxu0 %v1348
        %1725 = vmatpush1.msra.mxu0 %v1347
        %1726 = vmatprep.subr.mxu0 %v1356
        %1727 = vmatpush1.msra.mxu0 %v1355
        %1728 = vmatprep.mubr.f32.mxu0 %v330
        %1729 = vmatmul.mubr.f32.gmra.mrb[0].mxu0 %v329
        %v1730 = vpop.f32.mrb[0].mxu0
        %v1731 = vadd.f32 %v1654, %v1730
        %v1732 = vpop.f32.mrb[0].mxu0
        %v1733 = vadd.f32 %v1656, %v1732
        %1734 = vmatprep.mubr.f32.mxu0 %v338
        %1735 = vmatmul.mubr.f32.gmra.mrb[0].mxu0 %v337
        %v1736 = vpop.f32.mrb[0].mxu0
        %v1737 = vadd.f32 %v1660, %v1736
        %v1738 = vpop.f32.mrb[0].mxu0
        %v1739 = vadd.f32 %v1662, %v1738
        %1740 = vdwg.mxu0
        %1741 = vmatprep.subr.mxu0 %v342
        %1742 = vmatpush1.msra.mxu0 %v341
        %1743 = vmatprep.subr.mxu0 %v350
        %1744 = vmatpush1.msra.mxu0 %v349
        %1745 = vmatprep.subr.mxu0 %v358
        %1746 = vmatpush1.msra.mxu0 %v357
        %1747 = vmatprep.subr.mxu0 %v366
        %1748 = vmatpush1.msra.mxu0 %v365
        %1749 = vmatprep.subr.mxu0 %v374
        %1750 = vmatpush1.msra.mxu0 %v373
        %1751 = vmatprep.subr.mxu0 %v382
        %1752 = vmatpush1.msra.mxu0 %v381
        %1753 = vmatprep.subr.mxu0 %v390
        %1754 = vmatpush1.msra.mxu0 %v389
        %1755 = vmatprep.subr.mxu0 %v398
        %1756 = vmatpush1.msra.mxu0 %v397
        %1757 = vmatprep.subr.mxu0 %v406
        %1758 = vmatpush1.msra.mxu0 %v405
        %1759 = vmatprep.subr.mxu0 %v414
        %1760 = vmatpush1.msra.mxu0 %v413
        %1761 = vmatprep.subr.mxu0 %v422
        %1762 = vmatpush1.msra.mxu0 %v421
        %1763 = vmatprep.subr.mxu0 %v430
        %1764 = vmatpush1.msra.mxu0 %v429
        %1765 = vmatprep.subr.mxu0 %v438
        %1766 = vmatpush1.msra.mxu0 %v437
        %1767 = vmatprep.subr.mxu0 %v446
        %1768 = vmatpush1.msra.mxu0 %v445
        %1769 = vmatprep.subr.mxu0 %v454
        %1770 = vmatpush1.msra.mxu0 %v453
        %1771 = vmatprep.subr.mxu0 %v462
        %1772 = vmatpush1.msra.mxu0 %v461
        %1773 = vmatprep.subr.mxu0 %v470
        %1774 = vmatpush1.msra.mxu0 %v469
        %1775 = vmatprep.subr.mxu0 %v478
        %1776 = vmatpush1.msra.mxu0 %v477
        %1777 = vmatprep.subr.mxu0 %v486
        %1778 = vmatpush1.msra.mxu0 %v485
        %1779 = vmatprep.subr.mxu0 %v494
        %1780 = vmatpush1.msra.mxu0 %v493
        %1781 = vmatprep.subr.mxu0 %v502
        %1782 = vmatpush1.msra.mxu0 %v501
        %1783 = vmatprep.subr.mxu0 %v510
        %1784 = vmatpush1.msra.mxu0 %v509
        %1785 = vmatprep.subr.mxu0 %v518
        %1786 = vmatpush1.msra.mxu0 %v517
        %1787 = vmatprep.subr.mxu0 %v526
        %1788 = vmatpush1.msra.mxu0 %v525
        %1789 = vmatprep.subr.mxu0 %v534
        %1790 = vmatpush1.msra.mxu0 %v533
        %1791 = vmatprep.subr.mxu0 %v542
        %1792 = vmatpush1.msra.mxu0 %v541
        %1793 = vmatprep.subr.mxu0 %v550
        %1794 = vmatpush1.msra.mxu0 %v549
        %1795 = vmatprep.subr.mxu0 %v558
        %1796 = vmatpush1.msra.mxu0 %v557
        %1797 = vmatprep.subr.mxu0 %v566
        %1798 = vmatpush1.msra.mxu0 %v565
        %1799 = vmatprep.subr.mxu0 %v574
        %1800 = vmatpush1.msra.mxu0 %v573
        %1801 = vmatprep.subr.mxu0 %v582
        %1802 = vmatpush1.msra.mxu0 %v581
        %1803 = vmatprep.subr.mxu0 %v590
        %1804 = vmatpush1.msra.mxu0 %v589
        %1805 = vmatprep.mubr.f32.mxu0 %v324
        %1806 = vmatmul.mubr.f32.gmra.mrb[0].mxu0 %v323
        %v1807 = vpop.f32.mrb[0].mxu0
        %v1808 = vadd.f32 %v1419, %v1807
        %v1809 = vpop.f32.mrb[0].mxu0
        %v1810 = vadd.f32 %v1420, %v1809
        %1811 = vmatprep.mubr.f32.mxu0 %v332
        %1812 = vmatmul.mubr.f32.gmra.mrb[0].mxu0 %v331
        %v1813 = vpop.f32.mrb[0].mxu0
        %v1814 = vadd.f32 %v1427, %v1813
        %v1815 = vpop.f32.mrb[0].mxu0
        %v1816 = vadd.f32 %v1428, %v1815
        %1817 = vdwg.mxu0
        %1818 = vmatprep.subr.mxu0 %v598
        %1819 = vmatpush1.msra.mxu0 %v597
        %1820 = vmatprep.subr.mxu0 %v606
        %1821 = vmatpush1.msra.mxu0 %v605
        %1822 = vmatprep.subr.mxu0 %v614
        %1823 = vmatpush1.msra.mxu0 %v613
        %1824 = vmatprep.subr.mxu0 %v622
        %1825 = vmatpush1.msra.mxu0 %v621
        %1826 = vmatprep.subr.mxu0 %v630
        %1827 = vmatpush1.msra.mxu0 %v629
        %1828 = vmatprep.subr.mxu0 %v638
        %1829 = vmatpush1.msra.mxu0 %v637
        %1830 = vmatprep.subr.mxu0 %v646
        %1831 = vmatpush1.msra.mxu0 %v645
        %1832 = vmatprep.subr.mxu0 %v654
        %1833 = vmatpush1.msra.mxu0 %v653
        %1834 = vmatprep.subr.mxu0 %v662
        %1835 = vmatpush1.msra.mxu0 %v661
        %1836 = vmatprep.subr.mxu0 %v670
        %1837 = vmatpush1.msra.mxu0 %v669
        %1838 = vmatprep.subr.mxu0 %v678
        %1839 = vmatpush1.msra.mxu0 %v677
        %1840 = vmatprep.subr.mxu0 %v686
        %1841 = vmatpush1.msra.mxu0 %v685
        %1842 = vmatprep.subr.mxu0 %v694
        %1843 = vmatpush1.msra.mxu0 %v693
        %1844 = vmatprep.subr.mxu0 %v702
        %1845 = vmatpush1.msra.mxu0 %v701
        %1846 = vmatprep.subr.mxu0 %v710
        %1847 = vmatpush1.msra.mxu0 %v709
        %1848 = vmatprep.subr.mxu0 %v718
        %1849 = vmatpush1.msra.mxu0 %v717
        %1850 = vmatprep.subr.mxu0 %v726
        %1851 = vmatpush1.msra.mxu0 %v725
        %1852 = vmatprep.subr.mxu0 %v734
        %1853 = vmatpush1.msra.mxu0 %v733
        %1854 = vmatprep.subr.mxu0 %v742
        %1855 = vmatpush1.msra.mxu0 %v741
        %1856 = vmatprep.subr.mxu0 %v750
        %1857 = vmatpush1.msra.mxu0 %v749
        %1858 = vmatprep.subr.mxu0 %v758
        %1859 = vmatpush1.msra.mxu0 %v757
        %1860 = vmatprep.subr.mxu0 %v766
        %1861 = vmatpush1.msra.mxu0 %v765
        %1862 = vmatprep.subr.mxu0 %v774
        %1863 = vmatpush1.msra.mxu0 %v773
        %1864 = vmatprep.subr.mxu0 %v782
        %1865 = vmatpush1.msra.mxu0 %v781
        %1866 = vmatprep.subr.mxu0 %v790
        %1867 = vmatpush1.msra.mxu0 %v789
        %1868 = vmatprep.subr.mxu0 %v798
        %1869 = vmatpush1.msra.mxu0 %v797
        %1870 = vmatprep.subr.mxu0 %v806
        %1871 = vmatpush1.msra.mxu0 %v805
        %1872 = vmatprep.subr.mxu0 %v814
        %1873 = vmatpush1.msra.mxu0 %v813
        %1874 = vmatprep.subr.mxu0 %v822
        %1875 = vmatpush1.msra.mxu0 %v821
        %1876 = vmatprep.subr.mxu0 %v830
        %1877 = vmatpush1.msra.mxu0 %v829
        %1878 = vmatprep.subr.mxu0 %v838
        %1879 = vmatpush1.msra.mxu0 %v837
        %1880 = vmatprep.subr.mxu0 %v846
        %1881 = vmatpush1.msra.mxu0 %v845
        %1882 = vmatprep.mubr.f32.mxu0 %v326
        %1883 = vmatmul.mubr.f32.gmra.mrb[0].mxu0 %v325
        %v1884 = vpop.f32.mrb[0].mxu0
        %v1885 = vadd.f32 %v1808, %v1884
        %v1886 = vpop.f32.mrb[0].mxu0
        %v1887 = vadd.f32 %v1810, %v1886
        %1888 = vmatprep.mubr.f32.mxu0 %v334
        %1889 = vmatmul.mubr.f32.gmra.mrb[0].mxu0 %v333
        %v1890 = vpop.f32.mrb[0].mxu0
        %v1891 = vadd.f32 %v1814, %v1890
        %v1892 = vpop.f32.mrb[0].mxu0
        %v1893 = vadd.f32 %v1816, %v1892
        %1894 = vdwg.mxu0
        %1895 = vmatprep.subr.mxu0 %v854
        %1896 = vmatpush1.msra.mxu0 %v853
        %1897 = vmatprep.subr.mxu0 %v862
        %1898 = vmatpush1.msra.mxu0 %v861
        %1899 = vmatprep.subr.mxu0 %v870
        %1900 = vmatpush1.msra.mxu0 %v869
        %1901 = vmatprep.subr.mxu0 %v878
        %1902 = vmatpush1.msra.mxu0 %v877
        %1903 = vmatprep.subr.mxu0 %v886
        %1904 = vmatpush1.msra.mxu0 %v885
        %1905 = vmatprep.subr.mxu0 %v894
        %1906 = vmatpush1.msra.mxu0 %v893
        %1907 = vmatprep.subr.mxu0 %v902
        %1908 = vmatpush1.msra.mxu0 %v901
        %1909 = vmatprep.subr.mxu0 %v910
        %1910 = vmatpush1.msra.mxu0 %v909
        %1911 = vmatprep.subr.mxu0 %v918
        %1912 = vmatpush1.msra.mxu0 %v917
        %1913 = vmatprep.subr.mxu0 %v926
        %1914 = vmatpush1.msra.mxu0 %v925
        %1915 = vmatprep.subr.mxu0 %v934
        %1916 = vmatpush1.msra.mxu0 %v933
        %1917 = vmatprep.subr.mxu0 %v942
        %1918 = vmatpush1.msra.mxu0 %v941
        %1919 = vmatprep.subr.mxu0 %v950
        %1920 = vmatpush1.msra.mxu0 %v949
        %1921 = vmatprep.subr.mxu0 %v958
        %1922 = vmatpush1.msra.mxu0 %v957
        %1923 = vmatprep.subr.mxu0 %v966
        %1924 = vmatpush1.msra.mxu0 %v965
        %1925 = vmatprep.subr.mxu0 %v974
        %1926 = vmatpush1.msra.mxu0 %v973
        %1927 = vmatprep.subr.mxu0 %v982
        %1928 = vmatpush1.msra.mxu0 %v981
        %1929 = vmatprep.subr.mxu0 %v990
        %1930 = vmatpush1.msra.mxu0 %v989
        %1931 = vmatprep.subr.mxu0 %v998
        %1932 = vmatpush1.msra.mxu0 %v997
        %1933 = vmatprep.subr.mxu0 %v1006
        %1934 = vmatpush1.msra.mxu0 %v1005
        %1935 = vmatprep.subr.mxu0 %v1014
        %1936 = vmatpush1.msra.mxu0 %v1013
        %1937 = vmatprep.subr.mxu0 %v1022
        %1938 = vmatpush1.msra.mxu0 %v1021
        %1939 = vmatprep.subr.mxu0 %v1030
        %1940 = vmatpush1.msra.mxu0 %v1029
        %1941 = vmatprep.subr.mxu0 %v1038
        %1942 = vmatpush1.msra.mxu0 %v1037
        %1943 = vmatprep.subr.mxu0 %v1046
        %1944 = vmatpush1.msra.mxu0 %v1045
        %1945 = vmatprep.subr.mxu0 %v1054
        %1946 = vmatpush1.msra.mxu0 %v1053
        %1947 = vmatprep.subr.mxu0 %v1062
        %1948 = vmatpush1.msra.mxu0 %v1061
        %1949 = vmatprep.subr.mxu0 %v1070
        %1950 = vmatpush1.msra.mxu0 %v1069
        %1951 = vmatprep.subr.mxu0 %v1078
        %1952 = vmatpush1.msra.mxu0 %v1077
        %1953 = vmatprep.subr.mxu0 %v1086
        %1954 = vmatpush1.msra.mxu0 %v1085
        %1955 = vmatprep.subr.mxu0 %v1094
        %1956 = vmatpush1.msra.mxu0 %v1093
        %1957 = vmatprep.subr.mxu0 %v1102
        %1958 = vmatpush1.msra.mxu0 %v1101
        %1959 = vmatprep.mubr.f32.mxu0 %v328
        %1960 = vmatmul.mubr.f32.gmra.mrb[0].mxu0 %v327
        %v1961 = vpop.f32.mrb[0].mxu0
        %v1962 = vadd.f32 %v1885, %v1961
        %v1963 = vpop.f32.mrb[0].mxu0
        %v1964 = vadd.f32 %v1887, %v1963
        %1965 = vmatprep.mubr.f32.mxu0 %v336
        %1966 = vmatmul.mubr.f32.gmra.mrb[0].mxu0 %v335
        %v1967 = vpop.f32.mrb[0].mxu0
        %v1968 = vadd.f32 %v1891, %v1967
        %v1969 = vpop.f32.mrb[0].mxu0
        %v1970 = vadd.f32 %v1893, %v1969
        %1971 = vdwg.mxu0
        %1972 = vmatprep.subr.mxu0 %v1110
        %1973 = vmatpush1.msra.mxu0 %v1109
        %1974 = vmatprep.subr.mxu0 %v1118
        %1975 = vmatpush1.msra.mxu0 %v1117
        %1976 = vmatprep.subr.mxu0 %v1126
        %1977 = vmatpush1.msra.mxu0 %v1125
        %1978 = vmatprep.subr.mxu0 %v1134
        %1979 = vmatpush1.msra.mxu0 %v1133
        %1980 = vmatprep.subr.mxu0 %v1142
        %1981 = vmatpush1.msra.mxu0 %v1141
        %1982 = vmatprep.subr.mxu0 %v1150
        %1983 = vmatpush1.msra.mxu0 %v1149
        %1984 = vmatprep.subr.mxu0 %v1158
        %1985 = vmatpush1.msra.mxu0 %v1157
        %1986 = vmatprep.subr.mxu0 %v1166
        %1987 = vmatpush1.msra.mxu0 %v1165
        %1988 = vmatprep.subr.mxu0 %v1174
        %1989 = vmatpush1.msra.mxu0 %v1173
        %1990 = vmatprep.subr.mxu0 %v1182
        %1991 = vmatpush1.msra.mxu0 %v1181
        %1992 = vmatprep.subr.mxu0 %v1190
        %1993 = vmatpush1.msra.mxu0 %v1189
        %1994 = vmatprep.subr.mxu0 %v1198
        %1995 = vmatpush1.msra.mxu0 %v1197
        %1996 = vmatprep.subr.mxu0 %v1206
        %1997 = vmatpush1.msra.mxu0 %v1205
        %1998 = vmatprep.subr.mxu0 %v1214
        %1999 = vmatpush1.msra.mxu0 %v1213
        %2000 = vmatprep.subr.mxu0 %v1222
        %2001 = vmatpush1.msra.mxu0 %v1221
        %2002 = vmatprep.subr.mxu0 %v1230
        %2003 = vmatpush1.msra.mxu0 %v1229
        %2004 = vmatprep.subr.mxu0 %v1238
        %2005 = vmatpush1.msra.mxu0 %v1237
        %2006 = vmatprep.subr.mxu0 %v1246
        %2007 = vmatpush1.msra.mxu0 %v1245
        %2008 = vmatprep.subr.mxu0 %v1254
        %2009 = vmatpush1.msra.mxu0 %v1253
        %2010 = vmatprep.subr.mxu0 %v1262
        %2011 = vmatpush1.msra.mxu0 %v1261
        %2012 = vmatprep.subr.mxu0 %v1270
        %2013 = vmatpush1.msra.mxu0 %v1269
        %2014 = vmatprep.subr.mxu0 %v1278
        %2015 = vmatpush1.msra.mxu0 %v1277
        %2016 = vmatprep.subr.mxu0 %v1286
        %2017 = vmatpush1.msra.mxu0 %v1285
        %2018 = vmatprep.subr.mxu0 %v1294
        %2019 = vmatpush1.msra.mxu0 %v1293
        %2020 = vmatprep.subr.mxu0 %v1302
        %2021 = vmatpush1.msra.mxu0 %v1301
        %2022 = vmatprep.subr.mxu0 %v1310
        %2023 = vmatpush1.msra.mxu0 %v1309
        %2024 = vmatprep.subr.mxu0 %v1318
        %2025 = vmatpush1.msra.mxu0 %v1317
        %2026 = vmatprep.subr.mxu0 %v1326
        %2027 = vmatpush1.msra.mxu0 %v1325
        %2028 = vmatprep.subr.mxu0 %v1334
        %2029 = vmatpush1.msra.mxu0 %v1333
        %2030 = vmatprep.subr.mxu0 %v1342
        %2031 = vmatpush1.msra.mxu0 %v1341
        %2032 = vmatprep.subr.mxu0 %v1350
        %2033 = vmatpush1.msra.mxu0 %v1349
        %2034 = vmatprep.subr.mxu0 %v1358
        %2035 = vmatpush1.msra.mxu0 %v1357
        %2036 = vmatprep.mubr.f32.mxu0 %v330
        %2037 = vmatmul.mubr.f32.gmra.mrb[0].mxu0 %v329
        %v2038 = vpop.f32.mrb[0].mxu0
        %v2039 = vadd.f32 %v1962, %v2038
        %v2040 = vpop.f32.mrb[0].mxu0
        %v2041 = vadd.f32 %v1964, %v2040
        %2042 = vmatprep.mubr.f32.mxu0 %v338
        %2043 = vmatmul.mubr.f32.gmra.mrb[0].mxu0 %v337
        %v2044 = vpop.f32.mrb[0].mxu0
        %v2045 = vadd.f32 %v1968, %v2044
        %v2046 = vpop.f32.mrb[0].mxu0
        %v2047 = vadd.f32 %v1970, %v2046
        %2048 = vdwg.mxu0
        %2049 = vmatprep.subr.mxu0 %v344
        %2050 = vmatpush1.msra.mxu0 %v343
        %2051 = vmatprep.subr.mxu0 %v352
        %2052 = vmatpush1.msra.mxu0 %v351
        %2053 = vmatprep.subr.mxu0 %v360
        %2054 = vmatpush1.msra.mxu0 %v359
        %2055 = vmatprep.subr.mxu0 %v368
        %2056 = vmatpush1.msra.mxu0 %v367
        %2057 = vmatprep.subr.mxu0 %v376
        %2058 = vmatpush1.msra.mxu0 %v375
        %2059 = vmatprep.subr.mxu0 %v384
        %2060 = vmatpush1.msra.mxu0 %v383
        %2061 = vmatprep.subr.mxu0 %v392
        %2062 = vmatpush1.msra.mxu0 %v391
        %2063 = vmatprep.subr.mxu0 %v400
        %2064 = vmatpush1.msra.mxu0 %v399
        %2065 = vmatprep.subr.mxu0 %v408
        %2066 = vmatpush1.msra.mxu0 %v407
        %2067 = vmatprep.subr.mxu0 %v416
        %2068 = vmatpush1.msra.mxu0 %v415
        %2069 = vmatprep.subr.mxu0 %v424
        %2070 = vmatpush1.msra.mxu0 %v423
        %2071 = vmatprep.subr.mxu0 %v432
        %2072 = vmatpush1.msra.mxu0 %v431
        %2073 = vmatprep.subr.mxu0 %v440
        %2074 = vmatpush1.msra.mxu0 %v439
        %2075 = vmatprep.subr.mxu0 %v448
        %2076 = vmatpush1.msra.mxu0 %v447
        %2077 = vmatprep.subr.mxu0 %v456
        %2078 = vmatpush1.msra.mxu0 %v455
        %2079 = vmatprep.subr.mxu0 %v464
        %2080 = vmatpush1.msra.mxu0 %v463
        %2081 = vmatprep.subr.mxu0 %v472
        %2082 = vmatpush1.msra.mxu0 %v471
        %2083 = vmatprep.subr.mxu0 %v480
        %2084 = vmatpush1.msra.mxu0 %v479
        %2085 = vmatprep.subr.mxu0 %v488
        %2086 = vmatpush1.msra.mxu0 %v487
        %2087 = vmatprep.subr.mxu0 %v496
        %2088 = vmatpush1.msra.mxu0 %v495
        %2089 = vmatprep.subr.mxu0 %v504
        %2090 = vmatpush1.msra.mxu0 %v503
        %2091 = vmatprep.subr.mxu0 %v512
        %2092 = vmatpush1.msra.mxu0 %v511
        %2093 = vmatprep.subr.mxu0 %v520
        %2094 = vmatpush1.msra.mxu0 %v519
        %2095 = vmatprep.subr.mxu0 %v528
        %2096 = vmatpush1.msra.mxu0 %v527
        %2097 = vmatprep.subr.mxu0 %v536
        %2098 = vmatpush1.msra.mxu0 %v535
        %2099 = vmatprep.subr.mxu0 %v544
        %2100 = vmatpush1.msra.mxu0 %v543
        %2101 = vmatprep.subr.mxu0 %v552
        %2102 = vmatpush1.msra.mxu0 %v551
        %2103 = vmatprep.subr.mxu0 %v560
        %2104 = vmatpush1.msra.mxu0 %v559
        %2105 = vmatprep.subr.mxu0 %v568
        %2106 = vmatpush1.msra.mxu0 %v567
        %2107 = vmatprep.subr.mxu0 %v576
        %2108 = vmatpush1.msra.mxu0 %v575
        %2109 = vmatprep.subr.mxu0 %v584
        %2110 = vmatpush1.msra.mxu0 %v583
        %2111 = vmatprep.subr.mxu0 %v592
        %2112 = vmatpush1.msra.mxu0 %v591
        %2113 = vmatprep.mubr.f32.mxu0 %v324
        %2114 = vmatmul.mubr.f32.gmra.mrb[0].mxu0 %v323
        %v2115 = vpop.f32.mrb[0].mxu0
        %v2116 = vadd.f32 %v1421, %v2115
        %v2117 = vpop.f32.mrb[0].mxu0
        %v2118 = vadd.f32 %v1422, %v2117
        %2119 = vmatprep.mubr.f32.mxu0 %v332
        %2120 = vmatmul.mubr.f32.gmra.mrb[0].mxu0 %v331
        %v2121 = vpop.f32.mrb[0].mxu0
        %v2122 = vadd.f32 %v1429, %v2121
        %v2123 = vpop.f32.mrb[0].mxu0
        %v2124 = vadd.f32 %v1430, %v2123
        %2125 = vdwg.mxu0
        %2126 = vmatprep.subr.mxu0 %v600
        %2127 = vmatpush1.msra.mxu0 %v599
        %2128 = vmatprep.subr.mxu0 %v608
        %2129 = vmatpush1.msra.mxu0 %v607
        %2130 = vmatprep.subr.mxu0 %v616
        %2131 = vmatpush1.msra.mxu0 %v615
        %2132 = vmatprep.subr.mxu0 %v624
        %2133 = vmatpush1.msra.mxu0 %v623
        %2134 = vmatprep.subr.mxu0 %v632
        %2135 = vmatpush1.msra.mxu0 %v631
        %2136 = vmatprep.subr.mxu0 %v640
        %2137 = vmatpush1.msra.mxu0 %v639
        %2138 = vmatprep.subr.mxu0 %v648
        %2139 = vmatpush1.msra.mxu0 %v647
        %2140 = vmatprep.subr.mxu0 %v656
        %2141 = vmatpush1.msra.mxu0 %v655
        %2142 = vmatprep.subr.mxu0 %v664
        %2143 = vmatpush1.msra.mxu0 %v663
        %2144 = vmatprep.subr.mxu0 %v672
        %2145 = vmatpush1.msra.mxu0 %v671
        %2146 = vmatprep.subr.mxu0 %v680
        %2147 = vmatpush1.msra.mxu0 %v679
        %2148 = vmatprep.subr.mxu0 %v688
        %2149 = vmatpush1.msra.mxu0 %v687
        %2150 = vmatprep.subr.mxu0 %v696
        %2151 = vmatpush1.msra.mxu0 %v695
        %2152 = vmatprep.subr.mxu0 %v704
        %2153 = vmatpush1.msra.mxu0 %v703
        %2154 = vmatprep.subr.mxu0 %v712
        %2155 = vmatpush1.msra.mxu0 %v711
        %2156 = vmatprep.subr.mxu0 %v720
        %2157 = vmatpush1.msra.mxu0 %v719
        %2158 = vmatprep.subr.mxu0 %v728
        %2159 = vmatpush1.msra.mxu0 %v727
        %2160 = vmatprep.subr.mxu0 %v736
        %2161 = vmatpush1.msra.mxu0 %v735
        %2162 = vmatprep.subr.mxu0 %v744
        %2163 = vmatpush1.msra.mxu0 %v743
        %2164 = vmatprep.subr.mxu0 %v752
        %2165 = vmatpush1.msra.mxu0 %v751
        %2166 = vmatprep.subr.mxu0 %v760
        %2167 = vmatpush1.msra.mxu0 %v759
        %2168 = vmatprep.subr.mxu0 %v768
        %2169 = vmatpush1.msra.mxu0 %v767
        %2170 = vmatprep.subr.mxu0 %v776
        %2171 = vmatpush1.msra.mxu0 %v775
        %2172 = vmatprep.subr.mxu0 %v784
        %2173 = vmatpush1.msra.mxu0 %v783
        %2174 = vmatprep.subr.mxu0 %v792
        %2175 = vmatpush1.msra.mxu0 %v791
        %2176 = vmatprep.subr.mxu0 %v800
        %2177 = vmatpush1.msra.mxu0 %v799
        %2178 = vmatprep.subr.mxu0 %v808
        %2179 = vmatpush1.msra.mxu0 %v807
        %2180 = vmatprep.subr.mxu0 %v816
        %2181 = vmatpush1.msra.mxu0 %v815
        %2182 = vmatprep.subr.mxu0 %v824
        %2183 = vmatpush1.msra.mxu0 %v823
        %2184 = vmatprep.subr.mxu0 %v832
        %2185 = vmatpush1.msra.mxu0 %v831
        %2186 = vmatprep.subr.mxu0 %v840
        %2187 = vmatpush1.msra.mxu0 %v839
        %2188 = vmatprep.subr.mxu0 %v848
        %2189 = vmatpush1.msra.mxu0 %v847
        %2190 = vmatprep.mubr.f32.mxu0 %v326
        %2191 = vmatmul.mubr.f32.gmra.mrb[0].mxu0 %v325
        %v2192 = vpop.f32.mrb[0].mxu0
        %v2193 = vadd.f32 %v2116, %v2192
        %v2194 = vpop.f32.mrb[0].mxu0
        %v2195 = vadd.f32 %v2118, %v2194
        %2196 = vmatprep.mubr.f32.mxu0 %v334
        %2197 = vmatmul.mubr.f32.gmra.mrb[0].mxu0 %v333
        %v2198 = vpop.f32.mrb[0].mxu0
        %v2199 = vadd.f32 %v2122, %v2198
        %v2200 = vpop.f32.mrb[0].mxu0
        %v2201 = vadd.f32 %v2124, %v2200
        %2202 = vdwg.mxu0
        %2203 = vmatprep.subr.mxu0 %v856
        %2204 = vmatpush1.msra.mxu0 %v855
        %2205 = vmatprep.subr.mxu0 %v864
        %2206 = vmatpush1.msra.mxu0 %v863
        %2207 = vmatprep.subr.mxu0 %v872
        %2208 = vmatpush1.msra.mxu0 %v871
        %2209 = vmatprep.subr.mxu0 %v880
        %2210 = vmatpush1.msra.mxu0 %v879
        %2211 = vmatprep.subr.mxu0 %v888
        %2212 = vmatpush1.msra.mxu0 %v887
        %2213 = vmatprep.subr.mxu0 %v896
        %2214 = vmatpush1.msra.mxu0 %v895
        %2215 = vmatprep.subr.mxu0 %v904
        %2216 = vmatpush1.msra.mxu0 %v903
        %2217 = vmatprep.subr.mxu0 %v912
        %2218 = vmatpush1.msra.mxu0 %v911
        %2219 = vmatprep.subr.mxu0 %v920
        %2220 = vmatpush1.msra.mxu0 %v919
        %2221 = vmatprep.subr.mxu0 %v928
        %2222 = vmatpush1.msra.mxu0 %v927
        %2223 = vmatprep.subr.mxu0 %v936
        %2224 = vmatpush1.msra.mxu0 %v935
        %2225 = vmatprep.subr.mxu0 %v944
        %2226 = vmatpush1.msra.mxu0 %v943
        %2227 = vmatprep.subr.mxu0 %v952
        %2228 = vmatpush1.msra.mxu0 %v951
        %2229 = vmatprep.subr.mxu0 %v960
        %2230 = vmatpush1.msra.mxu0 %v959
        %2231 = vmatprep.subr.mxu0 %v968
        %2232 = vmatpush1.msra.mxu0 %v967
        %2233 = vmatprep.subr.mxu0 %v976
        %2234 = vmatpush1.msra.mxu0 %v975
        %2235 = vmatprep.subr.mxu0 %v984
        %2236 = vmatpush1.msra.mxu0 %v983
        %2237 = vmatprep.subr.mxu0 %v992
        %2238 = vmatpush1.msra.mxu0 %v991
        %2239 = vmatprep.subr.mxu0 %v1000
        %2240 = vmatpush1.msra.mxu0 %v999
        %2241 = vmatprep.subr.mxu0 %v1008
        %2242 = vmatpush1.msra.mxu0 %v1007
        %2243 = vmatprep.subr.mxu0 %v1016
        %2244 = vmatpush1.msra.mxu0 %v1015
        %2245 = vmatprep.subr.mxu0 %v1024
        %2246 = vmatpush1.msra.mxu0 %v1023
        %2247 = vmatprep.subr.mxu0 %v1032
        %2248 = vmatpush1.msra.mxu0 %v1031
        %2249 = vmatprep.subr.mxu0 %v1040
        %2250 = vmatpush1.msra.mxu0 %v1039
        %2251 = vmatprep.subr.mxu0 %v1048
        %2252 = vmatpush1.msra.mxu0 %v1047
        %2253 = vmatprep.subr.mxu0 %v1056
        %2254 = vmatpush1.msra.mxu0 %v1055
        %2255 = vmatprep.subr.mxu0 %v1064
        %2256 = vmatpush1.msra.mxu0 %v1063
        %2257 = vmatprep.subr.mxu0 %v1072
        %2258 = vmatpush1.msra.mxu0 %v1071
        %2259 = vmatprep.subr.mxu0 %v1080
        %2260 = vmatpush1.msra.mxu0 %v1079
        %2261 = vmatprep.subr.mxu0 %v1088
        %2262 = vmatpush1.msra.mxu0 %v1087
        %2263 = vmatprep.subr.mxu0 %v1096
        %2264 = vmatpush1.msra.mxu0 %v1095
        %2265 = vmatprep.subr.mxu0 %v1104
        %2266 = vmatpush1.msra.mxu0 %v1103
        %2267 = vmatprep.mubr.f32.mxu0 %v328
        %2268 = vmatmul.mubr.f32.gmra.mrb[0].mxu0 %v327
        %v2269 = vpop.f32.mrb[0].mxu0
        %v2270 = vadd.f32 %v2193, %v2269
        %v2271 = vpop.f32.mrb[0].mxu0
        %v2272 = vadd.f32 %v2195, %v2271
        %2273 = vmatprep.mubr.f32.mxu0 %v336
        %2274 = vmatmul.mubr.f32.gmra.mrb[0].mxu0 %v335
        %v2275 = vpop.f32.mrb[0].mxu0
        %v2276 = vadd.f32 %v2199, %v2275
        %v2277 = vpop.f32.mrb[0].mxu0
        %v2278 = vadd.f32 %v2201, %v2277
        %2279 = vdwg.mxu0
        %2280 = vmatprep.subr.mxu0 %v1112
        %2281 = vmatpush1.msra.mxu0 %v1111
        %2282 = vmatprep.subr.mxu0 %v1120
        %2283 = vmatpush1.msra.mxu0 %v1119
        %2284 = vmatprep.subr.mxu0 %v1128
        %2285 = vmatpush1.msra.mxu0 %v1127
        %2286 = vmatprep.subr.mxu0 %v1136
        %2287 = vmatpush1.msra.mxu0 %v1135
        %2288 = vmatprep.subr.mxu0 %v1144
        %2289 = vmatpush1.msra.mxu0 %v1143
        %2290 = vmatprep.subr.mxu0 %v1152
        %2291 = vmatpush1.msra.mxu0 %v1151
        %2292 = vmatprep.subr.mxu0 %v1160
        %2293 = vmatpush1.msra.mxu0 %v1159
        %2294 = vmatprep.subr.mxu0 %v1168
        %2295 = vmatpush1.msra.mxu0 %v1167
        %2296 = vmatprep.subr.mxu0 %v1176
        %2297 = vmatpush1.msra.mxu0 %v1175
        %2298 = vmatprep.subr.mxu0 %v1184
        %2299 = vmatpush1.msra.mxu0 %v1183
        %2300 = vmatprep.subr.mxu0 %v1192
        %2301 = vmatpush1.msra.mxu0 %v1191
        %2302 = vmatprep.subr.mxu0 %v1200
        %2303 = vmatpush1.msra.mxu0 %v1199
        %2304 = vmatprep.subr.mxu0 %v1208
        %2305 = vmatpush1.msra.mxu0 %v1207
        %2306 = vmatprep.subr.mxu0 %v1216
        %2307 = vmatpush1.msra.mxu0 %v1215
        %2308 = vmatprep.subr.mxu0 %v1224
        %2309 = vmatpush1.msra.mxu0 %v1223
        %2310 = vmatprep.subr.mxu0 %v1232
        %2311 = vmatpush1.msra.mxu0 %v1231
        %2312 = vmatprep.subr.mxu0 %v1240
        %2313 = vmatpush1.msra.mxu0 %v1239
        %2314 = vmatprep.subr.mxu0 %v1248
        %2315 = vmatpush1.msra.mxu0 %v1247
        %2316 = vmatprep.subr.mxu0 %v1256
        %2317 = vmatpush1.msra.mxu0 %v1255
        %2318 = vmatprep.subr.mxu0 %v1264
        %2319 = vmatpush1.msra.mxu0 %v1263
        %2320 = vmatprep.subr.mxu0 %v1272
        %2321 = vmatpush1.msra.mxu0 %v1271
        %2322 = vmatprep.subr.mxu0 %v1280
        %2323 = vmatpush1.msra.mxu0 %v1279
        %2324 = vmatprep.subr.mxu0 %v1288
        %2325 = vmatpush1.msra.mxu0 %v1287
        %2326 = vmatprep.subr.mxu0 %v1296
        %2327 = vmatpush1.msra.mxu0 %v1295
        %2328 = vmatprep.subr.mxu0 %v1304
        %2329 = vmatpush1.msra.mxu0 %v1303
        %2330 = vmatprep.subr.mxu0 %v1312
        %2331 = vmatpush1.msra.mxu0 %v1311
        %2332 = vmatprep.subr.mxu0 %v1320
        %2333 = vmatpush1.msra.mxu0 %v1319
        %2334 = vmatprep.subr.mxu0 %v1328
        %2335 = vmatpush1.msra.mxu0 %v1327
        %2336 = vmatprep.subr.mxu0 %v1336
        %2337 = vmatpush1.msra.mxu0 %v1335
        %2338 = vmatprep.subr.mxu0 %v1344
        %2339 = vmatpush1.msra.mxu0 %v1343
        %2340 = vmatprep.subr.mxu0 %v1352
        %2341 = vmatpush1.msra.mxu0 %v1351
        %2342 = vmatprep.subr.mxu0 %v1360
        %2343 = vmatpush1.msra.mxu0 %v1359
        %2344 = vmatprep.mubr.f32.mxu0 %v330
        %2345 = vmatmul.mubr.f32.gmra.mrb[0].mxu0 %v329
        %v2346 = vpop.f32.mrb[0].mxu0
        %v2347 = vadd.f32 %v2270, %v2346
        %v2348 = vpop.f32.mrb[0].mxu0
        %v2349 = vadd.f32 %v2272, %v2348
        %2350 = vmatprep.mubr.f32.mxu0 %v338
        %2351 = vmatmul.mubr.f32.gmra.mrb[0].mxu0 %v337
        %v2352 = vpop.f32.mrb[0].mxu0
        %v2353 = vadd.f32 %v2276, %v2352
        %v2354 = vpop.f32.mrb[0].mxu0
        %v2355 = vadd.f32 %v2278, %v2354
        %2356 = vdwg.mxu0
        %2357 = vmatprep.subr.mxu0 %v346
        %2358 = vmatpush1.msra.mxu0 %v345
        %2359 = vmatprep.subr.mxu0 %v354
        %2360 = vmatpush1.msra.mxu0 %v353
        %2361 = vmatprep.subr.mxu0 %v362
        %2362 = vmatpush1.msra.mxu0 %v361
        %2363 = vmatprep.subr.mxu0 %v370
        %2364 = vmatpush1.msra.mxu0 %v369
        %2365 = vmatprep.subr.mxu0 %v378
        %2366 = vmatpush1.msra.mxu0 %v377
        %2367 = vmatprep.subr.mxu0 %v386
        %2368 = vmatpush1.msra.mxu0 %v385
        %2369 = vmatprep.subr.mxu0 %v394
        %2370 = vmatpush1.msra.mxu0 %v393
        %2371 = vmatprep.subr.mxu0 %v402
        %2372 = vmatpush1.msra.mxu0 %v401
        %2373 = vmatprep.subr.mxu0 %v410
        %2374 = vmatpush1.msra.mxu0 %v409
        %2375 = vmatprep.subr.mxu0 %v418
        %2376 = vmatpush1.msra.mxu0 %v417
        %2377 = vmatprep.subr.mxu0 %v426
        %2378 = vmatpush1.msra.mxu0 %v425
        %2379 = vmatprep.subr.mxu0 %v434
        %2380 = vmatpush1.msra.mxu0 %v433
        %2381 = vmatprep.subr.mxu0 %v442
        %2382 = vmatpush1.msra.mxu0 %v441
        %2383 = vmatprep.subr.mxu0 %v450
        %2384 = vmatpush1.msra.mxu0 %v449
        %2385 = vmatprep.subr.mxu0 %v458
        %2386 = vmatpush1.msra.mxu0 %v457
        %2387 = vmatprep.subr.mxu0 %v466
        %2388 = vmatpush1.msra.mxu0 %v465
        %2389 = vmatprep.subr.mxu0 %v474
        %2390 = vmatpush1.msra.mxu0 %v473
        %2391 = vmatprep.subr.mxu0 %v482
        %2392 = vmatpush1.msra.mxu0 %v481
        %2393 = vmatprep.subr.mxu0 %v490
        %2394 = vmatpush1.msra.mxu0 %v489
        %2395 = vmatprep.subr.mxu0 %v498
        %2396 = vmatpush1.msra.mxu0 %v497
        %2397 = vmatprep.subr.mxu0 %v506
        %2398 = vmatpush1.msra.mxu0 %v505
        %2399 = vmatprep.subr.mxu0 %v514
        %2400 = vmatpush1.msra.mxu0 %v513
        %2401 = vmatprep.subr.mxu0 %v522
        %2402 = vmatpush1.msra.mxu0 %v521
        %2403 = vmatprep.subr.mxu0 %v530
        %2404 = vmatpush1.msra.mxu0 %v529
        %2405 = vmatprep.subr.mxu0 %v538
        %2406 = vmatpush1.msra.mxu0 %v537
        %2407 = vmatprep.subr.mxu0 %v546
        %2408 = vmatpush1.msra.mxu0 %v545
        %2409 = vmatprep.subr.mxu0 %v554
        %2410 = vmatpush1.msra.mxu0 %v553
        %2411 = vmatprep.subr.mxu0 %v562
        %2412 = vmatpush1.msra.mxu0 %v561
        %2413 = vmatprep.subr.mxu0 %v570
        %2414 = vmatpush1.msra.mxu0 %v569
        %2415 = vmatprep.subr.mxu0 %v578
        %2416 = vmatpush1.msra.mxu0 %v577
        %2417 = vmatprep.subr.mxu0 %v586
        %2418 = vmatpush1.msra.mxu0 %v585
        %2419 = vmatprep.subr.mxu0 %v594
        %2420 = vmatpush1.msra.mxu0 %v593
        %2421 = vmatprep.mubr.f32.mxu0 %v324
        %2422 = vmatmul.mubr.f32.gmra.mrb[0].mxu0 %v323
        %v2423 = vpop.f32.mrb[0].mxu0
        %v2424 = vadd.f32 %v1423, %v2423
        %v2425 = vpop.f32.mrb[0].mxu0
        %v2426 = vadd.f32 %v1424, %v2425
        %2427 = vmatprep.mubr.f32.mxu0 %v332
        %2428 = vmatmul.mubr.f32.gmra.mrb[0].mxu0 %v331
        %v2429 = vpop.f32.mrb[0].mxu0
        %v2430 = vadd.f32 %v1431, %v2429
        %v2431 = vpop.f32.mrb[0].mxu0
        %v2432 = vadd.f32 %v1432, %v2431
        %2433 = vdwg.mxu0
        %2434 = vmatprep.subr.mxu0 %v602
        %2435 = vmatpush1.msra.mxu0 %v601
        %2436 = vmatprep.subr.mxu0 %v610
        %2437 = vmatpush1.msra.mxu0 %v609
        %2438 = vmatprep.subr.mxu0 %v618
        %2439 = vmatpush1.msra.mxu0 %v617
        %2440 = vmatprep.subr.mxu0 %v626
        %2441 = vmatpush1.msra.mxu0 %v625
        %2442 = vmatprep.subr.mxu0 %v634
        %2443 = vmatpush1.msra.mxu0 %v633
        %2444 = vmatprep.subr.mxu0 %v642
        %2445 = vmatpush1.msra.mxu0 %v641
        %2446 = vmatprep.subr.mxu0 %v650
        %2447 = vmatpush1.msra.mxu0 %v649
        %2448 = vmatprep.subr.mxu0 %v658
        %2449 = vmatpush1.msra.mxu0 %v657
        %2450 = vmatprep.subr.mxu0 %v666
        %2451 = vmatpush1.msra.mxu0 %v665
        %2452 = vmatprep.subr.mxu0 %v674
        %2453 = vmatpush1.msra.mxu0 %v673
        %2454 = vmatprep.subr.mxu0 %v682
        %2455 = vmatpush1.msra.mxu0 %v681
        %2456 = vmatprep.subr.mxu0 %v690
        %2457 = vmatpush1.msra.mxu0 %v689
        %2458 = vmatprep.subr.mxu0 %v698
        %2459 = vmatpush1.msra.mxu0 %v697
        %2460 = vmatprep.subr.mxu0 %v706
        %2461 = vmatpush1.msra.mxu0 %v705
        %2462 = vmatprep.subr.mxu0 %v714
        %2463 = vmatpush1.msra.mxu0 %v713
        %2464 = vmatprep.subr.mxu0 %v722
        %2465 = vmatpush1.msra.mxu0 %v721
        %2466 = vmatprep.subr.mxu0 %v730
        %2467 = vmatpush1.msra.mxu0 %v729
        %2468 = vmatprep.subr.mxu0 %v738
        %2469 = vmatpush1.msra.mxu0 %v737
        %2470 = vmatprep.subr.mxu0 %v746
        %2471 = vmatpush1.msra.mxu0 %v745
        %2472 = vmatprep.subr.mxu0 %v754
        %2473 = vmatpush1.msra.mxu0 %v753
        %2474 = vmatprep.subr.mxu0 %v762
        %2475 = vmatpush1.msra.mxu0 %v761
        %2476 = vmatprep.subr.mxu0 %v770
        %2477 = vmatpush1.msra.mxu0 %v769
        %2478 = vmatprep.subr.mxu0 %v778
        %2479 = vmatpush1.msra.mxu0 %v777
        %2480 = vmatprep.subr.mxu0 %v786
        %2481 = vmatpush1.msra.mxu0 %v785
        %2482 = vmatprep.subr.mxu0 %v794
        %2483 = vmatpush1.msra.mxu0 %v793
        %2484 = vmatprep.subr.mxu0 %v802
        %2485 = vmatpush1.msra.mxu0 %v801
        %2486 = vmatprep.subr.mxu0 %v810
        %2487 = vmatpush1.msra.mxu0 %v809
        %2488 = vmatprep.subr.mxu0 %v818
        %2489 = vmatpush1.msra.mxu0 %v817
        %2490 = vmatprep.subr.mxu0 %v826
        %2491 = vmatpush1.msra.mxu0 %v825
        %2492 = vmatprep.subr.mxu0 %v834
        %2493 = vmatpush1.msra.mxu0 %v833
        %2494 = vmatprep.subr.mxu0 %v842
        %2495 = vmatpush1.msra.mxu0 %v841
        %2496 = vmatprep.subr.mxu0 %v850
        %2497 = vmatpush1.msra.mxu0 %v849
        %2498 = vmatprep.mubr.f32.mxu0 %v326
        %2499 = vmatmul.mubr.f32.gmra.mrb[0].mxu0 %v325
        %v2500 = vpop.f32.mrb[0].mxu0
        %v2501 = vadd.f32 %v2424, %v2500
        %v2502 = vpop.f32.mrb[0].mxu0
        %v2503 = vadd.f32 %v2426, %v2502
        %2504 = vmatprep.mubr.f32.mxu0 %v334
        %2505 = vmatmul.mubr.f32.gmra.mrb[0].mxu0 %v333
        %v2506 = vpop.f32.mrb[0].mxu0
        %v2507 = vadd.f32 %v2430, %v2506
        %v2508 = vpop.f32.mrb[0].mxu0
        %v2509 = vadd.f32 %v2432, %v2508
        %2510 = vdwg.mxu0
        %2511 = vmatprep.subr.mxu0 %v858
        %2512 = vmatpush1.msra.mxu0 %v857
        %2513 = vmatprep.subr.mxu0 %v866
        %2514 = vmatpush1.msra.mxu0 %v865
        %2515 = vmatprep.subr.mxu0 %v874
        %2516 = vmatpush1.msra.mxu0 %v873
        %2517 = vmatprep.subr.mxu0 %v882
        %2518 = vmatpush1.msra.mxu0 %v881
        %2519 = vmatprep.subr.mxu0 %v890
        %2520 = vmatpush1.msra.mxu0 %v889
        %2521 = vmatprep.subr.mxu0 %v898
        %2522 = vmatpush1.msra.mxu0 %v897
        %2523 = vmatprep.subr.mxu0 %v906
        %2524 = vmatpush1.msra.mxu0 %v905
        %2525 = vmatprep.subr.mxu0 %v914
        %2526 = vmatpush1.msra.mxu0 %v913
        %2527 = vmatprep.subr.mxu0 %v922
        %2528 = vmatpush1.msra.mxu0 %v921
        %2529 = vmatprep.subr.mxu0 %v930
        %2530 = vmatpush1.msra.mxu0 %v929
        %2531 = vmatprep.subr.mxu0 %v938
        %2532 = vmatpush1.msra.mxu0 %v937
        %2533 = vmatprep.subr.mxu0 %v946
        %2534 = vmatpush1.msra.mxu0 %v945
        %2535 = vmatprep.subr.mxu0 %v954
        %2536 = vmatpush1.msra.mxu0 %v953
        %2537 = vmatprep.subr.mxu0 %v962
        %2538 = vmatpush1.msra.mxu0 %v961
        %2539 = vmatprep.subr.mxu0 %v970
        %2540 = vmatpush1.msra.mxu0 %v969
        %2541 = vmatprep.subr.mxu0 %v978
        %2542 = vmatpush1.msra.mxu0 %v977
        %2543 = vmatprep.subr.mxu0 %v986
        %2544 = vmatpush1.msra.mxu0 %v985
        %2545 = vmatprep.subr.mxu0 %v994
        %2546 = vmatpush1.msra.mxu0 %v993
        %2547 = vmatprep.subr.mxu0 %v1002
        %2548 = vmatpush1.msra.mxu0 %v1001
        %2549 = vmatprep.subr.mxu0 %v1010
        %2550 = vmatpush1.msra.mxu0 %v1009
        %2551 = vmatprep.subr.mxu0 %v1018
        %2552 = vmatpush1.msra.mxu0 %v1017
        %2553 = vmatprep.subr.mxu0 %v1026
        %2554 = vmatpush1.msra.mxu0 %v1025
        %2555 = vmatprep.subr.mxu0 %v1034
        %2556 = vmatpush1.msra.mxu0 %v1033
        %2557 = vmatprep.subr.mxu0 %v1042
        %2558 = vmatpush1.msra.mxu0 %v1041
        %2559 = vmatprep.subr.mxu0 %v1050
        %2560 = vmatpush1.msra.mxu0 %v1049
        %2561 = vmatprep.subr.mxu0 %v1058
        %2562 = vmatpush1.msra.mxu0 %v1057
        %2563 = vmatprep.subr.mxu0 %v1066
        %2564 = vmatpush1.msra.mxu0 %v1065
        %2565 = vmatprep.subr.mxu0 %v1074
        %2566 = vmatpush1.msra.mxu0 %v1073
        %2567 = vmatprep.subr.mxu0 %v1082
        %2568 = vmatpush1.msra.mxu0 %v1081
        %2569 = vmatprep.subr.mxu0 %v1090
        %2570 = vmatpush1.msra.mxu0 %v1089
        %2571 = vmatprep.subr.mxu0 %v1098
        %2572 = vmatpush1.msra.mxu0 %v1097
        %2573 = vmatprep.subr.mxu0 %v1106
        %2574 = vmatpush1.msra.mxu0 %v1105
        %2575 = vmatprep.mubr.f32.mxu0 %v328
        %2576 = vmatmul.mubr.f32.gmra.mrb[0].mxu0 %v327
        %v2577 = vpop.f32.mrb[0].mxu0
        %v2578 = vadd.f32 %v2501, %v2577
        %v2579 = vpop.f32.mrb[0].mxu0
        %v2580 = vadd.f32 %v2503, %v2579
        %2581 = vmatprep.mubr.f32.mxu0 %v336
        %2582 = vmatmul.mubr.f32.gmra.mrb[0].mxu0 %v335
        %v2583 = vpop.f32.mrb[0].mxu0
        %v2584 = vadd.f32 %v2507, %v2583
        %v2585 = vpop.f32.mrb[0].mxu0
        %v2586 = vadd.f32 %v2509, %v2585
        %2587 = vdwg.mxu0
        %2588 = vmatprep.subr.mxu0 %v1114
        %2589 = vmatpush1.msra.mxu0 %v1113
        %2590 = vmatprep.subr.mxu0 %v1122
        %2591 = vmatpush1.msra.mxu0 %v1121
        %2592 = vmatprep.subr.mxu0 %v1130
        %2593 = vmatpush1.msra.mxu0 %v1129
        %2594 = vmatprep.subr.mxu0 %v1138
        %2595 = vmatpush1.msra.mxu0 %v1137
        %2596 = vmatprep.subr.mxu0 %v1146
        %2597 = vmatpush1.msra.mxu0 %v1145
        %2598 = vmatprep.subr.mxu0 %v1154
        %2599 = vmatpush1.msra.mxu0 %v1153
        %2600 = vmatprep.subr.mxu0 %v1162
        %2601 = vmatpush1.msra.mxu0 %v1161
        %2602 = vmatprep.subr.mxu0 %v1170
        %2603 = vmatpush1.msra.mxu0 %v1169
        %2604 = vmatprep.subr.mxu0 %v1178
        %2605 = vmatpush1.msra.mxu0 %v1177
        %2606 = vmatprep.subr.mxu0 %v1186
        %2607 = vmatpush1.msra.mxu0 %v1185
        %2608 = vmatprep.subr.mxu0 %v1194
        %2609 = vmatpush1.msra.mxu0 %v1193
        %2610 = vmatprep.subr.mxu0 %v1202
        %2611 = vmatpush1.msra.mxu0 %v1201
        %2612 = vmatprep.subr.mxu0 %v1210
        %2613 = vmatpush1.msra.mxu0 %v1209
        %2614 = vmatprep.subr.mxu0 %v1218
        %2615 = vmatpush1.msra.mxu0 %v1217
        %2616 = vmatprep.subr.mxu0 %v1226
        %2617 = vmatpush1.msra.mxu0 %v1225
        %2618 = vmatprep.subr.mxu0 %v1234
        %2619 = vmatpush1.msra.mxu0 %v1233
        %2620 = vmatprep.subr.mxu0 %v1242
        %2621 = vmatpush1.msra.mxu0 %v1241
        %2622 = vmatprep.subr.mxu0 %v1250
        %2623 = vmatpush1.msra.mxu0 %v1249
        %2624 = vmatprep.subr.mxu0 %v1258
        %2625 = vmatpush1.msra.mxu0 %v1257
        %2626 = vmatprep.subr.mxu0 %v1266
        %2627 = vmatpush1.msra.mxu0 %v1265
        %2628 = vmatprep.subr.mxu0 %v1274
        %2629 = vmatpush1.msra.mxu0 %v1273
        %2630 = vmatprep.subr.mxu0 %v1282
        %2631 = vmatpush1.msra.mxu0 %v1281
        %2632 = vmatprep.subr.mxu0 %v1290
        %2633 = vmatpush1.msra.mxu0 %v1289
        %2634 = vmatprep.subr.mxu0 %v1298
        %2635 = vmatpush1.msra.mxu0 %v1297
        %2636 = vmatprep.subr.mxu0 %v1306
        %2637 = vmatpush1.msra.mxu0 %v1305
        %2638 = vmatprep.subr.mxu0 %v1314
        %2639 = vmatpush1.msra.mxu0 %v1313
        %2640 = vmatprep.subr.mxu0 %v1322
        %2641 = vmatpush1.msra.mxu0 %v1321
        %2642 = vmatprep.subr.mxu0 %v1330
        %2643 = vmatpush1.msra.mxu0 %v1329
        %2644 = vmatprep.subr.mxu0 %v1338
        %2645 = vmatpush1.msra.mxu0 %v1337
        %2646 = vmatprep.subr.mxu0 %v1346
        %2647 = vmatpush1.msra.mxu0 %v1345
        %2648 = vmatprep.subr.mxu0 %v1354
        %2649 = vmatpush1.msra.mxu0 %v1353
        %2650 = vmatprep.subr.mxu0 %v1362
        %2651 = vmatpush1.msra.mxu0 %v1361
        %2652 = vmatprep.mubr.f32.mxu0 %v330
        %2653 = vmatmul.mubr.f32.gmra.mrb[0].mxu0 %v329
        %v2654 = vpop.f32.mrb[0].mxu0
        %v2655 = vadd.f32 %v2578, %v2654
        %v2656 = vpop.f32.mrb[0].mxu0
        %v2657 = vadd.f32 %v2580, %v2656
        %2658 = vmatprep.mubr.f32.mxu0 %v338
        %2659 = vmatmul.mubr.f32.gmra.mrb[0].mxu0 %v337
        %v2660 = vpop.f32.mrb[0].mxu0
        %v2661 = vadd.f32 %v2584, %v2660
        %v2662 = vpop.f32.mrb[0].mxu0
        %v2663 = vadd.f32 %v2586, %v2662
        %2664 = vdwg.mxu0
        %s2665 = scalar_lea.vmem %s0, 128
        %v2666 = vld [vmem:[%s2665] sm:$0xff]
        %v2667 = vld [vmem:[%s2665 + $0x8] sm:$0xff]
        %v2668 = vld [vmem:[%s2665 + $0x10] sm:$0xff]
        %v2669 = vld [vmem:[%s2665 + $0x18] sm:$0xff]
        %v2670 = vld [vmem:[%s2665 + $0x20] sm:$0xff]
        %v2671 = vld [vmem:[%s2665 + $0x28] sm:$0xff]
        %v2672 = vld [vmem:[%s2665 + $0x30] sm:$0xff]
        %v2673 = vld [vmem:[%s2665 + $0x38] sm:$0xff]
        %v2674 = vld [vmem:[%s2665 + $0x40] sm:$0xff]
        %v2675 = vld [vmem:[%s2665 + $0x48] sm:$0xff]
        %v2676 = vld [vmem:[%s2665 + $0x50] sm:$0xff]
        %v2677 = vld [vmem:[%s2665 + $0x58] sm:$0xff]
        %v2678 = vld [vmem:[%s2665 + $0x60] sm:$0xff]
        %v2679 = vld [vmem:[%s2665 + $0x68] sm:$0xff]
        %v2680 = vld [vmem:[%s2665 + $0x70] sm:$0xff]
        %v2681 = vld [vmem:[%s2665 + $0x78] sm:$0xff]
        %s2682 = scalar_lea.vmem %s274, 8192 [#allocation2]
        %v2683 = vld [vmem:[%s2682] sm:$0xff]
        %v2684 = vld [vmem:[%s2682 + $0x8] sm:$0xff]
        %v2685 = vld [vmem:[%s2682 + $0x10] sm:$0xff]
        %v2686 = vld [vmem:[%s2682 + $0x18] sm:$0xff]
        %v2687 = vld [vmem:[%s2682 + $0x20] sm:$0xff]
        %v2688 = vld [vmem:[%s2682 + $0x28] sm:$0xff]
        %v2689 = vld [vmem:[%s2682 + $0x30] sm:$0xff]
        %v2690 = vld [vmem:[%s2682 + $0x38] sm:$0xff]
        %v2691 = vld [vmem:[%s2682 + $0x40] sm:$0xff]
        %v2692 = vld [vmem:[%s2682 + $0x48] sm:$0xff]
        %v2693 = vld [vmem:[%s2682 + $0x50] sm:$0xff]
        %v2694 = vld [vmem:[%s2682 + $0x58] sm:$0xff]
        %v2695 = vld [vmem:[%s2682 + $0x60] sm:$0xff]
        %v2696 = vld [vmem:[%s2682 + $0x68] sm:$0xff]
        %v2697 = vld [vmem:[%s2682 + $0x70] sm:$0xff]
        %v2698 = vld [vmem:[%s2682 + $0x78] sm:$0xff]
        %v2699 = vld [vmem:[%s2682 + $0x80] sm:$0xff]
        %v2700 = vld [vmem:[%s2682 + $0x88] sm:$0xff]
        %v2701 = vld [vmem:[%s2682 + $0x90] sm:$0xff]
        %v2702 = vld [vmem:[%s2682 + $0x98] sm:$0xff]
        %v2703 = vld [vmem:[%s2682 + $0xa0] sm:$0xff]
        %v2704 = vld [vmem:[%s2682 + $0xa8] sm:$0xff]
        %v2705 = vld [vmem:[%s2682 + $0xb0] sm:$0xff]
        %v2706 = vld [vmem:[%s2682 + $0xb8] sm:$0xff]
        %v2707 = vld [vmem:[%s2682 + $0xc0] sm:$0xff]
        %v2708 = vld [vmem:[%s2682 + $0xc8] sm:$0xff]
        %v2709 = vld [vmem:[%s2682 + $0xd0] sm:$0xff]
        %v2710 = vld [vmem:[%s2682 + $0xd8] sm:$0xff]
        %v2711 = vld [vmem:[%s2682 + $0xe0] sm:$0xff]
        %v2712 = vld [vmem:[%s2682 + $0xe8] sm:$0xff]
        %v2713 = vld [vmem:[%s2682 + $0xf0] sm:$0xff]
        %v2714 = vld [vmem:[%s2682 + $0xf8] sm:$0xff]
        %v2715 = vld [vmem:[%s2682 + $0x100] sm:$0xff]
        %v2716 = vld [vmem:[%s2682 + $0x108] sm:$0xff]
        %v2717 = vld [vmem:[%s2682 + $0x110] sm:$0xff]
        %v2718 = vld [vmem:[%s2682 + $0x118] sm:$0xff]
        %v2719 = vld [vmem:[%s2682 + $0x120] sm:$0xff]
        %v2720 = vld [vmem:[%s2682 + $0x128] sm:$0xff]
        %v2721 = vld [vmem:[%s2682 + $0x130] sm:$0xff]
        %v2722 = vld [vmem:[%s2682 + $0x138] sm:$0xff]
        %v2723 = vld [vmem:[%s2682 + $0x140] sm:$0xff]
        %v2724 = vld [vmem:[%s2682 + $0x148] sm:$0xff]
        %v2725 = vld [vmem:[%s2682 + $0x150] sm:$0xff]
        %v2726 = vld [vmem:[%s2682 + $0x158] sm:$0xff]
        %v2727 = vld [vmem:[%s2682 + $0x160] sm:$0xff]
        %v2728 = vld [vmem:[%s2682 + $0x168] sm:$0xff]
        %v2729 = vld [vmem:[%s2682 + $0x170] sm:$0xff]
        %v2730 = vld [vmem:[%s2682 + $0x178] sm:$0xff]
        %v2731 = vld [vmem:[%s2682 + $0x180] sm:$0xff]
        %v2732 = vld [vmem:[%s2682 + $0x188] sm:$0xff]
        %v2733 = vld [vmem:[%s2682 + $0x190] sm:$0xff]
        %v2734 = vld [vmem:[%s2682 + $0x198] sm:$0xff]
        %v2735 = vld [vmem:[%s2682 + $0x1a0] sm:$0xff]
        %v2736 = vld [vmem:[%s2682 + $0x1a8] sm:$0xff]
        %v2737 = vld [vmem:[%s2682 + $0x1b0] sm:$0xff]
        %v2738 = vld [vmem:[%s2682 + $0x1b8] sm:$0xff]
        %v2739 = vld [vmem:[%s2682 + $0x1c0] sm:$0xff]
        %v2740 = vld [vmem:[%s2682 + $0x1c8] sm:$0xff]
        %v2741 = vld [vmem:[%s2682 + $0x1d0] sm:$0xff]
        %v2742 = vld [vmem:[%s2682 + $0x1d8] sm:$0xff]
        %v2743 = vld [vmem:[%s2682 + $0x1e0] sm:$0xff]
        %v2744 = vld [vmem:[%s2682 + $0x1e8] sm:$0xff]
        %v2745 = vld [vmem:[%s2682 + $0x1f0] sm:$0xff]
        %v2746 = vld [vmem:[%s2682 + $0x1f8] sm:$0xff]
        %v2747 = vld [vmem:[%s2682 + $0x200] sm:$0xff]
        %v2748 = vld [vmem:[%s2682 + $0x208] sm:$0xff]
        %v2749 = vld [vmem:[%s2682 + $0x210] sm:$0xff]
        %v2750 = vld [vmem:[%s2682 + $0x218] sm:$0xff]
        %v2751 = vld [vmem:[%s2682 + $0x220] sm:$0xff]
        %v2752 = vld [vmem:[%s2682 + $0x228] sm:$0xff]
        %v2753 = vld [vmem:[%s2682 + $0x230] sm:$0xff]
        %v2754 = vld [vmem:[%s2682 + $0x238] sm:$0xff]
        %v2755 = vld [vmem:[%s2682 + $0x240] sm:$0xff]
        %v2756 = vld [vmem:[%s2682 + $0x248] sm:$0xff]
        %v2757 = vld [vmem:[%s2682 + $0x250] sm:$0xff]
        %v2758 = vld [vmem:[%s2682 + $0x258] sm:$0xff]
        %v2759 = vld [vmem:[%s2682 + $0x260] sm:$0xff]
        %v2760 = vld [vmem:[%s2682 + $0x268] sm:$0xff]
        %v2761 = vld [vmem:[%s2682 + $0x270] sm:$0xff]
        %v2762 = vld [vmem:[%s2682 + $0x278] sm:$0xff]
        %v2763 = vld [vmem:[%s2682 + $0x280] sm:$0xff]
        %v2764 = vld [vmem:[%s2682 + $0x288] sm:$0xff]
        %v2765 = vld [vmem:[%s2682 + $0x290] sm:$0xff]
        %v2766 = vld [vmem:[%s2682 + $0x298] sm:$0xff]
        %v2767 = vld [vmem:[%s2682 + $0x2a0] sm:$0xff]
        %v2768 = vld [vmem:[%s2682 + $0x2a8] sm:$0xff]
        %v2769 = vld [vmem:[%s2682 + $0x2b0] sm:$0xff]
        %v2770 = vld [vmem:[%s2682 + $0x2b8] sm:$0xff]
        %v2771 = vld [vmem:[%s2682 + $0x2c0] sm:$0xff]
        %v2772 = vld [vmem:[%s2682 + $0x2c8] sm:$0xff]
        %v2773 = vld [vmem:[%s2682 + $0x2d0] sm:$0xff]
        %v2774 = vld [vmem:[%s2682 + $0x2d8] sm:$0xff]
        %v2775 = vld [vmem:[%s2682 + $0x2e0] sm:$0xff]
        %v2776 = vld [vmem:[%s2682 + $0x2e8] sm:$0xff]
        %v2777 = vld [vmem:[%s2682 + $0x2f0] sm:$0xff]
        %v2778 = vld [vmem:[%s2682 + $0x2f8] sm:$0xff]
        %v2779 = vld [vmem:[%s2682 + $0x300] sm:$0xff]
        %v2780 = vld [vmem:[%s2682 + $0x308] sm:$0xff]
        %v2781 = vld [vmem:[%s2682 + $0x310] sm:$0xff]
        %v2782 = vld [vmem:[%s2682 + $0x318] sm:$0xff]
        %v2783 = vld [vmem:[%s2682 + $0x320] sm:$0xff]
        %v2784 = vld [vmem:[%s2682 + $0x328] sm:$0xff]
        %v2785 = vld [vmem:[%s2682 + $0x330] sm:$0xff]
        %v2786 = vld [vmem:[%s2682 + $0x338] sm:$0xff]
        %v2787 = vld [vmem:[%s2682 + $0x340] sm:$0xff]
        %v2788 = vld [vmem:[%s2682 + $0x348] sm:$0xff]
        %v2789 = vld [vmem:[%s2682 + $0x350] sm:$0xff]
        %v2790 = vld [vmem:[%s2682 + $0x358] sm:$0xff]
        %v2791 = vld [vmem:[%s2682 + $0x360] sm:$0xff]
        %v2792 = vld [vmem:[%s2682 + $0x368] sm:$0xff]
        %v2793 = vld [vmem:[%s2682 + $0x370] sm:$0xff]
        %v2794 = vld [vmem:[%s2682 + $0x378] sm:$0xff]
        %v2795 = vld [vmem:[%s2682 + $0x380] sm:$0xff]
        %v2796 = vld [vmem:[%s2682 + $0x388] sm:$0xff]
        %v2797 = vld [vmem:[%s2682 + $0x390] sm:$0xff]
        %v2798 = vld [vmem:[%s2682 + $0x398] sm:$0xff]
        %v2799 = vld [vmem:[%s2682 + $0x3a0] sm:$0xff]
        %v2800 = vld [vmem:[%s2682 + $0x3a8] sm:$0xff]
        %v2801 = vld [vmem:[%s2682 + $0x3b0] sm:$0xff]
        %v2802 = vld [vmem:[%s2682 + $0x3b8] sm:$0xff]
        %v2803 = vld [vmem:[%s2682 + $0x3c0] sm:$0xff]
        %v2804 = vld [vmem:[%s2682 + $0x3c8] sm:$0xff]
        %v2805 = vld [vmem:[%s2682 + $0x3d0] sm:$0xff]
        %v2806 = vld [vmem:[%s2682 + $0x3d8] sm:$0xff]
        %v2807 = vld [vmem:[%s2682 + $0x3e0] sm:$0xff]
        %v2808 = vld [vmem:[%s2682 + $0x3e8] sm:$0xff]
        %v2809 = vld [vmem:[%s2682 + $0x3f0] sm:$0xff]
        %v2810 = vld [vmem:[%s2682 + $0x3f8] sm:$0xff]
        %v2811 = vld [vmem:[%s2682 + $0x400] sm:$0xff]
        %v2812 = vld [vmem:[%s2682 + $0x408] sm:$0xff]
        %v2813 = vld [vmem:[%s2682 + $0x410] sm:$0xff]
        %v2814 = vld [vmem:[%s2682 + $0x418] sm:$0xff]
        %v2815 = vld [vmem:[%s2682 + $0x420] sm:$0xff]
        %v2816 = vld [vmem:[%s2682 + $0x428] sm:$0xff]
        %v2817 = vld [vmem:[%s2682 + $0x430] sm:$0xff]
        %v2818 = vld [vmem:[%s2682 + $0x438] sm:$0xff]
        %v2819 = vld [vmem:[%s2682 + $0x440] sm:$0xff]
        %v2820 = vld [vmem:[%s2682 + $0x448] sm:$0xff]
        %v2821 = vld [vmem:[%s2682 + $0x450] sm:$0xff]
        %v2822 = vld [vmem:[%s2682 + $0x458] sm:$0xff]
        %v2823 = vld [vmem:[%s2682 + $0x460] sm:$0xff]
        %v2824 = vld [vmem:[%s2682 + $0x468] sm:$0xff]
        %v2825 = vld [vmem:[%s2682 + $0x470] sm:$0xff]
        %v2826 = vld [vmem:[%s2682 + $0x478] sm:$0xff]
        %v2827 = vld [vmem:[%s2682 + $0x480] sm:$0xff]
        %v2828 = vld [vmem:[%s2682 + $0x488] sm:$0xff]
        %v2829 = vld [vmem:[%s2682 + $0x490] sm:$0xff]
        %v2830 = vld [vmem:[%s2682 + $0x498] sm:$0xff]
        %v2831 = vld [vmem:[%s2682 + $0x4a0] sm:$0xff]
        %v2832 = vld [vmem:[%s2682 + $0x4a8] sm:$0xff]
        %v2833 = vld [vmem:[%s2682 + $0x4b0] sm:$0xff]
        %v2834 = vld [vmem:[%s2682 + $0x4b8] sm:$0xff]
        %v2835 = vld [vmem:[%s2682 + $0x4c0] sm:$0xff]
        %v2836 = vld [vmem:[%s2682 + $0x4c8] sm:$0xff]
        %v2837 = vld [vmem:[%s2682 + $0x4d0] sm:$0xff]
        %v2838 = vld [vmem:[%s2682 + $0x4d8] sm:$0xff]
        %v2839 = vld [vmem:[%s2682 + $0x4e0] sm:$0xff]
        %v2840 = vld [vmem:[%s2682 + $0x4e8] sm:$0xff]
        %v2841 = vld [vmem:[%s2682 + $0x4f0] sm:$0xff]
        %v2842 = vld [vmem:[%s2682 + $0x4f8] sm:$0xff]
        %v2843 = vld [vmem:[%s2682 + $0x500] sm:$0xff]
        %v2844 = vld [vmem:[%s2682 + $0x508] sm:$0xff]
        %v2845 = vld [vmem:[%s2682 + $0x510] sm:$0xff]
        %v2846 = vld [vmem:[%s2682 + $0x518] sm:$0xff]
        %v2847 = vld [vmem:[%s2682 + $0x520] sm:$0xff]
        %v2848 = vld [vmem:[%s2682 + $0x528] sm:$0xff]
        %v2849 = vld [vmem:[%s2682 + $0x530] sm:$0xff]
        %v2850 = vld [vmem:[%s2682 + $0x538] sm:$0xff]
        %v2851 = vld [vmem:[%s2682 + $0x540] sm:$0xff]
        %v2852 = vld [vmem:[%s2682 + $0x548] sm:$0xff]
        %v2853 = vld [vmem:[%s2682 + $0x550] sm:$0xff]
        %v2854 = vld [vmem:[%s2682 + $0x558] sm:$0xff]
        %v2855 = vld [vmem:[%s2682 + $0x560] sm:$0xff]
        %v2856 = vld [vmem:[%s2682 + $0x568] sm:$0xff]
        %v2857 = vld [vmem:[%s2682 + $0x570] sm:$0xff]
        %v2858 = vld [vmem:[%s2682 + $0x578] sm:$0xff]
        %v2859 = vld [vmem:[%s2682 + $0x580] sm:$0xff]
        %v2860 = vld [vmem:[%s2682 + $0x588] sm:$0xff]
        %v2861 = vld [vmem:[%s2682 + $0x590] sm:$0xff]
        %v2862 = vld [vmem:[%s2682 + $0x598] sm:$0xff]
        %v2863 = vld [vmem:[%s2682 + $0x5a0] sm:$0xff]
        %v2864 = vld [vmem:[%s2682 + $0x5a8] sm:$0xff]
        %v2865 = vld [vmem:[%s2682 + $0x5b0] sm:$0xff]
        %v2866 = vld [vmem:[%s2682 + $0x5b8] sm:$0xff]
        %v2867 = vld [vmem:[%s2682 + $0x5c0] sm:$0xff]
        %v2868 = vld [vmem:[%s2682 + $0x5c8] sm:$0xff]
        %v2869 = vld [vmem:[%s2682 + $0x5d0] sm:$0xff]
        %v2870 = vld [vmem:[%s2682 + $0x5d8] sm:$0xff]
        %v2871 = vld [vmem:[%s2682 + $0x5e0] sm:$0xff]
        %v2872 = vld [vmem:[%s2682 + $0x5e8] sm:$0xff]
        %v2873 = vld [vmem:[%s2682 + $0x5f0] sm:$0xff]
        %v2874 = vld [vmem:[%s2682 + $0x5f8] sm:$0xff]
        %v2875 = vld [vmem:[%s2682 + $0x600] sm:$0xff]
        %v2876 = vld [vmem:[%s2682 + $0x608] sm:$0xff]
        %v2877 = vld [vmem:[%s2682 + $0x610] sm:$0xff]
        %v2878 = vld [vmem:[%s2682 + $0x618] sm:$0xff]
        %v2879 = vld [vmem:[%s2682 + $0x620] sm:$0xff]
        %v2880 = vld [vmem:[%s2682 + $0x628] sm:$0xff]
        %v2881 = vld [vmem:[%s2682 + $0x630] sm:$0xff]
        %v2882 = vld [vmem:[%s2682 + $0x638] sm:$0xff]
        %v2883 = vld [vmem:[%s2682 + $0x640] sm:$0xff]
        %v2884 = vld [vmem:[%s2682 + $0x648] sm:$0xff]
        %v2885 = vld [vmem:[%s2682 + $0x650] sm:$0xff]
        %v2886 = vld [vmem:[%s2682 + $0x658] sm:$0xff]
        %v2887 = vld [vmem:[%s2682 + $0x660] sm:$0xff]
        %v2888 = vld [vmem:[%s2682 + $0x668] sm:$0xff]
        %v2889 = vld [vmem:[%s2682 + $0x670] sm:$0xff]
        %v2890 = vld [vmem:[%s2682 + $0x678] sm:$0xff]
        %v2891 = vld [vmem:[%s2682 + $0x680] sm:$0xff]
        %v2892 = vld [vmem:[%s2682 + $0x688] sm:$0xff]
        %v2893 = vld [vmem:[%s2682 + $0x690] sm:$0xff]
        %v2894 = vld [vmem:[%s2682 + $0x698] sm:$0xff]
        %v2895 = vld [vmem:[%s2682 + $0x6a0] sm:$0xff]
        %v2896 = vld [vmem:[%s2682 + $0x6a8] sm:$0xff]
        %v2897 = vld [vmem:[%s2682 + $0x6b0] sm:$0xff]
        %v2898 = vld [vmem:[%s2682 + $0x6b8] sm:$0xff]
        %v2899 = vld [vmem:[%s2682 + $0x6c0] sm:$0xff]
        %v2900 = vld [vmem:[%s2682 + $0x6c8] sm:$0xff]
        %v2901 = vld [vmem:[%s2682 + $0x6d0] sm:$0xff]
        %v2902 = vld [vmem:[%s2682 + $0x6d8] sm:$0xff]
        %v2903 = vld [vmem:[%s2682 + $0x6e0] sm:$0xff]
        %v2904 = vld [vmem:[%s2682 + $0x6e8] sm:$0xff]
        %v2905 = vld [vmem:[%s2682 + $0x6f0] sm:$0xff]
        %v2906 = vld [vmem:[%s2682 + $0x6f8] sm:$0xff]
        %v2907 = vld [vmem:[%s2682 + $0x700] sm:$0xff]
        %v2908 = vld [vmem:[%s2682 + $0x708] sm:$0xff]
        %v2909 = vld [vmem:[%s2682 + $0x710] sm:$0xff]
        %v2910 = vld [vmem:[%s2682 + $0x718] sm:$0xff]
        %v2911 = vld [vmem:[%s2682 + $0x720] sm:$0xff]
        %v2912 = vld [vmem:[%s2682 + $0x728] sm:$0xff]
        %v2913 = vld [vmem:[%s2682 + $0x730] sm:$0xff]
        %v2914 = vld [vmem:[%s2682 + $0x738] sm:$0xff]
        %v2915 = vld [vmem:[%s2682 + $0x740] sm:$0xff]
        %v2916 = vld [vmem:[%s2682 + $0x748] sm:$0xff]
        %v2917 = vld [vmem:[%s2682 + $0x750] sm:$0xff]
        %v2918 = vld [vmem:[%s2682 + $0x758] sm:$0xff]
        %v2919 = vld [vmem:[%s2682 + $0x760] sm:$0xff]
        %v2920 = vld [vmem:[%s2682 + $0x768] sm:$0xff]
        %v2921 = vld [vmem:[%s2682 + $0x770] sm:$0xff]
        %v2922 = vld [vmem:[%s2682 + $0x778] sm:$0xff]
        %v2923 = vld [vmem:[%s2682 + $0x780] sm:$0xff]
        %v2924 = vld [vmem:[%s2682 + $0x788] sm:$0xff]
        %v2925 = vld [vmem:[%s2682 + $0x790] sm:$0xff]
        %v2926 = vld [vmem:[%s2682 + $0x798] sm:$0xff]
        %v2927 = vld [vmem:[%s2682 + $0x7a0] sm:$0xff]
        %v2928 = vld [vmem:[%s2682 + $0x7a8] sm:$0xff]
        %v2929 = vld [vmem:[%s2682 + $0x7b0] sm:$0xff]
        %v2930 = vld [vmem:[%s2682 + $0x7b8] sm:$0xff]
        %v2931 = vld [vmem:[%s2682 + $0x7c0] sm:$0xff]
        %v2932 = vld [vmem:[%s2682 + $0x7c8] sm:$0xff]
        %v2933 = vld [vmem:[%s2682 + $0x7d0] sm:$0xff]
        %v2934 = vld [vmem:[%s2682 + $0x7d8] sm:$0xff]
        %v2935 = vld [vmem:[%s2682 + $0x7e0] sm:$0xff]
        %v2936 = vld [vmem:[%s2682 + $0x7e8] sm:$0xff]
        %v2937 = vld [vmem:[%s2682 + $0x7f0] sm:$0xff]
        %v2938 = vld [vmem:[%s2682 + $0x7f8] sm:$0xff]
        %v2939 = vld [vmem:[%s2682 + $0x800] sm:$0xff]
        %v2940 = vld [vmem:[%s2682 + $0x808] sm:$0xff]
        %v2941 = vld [vmem:[%s2682 + $0x810] sm:$0xff]
        %v2942 = vld [vmem:[%s2682 + $0x818] sm:$0xff]
        %v2943 = vld [vmem:[%s2682 + $0x820] sm:$0xff]
        %v2944 = vld [vmem:[%s2682 + $0x828] sm:$0xff]
        %v2945 = vld [vmem:[%s2682 + $0x830] sm:$0xff]
        %v2946 = vld [vmem:[%s2682 + $0x838] sm:$0xff]
        %v2947 = vld [vmem:[%s2682 + $0x840] sm:$0xff]
        %v2948 = vld [vmem:[%s2682 + $0x848] sm:$0xff]
        %v2949 = vld [vmem:[%s2682 + $0x850] sm:$0xff]
        %v2950 = vld [vmem:[%s2682 + $0x858] sm:$0xff]
        %v2951 = vld [vmem:[%s2682 + $0x860] sm:$0xff]
        %v2952 = vld [vmem:[%s2682 + $0x868] sm:$0xff]
        %v2953 = vld [vmem:[%s2682 + $0x870] sm:$0xff]
        %v2954 = vld [vmem:[%s2682 + $0x878] sm:$0xff]
        %v2955 = vld [vmem:[%s2682 + $0x880] sm:$0xff]
        %v2956 = vld [vmem:[%s2682 + $0x888] sm:$0xff]
        %v2957 = vld [vmem:[%s2682 + $0x890] sm:$0xff]
        %v2958 = vld [vmem:[%s2682 + $0x898] sm:$0xff]
        %v2959 = vld [vmem:[%s2682 + $0x8a0] sm:$0xff]
        %v2960 = vld [vmem:[%s2682 + $0x8a8] sm:$0xff]
        %v2961 = vld [vmem:[%s2682 + $0x8b0] sm:$0xff]
        %v2962 = vld [vmem:[%s2682 + $0x8b8] sm:$0xff]
        %v2963 = vld [vmem:[%s2682 + $0x8c0] sm:$0xff]
        %v2964 = vld [vmem:[%s2682 + $0x8c8] sm:$0xff]
        %v2965 = vld [vmem:[%s2682 + $0x8d0] sm:$0xff]
        %v2966 = vld [vmem:[%s2682 + $0x8d8] sm:$0xff]
        %v2967 = vld [vmem:[%s2682 + $0x8e0] sm:$0xff]
        %v2968 = vld [vmem:[%s2682 + $0x8e8] sm:$0xff]
        %v2969 = vld [vmem:[%s2682 + $0x8f0] sm:$0xff]
        %v2970 = vld [vmem:[%s2682 + $0x8f8] sm:$0xff]
        %v2971 = vld [vmem:[%s2682 + $0x900] sm:$0xff]
        %v2972 = vld [vmem:[%s2682 + $0x908] sm:$0xff]
        %v2973 = vld [vmem:[%s2682 + $0x910] sm:$0xff]
        %v2974 = vld [vmem:[%s2682 + $0x918] sm:$0xff]
        %v2975 = vld [vmem:[%s2682 + $0x920] sm:$0xff]
        %v2976 = vld [vmem:[%s2682 + $0x928] sm:$0xff]
        %v2977 = vld [vmem:[%s2682 + $0x930] sm:$0xff]
        %v2978 = vld [vmem:[%s2682 + $0x938] sm:$0xff]
        %v2979 = vld [vmem:[%s2682 + $0x940] sm:$0xff]
        %v2980 = vld [vmem:[%s2682 + $0x948] sm:$0xff]
        %v2981 = vld [vmem:[%s2682 + $0x950] sm:$0xff]
        %v2982 = vld [vmem:[%s2682 + $0x958] sm:$0xff]
        %v2983 = vld [vmem:[%s2682 + $0x960] sm:$0xff]
        %v2984 = vld [vmem:[%s2682 + $0x968] sm:$0xff]
        %v2985 = vld [vmem:[%s2682 + $0x970] sm:$0xff]
        %v2986 = vld [vmem:[%s2682 + $0x978] sm:$0xff]
        %v2987 = vld [vmem:[%s2682 + $0x980] sm:$0xff]
        %v2988 = vld [vmem:[%s2682 + $0x988] sm:$0xff]
        %v2989 = vld [vmem:[%s2682 + $0x990] sm:$0xff]
        %v2990 = vld [vmem:[%s2682 + $0x998] sm:$0xff]
        %v2991 = vld [vmem:[%s2682 + $0x9a0] sm:$0xff]
        %v2992 = vld [vmem:[%s2682 + $0x9a8] sm:$0xff]
        %v2993 = vld [vmem:[%s2682 + $0x9b0] sm:$0xff]
        %v2994 = vld [vmem:[%s2682 + $0x9b8] sm:$0xff]
        %v2995 = vld [vmem:[%s2682 + $0x9c0] sm:$0xff]
        %v2996 = vld [vmem:[%s2682 + $0x9c8] sm:$0xff]
        %v2997 = vld [vmem:[%s2682 + $0x9d0] sm:$0xff]
        %v2998 = vld [vmem:[%s2682 + $0x9d8] sm:$0xff]
        %v2999 = vld [vmem:[%s2682 + $0x9e0] sm:$0xff]
        %v3000 = vld [vmem:[%s2682 + $0x9e8] sm:$0xff]
        %v3001 = vld [vmem:[%s2682 + $0x9f0] sm:$0xff]
        %v3002 = vld [vmem:[%s2682 + $0x9f8] sm:$0xff]
        %v3003 = vld [vmem:[%s2682 + $0xa00] sm:$0xff]
        %v3004 = vld [vmem:[%s2682 + $0xa08] sm:$0xff]
        %v3005 = vld [vmem:[%s2682 + $0xa10] sm:$0xff]
        %v3006 = vld [vmem:[%s2682 + $0xa18] sm:$0xff]
        %v3007 = vld [vmem:[%s2682 + $0xa20] sm:$0xff]
        %v3008 = vld [vmem:[%s2682 + $0xa28] sm:$0xff]
        %v3009 = vld [vmem:[%s2682 + $0xa30] sm:$0xff]
        %v3010 = vld [vmem:[%s2682 + $0xa38] sm:$0xff]
        %v3011 = vld [vmem:[%s2682 + $0xa40] sm:$0xff]
        %v3012 = vld [vmem:[%s2682 + $0xa48] sm:$0xff]
        %v3013 = vld [vmem:[%s2682 + $0xa50] sm:$0xff]
        %v3014 = vld [vmem:[%s2682 + $0xa58] sm:$0xff]
        %v3015 = vld [vmem:[%s2682 + $0xa60] sm:$0xff]
        %v3016 = vld [vmem:[%s2682 + $0xa68] sm:$0xff]
        %v3017 = vld [vmem:[%s2682 + $0xa70] sm:$0xff]
        %v3018 = vld [vmem:[%s2682 + $0xa78] sm:$0xff]
        %v3019 = vld [vmem:[%s2682 + $0xa80] sm:$0xff]
        %v3020 = vld [vmem:[%s2682 + $0xa88] sm:$0xff]
        %v3021 = vld [vmem:[%s2682 + $0xa90] sm:$0xff]
        %v3022 = vld [vmem:[%s2682 + $0xa98] sm:$0xff]
        %v3023 = vld [vmem:[%s2682 + $0xaa0] sm:$0xff]
        %v3024 = vld [vmem:[%s2682 + $0xaa8] sm:$0xff]
        %v3025 = vld [vmem:[%s2682 + $0xab0] sm:$0xff]
        %v3026 = vld [vmem:[%s2682 + $0xab8] sm:$0xff]
        %v3027 = vld [vmem:[%s2682 + $0xac0] sm:$0xff]
        %v3028 = vld [vmem:[%s2682 + $0xac8] sm:$0xff]
        %v3029 = vld [vmem:[%s2682 + $0xad0] sm:$0xff]
        %v3030 = vld [vmem:[%s2682 + $0xad8] sm:$0xff]
        %v3031 = vld [vmem:[%s2682 + $0xae0] sm:$0xff]
        %v3032 = vld [vmem:[%s2682 + $0xae8] sm:$0xff]
        %v3033 = vld [vmem:[%s2682 + $0xaf0] sm:$0xff]
        %v3034 = vld [vmem:[%s2682 + $0xaf8] sm:$0xff]
        %v3035 = vld [vmem:[%s2682 + $0xb00] sm:$0xff]
        %v3036 = vld [vmem:[%s2682 + $0xb08] sm:$0xff]
        %v3037 = vld [vmem:[%s2682 + $0xb10] sm:$0xff]
        %v3038 = vld [vmem:[%s2682 + $0xb18] sm:$0xff]
        %v3039 = vld [vmem:[%s2682 + $0xb20] sm:$0xff]
        %v3040 = vld [vmem:[%s2682 + $0xb28] sm:$0xff]
        %v3041 = vld [vmem:[%s2682 + $0xb30] sm:$0xff]
        %v3042 = vld [vmem:[%s2682 + $0xb38] sm:$0xff]
        %v3043 = vld [vmem:[%s2682 + $0xb40] sm:$0xff]
        %v3044 = vld [vmem:[%s2682 + $0xb48] sm:$0xff]
        %v3045 = vld [vmem:[%s2682 + $0xb50] sm:$0xff]
        %v3046 = vld [vmem:[%s2682 + $0xb58] sm:$0xff]
        %v3047 = vld [vmem:[%s2682 + $0xb60] sm:$0xff]
        %v3048 = vld [vmem:[%s2682 + $0xb68] sm:$0xff]
        %v3049 = vld [vmem:[%s2682 + $0xb70] sm:$0xff]
        %v3050 = vld [vmem:[%s2682 + $0xb78] sm:$0xff]
        %v3051 = vld [vmem:[%s2682 + $0xb80] sm:$0xff]
        %v3052 = vld [vmem:[%s2682 + $0xb88] sm:$0xff]
        %v3053 = vld [vmem:[%s2682 + $0xb90] sm:$0xff]
        %v3054 = vld [vmem:[%s2682 + $0xb98] sm:$0xff]
        %v3055 = vld [vmem:[%s2682 + $0xba0] sm:$0xff]
        %v3056 = vld [vmem:[%s2682 + $0xba8] sm:$0xff]
        %v3057 = vld [vmem:[%s2682 + $0xbb0] sm:$0xff]
        %v3058 = vld [vmem:[%s2682 + $0xbb8] sm:$0xff]
        %v3059 = vld [vmem:[%s2682 + $0xbc0] sm:$0xff]
        %v3060 = vld [vmem:[%s2682 + $0xbc8] sm:$0xff]
        %v3061 = vld [vmem:[%s2682 + $0xbd0] sm:$0xff]
        %v3062 = vld [vmem:[%s2682 + $0xbd8] sm:$0xff]
        %v3063 = vld [vmem:[%s2682 + $0xbe0] sm:$0xff]
        %v3064 = vld [vmem:[%s2682 + $0xbe8] sm:$0xff]
        %v3065 = vld [vmem:[%s2682 + $0xbf0] sm:$0xff]
        %v3066 = vld [vmem:[%s2682 + $0xbf8] sm:$0xff]
        %v3067 = vld [vmem:[%s2682 + $0xc00] sm:$0xff]
        %v3068 = vld [vmem:[%s2682 + $0xc08] sm:$0xff]
        %v3069 = vld [vmem:[%s2682 + $0xc10] sm:$0xff]
        %v3070 = vld [vmem:[%s2682 + $0xc18] sm:$0xff]
        %v3071 = vld [vmem:[%s2682 + $0xc20] sm:$0xff]
        %v3072 = vld [vmem:[%s2682 + $0xc28] sm:$0xff]
        %v3073 = vld [vmem:[%s2682 + $0xc30] sm:$0xff]
        %v3074 = vld [vmem:[%s2682 + $0xc38] sm:$0xff]
        %v3075 = vld [vmem:[%s2682 + $0xc40] sm:$0xff]
        %v3076 = vld [vmem:[%s2682 + $0xc48] sm:$0xff]
        %v3077 = vld [vmem:[%s2682 + $0xc50] sm:$0xff]
        %v3078 = vld [vmem:[%s2682 + $0xc58] sm:$0xff]
        %v3079 = vld [vmem:[%s2682 + $0xc60] sm:$0xff]
        %v3080 = vld [vmem:[%s2682 + $0xc68] sm:$0xff]
        %v3081 = vld [vmem:[%s2682 + $0xc70] sm:$0xff]
        %v3082 = vld [vmem:[%s2682 + $0xc78] sm:$0xff]
        %v3083 = vld [vmem:[%s2682 + $0xc80] sm:$0xff]
        %v3084 = vld [vmem:[%s2682 + $0xc88] sm:$0xff]
        %v3085 = vld [vmem:[%s2682 + $0xc90] sm:$0xff]
        %v3086 = vld [vmem:[%s2682 + $0xc98] sm:$0xff]
        %v3087 = vld [vmem:[%s2682 + $0xca0] sm:$0xff]
        %v3088 = vld [vmem:[%s2682 + $0xca8] sm:$0xff]
        %v3089 = vld [vmem:[%s2682 + $0xcb0] sm:$0xff]
        %v3090 = vld [vmem:[%s2682 + $0xcb8] sm:$0xff]
        %v3091 = vld [vmem:[%s2682 + $0xcc0] sm:$0xff]
        %v3092 = vld [vmem:[%s2682 + $0xcc8] sm:$0xff]
        %v3093 = vld [vmem:[%s2682 + $0xcd0] sm:$0xff]
        %v3094 = vld [vmem:[%s2682 + $0xcd8] sm:$0xff]
        %v3095 = vld [vmem:[%s2682 + $0xce0] sm:$0xff]
        %v3096 = vld [vmem:[%s2682 + $0xce8] sm:$0xff]
        %v3097 = vld [vmem:[%s2682 + $0xcf0] sm:$0xff]
        %v3098 = vld [vmem:[%s2682 + $0xcf8] sm:$0xff]
        %v3099 = vld [vmem:[%s2682 + $0xd00] sm:$0xff]
        %v3100 = vld [vmem:[%s2682 + $0xd08] sm:$0xff]
        %v3101 = vld [vmem:[%s2682 + $0xd10] sm:$0xff]
        %v3102 = vld [vmem:[%s2682 + $0xd18] sm:$0xff]
        %v3103 = vld [vmem:[%s2682 + $0xd20] sm:$0xff]
        %v3104 = vld [vmem:[%s2682 + $0xd28] sm:$0xff]
        %v3105 = vld [vmem:[%s2682 + $0xd30] sm:$0xff]
        %v3106 = vld [vmem:[%s2682 + $0xd38] sm:$0xff]
        %v3107 = vld [vmem:[%s2682 + $0xd40] sm:$0xff]
        %v3108 = vld [vmem:[%s2682 + $0xd48] sm:$0xff]
        %v3109 = vld [vmem:[%s2682 + $0xd50] sm:$0xff]
        %v3110 = vld [vmem:[%s2682 + $0xd58] sm:$0xff]
        %v3111 = vld [vmem:[%s2682 + $0xd60] sm:$0xff]
        %v3112 = vld [vmem:[%s2682 + $0xd68] sm:$0xff]
        %v3113 = vld [vmem:[%s2682 + $0xd70] sm:$0xff]
        %v3114 = vld [vmem:[%s2682 + $0xd78] sm:$0xff]
        %v3115 = vld [vmem:[%s2682 + $0xd80] sm:$0xff]
        %v3116 = vld [vmem:[%s2682 + $0xd88] sm:$0xff]
        %v3117 = vld [vmem:[%s2682 + $0xd90] sm:$0xff]
        %v3118 = vld [vmem:[%s2682 + $0xd98] sm:$0xff]
        %v3119 = vld [vmem:[%s2682 + $0xda0] sm:$0xff]
        %v3120 = vld [vmem:[%s2682 + $0xda8] sm:$0xff]
        %v3121 = vld [vmem:[%s2682 + $0xdb0] sm:$0xff]
        %v3122 = vld [vmem:[%s2682 + $0xdb8] sm:$0xff]
        %v3123 = vld [vmem:[%s2682 + $0xdc0] sm:$0xff]
        %v3124 = vld [vmem:[%s2682 + $0xdc8] sm:$0xff]
        %v3125 = vld [vmem:[%s2682 + $0xdd0] sm:$0xff]
        %v3126 = vld [vmem:[%s2682 + $0xdd8] sm:$0xff]
        %v3127 = vld [vmem:[%s2682 + $0xde0] sm:$0xff]
        %v3128 = vld [vmem:[%s2682 + $0xde8] sm:$0xff]
        %v3129 = vld [vmem:[%s2682 + $0xdf0] sm:$0xff]
        %v3130 = vld [vmem:[%s2682 + $0xdf8] sm:$0xff]
        %v3131 = vld [vmem:[%s2682 + $0xe00] sm:$0xff]
        %v3132 = vld [vmem:[%s2682 + $0xe08] sm:$0xff]
        %v3133 = vld [vmem:[%s2682 + $0xe10] sm:$0xff]
        %v3134 = vld [vmem:[%s2682 + $0xe18] sm:$0xff]
        %v3135 = vld [vmem:[%s2682 + $0xe20] sm:$0xff]
        %v3136 = vld [vmem:[%s2682 + $0xe28] sm:$0xff]
        %v3137 = vld [vmem:[%s2682 + $0xe30] sm:$0xff]
        %v3138 = vld [vmem:[%s2682 + $0xe38] sm:$0xff]
        %v3139 = vld [vmem:[%s2682 + $0xe40] sm:$0xff]
        %v3140 = vld [vmem:[%s2682 + $0xe48] sm:$0xff]
        %v3141 = vld [vmem:[%s2682 + $0xe50] sm:$0xff]
        %v3142 = vld [vmem:[%s2682 + $0xe58] sm:$0xff]
        %v3143 = vld [vmem:[%s2682 + $0xe60] sm:$0xff]
        %v3144 = vld [vmem:[%s2682 + $0xe68] sm:$0xff]
        %v3145 = vld [vmem:[%s2682 + $0xe70] sm:$0xff]
        %v3146 = vld [vmem:[%s2682 + $0xe78] sm:$0xff]
        %v3147 = vld [vmem:[%s2682 + $0xe80] sm:$0xff]
        %v3148 = vld [vmem:[%s2682 + $0xe88] sm:$0xff]
        %v3149 = vld [vmem:[%s2682 + $0xe90] sm:$0xff]
        %v3150 = vld [vmem:[%s2682 + $0xe98] sm:$0xff]
        %v3151 = vld [vmem:[%s2682 + $0xea0] sm:$0xff]
        %v3152 = vld [vmem:[%s2682 + $0xea8] sm:$0xff]
        %v3153 = vld [vmem:[%s2682 + $0xeb0] sm:$0xff]
        %v3154 = vld [vmem:[%s2682 + $0xeb8] sm:$0xff]
        %v3155 = vld [vmem:[%s2682 + $0xec0] sm:$0xff]
        %v3156 = vld [vmem:[%s2682 + $0xec8] sm:$0xff]
        %v3157 = vld [vmem:[%s2682 + $0xed0] sm:$0xff]
        %v3158 = vld [vmem:[%s2682 + $0xed8] sm:$0xff]
        %v3159 = vld [vmem:[%s2682 + $0xee0] sm:$0xff]
        %v3160 = vld [vmem:[%s2682 + $0xee8] sm:$0xff]
        %v3161 = vld [vmem:[%s2682 + $0xef0] sm:$0xff]
        %v3162 = vld [vmem:[%s2682 + $0xef8] sm:$0xff]
        %v3163 = vld [vmem:[%s2682 + $0xf00] sm:$0xff]
        %v3164 = vld [vmem:[%s2682 + $0xf08] sm:$0xff]
        %v3165 = vld [vmem:[%s2682 + $0xf10] sm:$0xff]
        %v3166 = vld [vmem:[%s2682 + $0xf18] sm:$0xff]
        %v3167 = vld [vmem:[%s2682 + $0xf20] sm:$0xff]
        %v3168 = vld [vmem:[%s2682 + $0xf28] sm:$0xff]
        %v3169 = vld [vmem:[%s2682 + $0xf30] sm:$0xff]
        %v3170 = vld [vmem:[%s2682 + $0xf38] sm:$0xff]
        %v3171 = vld [vmem:[%s2682 + $0xf40] sm:$0xff]
        %v3172 = vld [vmem:[%s2682 + $0xf48] sm:$0xff]
        %v3173 = vld [vmem:[%s2682 + $0xf50] sm:$0xff]
        %v3174 = vld [vmem:[%s2682 + $0xf58] sm:$0xff]
        %v3175 = vld [vmem:[%s2682 + $0xf60] sm:$0xff]
        %v3176 = vld [vmem:[%s2682 + $0xf68] sm:$0xff]
        %v3177 = vld [vmem:[%s2682 + $0xf70] sm:$0xff]
        %v3178 = vld [vmem:[%s2682 + $0xf78] sm:$0xff]
        %v3179 = vld [vmem:[%s2682 + $0xf80] sm:$0xff]
        %v3180 = vld [vmem:[%s2682 + $0xf88] sm:$0xff]
        %v3181 = vld [vmem:[%s2682 + $0xf90] sm:$0xff]
        %v3182 = vld [vmem:[%s2682 + $0xf98] sm:$0xff]
        %v3183 = vld [vmem:[%s2682 + $0xfa0] sm:$0xff]
        %v3184 = vld [vmem:[%s2682 + $0xfa8] sm:$0xff]
        %v3185 = vld [vmem:[%s2682 + $0xfb0] sm:$0xff]
        %v3186 = vld [vmem:[%s2682 + $0xfb8] sm:$0xff]
        %v3187 = vld [vmem:[%s2682 + $0xfc0] sm:$0xff]
        %v3188 = vld [vmem:[%s2682 + $0xfc8] sm:$0xff]
        %v3189 = vld [vmem:[%s2682 + $0xfd0] sm:$0xff]
        %v3190 = vld [vmem:[%s2682 + $0xfd8] sm:$0xff]
        %v3191 = vld [vmem:[%s2682 + $0xfe0] sm:$0xff]
        %v3192 = vld [vmem:[%s2682 + $0xfe8] sm:$0xff]
        %v3193 = vld [vmem:[%s2682 + $0xff0] sm:$0xff]
        %v3194 = vld [vmem:[%s2682 + $0xff8] sm:$0xff]
        %v3195 = vld [vmem:[%s2682 + $0x1000] sm:$0xff]
        %v3196 = vld [vmem:[%s2682 + $0x1008] sm:$0xff]
        %v3197 = vld [vmem:[%s2682 + $0x1010] sm:$0xff]
        %v3198 = vld [vmem:[%s2682 + $0x1018] sm:$0xff]
        %v3199 = vld [vmem:[%s2682 + $0x1020] sm:$0xff]
        %v3200 = vld [vmem:[%s2682 + $0x1028] sm:$0xff]
        %v3201 = vld [vmem:[%s2682 + $0x1030] sm:$0xff]
        %v3202 = vld [vmem:[%s2682 + $0x1038] sm:$0xff]
        %v3203 = vld [vmem:[%s2682 + $0x1040] sm:$0xff]
        %v3204 = vld [vmem:[%s2682 + $0x1048] sm:$0xff]
        %v3205 = vld [vmem:[%s2682 + $0x1050] sm:$0xff]
        %v3206 = vld [vmem:[%s2682 + $0x1058] sm:$0xff]
        %v3207 = vld [vmem:[%s2682 + $0x1060] sm:$0xff]
        %v3208 = vld [vmem:[%s2682 + $0x1068] sm:$0xff]
        %v3209 = vld [vmem:[%s2682 + $0x1070] sm:$0xff]
        %v3210 = vld [vmem:[%s2682 + $0x1078] sm:$0xff]
        %v3211 = vld [vmem:[%s2682 + $0x1080] sm:$0xff]
        %v3212 = vld [vmem:[%s2682 + $0x1088] sm:$0xff]
        %v3213 = vld [vmem:[%s2682 + $0x1090] sm:$0xff]
        %v3214 = vld [vmem:[%s2682 + $0x1098] sm:$0xff]
        %v3215 = vld [vmem:[%s2682 + $0x10a0] sm:$0xff]
        %v3216 = vld [vmem:[%s2682 + $0x10a8] sm:$0xff]
        %v3217 = vld [vmem:[%s2682 + $0x10b0] sm:$0xff]
        %v3218 = vld [vmem:[%s2682 + $0x10b8] sm:$0xff]
        %v3219 = vld [vmem:[%s2682 + $0x10c0] sm:$0xff]
        %v3220 = vld [vmem:[%s2682 + $0x10c8] sm:$0xff]
        %v3221 = vld [vmem:[%s2682 + $0x10d0] sm:$0xff]
        %v3222 = vld [vmem:[%s2682 + $0x10d8] sm:$0xff]
        %v3223 = vld [vmem:[%s2682 + $0x10e0] sm:$0xff]
        %v3224 = vld [vmem:[%s2682 + $0x10e8] sm:$0xff]
        %v3225 = vld [vmem:[%s2682 + $0x10f0] sm:$0xff]
        %v3226 = vld [vmem:[%s2682 + $0x10f8] sm:$0xff]
        %v3227 = vld [vmem:[%s2682 + $0x1100] sm:$0xff]
        %v3228 = vld [vmem:[%s2682 + $0x1108] sm:$0xff]
        %v3229 = vld [vmem:[%s2682 + $0x1110] sm:$0xff]
        %v3230 = vld [vmem:[%s2682 + $0x1118] sm:$0xff]
        %v3231 = vld [vmem:[%s2682 + $0x1120] sm:$0xff]
        %v3232 = vld [vmem:[%s2682 + $0x1128] sm:$0xff]
        %v3233 = vld [vmem:[%s2682 + $0x1130] sm:$0xff]
        %v3234 = vld [vmem:[%s2682 + $0x1138] sm:$0xff]
        %v3235 = vld [vmem:[%s2682 + $0x1140] sm:$0xff]
        %v3236 = vld [vmem:[%s2682 + $0x1148] sm:$0xff]
        %v3237 = vld [vmem:[%s2682 + $0x1150] sm:$0xff]
        %v3238 = vld [vmem:[%s2682 + $0x1158] sm:$0xff]
        %v3239 = vld [vmem:[%s2682 + $0x1160] sm:$0xff]
        %v3240 = vld [vmem:[%s2682 + $0x1168] sm:$0xff]
        %v3241 = vld [vmem:[%s2682 + $0x1170] sm:$0xff]
        %v3242 = vld [vmem:[%s2682 + $0x1178] sm:$0xff]
        %v3243 = vld [vmem:[%s2682 + $0x1180] sm:$0xff]
        %v3244 = vld [vmem:[%s2682 + $0x1188] sm:$0xff]
        %v3245 = vld [vmem:[%s2682 + $0x1190] sm:$0xff]
        %v3246 = vld [vmem:[%s2682 + $0x1198] sm:$0xff]
        %v3247 = vld [vmem:[%s2682 + $0x11a0] sm:$0xff]
        %v3248 = vld [vmem:[%s2682 + $0x11a8] sm:$0xff]
        %v3249 = vld [vmem:[%s2682 + $0x11b0] sm:$0xff]
        %v3250 = vld [vmem:[%s2682 + $0x11b8] sm:$0xff]
        %v3251 = vld [vmem:[%s2682 + $0x11c0] sm:$0xff]
        %v3252 = vld [vmem:[%s2682 + $0x11c8] sm:$0xff]
        %v3253 = vld [vmem:[%s2682 + $0x11d0] sm:$0xff]
        %v3254 = vld [vmem:[%s2682 + $0x11d8] sm:$0xff]
        %v3255 = vld [vmem:[%s2682 + $0x11e0] sm:$0xff]
        %v3256 = vld [vmem:[%s2682 + $0x11e8] sm:$0xff]
        %v3257 = vld [vmem:[%s2682 + $0x11f0] sm:$0xff]
        %v3258 = vld [vmem:[%s2682 + $0x11f8] sm:$0xff]
        %v3259 = vld [vmem:[%s2682 + $0x1200] sm:$0xff]
        %v3260 = vld [vmem:[%s2682 + $0x1208] sm:$0xff]
        %v3261 = vld [vmem:[%s2682 + $0x1210] sm:$0xff]
        %v3262 = vld [vmem:[%s2682 + $0x1218] sm:$0xff]
        %v3263 = vld [vmem:[%s2682 + $0x1220] sm:$0xff]
        %v3264 = vld [vmem:[%s2682 + $0x1228] sm:$0xff]
        %v3265 = vld [vmem:[%s2682 + $0x1230] sm:$0xff]
        %v3266 = vld [vmem:[%s2682 + $0x1238] sm:$0xff]
        %v3267 = vld [vmem:[%s2682 + $0x1240] sm:$0xff]
        %v3268 = vld [vmem:[%s2682 + $0x1248] sm:$0xff]
        %v3269 = vld [vmem:[%s2682 + $0x1250] sm:$0xff]
        %v3270 = vld [vmem:[%s2682 + $0x1258] sm:$0xff]
        %v3271 = vld [vmem:[%s2682 + $0x1260] sm:$0xff]
        %v3272 = vld [vmem:[%s2682 + $0x1268] sm:$0xff]
        %v3273 = vld [vmem:[%s2682 + $0x1270] sm:$0xff]
        %v3274 = vld [vmem:[%s2682 + $0x1278] sm:$0xff]
        %v3275 = vld [vmem:[%s2682 + $0x1280] sm:$0xff]
        %v3276 = vld [vmem:[%s2682 + $0x1288] sm:$0xff]
        %v3277 = vld [vmem:[%s2682 + $0x1290] sm:$0xff]
        %v3278 = vld [vmem:[%s2682 + $0x1298] sm:$0xff]
        %v3279 = vld [vmem:[%s2682 + $0x12a0] sm:$0xff]
        %v3280 = vld [vmem:[%s2682 + $0x12a8] sm:$0xff]
        %v3281 = vld [vmem:[%s2682 + $0x12b0] sm:$0xff]
        %v3282 = vld [vmem:[%s2682 + $0x12b8] sm:$0xff]
        %v3283 = vld [vmem:[%s2682 + $0x12c0] sm:$0xff]
        %v3284 = vld [vmem:[%s2682 + $0x12c8] sm:$0xff]
        %v3285 = vld [vmem:[%s2682 + $0x12d0] sm:$0xff]
        %v3286 = vld [vmem:[%s2682 + $0x12d8] sm:$0xff]
        %v3287 = vld [vmem:[%s2682 + $0x12e0] sm:$0xff]
        %v3288 = vld [vmem:[%s2682 + $0x12e8] sm:$0xff]
        %v3289 = vld [vmem:[%s2682 + $0x12f0] sm:$0xff]
        %v3290 = vld [vmem:[%s2682 + $0x12f8] sm:$0xff]
        %v3291 = vld [vmem:[%s2682 + $0x1300] sm:$0xff]
        %v3292 = vld [vmem:[%s2682 + $0x1308] sm:$0xff]
        %v3293 = vld [vmem:[%s2682 + $0x1310] sm:$0xff]
        %v3294 = vld [vmem:[%s2682 + $0x1318] sm:$0xff]
        %v3295 = vld [vmem:[%s2682 + $0x1320] sm:$0xff]
        %v3296 = vld [vmem:[%s2682 + $0x1328] sm:$0xff]
        %v3297 = vld [vmem:[%s2682 + $0x1330] sm:$0xff]
        %v3298 = vld [vmem:[%s2682 + $0x1338] sm:$0xff]
        %v3299 = vld [vmem:[%s2682 + $0x1340] sm:$0xff]
        %v3300 = vld [vmem:[%s2682 + $0x1348] sm:$0xff]
        %v3301 = vld [vmem:[%s2682 + $0x1350] sm:$0xff]
        %v3302 = vld [vmem:[%s2682 + $0x1358] sm:$0xff]
        %v3303 = vld [vmem:[%s2682 + $0x1360] sm:$0xff]
        %v3304 = vld [vmem:[%s2682 + $0x1368] sm:$0xff]
        %v3305 = vld [vmem:[%s2682 + $0x1370] sm:$0xff]
        %v3306 = vld [vmem:[%s2682 + $0x1378] sm:$0xff]
        %v3307 = vld [vmem:[%s2682 + $0x1380] sm:$0xff]
        %v3308 = vld [vmem:[%s2682 + $0x1388] sm:$0xff]
        %v3309 = vld [vmem:[%s2682 + $0x1390] sm:$0xff]
        %v3310 = vld [vmem:[%s2682 + $0x1398] sm:$0xff]
        %v3311 = vld [vmem:[%s2682 + $0x13a0] sm:$0xff]
        %v3312 = vld [vmem:[%s2682 + $0x13a8] sm:$0xff]
        %v3313 = vld [vmem:[%s2682 + $0x13b0] sm:$0xff]
        %v3314 = vld [vmem:[%s2682 + $0x13b8] sm:$0xff]
        %v3315 = vld [vmem:[%s2682 + $0x13c0] sm:$0xff]
        %v3316 = vld [vmem:[%s2682 + $0x13c8] sm:$0xff]
        %v3317 = vld [vmem:[%s2682 + $0x13d0] sm:$0xff]
        %v3318 = vld [vmem:[%s2682 + $0x13d8] sm:$0xff]
        %v3319 = vld [vmem:[%s2682 + $0x13e0] sm:$0xff]
        %v3320 = vld [vmem:[%s2682 + $0x13e8] sm:$0xff]
        %v3321 = vld [vmem:[%s2682 + $0x13f0] sm:$0xff]
        %v3322 = vld [vmem:[%s2682 + $0x13f8] sm:$0xff]
        %v3323 = vld [vmem:[%s2682 + $0x1400] sm:$0xff]
        %v3324 = vld [vmem:[%s2682 + $0x1408] sm:$0xff]
        %v3325 = vld [vmem:[%s2682 + $0x1410] sm:$0xff]
        %v3326 = vld [vmem:[%s2682 + $0x1418] sm:$0xff]
        %v3327 = vld [vmem:[%s2682 + $0x1420] sm:$0xff]
        %v3328 = vld [vmem:[%s2682 + $0x1428] sm:$0xff]
        %v3329 = vld [vmem:[%s2682 + $0x1430] sm:$0xff]
        %v3330 = vld [vmem:[%s2682 + $0x1438] sm:$0xff]
        %v3331 = vld [vmem:[%s2682 + $0x1440] sm:$0xff]
        %v3332 = vld [vmem:[%s2682 + $0x1448] sm:$0xff]
        %v3333 = vld [vmem:[%s2682 + $0x1450] sm:$0xff]
        %v3334 = vld [vmem:[%s2682 + $0x1458] sm:$0xff]
        %v3335 = vld [vmem:[%s2682 + $0x1460] sm:$0xff]
        %v3336 = vld [vmem:[%s2682 + $0x1468] sm:$0xff]
        %v3337 = vld [vmem:[%s2682 + $0x1470] sm:$0xff]
        %v3338 = vld [vmem:[%s2682 + $0x1478] sm:$0xff]
        %v3339 = vld [vmem:[%s2682 + $0x1480] sm:$0xff]
        %v3340 = vld [vmem:[%s2682 + $0x1488] sm:$0xff]
        %v3341 = vld [vmem:[%s2682 + $0x1490] sm:$0xff]
        %v3342 = vld [vmem:[%s2682 + $0x1498] sm:$0xff]
        %v3343 = vld [vmem:[%s2682 + $0x14a0] sm:$0xff]
        %v3344 = vld [vmem:[%s2682 + $0x14a8] sm:$0xff]
        %v3345 = vld [vmem:[%s2682 + $0x14b0] sm:$0xff]
        %v3346 = vld [vmem:[%s2682 + $0x14b8] sm:$0xff]
        %v3347 = vld [vmem:[%s2682 + $0x14c0] sm:$0xff]
        %v3348 = vld [vmem:[%s2682 + $0x14c8] sm:$0xff]
        %v3349 = vld [vmem:[%s2682 + $0x14d0] sm:$0xff]
        %v3350 = vld [vmem:[%s2682 + $0x14d8] sm:$0xff]
        %v3351 = vld [vmem:[%s2682 + $0x14e0] sm:$0xff]
        %v3352 = vld [vmem:[%s2682 + $0x14e8] sm:$0xff]
        %v3353 = vld [vmem:[%s2682 + $0x14f0] sm:$0xff]
        %v3354 = vld [vmem:[%s2682 + $0x14f8] sm:$0xff]
        %v3355 = vld [vmem:[%s2682 + $0x1500] sm:$0xff]
        %v3356 = vld [vmem:[%s2682 + $0x1508] sm:$0xff]
        %v3357 = vld [vmem:[%s2682 + $0x1510] sm:$0xff]
        %v3358 = vld [vmem:[%s2682 + $0x1518] sm:$0xff]
        %v3359 = vld [vmem:[%s2682 + $0x1520] sm:$0xff]
        %v3360 = vld [vmem:[%s2682 + $0x1528] sm:$0xff]
        %v3361 = vld [vmem:[%s2682 + $0x1530] sm:$0xff]
        %v3362 = vld [vmem:[%s2682 + $0x1538] sm:$0xff]
        %v3363 = vld [vmem:[%s2682 + $0x1540] sm:$0xff]
        %v3364 = vld [vmem:[%s2682 + $0x1548] sm:$0xff]
        %v3365 = vld [vmem:[%s2682 + $0x1550] sm:$0xff]
        %v3366 = vld [vmem:[%s2682 + $0x1558] sm:$0xff]
        %v3367 = vld [vmem:[%s2682 + $0x1560] sm:$0xff]
        %v3368 = vld [vmem:[%s2682 + $0x1568] sm:$0xff]
        %v3369 = vld [vmem:[%s2682 + $0x1570] sm:$0xff]
        %v3370 = vld [vmem:[%s2682 + $0x1578] sm:$0xff]
        %v3371 = vld [vmem:[%s2682 + $0x1580] sm:$0xff]
        %v3372 = vld [vmem:[%s2682 + $0x1588] sm:$0xff]
        %v3373 = vld [vmem:[%s2682 + $0x1590] sm:$0xff]
        %v3374 = vld [vmem:[%s2682 + $0x1598] sm:$0xff]
        %v3375 = vld [vmem:[%s2682 + $0x15a0] sm:$0xff]
        %v3376 = vld [vmem:[%s2682 + $0x15a8] sm:$0xff]
        %v3377 = vld [vmem:[%s2682 + $0x15b0] sm:$0xff]
        %v3378 = vld [vmem:[%s2682 + $0x15b8] sm:$0xff]
        %v3379 = vld [vmem:[%s2682 + $0x15c0] sm:$0xff]
        %v3380 = vld [vmem:[%s2682 + $0x15c8] sm:$0xff]
        %v3381 = vld [vmem:[%s2682 + $0x15d0] sm:$0xff]
        %v3382 = vld [vmem:[%s2682 + $0x15d8] sm:$0xff]
        %v3383 = vld [vmem:[%s2682 + $0x15e0] sm:$0xff]
        %v3384 = vld [vmem:[%s2682 + $0x15e8] sm:$0xff]
        %v3385 = vld [vmem:[%s2682 + $0x15f0] sm:$0xff]
        %v3386 = vld [vmem:[%s2682 + $0x15f8] sm:$0xff]
        %v3387 = vld [vmem:[%s2682 + $0x1600] sm:$0xff]
        %v3388 = vld [vmem:[%s2682 + $0x1608] sm:$0xff]
        %v3389 = vld [vmem:[%s2682 + $0x1610] sm:$0xff]
        %v3390 = vld [vmem:[%s2682 + $0x1618] sm:$0xff]
        %v3391 = vld [vmem:[%s2682 + $0x1620] sm:$0xff]
        %v3392 = vld [vmem:[%s2682 + $0x1628] sm:$0xff]
        %v3393 = vld [vmem:[%s2682 + $0x1630] sm:$0xff]
        %v3394 = vld [vmem:[%s2682 + $0x1638] sm:$0xff]
        %v3395 = vld [vmem:[%s2682 + $0x1640] sm:$0xff]
        %v3396 = vld [vmem:[%s2682 + $0x1648] sm:$0xff]
        %v3397 = vld [vmem:[%s2682 + $0x1650] sm:$0xff]
        %v3398 = vld [vmem:[%s2682 + $0x1658] sm:$0xff]
        %v3399 = vld [vmem:[%s2682 + $0x1660] sm:$0xff]
        %v3400 = vld [vmem:[%s2682 + $0x1668] sm:$0xff]
        %v3401 = vld [vmem:[%s2682 + $0x1670] sm:$0xff]
        %v3402 = vld [vmem:[%s2682 + $0x1678] sm:$0xff]
        %v3403 = vld [vmem:[%s2682 + $0x1680] sm:$0xff]
        %v3404 = vld [vmem:[%s2682 + $0x1688] sm:$0xff]
        %v3405 = vld [vmem:[%s2682 + $0x1690] sm:$0xff]
        %v3406 = vld [vmem:[%s2682 + $0x1698] sm:$0xff]
        %v3407 = vld [vmem:[%s2682 + $0x16a0] sm:$0xff]
        %v3408 = vld [vmem:[%s2682 + $0x16a8] sm:$0xff]
        %v3409 = vld [vmem:[%s2682 + $0x16b0] sm:$0xff]
        %v3410 = vld [vmem:[%s2682 + $0x16b8] sm:$0xff]
        %v3411 = vld [vmem:[%s2682 + $0x16c0] sm:$0xff]
        %v3412 = vld [vmem:[%s2682 + $0x16c8] sm:$0xff]
        %v3413 = vld [vmem:[%s2682 + $0x16d0] sm:$0xff]
        %v3414 = vld [vmem:[%s2682 + $0x16d8] sm:$0xff]
        %v3415 = vld [vmem:[%s2682 + $0x16e0] sm:$0xff]
        %v3416 = vld [vmem:[%s2682 + $0x16e8] sm:$0xff]
        %v3417 = vld [vmem:[%s2682 + $0x16f0] sm:$0xff]
        %v3418 = vld [vmem:[%s2682 + $0x16f8] sm:$0xff]
        %v3419 = vld [vmem:[%s2682 + $0x1700] sm:$0xff]
        %v3420 = vld [vmem:[%s2682 + $0x1708] sm:$0xff]
        %v3421 = vld [vmem:[%s2682 + $0x1710] sm:$0xff]
        %v3422 = vld [vmem:[%s2682 + $0x1718] sm:$0xff]
        %v3423 = vld [vmem:[%s2682 + $0x1720] sm:$0xff]
        %v3424 = vld [vmem:[%s2682 + $0x1728] sm:$0xff]
        %v3425 = vld [vmem:[%s2682 + $0x1730] sm:$0xff]
        %v3426 = vld [vmem:[%s2682 + $0x1738] sm:$0xff]
        %v3427 = vld [vmem:[%s2682 + $0x1740] sm:$0xff]
        %v3428 = vld [vmem:[%s2682 + $0x1748] sm:$0xff]
        %v3429 = vld [vmem:[%s2682 + $0x1750] sm:$0xff]
        %v3430 = vld [vmem:[%s2682 + $0x1758] sm:$0xff]
        %v3431 = vld [vmem:[%s2682 + $0x1760] sm:$0xff]
        %v3432 = vld [vmem:[%s2682 + $0x1768] sm:$0xff]
        %v3433 = vld [vmem:[%s2682 + $0x1770] sm:$0xff]
        %v3434 = vld [vmem:[%s2682 + $0x1778] sm:$0xff]
        %v3435 = vld [vmem:[%s2682 + $0x1780] sm:$0xff]
        %v3436 = vld [vmem:[%s2682 + $0x1788] sm:$0xff]
        %v3437 = vld [vmem:[%s2682 + $0x1790] sm:$0xff]
        %v3438 = vld [vmem:[%s2682 + $0x1798] sm:$0xff]
        %v3439 = vld [vmem:[%s2682 + $0x17a0] sm:$0xff]
        %v3440 = vld [vmem:[%s2682 + $0x17a8] sm:$0xff]
        %v3441 = vld [vmem:[%s2682 + $0x17b0] sm:$0xff]
        %v3442 = vld [vmem:[%s2682 + $0x17b8] sm:$0xff]
        %v3443 = vld [vmem:[%s2682 + $0x17c0] sm:$0xff]
        %v3444 = vld [vmem:[%s2682 + $0x17c8] sm:$0xff]
        %v3445 = vld [vmem:[%s2682 + $0x17d0] sm:$0xff]
        %v3446 = vld [vmem:[%s2682 + $0x17d8] sm:$0xff]
        %v3447 = vld [vmem:[%s2682 + $0x17e0] sm:$0xff]
        %v3448 = vld [vmem:[%s2682 + $0x17e8] sm:$0xff]
        %v3449 = vld [vmem:[%s2682 + $0x17f0] sm:$0xff]
        %v3450 = vld [vmem:[%s2682 + $0x17f8] sm:$0xff]
        %v3451 = vld [vmem:[%s2682 + $0x1800] sm:$0xff]
        %v3452 = vld [vmem:[%s2682 + $0x1808] sm:$0xff]
        %v3453 = vld [vmem:[%s2682 + $0x1810] sm:$0xff]
        %v3454 = vld [vmem:[%s2682 + $0x1818] sm:$0xff]
        %v3455 = vld [vmem:[%s2682 + $0x1820] sm:$0xff]
        %v3456 = vld [vmem:[%s2682 + $0x1828] sm:$0xff]
        %v3457 = vld [vmem:[%s2682 + $0x1830] sm:$0xff]
        %v3458 = vld [vmem:[%s2682 + $0x1838] sm:$0xff]
        %v3459 = vld [vmem:[%s2682 + $0x1840] sm:$0xff]
        %v3460 = vld [vmem:[%s2682 + $0x1848] sm:$0xff]
        %v3461 = vld [vmem:[%s2682 + $0x1850] sm:$0xff]
        %v3462 = vld [vmem:[%s2682 + $0x1858] sm:$0xff]
        %v3463 = vld [vmem:[%s2682 + $0x1860] sm:$0xff]
        %v3464 = vld [vmem:[%s2682 + $0x1868] sm:$0xff]
        %v3465 = vld [vmem:[%s2682 + $0x1870] sm:$0xff]
        %v3466 = vld [vmem:[%s2682 + $0x1878] sm:$0xff]
        %v3467 = vld [vmem:[%s2682 + $0x1880] sm:$0xff]
        %v3468 = vld [vmem:[%s2682 + $0x1888] sm:$0xff]
        %v3469 = vld [vmem:[%s2682 + $0x1890] sm:$0xff]
        %v3470 = vld [vmem:[%s2682 + $0x1898] sm:$0xff]
        %v3471 = vld [vmem:[%s2682 + $0x18a0] sm:$0xff]
        %v3472 = vld [vmem:[%s2682 + $0x18a8] sm:$0xff]
        %v3473 = vld [vmem:[%s2682 + $0x18b0] sm:$0xff]
        %v3474 = vld [vmem:[%s2682 + $0x18b8] sm:$0xff]
        %v3475 = vld [vmem:[%s2682 + $0x18c0] sm:$0xff]
        %v3476 = vld [vmem:[%s2682 + $0x18c8] sm:$0xff]
        %v3477 = vld [vmem:[%s2682 + $0x18d0] sm:$0xff]
        %v3478 = vld [vmem:[%s2682 + $0x18d8] sm:$0xff]
        %v3479 = vld [vmem:[%s2682 + $0x18e0] sm:$0xff]
        %v3480 = vld [vmem:[%s2682 + $0x18e8] sm:$0xff]
        %v3481 = vld [vmem:[%s2682 + $0x18f0] sm:$0xff]
        %v3482 = vld [vmem:[%s2682 + $0x18f8] sm:$0xff]
        %v3483 = vld [vmem:[%s2682 + $0x1900] sm:$0xff]
        %v3484 = vld [vmem:[%s2682 + $0x1908] sm:$0xff]
        %v3485 = vld [vmem:[%s2682 + $0x1910] sm:$0xff]
        %v3486 = vld [vmem:[%s2682 + $0x1918] sm:$0xff]
        %v3487 = vld [vmem:[%s2682 + $0x1920] sm:$0xff]
        %v3488 = vld [vmem:[%s2682 + $0x1928] sm:$0xff]
        %v3489 = vld [vmem:[%s2682 + $0x1930] sm:$0xff]
        %v3490 = vld [vmem:[%s2682 + $0x1938] sm:$0xff]
        %v3491 = vld [vmem:[%s2682 + $0x1940] sm:$0xff]
        %v3492 = vld [vmem:[%s2682 + $0x1948] sm:$0xff]
        %v3493 = vld [vmem:[%s2682 + $0x1950] sm:$0xff]
        %v3494 = vld [vmem:[%s2682 + $0x1958] sm:$0xff]
        %v3495 = vld [vmem:[%s2682 + $0x1960] sm:$0xff]
        %v3496 = vld [vmem:[%s2682 + $0x1968] sm:$0xff]
        %v3497 = vld [vmem:[%s2682 + $0x1970] sm:$0xff]
        %v3498 = vld [vmem:[%s2682 + $0x1978] sm:$0xff]
        %v3499 = vld [vmem:[%s2682 + $0x1980] sm:$0xff]
        %v3500 = vld [vmem:[%s2682 + $0x1988] sm:$0xff]
        %v3501 = vld [vmem:[%s2682 + $0x1990] sm:$0xff]
        %v3502 = vld [vmem:[%s2682 + $0x1998] sm:$0xff]
        %v3503 = vld [vmem:[%s2682 + $0x19a0] sm:$0xff]
        %v3504 = vld [vmem:[%s2682 + $0x19a8] sm:$0xff]
        %v3505 = vld [vmem:[%s2682 + $0x19b0] sm:$0xff]
        %v3506 = vld [vmem:[%s2682 + $0x19b8] sm:$0xff]
        %v3507 = vld [vmem:[%s2682 + $0x19c0] sm:$0xff]
        %v3508 = vld [vmem:[%s2682 + $0x19c8] sm:$0xff]
        %v3509 = vld [vmem:[%s2682 + $0x19d0] sm:$0xff]
        %v3510 = vld [vmem:[%s2682 + $0x19d8] sm:$0xff]
        %v3511 = vld [vmem:[%s2682 + $0x19e0] sm:$0xff]
        %v3512 = vld [vmem:[%s2682 + $0x19e8] sm:$0xff]
        %v3513 = vld [vmem:[%s2682 + $0x19f0] sm:$0xff]
        %v3514 = vld [vmem:[%s2682 + $0x19f8] sm:$0xff]
        %v3515 = vld [vmem:[%s2682 + $0x1a00] sm:$0xff]
        %v3516 = vld [vmem:[%s2682 + $0x1a08] sm:$0xff]
        %v3517 = vld [vmem:[%s2682 + $0x1a10] sm:$0xff]
        %v3518 = vld [vmem:[%s2682 + $0x1a18] sm:$0xff]
        %v3519 = vld [vmem:[%s2682 + $0x1a20] sm:$0xff]
        %v3520 = vld [vmem:[%s2682 + $0x1a28] sm:$0xff]
        %v3521 = vld [vmem:[%s2682 + $0x1a30] sm:$0xff]
        %v3522 = vld [vmem:[%s2682 + $0x1a38] sm:$0xff]
        %v3523 = vld [vmem:[%s2682 + $0x1a40] sm:$0xff]
        %v3524 = vld [vmem:[%s2682 + $0x1a48] sm:$0xff]
        %v3525 = vld [vmem:[%s2682 + $0x1a50] sm:$0xff]
        %v3526 = vld [vmem:[%s2682 + $0x1a58] sm:$0xff]
        %v3527 = vld [vmem:[%s2682 + $0x1a60] sm:$0xff]
        %v3528 = vld [vmem:[%s2682 + $0x1a68] sm:$0xff]
        %v3529 = vld [vmem:[%s2682 + $0x1a70] sm:$0xff]
        %v3530 = vld [vmem:[%s2682 + $0x1a78] sm:$0xff]
        %v3531 = vld [vmem:[%s2682 + $0x1a80] sm:$0xff]
        %v3532 = vld [vmem:[%s2682 + $0x1a88] sm:$0xff]
        %v3533 = vld [vmem:[%s2682 + $0x1a90] sm:$0xff]
        %v3534 = vld [vmem:[%s2682 + $0x1a98] sm:$0xff]
        %v3535 = vld [vmem:[%s2682 + $0x1aa0] sm:$0xff]
        %v3536 = vld [vmem:[%s2682 + $0x1aa8] sm:$0xff]
        %v3537 = vld [vmem:[%s2682 + $0x1ab0] sm:$0xff]
        %v3538 = vld [vmem:[%s2682 + $0x1ab8] sm:$0xff]
        %v3539 = vld [vmem:[%s2682 + $0x1ac0] sm:$0xff]
        %v3540 = vld [vmem:[%s2682 + $0x1ac8] sm:$0xff]
        %v3541 = vld [vmem:[%s2682 + $0x1ad0] sm:$0xff]
        %v3542 = vld [vmem:[%s2682 + $0x1ad8] sm:$0xff]
        %v3543 = vld [vmem:[%s2682 + $0x1ae0] sm:$0xff]
        %v3544 = vld [vmem:[%s2682 + $0x1ae8] sm:$0xff]
        %v3545 = vld [vmem:[%s2682 + $0x1af0] sm:$0xff]
        %v3546 = vld [vmem:[%s2682 + $0x1af8] sm:$0xff]
        %v3547 = vld [vmem:[%s2682 + $0x1b00] sm:$0xff]
        %v3548 = vld [vmem:[%s2682 + $0x1b08] sm:$0xff]
        %v3549 = vld [vmem:[%s2682 + $0x1b10] sm:$0xff]
        %v3550 = vld [vmem:[%s2682 + $0x1b18] sm:$0xff]
        %v3551 = vld [vmem:[%s2682 + $0x1b20] sm:$0xff]
        %v3552 = vld [vmem:[%s2682 + $0x1b28] sm:$0xff]
        %v3553 = vld [vmem:[%s2682 + $0x1b30] sm:$0xff]
        %v3554 = vld [vmem:[%s2682 + $0x1b38] sm:$0xff]
        %v3555 = vld [vmem:[%s2682 + $0x1b40] sm:$0xff]
        %v3556 = vld [vmem:[%s2682 + $0x1b48] sm:$0xff]
        %v3557 = vld [vmem:[%s2682 + $0x1b50] sm:$0xff]
        %v3558 = vld [vmem:[%s2682 + $0x1b58] sm:$0xff]
        %v3559 = vld [vmem:[%s2682 + $0x1b60] sm:$0xff]
        %v3560 = vld [vmem:[%s2682 + $0x1b68] sm:$0xff]
        %v3561 = vld [vmem:[%s2682 + $0x1b70] sm:$0xff]
        %v3562 = vld [vmem:[%s2682 + $0x1b78] sm:$0xff]
        %v3563 = vld [vmem:[%s2682 + $0x1b80] sm:$0xff]
        %v3564 = vld [vmem:[%s2682 + $0x1b88] sm:$0xff]
        %v3565 = vld [vmem:[%s2682 + $0x1b90] sm:$0xff]
        %v3566 = vld [vmem:[%s2682 + $0x1b98] sm:$0xff]
        %v3567 = vld [vmem:[%s2682 + $0x1ba0] sm:$0xff]
        %v3568 = vld [vmem:[%s2682 + $0x1ba8] sm:$0xff]
        %v3569 = vld [vmem:[%s2682 + $0x1bb0] sm:$0xff]
        %v3570 = vld [vmem:[%s2682 + $0x1bb8] sm:$0xff]
        %v3571 = vld [vmem:[%s2682 + $0x1bc0] sm:$0xff]
        %v3572 = vld [vmem:[%s2682 + $0x1bc8] sm:$0xff]
        %v3573 = vld [vmem:[%s2682 + $0x1bd0] sm:$0xff]
        %v3574 = vld [vmem:[%s2682 + $0x1bd8] sm:$0xff]
        %v3575 = vld [vmem:[%s2682 + $0x1be0] sm:$0xff]
        %v3576 = vld [vmem:[%s2682 + $0x1be8] sm:$0xff]
        %v3577 = vld [vmem:[%s2682 + $0x1bf0] sm:$0xff]
        %v3578 = vld [vmem:[%s2682 + $0x1bf8] sm:$0xff]
        %v3579 = vld [vmem:[%s2682 + $0x1c00] sm:$0xff]
        %v3580 = vld [vmem:[%s2682 + $0x1c08] sm:$0xff]
        %v3581 = vld [vmem:[%s2682 + $0x1c10] sm:$0xff]
        %v3582 = vld [vmem:[%s2682 + $0x1c18] sm:$0xff]
        %v3583 = vld [vmem:[%s2682 + $0x1c20] sm:$0xff]
        %v3584 = vld [vmem:[%s2682 + $0x1c28] sm:$0xff]
        %v3585 = vld [vmem:[%s2682 + $0x1c30] sm:$0xff]
        %v3586 = vld [vmem:[%s2682 + $0x1c38] sm:$0xff]
        %v3587 = vld [vmem:[%s2682 + $0x1c40] sm:$0xff]
        %v3588 = vld [vmem:[%s2682 + $0x1c48] sm:$0xff]
        %v3589 = vld [vmem:[%s2682 + $0x1c50] sm:$0xff]
        %v3590 = vld [vmem:[%s2682 + $0x1c58] sm:$0xff]
        %v3591 = vld [vmem:[%s2682 + $0x1c60] sm:$0xff]
        %v3592 = vld [vmem:[%s2682 + $0x1c68] sm:$0xff]
        %v3593 = vld [vmem:[%s2682 + $0x1c70] sm:$0xff]
        %v3594 = vld [vmem:[%s2682 + $0x1c78] sm:$0xff]
        %v3595 = vld [vmem:[%s2682 + $0x1c80] sm:$0xff]
        %v3596 = vld [vmem:[%s2682 + $0x1c88] sm:$0xff]
        %v3597 = vld [vmem:[%s2682 + $0x1c90] sm:$0xff]
        %v3598 = vld [vmem:[%s2682 + $0x1c98] sm:$0xff]
        %v3599 = vld [vmem:[%s2682 + $0x1ca0] sm:$0xff]
        %v3600 = vld [vmem:[%s2682 + $0x1ca8] sm:$0xff]
        %v3601 = vld [vmem:[%s2682 + $0x1cb0] sm:$0xff]
        %v3602 = vld [vmem:[%s2682 + $0x1cb8] sm:$0xff]
        %v3603 = vld [vmem:[%s2682 + $0x1cc0] sm:$0xff]
        %v3604 = vld [vmem:[%s2682 + $0x1cc8] sm:$0xff]
        %v3605 = vld [vmem:[%s2682 + $0x1cd0] sm:$0xff]
        %v3606 = vld [vmem:[%s2682 + $0x1cd8] sm:$0xff]
        %v3607 = vld [vmem:[%s2682 + $0x1ce0] sm:$0xff]
        %v3608 = vld [vmem:[%s2682 + $0x1ce8] sm:$0xff]
        %v3609 = vld [vmem:[%s2682 + $0x1cf0] sm:$0xff]
        %v3610 = vld [vmem:[%s2682 + $0x1cf8] sm:$0xff]
        %v3611 = vld [vmem:[%s2682 + $0x1d00] sm:$0xff]
        %v3612 = vld [vmem:[%s2682 + $0x1d08] sm:$0xff]
        %v3613 = vld [vmem:[%s2682 + $0x1d10] sm:$0xff]
        %v3614 = vld [vmem:[%s2682 + $0x1d18] sm:$0xff]
        %v3615 = vld [vmem:[%s2682 + $0x1d20] sm:$0xff]
        %v3616 = vld [vmem:[%s2682 + $0x1d28] sm:$0xff]
        %v3617 = vld [vmem:[%s2682 + $0x1d30] sm:$0xff]
        %v3618 = vld [vmem:[%s2682 + $0x1d38] sm:$0xff]
        %v3619 = vld [vmem:[%s2682 + $0x1d40] sm:$0xff]
        %v3620 = vld [vmem:[%s2682 + $0x1d48] sm:$0xff]
        %v3621 = vld [vmem:[%s2682 + $0x1d50] sm:$0xff]
        %v3622 = vld [vmem:[%s2682 + $0x1d58] sm:$0xff]
        %v3623 = vld [vmem:[%s2682 + $0x1d60] sm:$0xff]
        %v3624 = vld [vmem:[%s2682 + $0x1d68] sm:$0xff]
        %v3625 = vld [vmem:[%s2682 + $0x1d70] sm:$0xff]
        %v3626 = vld [vmem:[%s2682 + $0x1d78] sm:$0xff]
        %v3627 = vld [vmem:[%s2682 + $0x1d80] sm:$0xff]
        %v3628 = vld [vmem:[%s2682 + $0x1d88] sm:$0xff]
        %v3629 = vld [vmem:[%s2682 + $0x1d90] sm:$0xff]
        %v3630 = vld [vmem:[%s2682 + $0x1d98] sm:$0xff]
        %v3631 = vld [vmem:[%s2682 + $0x1da0] sm:$0xff]
        %v3632 = vld [vmem:[%s2682 + $0x1da8] sm:$0xff]
        %v3633 = vld [vmem:[%s2682 + $0x1db0] sm:$0xff]
        %v3634 = vld [vmem:[%s2682 + $0x1db8] sm:$0xff]
        %v3635 = vld [vmem:[%s2682 + $0x1dc0] sm:$0xff]
        %v3636 = vld [vmem:[%s2682 + $0x1dc8] sm:$0xff]
        %v3637 = vld [vmem:[%s2682 + $0x1dd0] sm:$0xff]
        %v3638 = vld [vmem:[%s2682 + $0x1dd8] sm:$0xff]
        %v3639 = vld [vmem:[%s2682 + $0x1de0] sm:$0xff]
        %v3640 = vld [vmem:[%s2682 + $0x1de8] sm:$0xff]
        %v3641 = vld [vmem:[%s2682 + $0x1df0] sm:$0xff]
        %v3642 = vld [vmem:[%s2682 + $0x1df8] sm:$0xff]
        %v3643 = vld [vmem:[%s2682 + $0x1e00] sm:$0xff]
        %v3644 = vld [vmem:[%s2682 + $0x1e08] sm:$0xff]
        %v3645 = vld [vmem:[%s2682 + $0x1e10] sm:$0xff]
        %v3646 = vld [vmem:[%s2682 + $0x1e18] sm:$0xff]
        %v3647 = vld [vmem:[%s2682 + $0x1e20] sm:$0xff]
        %v3648 = vld [vmem:[%s2682 + $0x1e28] sm:$0xff]
        %v3649 = vld [vmem:[%s2682 + $0x1e30] sm:$0xff]
        %v3650 = vld [vmem:[%s2682 + $0x1e38] sm:$0xff]
        %v3651 = vld [vmem:[%s2682 + $0x1e40] sm:$0xff]
        %v3652 = vld [vmem:[%s2682 + $0x1e48] sm:$0xff]
        %v3653 = vld [vmem:[%s2682 + $0x1e50] sm:$0xff]
        %v3654 = vld [vmem:[%s2682 + $0x1e58] sm:$0xff]
        %v3655 = vld [vmem:[%s2682 + $0x1e60] sm:$0xff]
        %v3656 = vld [vmem:[%s2682 + $0x1e68] sm:$0xff]
        %v3657 = vld [vmem:[%s2682 + $0x1e70] sm:$0xff]
        %v3658 = vld [vmem:[%s2682 + $0x1e78] sm:$0xff]
        %v3659 = vld [vmem:[%s2682 + $0x1e80] sm:$0xff]
        %v3660 = vld [vmem:[%s2682 + $0x1e88] sm:$0xff]
        %v3661 = vld [vmem:[%s2682 + $0x1e90] sm:$0xff]
        %v3662 = vld [vmem:[%s2682 + $0x1e98] sm:$0xff]
        %v3663 = vld [vmem:[%s2682 + $0x1ea0] sm:$0xff]
        %v3664 = vld [vmem:[%s2682 + $0x1ea8] sm:$0xff]
        %v3665 = vld [vmem:[%s2682 + $0x1eb0] sm:$0xff]
        %v3666 = vld [vmem:[%s2682 + $0x1eb8] sm:$0xff]
        %v3667 = vld [vmem:[%s2682 + $0x1ec0] sm:$0xff]
        %v3668 = vld [vmem:[%s2682 + $0x1ec8] sm:$0xff]
        %v3669 = vld [vmem:[%s2682 + $0x1ed0] sm:$0xff]
        %v3670 = vld [vmem:[%s2682 + $0x1ed8] sm:$0xff]
        %v3671 = vld [vmem:[%s2682 + $0x1ee0] sm:$0xff]
        %v3672 = vld [vmem:[%s2682 + $0x1ee8] sm:$0xff]
        %v3673 = vld [vmem:[%s2682 + $0x1ef0] sm:$0xff]
        %v3674 = vld [vmem:[%s2682 + $0x1ef8] sm:$0xff]
        %v3675 = vld [vmem:[%s2682 + $0x1f00] sm:$0xff]
        %v3676 = vld [vmem:[%s2682 + $0x1f08] sm:$0xff]
        %v3677 = vld [vmem:[%s2682 + $0x1f10] sm:$0xff]
        %v3678 = vld [vmem:[%s2682 + $0x1f18] sm:$0xff]
        %v3679 = vld [vmem:[%s2682 + $0x1f20] sm:$0xff]
        %v3680 = vld [vmem:[%s2682 + $0x1f28] sm:$0xff]
        %v3681 = vld [vmem:[%s2682 + $0x1f30] sm:$0xff]
        %v3682 = vld [vmem:[%s2682 + $0x1f38] sm:$0xff]
        %v3683 = vld [vmem:[%s2682 + $0x1f40] sm:$0xff]
        %v3684 = vld [vmem:[%s2682 + $0x1f48] sm:$0xff]
        %v3685 = vld [vmem:[%s2682 + $0x1f50] sm:$0xff]
        %v3686 = vld [vmem:[%s2682 + $0x1f58] sm:$0xff]
        %v3687 = vld [vmem:[%s2682 + $0x1f60] sm:$0xff]
        %v3688 = vld [vmem:[%s2682 + $0x1f68] sm:$0xff]
        %v3689 = vld [vmem:[%s2682 + $0x1f70] sm:$0xff]
        %v3690 = vld [vmem:[%s2682 + $0x1f78] sm:$0xff]
        %v3691 = vld [vmem:[%s2682 + $0x1f80] sm:$0xff]
        %v3692 = vld [vmem:[%s2682 + $0x1f88] sm:$0xff]
        %v3693 = vld [vmem:[%s2682 + $0x1f90] sm:$0xff]
        %v3694 = vld [vmem:[%s2682 + $0x1f98] sm:$0xff]
        %v3695 = vld [vmem:[%s2682 + $0x1fa0] sm:$0xff]
        %v3696 = vld [vmem:[%s2682 + $0x1fa8] sm:$0xff]
        %v3697 = vld [vmem:[%s2682 + $0x1fb0] sm:$0xff]
        %v3698 = vld [vmem:[%s2682 + $0x1fb8] sm:$0xff]
        %v3699 = vld [vmem:[%s2682 + $0x1fc0] sm:$0xff]
        %v3700 = vld [vmem:[%s2682 + $0x1fc8] sm:$0xff]
        %v3701 = vld [vmem:[%s2682 + $0x1fd0] sm:$0xff]
        %v3702 = vld [vmem:[%s2682 + $0x1fd8] sm:$0xff]
        %v3703 = vld [vmem:[%s2682 + $0x1fe0] sm:$0xff]
        %v3704 = vld [vmem:[%s2682 + $0x1fe8] sm:$0xff]
        %v3705 = vld [vmem:[%s2682 + $0x1ff0] sm:$0xff]
        %v3706 = vld [vmem:[%s2682 + $0x1ff8] sm:$0xff]
        %3707 = vmatprep.subr.mxu0 %v2684
        %3708 = vmatpush1.msra.mxu0 %v2683
        %3709 = vmatprep.subr.mxu0 %v2692
        %3710 = vmatpush1.msra.mxu0 %v2691
        %3711 = vmatprep.subr.mxu0 %v2700
        %3712 = vmatpush1.msra.mxu0 %v2699
        %3713 = vmatprep.subr.mxu0 %v2708
        %3714 = vmatpush1.msra.mxu0 %v2707
        %3715 = vmatprep.subr.mxu0 %v2716
        %3716 = vmatpush1.msra.mxu0 %v2715
        %3717 = vmatprep.subr.mxu0 %v2724
        %3718 = vmatpush1.msra.mxu0 %v2723
        %3719 = vmatprep.subr.mxu0 %v2732
        %3720 = vmatpush1.msra.mxu0 %v2731
        %3721 = vmatprep.subr.mxu0 %v2740
        %3722 = vmatpush1.msra.mxu0 %v2739
        %3723 = vmatprep.subr.mxu0 %v2748
        %3724 = vmatpush1.msra.mxu0 %v2747
        %3725 = vmatprep.subr.mxu0 %v2756
        %3726 = vmatpush1.msra.mxu0 %v2755
        %3727 = vmatprep.subr.mxu0 %v2764
        %3728 = vmatpush1.msra.mxu0 %v2763
        %3729 = vmatprep.subr.mxu0 %v2772
        %3730 = vmatpush1.msra.mxu0 %v2771
        %3731 = vmatprep.subr.mxu0 %v2780
        %3732 = vmatpush1.msra.mxu0 %v2779
        %3733 = vmatprep.subr.mxu0 %v2788
        %3734 = vmatpush1.msra.mxu0 %v2787
        %3735 = vmatprep.subr.mxu0 %v2796
        %3736 = vmatpush1.msra.mxu0 %v2795
        %3737 = vmatprep.subr.mxu0 %v2804
        %3738 = vmatpush1.msra.mxu0 %v2803
        %3739 = vmatprep.subr.mxu0 %v2812
        %3740 = vmatpush1.msra.mxu0 %v2811
        %3741 = vmatprep.subr.mxu0 %v2820
        %3742 = vmatpush1.msra.mxu0 %v2819
        %3743 = vmatprep.subr.mxu0 %v2828
        %3744 = vmatpush1.msra.mxu0 %v2827
        %3745 = vmatprep.subr.mxu0 %v2836
        %3746 = vmatpush1.msra.mxu0 %v2835
        %3747 = vmatprep.subr.mxu0 %v2844
        %3748 = vmatpush1.msra.mxu0 %v2843
        %3749 = vmatprep.subr.mxu0 %v2852
        %3750 = vmatpush1.msra.mxu0 %v2851
        %3751 = vmatprep.subr.mxu0 %v2860
        %3752 = vmatpush1.msra.mxu0 %v2859
        %3753 = vmatprep.subr.mxu0 %v2868
        %3754 = vmatpush1.msra.mxu0 %v2867
        %3755 = vmatprep.subr.mxu0 %v2876
        %3756 = vmatpush1.msra.mxu0 %v2875
        %3757 = vmatprep.subr.mxu0 %v2884
        %3758 = vmatpush1.msra.mxu0 %v2883
        %3759 = vmatprep.subr.mxu0 %v2892
        %3760 = vmatpush1.msra.mxu0 %v2891
        %3761 = vmatprep.subr.mxu0 %v2900
        %3762 = vmatpush1.msra.mxu0 %v2899
        %3763 = vmatprep.subr.mxu0 %v2908
        %3764 = vmatpush1.msra.mxu0 %v2907
        %3765 = vmatprep.subr.mxu0 %v2916
        %3766 = vmatpush1.msra.mxu0 %v2915
        %3767 = vmatprep.subr.mxu0 %v2924
        %3768 = vmatpush1.msra.mxu0 %v2923
        %3769 = vmatprep.subr.mxu0 %v2932
        %3770 = vmatpush1.msra.mxu0 %v2931
        %3771 = vmatprep.mubr.f32.mxu0 %v2667
        %3772 = vmatmul.mubr.f32.gmra.mrb[0].mxu0 %v2666
        %v3773 = vpop.f32.mrb[0].mxu0
        %v3774 = vadd.f32 0.0, %v3773
        %v3775 = vpop.f32.mrb[0].mxu0
        %v3776 = vadd.f32 0.0, %v3775
        %3777 = vmatprep.mubr.f32.mxu0 %v2675
        %3778 = vmatmul.mubr.f32.gmra.mrb[0].mxu0 %v2674
        %v3779 = vpop.f32.mrb[0].mxu0
        %v3780 = vadd.f32 0.0, %v3779
        %v3781 = vpop.f32.mrb[0].mxu0
        %v3782 = vadd.f32 0.0, %v3781
        %3783 = vdwg.mxu0
        %3784 = vmatprep.subr.mxu0 %v2940
        %3785 = vmatpush1.msra.mxu0 %v2939
        %3786 = vmatprep.subr.mxu0 %v2948
        %3787 = vmatpush1.msra.mxu0 %v2947
        %3788 = vmatprep.subr.mxu0 %v2956
        %3789 = vmatpush1.msra.mxu0 %v2955
        %3790 = vmatprep.subr.mxu0 %v2964
        %3791 = vmatpush1.msra.mxu0 %v2963
        %3792 = vmatprep.subr.mxu0 %v2972
        %3793 = vmatpush1.msra.mxu0 %v2971
        %3794 = vmatprep.subr.mxu0 %v2980
        %3795 = vmatpush1.msra.mxu0 %v2979
        %3796 = vmatprep.subr.mxu0 %v2988
        %3797 = vmatpush1.msra.mxu0 %v2987
        %3798 = vmatprep.subr.mxu0 %v2996
        %3799 = vmatpush1.msra.mxu0 %v2995
        %3800 = vmatprep.subr.mxu0 %v3004
        %3801 = vmatpush1.msra.mxu0 %v3003
        %3802 = vmatprep.subr.mxu0 %v3012
        %3803 = vmatpush1.msra.mxu0 %v3011
        %3804 = vmatprep.subr.mxu0 %v3020
        %3805 = vmatpush1.msra.mxu0 %v3019
        %3806 = vmatprep.subr.mxu0 %v3028
        %3807 = vmatpush1.msra.mxu0 %v3027
        %3808 = vmatprep.subr.mxu0 %v3036
        %3809 = vmatpush1.msra.mxu0 %v3035
        %3810 = vmatprep.subr.mxu0 %v3044
        %3811 = vmatpush1.msra.mxu0 %v3043
        %3812 = vmatprep.subr.mxu0 %v3052
        %3813 = vmatpush1.msra.mxu0 %v3051
        %3814 = vmatprep.subr.mxu0 %v3060
        %3815 = vmatpush1.msra.mxu0 %v3059
        %3816 = vmatprep.subr.mxu0 %v3068
        %3817 = vmatpush1.msra.mxu0 %v3067
        %3818 = vmatprep.subr.mxu0 %v3076
        %3819 = vmatpush1.msra.mxu0 %v3075
        %3820 = vmatprep.subr.mxu0 %v3084
        %3821 = vmatpush1.msra.mxu0 %v3083
        %3822 = vmatprep.subr.mxu0 %v3092
        %3823 = vmatpush1.msra.mxu0 %v3091
        %3824 = vmatprep.subr.mxu0 %v3100
        %3825 = vmatpush1.msra.mxu0 %v3099
        %3826 = vmatprep.subr.mxu0 %v3108
        %3827 = vmatpush1.msra.mxu0 %v3107
        %3828 = vmatprep.subr.mxu0 %v3116
        %3829 = vmatpush1.msra.mxu0 %v3115
        %3830 = vmatprep.subr.mxu0 %v3124
        %3831 = vmatpush1.msra.mxu0 %v3123
        %3832 = vmatprep.subr.mxu0 %v3132
        %3833 = vmatpush1.msra.mxu0 %v3131
        %3834 = vmatprep.subr.mxu0 %v3140
        %3835 = vmatpush1.msra.mxu0 %v3139
        %3836 = vmatprep.subr.mxu0 %v3148
        %3837 = vmatpush1.msra.mxu0 %v3147
        %3838 = vmatprep.subr.mxu0 %v3156
        %3839 = vmatpush1.msra.mxu0 %v3155
        %3840 = vmatprep.subr.mxu0 %v3164
        %3841 = vmatpush1.msra.mxu0 %v3163
        %3842 = vmatprep.subr.mxu0 %v3172
        %3843 = vmatpush1.msra.mxu0 %v3171
        %3844 = vmatprep.subr.mxu0 %v3180
        %3845 = vmatpush1.msra.mxu0 %v3179
        %3846 = vmatprep.subr.mxu0 %v3188
        %3847 = vmatpush1.msra.mxu0 %v3187
        %3848 = vmatprep.mubr.f32.mxu0 %v2669
        %3849 = vmatmul.mubr.f32.gmra.mrb[0].mxu0 %v2668
        %v3850 = vpop.f32.mrb[0].mxu0
        %v3851 = vadd.f32 %v3774, %v3850
        %v3852 = vpop.f32.mrb[0].mxu0
        %v3853 = vadd.f32 %v3776, %v3852
        %3854 = vmatprep.mubr.f32.mxu0 %v2677
        %3855 = vmatmul.mubr.f32.gmra.mrb[0].mxu0 %v2676
        %v3856 = vpop.f32.mrb[0].mxu0
        %v3857 = vadd.f32 %v3780, %v3856
        %v3858 = vpop.f32.mrb[0].mxu0
        %v3859 = vadd.f32 %v3782, %v3858
        %3860 = vdwg.mxu0
        %3861 = vmatprep.subr.mxu0 %v3196
        %3862 = vmatpush1.msra.mxu0 %v3195
        %3863 = vmatprep.subr.mxu0 %v3204
        %3864 = vmatpush1.msra.mxu0 %v3203
        %3865 = vmatprep.subr.mxu0 %v3212
        %3866 = vmatpush1.msra.mxu0 %v3211
        %3867 = vmatprep.subr.mxu0 %v3220
        %3868 = vmatpush1.msra.mxu0 %v3219
        %3869 = vmatprep.subr.mxu0 %v3228
        %3870 = vmatpush1.msra.mxu0 %v3227
        %3871 = vmatprep.subr.mxu0 %v3236
        %3872 = vmatpush1.msra.mxu0 %v3235
        %3873 = vmatprep.subr.mxu0 %v3244
        %3874 = vmatpush1.msra.mxu0 %v3243
        %3875 = vmatprep.subr.mxu0 %v3252
        %3876 = vmatpush1.msra.mxu0 %v3251
        %3877 = vmatprep.subr.mxu0 %v3260
        %3878 = vmatpush1.msra.mxu0 %v3259
        %3879 = vmatprep.subr.mxu0 %v3268
        %3880 = vmatpush1.msra.mxu0 %v3267
        %3881 = vmatprep.subr.mxu0 %v3276
        %3882 = vmatpush1.msra.mxu0 %v3275
        %3883 = vmatprep.subr.mxu0 %v3284
        %3884 = vmatpush1.msra.mxu0 %v3283
        %3885 = vmatprep.subr.mxu0 %v3292
        %3886 = vmatpush1.msra.mxu0 %v3291
        %3887 = vmatprep.subr.mxu0 %v3300
        %3888 = vmatpush1.msra.mxu0 %v3299
        %3889 = vmatprep.subr.mxu0 %v3308
        %3890 = vmatpush1.msra.mxu0 %v3307
        %3891 = vmatprep.subr.mxu0 %v3316
        %3892 = vmatpush1.msra.mxu0 %v3315
        %3893 = vmatprep.subr.mxu0 %v3324
        %3894 = vmatpush1.msra.mxu0 %v3323
        %3895 = vmatprep.subr.mxu0 %v3332
        %3896 = vmatpush1.msra.mxu0 %v3331
        %3897 = vmatprep.subr.mxu0 %v3340
        %3898 = vmatpush1.msra.mxu0 %v3339
        %3899 = vmatprep.subr.mxu0 %v3348
        %3900 = vmatpush1.msra.mxu0 %v3347
        %3901 = vmatprep.subr.mxu0 %v3356
        %3902 = vmatpush1.msra.mxu0 %v3355
        %3903 = vmatprep.subr.mxu0 %v3364
        %3904 = vmatpush1.msra.mxu0 %v3363
        %3905 = vmatprep.subr.mxu0 %v3372
        %3906 = vmatpush1.msra.mxu0 %v3371
        %3907 = vmatprep.subr.mxu0 %v3380
        %3908 = vmatpush1.msra.mxu0 %v3379
        %3909 = vmatprep.subr.mxu0 %v3388
        %3910 = vmatpush1.msra.mxu0 %v3387
        %3911 = vmatprep.subr.mxu0 %v3396
        %3912 = vmatpush1.msra.mxu0 %v3395
        %3913 = vmatprep.subr.mxu0 %v3404
        %3914 = vmatpush1.msra.mxu0 %v3403
        %3915 = vmatprep.subr.mxu0 %v3412
        %3916 = vmatpush1.msra.mxu0 %v3411
        %3917 = vmatprep.subr.mxu0 %v3420
        %3918 = vmatpush1.msra.mxu0 %v3419
        %3919 = vmatprep.subr.mxu0 %v3428
        %3920 = vmatpush1.msra.mxu0 %v3427
        %3921 = vmatprep.subr.mxu0 %v3436
        %3922 = vmatpush1.msra.mxu0 %v3435
        %3923 = vmatprep.subr.mxu0 %v3444
        %3924 = vmatpush1.msra.mxu0 %v3443
        %3925 = vmatprep.mubr.f32.mxu0 %v2671
        %3926 = vmatmul.mubr.f32.gmra.mrb[0].mxu0 %v2670
        %v3927 = vpop.f32.mrb[0].mxu0
        %v3928 = vadd.f32 %v3851, %v3927
        %v3929 = vpop.f32.mrb[0].mxu0
        %v3930 = vadd.f32 %v3853, %v3929
        %3931 = vmatprep.mubr.f32.mxu0 %v2679
        %3932 = vmatmul.mubr.f32.gmra.mrb[0].mxu0 %v2678
        %v3933 = vpop.f32.mrb[0].mxu0
        %v3934 = vadd.f32 %v3857, %v3933
        %v3935 = vpop.f32.mrb[0].mxu0
        %v3936 = vadd.f32 %v3859, %v3935
        %3937 = vdwg.mxu0
        %3938 = vmatprep.subr.mxu0 %v3452
        %3939 = vmatpush1.msra.mxu0 %v3451
        %3940 = vmatprep.subr.mxu0 %v3460
        %3941 = vmatpush1.msra.mxu0 %v3459
        %3942 = vmatprep.subr.mxu0 %v3468
        %3943 = vmatpush1.msra.mxu0 %v3467
        %3944 = vmatprep.subr.mxu0 %v3476
        %3945 = vmatpush1.msra.mxu0 %v3475
        %3946 = vmatprep.subr.mxu0 %v3484
        %3947 = vmatpush1.msra.mxu0 %v3483
        %3948 = vmatprep.subr.mxu0 %v3492
        %3949 = vmatpush1.msra.mxu0 %v3491
        %3950 = vmatprep.subr.mxu0 %v3500
        %3951 = vmatpush1.msra.mxu0 %v3499
        %3952 = vmatprep.subr.mxu0 %v3508
        %3953 = vmatpush1.msra.mxu0 %v3507
        %3954 = vmatprep.subr.mxu0 %v3516
        %3955 = vmatpush1.msra.mxu0 %v3515
        %3956 = vmatprep.subr.mxu0 %v3524
        %3957 = vmatpush1.msra.mxu0 %v3523
        %3958 = vmatprep.subr.mxu0 %v3532
        %3959 = vmatpush1.msra.mxu0 %v3531
        %3960 = vmatprep.subr.mxu0 %v3540
        %3961 = vmatpush1.msra.mxu0 %v3539
        %3962 = vmatprep.subr.mxu0 %v3548
        %3963 = vmatpush1.msra.mxu0 %v3547
        %3964 = vmatprep.subr.mxu0 %v3556
        %3965 = vmatpush1.msra.mxu0 %v3555
        %3966 = vmatprep.subr.mxu0 %v3564
        %3967 = vmatpush1.msra.mxu0 %v3563
        %3968 = vmatprep.subr.mxu0 %v3572
        %3969 = vmatpush1.msra.mxu0 %v3571
        %3970 = vmatprep.subr.mxu0 %v3580
        %3971 = vmatpush1.msra.mxu0 %v3579
        %3972 = vmatprep.subr.mxu0 %v3588
        %3973 = vmatpush1.msra.mxu0 %v3587
        %3974 = vmatprep.subr.mxu0 %v3596
        %3975 = vmatpush1.msra.mxu0 %v3595
        %3976 = vmatprep.subr.mxu0 %v3604
        %3977 = vmatpush1.msra.mxu0 %v3603
        %3978 = vmatprep.subr.mxu0 %v3612
        %3979 = vmatpush1.msra.mxu0 %v3611
        %3980 = vmatprep.subr.mxu0 %v3620
        %3981 = vmatpush1.msra.mxu0 %v3619
        %3982 = vmatprep.subr.mxu0 %v3628
        %3983 = vmatpush1.msra.mxu0 %v3627
        %3984 = vmatprep.subr.mxu0 %v3636
        %3985 = vmatpush1.msra.mxu0 %v3635
        %3986 = vmatprep.subr.mxu0 %v3644
        %3987 = vmatpush1.msra.mxu0 %v3643
        %3988 = vmatprep.subr.mxu0 %v3652
        %3989 = vmatpush1.msra.mxu0 %v3651
        %3990 = vmatprep.subr.mxu0 %v3660
        %3991 = vmatpush1.msra.mxu0 %v3659
        %3992 = vmatprep.subr.mxu0 %v3668
        %3993 = vmatpush1.msra.mxu0 %v3667
        %3994 = vmatprep.subr.mxu0 %v3676
        %3995 = vmatpush1.msra.mxu0 %v3675
        %3996 = vmatprep.subr.mxu0 %v3684
        %3997 = vmatpush1.msra.mxu0 %v3683
        %3998 = vmatprep.subr.mxu0 %v3692
        %3999 = vmatpush1.msra.mxu0 %v3691
        %4000 = vmatprep.subr.mxu0 %v3700
        %4001 = vmatpush1.msra.mxu0 %v3699
        %4002 = vmatprep.mubr.f32.mxu0 %v2673
        %4003 = vmatmul.mubr.f32.gmra.mrb[0].mxu0 %v2672
        %v4004 = vpop.f32.mrb[0].mxu0
        %v4005 = vadd.f32 %v3928, %v4004
        %v4006 = vpop.f32.mrb[0].mxu0
        %v4007 = vadd.f32 %v3930, %v4006
        %4008 = vmatprep.mubr.f32.mxu0 %v2681
        %4009 = vmatmul.mubr.f32.gmra.mrb[0].mxu0 %v2680
        %v4010 = vpop.f32.mrb[0].mxu0
        %v4011 = vadd.f32 %v3934, %v4010
        %v4012 = vpop.f32.mrb[0].mxu0
        %v4013 = vadd.f32 %v3936, %v4012
        %4014 = vdwg.mxu0
        %4015 = vmatprep.subr.mxu0 %v2686
        %4016 = vmatpush1.msra.mxu0 %v2685
        %4017 = vmatprep.subr.mxu0 %v2694
        %4018 = vmatpush1.msra.mxu0 %v2693
        %4019 = vmatprep.subr.mxu0 %v2702
        %4020 = vmatpush1.msra.mxu0 %v2701
        %4021 = vmatprep.subr.mxu0 %v2710
        %4022 = vmatpush1.msra.mxu0 %v2709
        %4023 = vmatprep.subr.mxu0 %v2718
        %4024 = vmatpush1.msra.mxu0 %v2717
        %4025 = vmatprep.subr.mxu0 %v2726
        %4026 = vmatpush1.msra.mxu0 %v2725
        %4027 = vmatprep.subr.mxu0 %v2734
        %4028 = vmatpush1.msra.mxu0 %v2733
        %4029 = vmatprep.subr.mxu0 %v2742
        %4030 = vmatpush1.msra.mxu0 %v2741
        %4031 = vmatprep.subr.mxu0 %v2750
        %4032 = vmatpush1.msra.mxu0 %v2749
        %4033 = vmatprep.subr.mxu0 %v2758
        %4034 = vmatpush1.msra.mxu0 %v2757
        %4035 = vmatprep.subr.mxu0 %v2766
        %4036 = vmatpush1.msra.mxu0 %v2765
        %4037 = vmatprep.subr.mxu0 %v2774
        %4038 = vmatpush1.msra.mxu0 %v2773
        %4039 = vmatprep.subr.mxu0 %v2782
        %4040 = vmatpush1.msra.mxu0 %v2781
        %4041 = vmatprep.subr.mxu0 %v2790
        %4042 = vmatpush1.msra.mxu0 %v2789
        %4043 = vmatprep.subr.mxu0 %v2798
        %4044 = vmatpush1.msra.mxu0 %v2797
        %4045 = vmatprep.subr.mxu0 %v2806
        %4046 = vmatpush1.msra.mxu0 %v2805
        %4047 = vmatprep.subr.mxu0 %v2814
        %4048 = vmatpush1.msra.mxu0 %v2813
        %4049 = vmatprep.subr.mxu0 %v2822
        %4050 = vmatpush1.msra.mxu0 %v2821
        %4051 = vmatprep.subr.mxu0 %v2830
        %4052 = vmatpush1.msra.mxu0 %v2829
        %4053 = vmatprep.subr.mxu0 %v2838
        %4054 = vmatpush1.msra.mxu0 %v2837
        %4055 = vmatprep.subr.mxu0 %v2846
        %4056 = vmatpush1.msra.mxu0 %v2845
        %4057 = vmatprep.subr.mxu0 %v2854
        %4058 = vmatpush1.msra.mxu0 %v2853
        %4059 = vmatprep.subr.mxu0 %v2862
        %4060 = vmatpush1.msra.mxu0 %v2861
        %4061 = vmatprep.subr.mxu0 %v2870
        %4062 = vmatpush1.msra.mxu0 %v2869
        %4063 = vmatprep.subr.mxu0 %v2878
        %4064 = vmatpush1.msra.mxu0 %v2877
        %4065 = vmatprep.subr.mxu0 %v2886
        %4066 = vmatpush1.msra.mxu0 %v2885
        %4067 = vmatprep.subr.mxu0 %v2894
        %4068 = vmatpush1.msra.mxu0 %v2893
        %4069 = vmatprep.subr.mxu0 %v2902
        %4070 = vmatpush1.msra.mxu0 %v2901
        %4071 = vmatprep.subr.mxu0 %v2910
        %4072 = vmatpush1.msra.mxu0 %v2909
        %4073 = vmatprep.subr.mxu0 %v2918
        %4074 = vmatpush1.msra.mxu0 %v2917
        %4075 = vmatprep.subr.mxu0 %v2926
        %4076 = vmatpush1.msra.mxu0 %v2925
        %4077 = vmatprep.subr.mxu0 %v2934
        %4078 = vmatpush1.msra.mxu0 %v2933
        %4079 = vmatprep.mubr.f32.mxu0 %v2667
        %4080 = vmatmul.mubr.f32.gmra.mrb[0].mxu0 %v2666
        %v4081 = vpop.f32.mrb[0].mxu0
        %v4082 = vadd.f32 0.0, %v4081
        %v4083 = vpop.f32.mrb[0].mxu0
        %v4084 = vadd.f32 0.0, %v4083
        %4085 = vmatprep.mubr.f32.mxu0 %v2675
        %4086 = vmatmul.mubr.f32.gmra.mrb[0].mxu0 %v2674
        %v4087 = vpop.f32.mrb[0].mxu0
        %v4088 = vadd.f32 0.0, %v4087
        %v4089 = vpop.f32.mrb[0].mxu0
        %v4090 = vadd.f32 0.0, %v4089
        %4091 = vdwg.mxu0
        %4092 = vmatprep.subr.mxu0 %v2942
        %4093 = vmatpush1.msra.mxu0 %v2941
        %4094 = vmatprep.subr.mxu0 %v2950
        %4095 = vmatpush1.msra.mxu0 %v2949
        %4096 = vmatprep.subr.mxu0 %v2958
        %4097 = vmatpush1.msra.mxu0 %v2957
        %4098 = vmatprep.subr.mxu0 %v2966
        %4099 = vmatpush1.msra.mxu0 %v2965
        %4100 = vmatprep.subr.mxu0 %v2974
        %4101 = vmatpush1.msra.mxu0 %v2973
        %4102 = vmatprep.subr.mxu0 %v2982
        %4103 = vmatpush1.msra.mxu0 %v2981
        %4104 = vmatprep.subr.mxu0 %v2990
        %4105 = vmatpush1.msra.mxu0 %v2989
        %4106 = vmatprep.subr.mxu0 %v2998
        %4107 = vmatpush1.msra.mxu0 %v2997
        %4108 = vmatprep.subr.mxu0 %v3006
        %4109 = vmatpush1.msra.mxu0 %v3005
        %4110 = vmatprep.subr.mxu0 %v3014
        %4111 = vmatpush1.msra.mxu0 %v3013
        %4112 = vmatprep.subr.mxu0 %v3022
        %4113 = vmatpush1.msra.mxu0 %v3021
        %4114 = vmatprep.subr.mxu0 %v3030
        %4115 = vmatpush1.msra.mxu0 %v3029
        %4116 = vmatprep.subr.mxu0 %v3038
        %4117 = vmatpush1.msra.mxu0 %v3037
        %4118 = vmatprep.subr.mxu0 %v3046
        %4119 = vmatpush1.msra.mxu0 %v3045
        %4120 = vmatprep.subr.mxu0 %v3054
        %4121 = vmatpush1.msra.mxu0 %v3053
        %4122 = vmatprep.subr.mxu0 %v3062
        %4123 = vmatpush1.msra.mxu0 %v3061
        %4124 = vmatprep.subr.mxu0 %v3070
        %4125 = vmatpush1.msra.mxu0 %v3069
        %4126 = vmatprep.subr.mxu0 %v3078
        %4127 = vmatpush1.msra.mxu0 %v3077
        %4128 = vmatprep.subr.mxu0 %v3086
        %4129 = vmatpush1.msra.mxu0 %v3085
        %4130 = vmatprep.subr.mxu0 %v3094
        %4131 = vmatpush1.msra.mxu0 %v3093
        %4132 = vmatprep.subr.mxu0 %v3102
        %4133 = vmatpush1.msra.mxu0 %v3101
        %4134 = vmatprep.subr.mxu0 %v3110
        %4135 = vmatpush1.msra.mxu0 %v3109
        %4136 = vmatprep.subr.mxu0 %v3118
        %4137 = vmatpush1.msra.mxu0 %v3117
        %4138 = vmatprep.subr.mxu0 %v3126
        %4139 = vmatpush1.msra.mxu0 %v3125
        %4140 = vmatprep.subr.mxu0 %v3134
        %4141 = vmatpush1.msra.mxu0 %v3133
        %4142 = vmatprep.subr.mxu0 %v3142
        %4143 = vmatpush1.msra.mxu0 %v3141
        %4144 = vmatprep.subr.mxu0 %v3150
        %4145 = vmatpush1.msra.mxu0 %v3149
        %4146 = vmatprep.subr.mxu0 %v3158
        %4147 = vmatpush1.msra.mxu0 %v3157
        %4148 = vmatprep.subr.mxu0 %v3166
        %4149 = vmatpush1.msra.mxu0 %v3165
        %4150 = vmatprep.subr.mxu0 %v3174
        %4151 = vmatpush1.msra.mxu0 %v3173
        %4152 = vmatprep.subr.mxu0 %v3182
        %4153 = vmatpush1.msra.mxu0 %v3181
        %4154 = vmatprep.subr.mxu0 %v3190
        %4155 = vmatpush1.msra.mxu0 %v3189
        %4156 = vmatprep.mubr.f32.mxu0 %v2669
        %4157 = vmatmul.mubr.f32.gmra.mrb[0].mxu0 %v2668
        %v4158 = vpop.f32.mrb[0].mxu0
        %v4159 = vadd.f32 %v4082, %v4158
        %v4160 = vpop.f32.mrb[0].mxu0
        %v4161 = vadd.f32 %v4084, %v4160
        %4162 = vmatprep.mubr.f32.mxu0 %v2677
        %4163 = vmatmul.mubr.f32.gmra.mrb[0].mxu0 %v2676
        %v4164 = vpop.f32.mrb[0].mxu0
        %v4165 = vadd.f32 %v4088, %v4164
        %v4166 = vpop.f32.mrb[0].mxu0
        %v4167 = vadd.f32 %v4090, %v4166
        %4168 = vdwg.mxu0
        %4169 = vmatprep.subr.mxu0 %v3198
        %4170 = vmatpush1.msra.mxu0 %v3197
        %4171 = vmatprep.subr.mxu0 %v3206
        %4172 = vmatpush1.msra.mxu0 %v3205
        %4173 = vmatprep.subr.mxu0 %v3214
        %4174 = vmatpush1.msra.mxu0 %v3213
        %4175 = vmatprep.subr.mxu0 %v3222
        %4176 = vmatpush1.msra.mxu0 %v3221
        %4177 = vmatprep.subr.mxu0 %v3230
        %4178 = vmatpush1.msra.mxu0 %v3229
        %4179 = vmatprep.subr.mxu0 %v3238
        %4180 = vmatpush1.msra.mxu0 %v3237
        %4181 = vmatprep.subr.mxu0 %v3246
        %4182 = vmatpush1.msra.mxu0 %v3245
        %4183 = vmatprep.subr.mxu0 %v3254
        %4184 = vmatpush1.msra.mxu0 %v3253
        %4185 = vmatprep.subr.mxu0 %v3262
        %4186 = vmatpush1.msra.mxu0 %v3261
        %4187 = vmatprep.subr.mxu0 %v3270
        %4188 = vmatpush1.msra.mxu0 %v3269
        %4189 = vmatprep.subr.mxu0 %v3278
        %4190 = vmatpush1.msra.mxu0 %v3277
        %4191 = vmatprep.subr.mxu0 %v3286
        %4192 = vmatpush1.msra.mxu0 %v3285
        %4193 = vmatprep.subr.mxu0 %v3294
        %4194 = vmatpush1.msra.mxu0 %v3293
        %4195 = vmatprep.subr.mxu0 %v3302
        %4196 = vmatpush1.msra.mxu0 %v3301
        %4197 = vmatprep.subr.mxu0 %v3310
        %4198 = vmatpush1.msra.mxu0 %v3309
        %4199 = vmatprep.subr.mxu0 %v3318
        %4200 = vmatpush1.msra.mxu0 %v3317
        %4201 = vmatprep.subr.mxu0 %v3326
        %4202 = vmatpush1.msra.mxu0 %v3325
        %4203 = vmatprep.subr.mxu0 %v3334
        %4204 = vmatpush1.msra.mxu0 %v3333
        %4205 = vmatprep.subr.mxu0 %v3342
        %4206 = vmatpush1.msra.mxu0 %v3341
        %4207 = vmatprep.subr.mxu0 %v3350
        %4208 = vmatpush1.msra.mxu0 %v3349
        %4209 = vmatprep.subr.mxu0 %v3358
        %4210 = vmatpush1.msra.mxu0 %v3357
        %4211 = vmatprep.subr.mxu0 %v3366
        %4212 = vmatpush1.msra.mxu0 %v3365
        %4213 = vmatprep.subr.mxu0 %v3374
        %4214 = vmatpush1.msra.mxu0 %v3373
        %4215 = vmatprep.subr.mxu0 %v3382
        %4216 = vmatpush1.msra.mxu0 %v3381
        %4217 = vmatprep.subr.mxu0 %v3390
        %4218 = vmatpush1.msra.mxu0 %v3389
        %4219 = vmatprep.subr.mxu0 %v3398
        %4220 = vmatpush1.msra.mxu0 %v3397
        %4221 = vmatprep.subr.mxu0 %v3406
        %4222 = vmatpush1.msra.mxu0 %v3405
        %4223 = vmatprep.subr.mxu0 %v3414
        %4224 = vmatpush1.msra.mxu0 %v3413
        %4225 = vmatprep.subr.mxu0 %v3422
        %4226 = vmatpush1.msra.mxu0 %v3421
        %4227 = vmatprep.subr.mxu0 %v3430
        %4228 = vmatpush1.msra.mxu0 %v3429
        %4229 = vmatprep.subr.mxu0 %v3438
        %4230 = vmatpush1.msra.mxu0 %v3437
        %4231 = vmatprep.subr.mxu0 %v3446
        %4232 = vmatpush1.msra.mxu0 %v3445
        %4233 = vmatprep.mubr.f32.mxu0 %v2671
        %4234 = vmatmul.mubr.f32.gmra.mrb[0].mxu0 %v2670
        %v4235 = vpop.f32.mrb[0].mxu0
        %v4236 = vadd.f32 %v4159, %v4235
        %v4237 = vpop.f32.mrb[0].mxu0
        %v4238 = vadd.f32 %v4161, %v4237
        %4239 = vmatprep.mubr.f32.mxu0 %v2679
        %4240 = vmatmul.mubr.f32.gmra.mrb[0].mxu0 %v2678
        %v4241 = vpop.f32.mrb[0].mxu0
        %v4242 = vadd.f32 %v4165, %v4241
        %v4243 = vpop.f32.mrb[0].mxu0
        %v4244 = vadd.f32 %v4167, %v4243
        %4245 = vdwg.mxu0
        %4246 = vmatprep.subr.mxu0 %v3454
        %4247 = vmatpush1.msra.mxu0 %v3453
        %4248 = vmatprep.subr.mxu0 %v3462
        %4249 = vmatpush1.msra.mxu0 %v3461
        %4250 = vmatprep.subr.mxu0 %v3470
        %4251 = vmatpush1.msra.mxu0 %v3469
        %4252 = vmatprep.subr.mxu0 %v3478
        %4253 = vmatpush1.msra.mxu0 %v3477
        %4254 = vmatprep.subr.mxu0 %v3486
        %4255 = vmatpush1.msra.mxu0 %v3485
        %4256 = vmatprep.subr.mxu0 %v3494
        %4257 = vmatpush1.msra.mxu0 %v3493
        %4258 = vmatprep.subr.mxu0 %v3502
        %4259 = vmatpush1.msra.mxu0 %v3501
        %4260 = vmatprep.subr.mxu0 %v3510
        %4261 = vmatpush1.msra.mxu0 %v3509
        %4262 = vmatprep.subr.mxu0 %v3518
        %4263 = vmatpush1.msra.mxu0 %v3517
        %4264 = vmatprep.subr.mxu0 %v3526
        %4265 = vmatpush1.msra.mxu0 %v3525
        %4266 = vmatprep.subr.mxu0 %v3534
        %4267 = vmatpush1.msra.mxu0 %v3533
        %4268 = vmatprep.subr.mxu0 %v3542
        %4269 = vmatpush1.msra.mxu0 %v3541
        %4270 = vmatprep.subr.mxu0 %v3550
        %4271 = vmatpush1.msra.mxu0 %v3549
        %4272 = vmatprep.subr.mxu0 %v3558
        %4273 = vmatpush1.msra.mxu0 %v3557
        %4274 = vmatprep.subr.mxu0 %v3566
        %4275 = vmatpush1.msra.mxu0 %v3565
        %4276 = vmatprep.subr.mxu0 %v3574
        %4277 = vmatpush1.msra.mxu0 %v3573
        %4278 = vmatprep.subr.mxu0 %v3582
        %4279 = vmatpush1.msra.mxu0 %v3581
        %4280 = vmatprep.subr.mxu0 %v3590
        %4281 = vmatpush1.msra.mxu0 %v3589
        %4282 = vmatprep.subr.mxu0 %v3598
        %4283 = vmatpush1.msra.mxu0 %v3597
        %4284 = vmatprep.subr.mxu0 %v3606
        %4285 = vmatpush1.msra.mxu0 %v3605
        %4286 = vmatprep.subr.mxu0 %v3614
        %4287 = vmatpush1.msra.mxu0 %v3613
        %4288 = vmatprep.subr.mxu0 %v3622
        %4289 = vmatpush1.msra.mxu0 %v3621
        %4290 = vmatprep.subr.mxu0 %v3630
        %4291 = vmatpush1.msra.mxu0 %v3629
        %4292 = vmatprep.subr.mxu0 %v3638
        %4293 = vmatpush1.msra.mxu0 %v3637
        %4294 = vmatprep.subr.mxu0 %v3646
        %4295 = vmatpush1.msra.mxu0 %v3645
        %4296 = vmatprep.subr.mxu0 %v3654
        %4297 = vmatpush1.msra.mxu0 %v3653
        %4298 = vmatprep.subr.mxu0 %v3662
        %4299 = vmatpush1.msra.mxu0 %v3661
        %4300 = vmatprep.subr.mxu0 %v3670
        %4301 = vmatpush1.msra.mxu0 %v3669
        %4302 = vmatprep.subr.mxu0 %v3678
        %4303 = vmatpush1.msra.mxu0 %v3677
        %4304 = vmatprep.subr.mxu0 %v3686
        %4305 = vmatpush1.msra.mxu0 %v3685
        %4306 = vmatprep.subr.mxu0 %v3694
        %4307 = vmatpush1.msra.mxu0 %v3693
        %4308 = vmatprep.subr.mxu0 %v3702
        %4309 = vmatpush1.msra.mxu0 %v3701
        %4310 = vmatprep.mubr.f32.mxu0 %v2673
        %4311 = vmatmul.mubr.f32.gmra.mrb[0].mxu0 %v2672
        %v4312 = vpop.f32.mrb[0].mxu0
        %v4313 = vadd.f32 %v4236, %v4312
        %v4314 = vpop.f32.mrb[0].mxu0
        %v4315 = vadd.f32 %v4238, %v4314
        %4316 = vmatprep.mubr.f32.mxu0 %v2681
        %4317 = vmatmul.mubr.f32.gmra.mrb[0].mxu0 %v2680
        %v4318 = vpop.f32.mrb[0].mxu0
        %v4319 = vadd.f32 %v4242, %v4318
        %v4320 = vpop.f32.mrb[0].mxu0
        %v4321 = vadd.f32 %v4244, %v4320
        %4322 = vdwg.mxu0
        %4323 = vmatprep.subr.mxu0 %v2688
        %4324 = vmatpush1.msra.mxu0 %v2687
        %4325 = vmatprep.subr.mxu0 %v2696
        %4326 = vmatpush1.msra.mxu0 %v2695
        %4327 = vmatprep.subr.mxu0 %v2704
        %4328 = vmatpush1.msra.mxu0 %v2703
        %4329 = vmatprep.subr.mxu0 %v2712
        %4330 = vmatpush1.msra.mxu0 %v2711
        %4331 = vmatprep.subr.mxu0 %v2720
        %4332 = vmatpush1.msra.mxu0 %v2719
        %4333 = vmatprep.subr.mxu0 %v2728
        %4334 = vmatpush1.msra.mxu0 %v2727
        %4335 = vmatprep.subr.mxu0 %v2736
        %4336 = vmatpush1.msra.mxu0 %v2735
        %4337 = vmatprep.subr.mxu0 %v2744
        %4338 = vmatpush1.msra.mxu0 %v2743
        %4339 = vmatprep.subr.mxu0 %v2752
        %4340 = vmatpush1.msra.mxu0 %v2751
        %4341 = vmatprep.subr.mxu0 %v2760
        %4342 = vmatpush1.msra.mxu0 %v2759
        %4343 = vmatprep.subr.mxu0 %v2768
        %4344 = vmatpush1.msra.mxu0 %v2767
        %4345 = vmatprep.subr.mxu0 %v2776
        %4346 = vmatpush1.msra.mxu0 %v2775
        %4347 = vmatprep.subr.mxu0 %v2784
        %4348 = vmatpush1.msra.mxu0 %v2783
        %4349 = vmatprep.subr.mxu0 %v2792
        %4350 = vmatpush1.msra.mxu0 %v2791
        %4351 = vmatprep.subr.mxu0 %v2800
        %4352 = vmatpush1.msra.mxu0 %v2799
        %4353 = vmatprep.subr.mxu0 %v2808
        %4354 = vmatpush1.msra.mxu0 %v2807
        %4355 = vmatprep.subr.mxu0 %v2816
        %4356 = vmatpush1.msra.mxu0 %v2815
        %4357 = vmatprep.subr.mxu0 %v2824
        %4358 = vmatpush1.msra.mxu0 %v2823
        %4359 = vmatprep.subr.mxu0 %v2832
        %4360 = vmatpush1.msra.mxu0 %v2831
        %4361 = vmatprep.subr.mxu0 %v2840
        %4362 = vmatpush1.msra.mxu0 %v2839
        %4363 = vmatprep.subr.mxu0 %v2848
        %4364 = vmatpush1.msra.mxu0 %v2847
        %4365 = vmatprep.subr.mxu0 %v2856
        %4366 = vmatpush1.msra.mxu0 %v2855
        %4367 = vmatprep.subr.mxu0 %v2864
        %4368 = vmatpush1.msra.mxu0 %v2863
        %4369 = vmatprep.subr.mxu0 %v2872
        %4370 = vmatpush1.msra.mxu0 %v2871
        %4371 = vmatprep.subr.mxu0 %v2880
        %4372 = vmatpush1.msra.mxu0 %v2879
        %4373 = vmatprep.subr.mxu0 %v2888
        %4374 = vmatpush1.msra.mxu0 %v2887
        %4375 = vmatprep.subr.mxu0 %v2896
        %4376 = vmatpush1.msra.mxu0 %v2895
        %4377 = vmatprep.subr.mxu0 %v2904
        %4378 = vmatpush1.msra.mxu0 %v2903
        %4379 = vmatprep.subr.mxu0 %v2912
        %4380 = vmatpush1.msra.mxu0 %v2911
        %4381 = vmatprep.subr.mxu0 %v2920
        %4382 = vmatpush1.msra.mxu0 %v2919
        %4383 = vmatprep.subr.mxu0 %v2928
        %4384 = vmatpush1.msra.mxu0 %v2927
        %4385 = vmatprep.subr.mxu0 %v2936
        %4386 = vmatpush1.msra.mxu0 %v2935
        %4387 = vmatprep.mubr.f32.mxu0 %v2667
        %4388 = vmatmul.mubr.f32.gmra.mrb[0].mxu0 %v2666
        %v4389 = vpop.f32.mrb[0].mxu0
        %v4390 = vadd.f32 0.0, %v4389
        %v4391 = vpop.f32.mrb[0].mxu0
        %v4392 = vadd.f32 0.0, %v4391
        %4393 = vmatprep.mubr.f32.mxu0 %v2675
        %4394 = vmatmul.mubr.f32.gmra.mrb[0].mxu0 %v2674
        %v4395 = vpop.f32.mrb[0].mxu0
        %v4396 = vadd.f32 0.0, %v4395
        %v4397 = vpop.f32.mrb[0].mxu0
        %v4398 = vadd.f32 0.0, %v4397
        %4399 = vdwg.mxu0
        %4400 = vmatprep.subr.mxu0 %v2944
        %4401 = vmatpush1.msra.mxu0 %v2943
        %4402 = vmatprep.subr.mxu0 %v2952
        %4403 = vmatpush1.msra.mxu0 %v2951
        %4404 = vmatprep.subr.mxu0 %v2960
        %4405 = vmatpush1.msra.mxu0 %v2959
        %4406 = vmatprep.subr.mxu0 %v2968
        %4407 = vmatpush1.msra.mxu0 %v2967
        %4408 = vmatprep.subr.mxu0 %v2976
        %4409 = vmatpush1.msra.mxu0 %v2975
        %4410 = vmatprep.subr.mxu0 %v2984
        %4411 = vmatpush1.msra.mxu0 %v2983
        %4412 = vmatprep.subr.mxu0 %v2992
        %4413 = vmatpush1.msra.mxu0 %v2991
        %4414 = vmatprep.subr.mxu0 %v3000
        %4415 = vmatpush1.msra.mxu0 %v2999
        %4416 = vmatprep.subr.mxu0 %v3008
        %4417 = vmatpush1.msra.mxu0 %v3007
        %4418 = vmatprep.subr.mxu0 %v3016
        %4419 = vmatpush1.msra.mxu0 %v3015
        %4420 = vmatprep.subr.mxu0 %v3024
        %4421 = vmatpush1.msra.mxu0 %v3023
        %4422 = vmatprep.subr.mxu0 %v3032
        %4423 = vmatpush1.msra.mxu0 %v3031
        %4424 = vmatprep.subr.mxu0 %v3040
        %4425 = vmatpush1.msra.mxu0 %v3039
        %4426 = vmatprep.subr.mxu0 %v3048
        %4427 = vmatpush1.msra.mxu0 %v3047
        %4428 = vmatprep.subr.mxu0 %v3056
        %4429 = vmatpush1.msra.mxu0 %v3055
        %4430 = vmatprep.subr.mxu0 %v3064
        %4431 = vmatpush1.msra.mxu0 %v3063
        %4432 = vmatprep.subr.mxu0 %v3072
        %4433 = vmatpush1.msra.mxu0 %v3071
        %4434 = vmatprep.subr.mxu0 %v3080
        %4435 = vmatpush1.msra.mxu0 %v3079
        %4436 = vmatprep.subr.mxu0 %v3088
        %4437 = vmatpush1.msra.mxu0 %v3087
        %4438 = vmatprep.subr.mxu0 %v3096
        %4439 = vmatpush1.msra.mxu0 %v3095
        %4440 = vmatprep.subr.mxu0 %v3104
        %4441 = vmatpush1.msra.mxu0 %v3103
        %4442 = vmatprep.subr.mxu0 %v3112
        %4443 = vmatpush1.msra.mxu0 %v3111
        %4444 = vmatprep.subr.mxu0 %v3120
        %4445 = vmatpush1.msra.mxu0 %v3119
        %4446 = vmatprep.subr.mxu0 %v3128
        %4447 = vmatpush1.msra.mxu0 %v3127
        %4448 = vmatprep.subr.mxu0 %v3136
        %4449 = vmatpush1.msra.mxu0 %v3135
        %4450 = vmatprep.subr.mxu0 %v3144
        %4451 = vmatpush1.msra.mxu0 %v3143
        %4452 = vmatprep.subr.mxu0 %v3152
        %4453 = vmatpush1.msra.mxu0 %v3151
        %4454 = vmatprep.subr.mxu0 %v3160
        %4455 = vmatpush1.msra.mxu0 %v3159
        %4456 = vmatprep.subr.mxu0 %v3168
        %4457 = vmatpush1.msra.mxu0 %v3167
        %4458 = vmatprep.subr.mxu0 %v3176
        %4459 = vmatpush1.msra.mxu0 %v3175
        %4460 = vmatprep.subr.mxu0 %v3184
        %4461 = vmatpush1.msra.mxu0 %v3183
        %4462 = vmatprep.subr.mxu0 %v3192
        %4463 = vmatpush1.msra.mxu0 %v3191
        %4464 = vmatprep.mubr.f32.mxu0 %v2669
        %4465 = vmatmul.mubr.f32.gmra.mrb[0].mxu0 %v2668
        %v4466 = vpop.f32.mrb[0].mxu0
        %v4467 = vadd.f32 %v4390, %v4466
        %v4468 = vpop.f32.mrb[0].mxu0
        %v4469 = vadd.f32 %v4392, %v4468
        %4470 = vmatprep.mubr.f32.mxu0 %v2677
        %4471 = vmatmul.mubr.f32.gmra.mrb[0].mxu0 %v2676
        %v4472 = vpop.f32.mrb[0].mxu0
        %v4473 = vadd.f32 %v4396, %v4472
        %v4474 = vpop.f32.mrb[0].mxu0
        %v4475 = vadd.f32 %v4398, %v4474
        %4476 = vdwg.mxu0
        %4477 = vmatprep.subr.mxu0 %v3200
        %4478 = vmatpush1.msra.mxu0 %v3199
        %4479 = vmatprep.subr.mxu0 %v3208
        %4480 = vmatpush1.msra.mxu0 %v3207
        %4481 = vmatprep.subr.mxu0 %v3216
        %4482 = vmatpush1.msra.mxu0 %v3215
        %4483 = vmatprep.subr.mxu0 %v3224
        %4484 = vmatpush1.msra.mxu0 %v3223
        %4485 = vmatprep.subr.mxu0 %v3232
        %4486 = vmatpush1.msra.mxu0 %v3231
        %4487 = vmatprep.subr.mxu0 %v3240
        %4488 = vmatpush1.msra.mxu0 %v3239
        %4489 = vmatprep.subr.mxu0 %v3248
        %4490 = vmatpush1.msra.mxu0 %v3247
        %4491 = vmatprep.subr.mxu0 %v3256
        %4492 = vmatpush1.msra.mxu0 %v3255
        %4493 = vmatprep.subr.mxu0 %v3264
        %4494 = vmatpush1.msra.mxu0 %v3263
        %4495 = vmatprep.subr.mxu0 %v3272
        %4496 = vmatpush1.msra.mxu0 %v3271
        %4497 = vmatprep.subr.mxu0 %v3280
        %4498 = vmatpush1.msra.mxu0 %v3279
        %4499 = vmatprep.subr.mxu0 %v3288
        %4500 = vmatpush1.msra.mxu0 %v3287
        %4501 = vmatprep.subr.mxu0 %v3296
        %4502 = vmatpush1.msra.mxu0 %v3295
        %4503 = vmatprep.subr.mxu0 %v3304
        %4504 = vmatpush1.msra.mxu0 %v3303
        %4505 = vmatprep.subr.mxu0 %v3312
        %4506 = vmatpush1.msra.mxu0 %v3311
        %4507 = vmatprep.subr.mxu0 %v3320
        %4508 = vmatpush1.msra.mxu0 %v3319
        %4509 = vmatprep.subr.mxu0 %v3328
        %4510 = vmatpush1.msra.mxu0 %v3327
        %4511 = vmatprep.subr.mxu0 %v3336
        %4512 = vmatpush1.msra.mxu0 %v3335
        %4513 = vmatprep.subr.mxu0 %v3344
        %4514 = vmatpush1.msra.mxu0 %v3343
        %4515 = vmatprep.subr.mxu0 %v3352
        %4516 = vmatpush1.msra.mxu0 %v3351
        %4517 = vmatprep.subr.mxu0 %v3360
        %4518 = vmatpush1.msra.mxu0 %v3359
        %4519 = vmatprep.subr.mxu0 %v3368
        %4520 = vmatpush1.msra.mxu0 %v3367
        %4521 = vmatprep.subr.mxu0 %v3376
        %4522 = vmatpush1.msra.mxu0 %v3375
        %4523 = vmatprep.subr.mxu0 %v3384
        %4524 = vmatpush1.msra.mxu0 %v3383
        %4525 = vmatprep.subr.mxu0 %v3392
        %4526 = vmatpush1.msra.mxu0 %v3391
        %4527 = vmatprep.subr.mxu0 %v3400
        %4528 = vmatpush1.msra.mxu0 %v3399
        %4529 = vmatprep.subr.mxu0 %v3408
        %4530 = vmatpush1.msra.mxu0 %v3407
        %4531 = vmatprep.subr.mxu0 %v3416
        %4532 = vmatpush1.msra.mxu0 %v3415
        %4533 = vmatprep.subr.mxu0 %v3424
        %4534 = vmatpush1.msra.mxu0 %v3423
        %4535 = vmatprep.subr.mxu0 %v3432
        %4536 = vmatpush1.msra.mxu0 %v3431
        %4537 = vmatprep.subr.mxu0 %v3440
        %4538 = vmatpush1.msra.mxu0 %v3439
        %4539 = vmatprep.subr.mxu0 %v3448
        %4540 = vmatpush1.msra.mxu0 %v3447
        %4541 = vmatprep.mubr.f32.mxu0 %v2671
        %4542 = vmatmul.mubr.f32.gmra.mrb[0].mxu0 %v2670
        %v4543 = vpop.f32.mrb[0].mxu0
        %v4544 = vadd.f32 %v4467, %v4543
        %v4545 = vpop.f32.mrb[0].mxu0
        %v4546 = vadd.f32 %v4469, %v4545
        %4547 = vmatprep.mubr.f32.mxu0 %v2679
        %4548 = vmatmul.mubr.f32.gmra.mrb[0].mxu0 %v2678
        %v4549 = vpop.f32.mrb[0].mxu0
        %v4550 = vadd.f32 %v4473, %v4549
        %v4551 = vpop.f32.mrb[0].mxu0
        %v4552 = vadd.f32 %v4475, %v4551
        %4553 = vdwg.mxu0
        %4554 = vmatprep.subr.mxu0 %v3456
        %4555 = vmatpush1.msra.mxu0 %v3455
        %4556 = vmatprep.subr.mxu0 %v3464
        %4557 = vmatpush1.msra.mxu0 %v3463
        %4558 = vmatprep.subr.mxu0 %v3472
        %4559 = vmatpush1.msra.mxu0 %v3471
        %4560 = vmatprep.subr.mxu0 %v3480
        %4561 = vmatpush1.msra.mxu0 %v3479
        %4562 = vmatprep.subr.mxu0 %v3488
        %4563 = vmatpush1.msra.mxu0 %v3487
        %4564 = vmatprep.subr.mxu0 %v3496
        %4565 = vmatpush1.msra.mxu0 %v3495
        %4566 = vmatprep.subr.mxu0 %v3504
        %4567 = vmatpush1.msra.mxu0 %v3503
        %4568 = vmatprep.subr.mxu0 %v3512
        %4569 = vmatpush1.msra.mxu0 %v3511
        %4570 = vmatprep.subr.mxu0 %v3520
        %4571 = vmatpush1.msra.mxu0 %v3519
        %4572 = vmatprep.subr.mxu0 %v3528
        %4573 = vmatpush1.msra.mxu0 %v3527
        %4574 = vmatprep.subr.mxu0 %v3536
        %4575 = vmatpush1.msra.mxu0 %v3535
        %4576 = vmatprep.subr.mxu0 %v3544
        %4577 = vmatpush1.msra.mxu0 %v3543
        %4578 = vmatprep.subr.mxu0 %v3552
        %4579 = vmatpush1.msra.mxu0 %v3551
        %4580 = vmatprep.subr.mxu0 %v3560
        %4581 = vmatpush1.msra.mxu0 %v3559
        %4582 = vmatprep.subr.mxu0 %v3568
        %4583 = vmatpush1.msra.mxu0 %v3567
        %4584 = vmatprep.subr.mxu0 %v3576
        %4585 = vmatpush1.msra.mxu0 %v3575
        %4586 = vmatprep.subr.mxu0 %v3584
        %4587 = vmatpush1.msra.mxu0 %v3583
        %4588 = vmatprep.subr.mxu0 %v3592
        %4589 = vmatpush1.msra.mxu0 %v3591
        %4590 = vmatprep.subr.mxu0 %v3600
        %4591 = vmatpush1.msra.mxu0 %v3599
        %4592 = vmatprep.subr.mxu0 %v3608
        %4593 = vmatpush1.msra.mxu0 %v3607
        %4594 = vmatprep.subr.mxu0 %v3616
        %4595 = vmatpush1.msra.mxu0 %v3615
        %4596 = vmatprep.subr.mxu0 %v3624
        %4597 = vmatpush1.msra.mxu0 %v3623
        %4598 = vmatprep.subr.mxu0 %v3632
        %4599 = vmatpush1.msra.mxu0 %v3631
        %4600 = vmatprep.subr.mxu0 %v3640
        %4601 = vmatpush1.msra.mxu0 %v3639
        %4602 = vmatprep.subr.mxu0 %v3648
        %4603 = vmatpush1.msra.mxu0 %v3647
        %4604 = vmatprep.subr.mxu0 %v3656
        %4605 = vmatpush1.msra.mxu0 %v3655
        %4606 = vmatprep.subr.mxu0 %v3664
        %4607 = vmatpush1.msra.mxu0 %v3663
        %4608 = vmatprep.subr.mxu0 %v3672
        %4609 = vmatpush1.msra.mxu0 %v3671
        %4610 = vmatprep.subr.mxu0 %v3680
        %4611 = vmatpush1.msra.mxu0 %v3679
        %4612 = vmatprep.subr.mxu0 %v3688
        %4613 = vmatpush1.msra.mxu0 %v3687
        %4614 = vmatprep.subr.mxu0 %v3696
        %4615 = vmatpush1.msra.mxu0 %v3695
        %4616 = vmatprep.subr.mxu0 %v3704
        %4617 = vmatpush1.msra.mxu0 %v3703
        %4618 = vmatprep.mubr.f32.mxu0 %v2673
        %4619 = vmatmul.mubr.f32.gmra.mrb[0].mxu0 %v2672
        %v4620 = vpop.f32.mrb[0].mxu0
        %v4621 = vadd.f32 %v4544, %v4620
        %v4622 = vpop.f32.mrb[0].mxu0
        %v4623 = vadd.f32 %v4546, %v4622
        %4624 = vmatprep.mubr.f32.mxu0 %v2681
        %4625 = vmatmul.mubr.f32.gmra.mrb[0].mxu0 %v2680
        %v4626 = vpop.f32.mrb[0].mxu0
        %v4627 = vadd.f32 %v4550, %v4626
        %v4628 = vpop.f32.mrb[0].mxu0
        %v4629 = vadd.f32 %v4552, %v4628
        %4630 = vdwg.mxu0
        %4631 = vmatprep.subr.mxu0 %v2690
        %4632 = vmatpush1.msra.mxu0 %v2689
        %4633 = vmatprep.subr.mxu0 %v2698
        %4634 = vmatpush1.msra.mxu0 %v2697
        %4635 = vmatprep.subr.mxu0 %v2706
        %4636 = vmatpush1.msra.mxu0 %v2705
        %4637 = vmatprep.subr.mxu0 %v2714
        %4638 = vmatpush1.msra.mxu0 %v2713
        %4639 = vmatprep.subr.mxu0 %v2722
        %4640 = vmatpush1.msra.mxu0 %v2721
        %4641 = vmatprep.subr.mxu0 %v2730
        %4642 = vmatpush1.msra.mxu0 %v2729
        %4643 = vmatprep.subr.mxu0 %v2738
        %4644 = vmatpush1.msra.mxu0 %v2737
        %4645 = vmatprep.subr.mxu0 %v2746
        %4646 = vmatpush1.msra.mxu0 %v2745
        %4647 = vmatprep.subr.mxu0 %v2754
        %4648 = vmatpush1.msra.mxu0 %v2753
        %4649 = vmatprep.subr.mxu0 %v2762
        %4650 = vmatpush1.msra.mxu0 %v2761
        %4651 = vmatprep.subr.mxu0 %v2770
        %4652 = vmatpush1.msra.mxu0 %v2769
        %4653 = vmatprep.subr.mxu0 %v2778
        %4654 = vmatpush1.msra.mxu0 %v2777
        %4655 = vmatprep.subr.mxu0 %v2786
        %4656 = vmatpush1.msra.mxu0 %v2785
        %4657 = vmatprep.subr.mxu0 %v2794
        %4658 = vmatpush1.msra.mxu0 %v2793
        %4659 = vmatprep.subr.mxu0 %v2802
        %4660 = vmatpush1.msra.mxu0 %v2801
        %4661 = vmatprep.subr.mxu0 %v2810
        %4662 = vmatpush1.msra.mxu0 %v2809
        %4663 = vmatprep.subr.mxu0 %v2818
        %4664 = vmatpush1.msra.mxu0 %v2817
        %4665 = vmatprep.subr.mxu0 %v2826
        %4666 = vmatpush1.msra.mxu0 %v2825
        %4667 = vmatprep.subr.mxu0 %v2834
        %4668 = vmatpush1.msra.mxu0 %v2833
        %4669 = vmatprep.subr.mxu0 %v2842
        %4670 = vmatpush1.msra.mxu0 %v2841
        %4671 = vmatprep.subr.mxu0 %v2850
        %4672 = vmatpush1.msra.mxu0 %v2849
        %4673 = vmatprep.subr.mxu0 %v2858
        %4674 = vmatpush1.msra.mxu0 %v2857
        %4675 = vmatprep.subr.mxu0 %v2866
        %4676 = vmatpush1.msra.mxu0 %v2865
        %4677 = vmatprep.subr.mxu0 %v2874
        %4678 = vmatpush1.msra.mxu0 %v2873
        %4679 = vmatprep.subr.mxu0 %v2882
        %4680 = vmatpush1.msra.mxu0 %v2881
        %4681 = vmatprep.subr.mxu0 %v2890
        %4682 = vmatpush1.msra.mxu0 %v2889
        %4683 = vmatprep.subr.mxu0 %v2898
        %4684 = vmatpush1.msra.mxu0 %v2897
        %4685 = vmatprep.subr.mxu0 %v2906
        %4686 = vmatpush1.msra.mxu0 %v2905
        %4687 = vmatprep.subr.mxu0 %v2914
        %4688 = vmatpush1.msra.mxu0 %v2913
        %4689 = vmatprep.subr.mxu0 %v2922
        %4690 = vmatpush1.msra.mxu0 %v2921
        %4691 = vmatprep.subr.mxu0 %v2930
        %4692 = vmatpush1.msra.mxu0 %v2929
        %4693 = vmatprep.subr.mxu0 %v2938
        %4694 = vmatpush1.msra.mxu0 %v2937
        %4695 = vmatprep.mubr.f32.mxu0 %v2667
        %4696 = vmatmul.mubr.f32.gmra.mrb[0].mxu0 %v2666
        %v4697 = vpop.f32.mrb[0].mxu0
        %v4698 = vadd.f32 0.0, %v4697
        %v4699 = vpop.f32.mrb[0].mxu0
        %v4700 = vadd.f32 0.0, %v4699
        %4701 = vmatprep.mubr.f32.mxu0 %v2675
        %4702 = vmatmul.mubr.f32.gmra.mrb[0].mxu0 %v2674
        %v4703 = vpop.f32.mrb[0].mxu0
        %v4704 = vadd.f32 0.0, %v4703
        %v4705 = vpop.f32.mrb[0].mxu0
        %v4706 = vadd.f32 0.0, %v4705
        %4707 = vdwg.mxu0
        %4708 = vmatprep.subr.mxu0 %v2946
        %4709 = vmatpush1.msra.mxu0 %v2945
        %4710 = vmatprep.subr.mxu0 %v2954
        %4711 = vmatpush1.msra.mxu0 %v2953
        %4712 = vmatprep.subr.mxu0 %v2962
        %4713 = vmatpush1.msra.mxu0 %v2961
        %4714 = vmatprep.subr.mxu0 %v2970
        %4715 = vmatpush1.msra.mxu0 %v2969
        %4716 = vmatprep.subr.mxu0 %v2978
        %4717 = vmatpush1.msra.mxu0 %v2977
        %4718 = vmatprep.subr.mxu0 %v2986
        %4719 = vmatpush1.msra.mxu0 %v2985
        %4720 = vmatprep.subr.mxu0 %v2994
        %4721 = vmatpush1.msra.mxu0 %v2993
        %4722 = vmatprep.subr.mxu0 %v3002
        %4723 = vmatpush1.msra.mxu0 %v3001
        %4724 = vmatprep.subr.mxu0 %v3010
        %4725 = vmatpush1.msra.mxu0 %v3009
        %4726 = vmatprep.subr.mxu0 %v3018
        %4727 = vmatpush1.msra.mxu0 %v3017
        %4728 = vmatprep.subr.mxu0 %v3026
        %4729 = vmatpush1.msra.mxu0 %v3025
        %4730 = vmatprep.subr.mxu0 %v3034
        %4731 = vmatpush1.msra.mxu0 %v3033
        %4732 = vmatprep.subr.mxu0 %v3042
        %4733 = vmatpush1.msra.mxu0 %v3041
        %4734 = vmatprep.subr.mxu0 %v3050
        %4735 = vmatpush1.msra.mxu0 %v3049
        %4736 = vmatprep.subr.mxu0 %v3058
        %4737 = vmatpush1.msra.mxu0 %v3057
        %4738 = vmatprep.subr.mxu0 %v3066
        %4739 = vmatpush1.msra.mxu0 %v3065
        %4740 = vmatprep.subr.mxu0 %v3074
        %4741 = vmatpush1.msra.mxu0 %v3073
        %4742 = vmatprep.subr.mxu0 %v3082
        %4743 = vmatpush1.msra.mxu0 %v3081
        %4744 = vmatprep.subr.mxu0 %v3090
        %4745 = vmatpush1.msra.mxu0 %v3089
        %4746 = vmatprep.subr.mxu0 %v3098
        %4747 = vmatpush1.msra.mxu0 %v3097
        %4748 = vmatprep.subr.mxu0 %v3106
        %4749 = vmatpush1.msra.mxu0 %v3105
        %4750 = vmatprep.subr.mxu0 %v3114
        %4751 = vmatpush1.msra.mxu0 %v3113
        %4752 = vmatprep.subr.mxu0 %v3122
        %4753 = vmatpush1.msra.mxu0 %v3121
        %4754 = vmatprep.subr.mxu0 %v3130
        %4755 = vmatpush1.msra.mxu0 %v3129
        %4756 = vmatprep.subr.mxu0 %v3138
        %4757 = vmatpush1.msra.mxu0 %v3137
        %4758 = vmatprep.subr.mxu0 %v3146
        %4759 = vmatpush1.msra.mxu0 %v3145
        %4760 = vmatprep.subr.mxu0 %v3154
        %4761 = vmatpush1.msra.mxu0 %v3153
        %4762 = vmatprep.subr.mxu0 %v3162
        %4763 = vmatpush1.msra.mxu0 %v3161
        %4764 = vmatprep.subr.mxu0 %v3170
        %4765 = vmatpush1.msra.mxu0 %v3169
        %4766 = vmatprep.subr.mxu0 %v3178
        %4767 = vmatpush1.msra.mxu0 %v3177
        %4768 = vmatprep.subr.mxu0 %v3186
        %4769 = vmatpush1.msra.mxu0 %v3185
        %4770 = vmatprep.subr.mxu0 %v3194
        %4771 = vmatpush1.msra.mxu0 %v3193
        %4772 = vmatprep.mubr.f32.mxu0 %v2669
        %4773 = vmatmul.mubr.f32.gmra.mrb[0].mxu0 %v2668
        %v4774 = vpop.f32.mrb[0].mxu0
        %v4775 = vadd.f32 %v4698, %v4774
        %v4776 = vpop.f32.mrb[0].mxu0
        %v4777 = vadd.f32 %v4700, %v4776
        %4778 = vmatprep.mubr.f32.mxu0 %v2677
        %4779 = vmatmul.mubr.f32.gmra.mrb[0].mxu0 %v2676
        %v4780 = vpop.f32.mrb[0].mxu0
        %v4781 = vadd.f32 %v4704, %v4780
        %v4782 = vpop.f32.mrb[0].mxu0
        %v4783 = vadd.f32 %v4706, %v4782
        %4784 = vdwg.mxu0
        %4785 = vmatprep.subr.mxu0 %v3202
        %4786 = vmatpush1.msra.mxu0 %v3201
        %4787 = vmatprep.subr.mxu0 %v3210
        %4788 = vmatpush1.msra.mxu0 %v3209
        %4789 = vmatprep.subr.mxu0 %v3218
        %4790 = vmatpush1.msra.mxu0 %v3217
        %4791 = vmatprep.subr.mxu0 %v3226
        %4792 = vmatpush1.msra.mxu0 %v3225
        %4793 = vmatprep.subr.mxu0 %v3234
        %4794 = vmatpush1.msra.mxu0 %v3233
        %4795 = vmatprep.subr.mxu0 %v3242
        %4796 = vmatpush1.msra.mxu0 %v3241
        %4797 = vmatprep.subr.mxu0 %v3250
        %4798 = vmatpush1.msra.mxu0 %v3249
        %4799 = vmatprep.subr.mxu0 %v3258
        %4800 = vmatpush1.msra.mxu0 %v3257
        %4801 = vmatprep.subr.mxu0 %v3266
        %4802 = vmatpush1.msra.mxu0 %v3265
        %4803 = vmatprep.subr.mxu0 %v3274
        %4804 = vmatpush1.msra.mxu0 %v3273
        %4805 = vmatprep.subr.mxu0 %v3282
        %4806 = vmatpush1.msra.mxu0 %v3281
        %4807 = vmatprep.subr.mxu0 %v3290
        %4808 = vmatpush1.msra.mxu0 %v3289
        %4809 = vmatprep.subr.mxu0 %v3298
        %4810 = vmatpush1.msra.mxu0 %v3297
        %4811 = vmatprep.subr.mxu0 %v3306
        %4812 = vmatpush1.msra.mxu0 %v3305
        %4813 = vmatprep.subr.mxu0 %v3314
        %4814 = vmatpush1.msra.mxu0 %v3313
        %4815 = vmatprep.subr.mxu0 %v3322
        %4816 = vmatpush1.msra.mxu0 %v3321
        %4817 = vmatprep.subr.mxu0 %v3330
        %4818 = vmatpush1.msra.mxu0 %v3329
        %4819 = vmatprep.subr.mxu0 %v3338
        %4820 = vmatpush1.msra.mxu0 %v3337
        %4821 = vmatprep.subr.mxu0 %v3346
        %4822 = vmatpush1.msra.mxu0 %v3345
        %4823 = vmatprep.subr.mxu0 %v3354
        %4824 = vmatpush1.msra.mxu0 %v3353
        %4825 = vmatprep.subr.mxu0 %v3362
        %4826 = vmatpush1.msra.mxu0 %v3361
        %4827 = vmatprep.subr.mxu0 %v3370
        %4828 = vmatpush1.msra.mxu0 %v3369
        %4829 = vmatprep.subr.mxu0 %v3378
        %4830 = vmatpush1.msra.mxu0 %v3377
        %4831 = vmatprep.subr.mxu0 %v3386
        %4832 = vmatpush1.msra.mxu0 %v3385
        %4833 = vmatprep.subr.mxu0 %v3394
        %4834 = vmatpush1.msra.mxu0 %v3393
        %4835 = vmatprep.subr.mxu0 %v3402
        %4836 = vmatpush1.msra.mxu0 %v3401
        %4837 = vmatprep.subr.mxu0 %v3410
        %4838 = vmatpush1.msra.mxu0 %v3409
        %4839 = vmatprep.subr.mxu0 %v3418
        %4840 = vmatpush1.msra.mxu0 %v3417
        %4841 = vmatprep.subr.mxu0 %v3426
        %4842 = vmatpush1.msra.mxu0 %v3425
        %4843 = vmatprep.subr.mxu0 %v3434
        %4844 = vmatpush1.msra.mxu0 %v3433
        %4845 = vmatprep.subr.mxu0 %v3442
        %4846 = vmatpush1.msra.mxu0 %v3441
        %4847 = vmatprep.subr.mxu0 %v3450
        %4848 = vmatpush1.msra.mxu0 %v3449
        %4849 = vmatprep.mubr.f32.mxu0 %v2671
        %4850 = vmatmul.mubr.f32.gmra.mrb[0].mxu0 %v2670
        %v4851 = vpop.f32.mrb[0].mxu0
        %v4852 = vadd.f32 %v4775, %v4851
        %v4853 = vpop.f32.mrb[0].mxu0
        %v4854 = vadd.f32 %v4777, %v4853
        %4855 = vmatprep.mubr.f32.mxu0 %v2679
        %4856 = vmatmul.mubr.f32.gmra.mrb[0].mxu0 %v2678
        %v4857 = vpop.f32.mrb[0].mxu0
        %v4858 = vadd.f32 %v4781, %v4857
        %v4859 = vpop.f32.mrb[0].mxu0
        %v4860 = vadd.f32 %v4783, %v4859
        %4861 = vdwg.mxu0
        %4862 = vmatprep.subr.mxu0 %v3458
        %4863 = vmatpush1.msra.mxu0 %v3457
        %4864 = vmatprep.subr.mxu0 %v3466
        %4865 = vmatpush1.msra.mxu0 %v3465
        %4866 = vmatprep.subr.mxu0 %v3474
        %4867 = vmatpush1.msra.mxu0 %v3473
        %4868 = vmatprep.subr.mxu0 %v3482
        %4869 = vmatpush1.msra.mxu0 %v3481
        %4870 = vmatprep.subr.mxu0 %v3490
        %4871 = vmatpush1.msra.mxu0 %v3489
        %4872 = vmatprep.subr.mxu0 %v3498
        %4873 = vmatpush1.msra.mxu0 %v3497
        %4874 = vmatprep.subr.mxu0 %v3506
        %4875 = vmatpush1.msra.mxu0 %v3505
        %4876 = vmatprep.subr.mxu0 %v3514
        %4877 = vmatpush1.msra.mxu0 %v3513
        %4878 = vmatprep.subr.mxu0 %v3522
        %4879 = vmatpush1.msra.mxu0 %v3521
        %4880 = vmatprep.subr.mxu0 %v3530
        %4881 = vmatpush1.msra.mxu0 %v3529
        %4882 = vmatprep.subr.mxu0 %v3538
        %4883 = vmatpush1.msra.mxu0 %v3537
        %4884 = vmatprep.subr.mxu0 %v3546
        %4885 = vmatpush1.msra.mxu0 %v3545
        %4886 = vmatprep.subr.mxu0 %v3554
        %4887 = vmatpush1.msra.mxu0 %v3553
        %4888 = vmatprep.subr.mxu0 %v3562
        %4889 = vmatpush1.msra.mxu0 %v3561
        %4890 = vmatprep.subr.mxu0 %v3570
        %4891 = vmatpush1.msra.mxu0 %v3569
        %4892 = vmatprep.subr.mxu0 %v3578
        %4893 = vmatpush1.msra.mxu0 %v3577
        %4894 = vmatprep.subr.mxu0 %v3586
        %4895 = vmatpush1.msra.mxu0 %v3585
        %4896 = vmatprep.subr.mxu0 %v3594
        %4897 = vmatpush1.msra.mxu0 %v3593
        %4898 = vmatprep.subr.mxu0 %v3602
        %4899 = vmatpush1.msra.mxu0 %v3601
        %4900 = vmatprep.subr.mxu0 %v3610
        %4901 = vmatpush1.msra.mxu0 %v3609
        %4902 = vmatprep.subr.mxu0 %v3618
        %4903 = vmatpush1.msra.mxu0 %v3617
        %4904 = vmatprep.subr.mxu0 %v3626
        %4905 = vmatpush1.msra.mxu0 %v3625
        %4906 = vmatprep.subr.mxu0 %v3634
        %4907 = vmatpush1.msra.mxu0 %v3633
        %4908 = vmatprep.subr.mxu0 %v3642
        %4909 = vmatpush1.msra.mxu0 %v3641
        %4910 = vmatprep.subr.mxu0 %v3650
        %4911 = vmatpush1.msra.mxu0 %v3649
        %4912 = vmatprep.subr.mxu0 %v3658
        %4913 = vmatpush1.msra.mxu0 %v3657
        %4914 = vmatprep.subr.mxu0 %v3666
        %4915 = vmatpush1.msra.mxu0 %v3665
        %4916 = vmatprep.subr.mxu0 %v3674
        %4917 = vmatpush1.msra.mxu0 %v3673
        %4918 = vmatprep.subr.mxu0 %v3682
        %4919 = vmatpush1.msra.mxu0 %v3681
        %4920 = vmatprep.subr.mxu0 %v3690
        %4921 = vmatpush1.msra.mxu0 %v3689
        %4922 = vmatprep.subr.mxu0 %v3698
        %4923 = vmatpush1.msra.mxu0 %v3697
        %4924 = vmatprep.subr.mxu0 %v3706
        %4925 = vmatpush1.msra.mxu0 %v3705
        %4926 = vmatprep.mubr.f32.mxu0 %v2673
        %4927 = vmatmul.mubr.f32.gmra.mrb[0].mxu0 %v2672
        %v4928 = vpop.f32.mrb[0].mxu0
        %v4929 = vadd.f32 %v4852, %v4928
        %v4930 = vpop.f32.mrb[0].mxu0
        %v4931 = vadd.f32 %v4854, %v4930
        %4932 = vmatprep.mubr.f32.mxu0 %v2681
        %4933 = vmatmul.mubr.f32.gmra.mrb[0].mxu0 %v2680
        %v4934 = vpop.f32.mrb[0].mxu0
        %v4935 = vadd.f32 %v4858, %v4934
        %v4936 = vpop.f32.mrb[0].mxu0
        %v4937 = vadd.f32 %v4860, %v4936
        %4938 = vdwg.mxu0
        %v4939 = vadd.f32 %v1731, %v4005
        %v4940 = vadd.f32 %v1733, %v4007
        %v4941 = vadd.f32 %v2039, %v4313
        %v4942 = vadd.f32 %v2041, %v4315
        %v4943 = vadd.f32 %v2347, %v4621
        %v4944 = vadd.f32 %v2349, %v4623
        %v4945 = vadd.f32 %v2655, %v4929
        %v4946 = vadd.f32 %v2657, %v4931
        %v4947 = vadd.f32 %v1737, %v4011
        %v4948 = vadd.f32 %v1739, %v4013
        %v4949 = vadd.f32 %v2045, %v4319
        %v4950 = vadd.f32 %v2047, %v4321
        %v4951 = vadd.f32 %v2353, %v4627
        %v4952 = vadd.f32 %v2355, %v4629
        %v4953 = vadd.f32 %v2661, %v4935
        %v4954 = vadd.f32 %v2663, %v4937
        %s4955 = scalar_lea.vmem %s1, 16
        %v4956 = vld [vmem:[%s4955] sm:$0xff]
        %v4957 = vld [vmem:[%s4955 + $0x8] sm:$0xff]
        %s4958 = scalar_lea.vmem %s282, 8 [#allocation4]
        %v4959 = vld [vmem:[%s4958] sm:$0xff]
        %4961 = vset.pattern.permute.xlu0 0
        %4962 = vperm.xlu0 %4961, %v4956
        %v4963 = vpop.permute.xlu0 %4962
        %4966 = vset.pattern.permute.xlu0 0
        %4967 = vperm.xlu0 %4966, %v4957
        %v4968 = vpop.permute.xlu0 %4967
        %v4971 = vlaneseq
        %v4972 = vshrl.u32 %v4971, 7
        %v4973 = vsub.s32 0, %v4972
        %v4974 = vrot.slane %v4959, %v4973
        %v4975 = vlaneseq
        %v4976 = vshrl.u32 %v4975, 7
        %v4977 = vsub.s32 1, %v4976
        %v4978 = vrot.slane %v4959, %v4977
        %v4979 = vlaneseq
        %v4980 = vshrl.u32 %v4979, 7
        %v4981 = vsub.s32 2, %v4980
        %v4982 = vrot.slane %v4959, %v4981
        %v4983 = vlaneseq
        %v4984 = vshrl.u32 %v4983, 7
        %v4985 = vsub.s32 3, %v4984
        %v4986 = vrot.slane %v4959, %v4985
        %v4987 = vlaneseq
        %v4988 = vshrl.u32 %v4987, 7
        %v4989 = vsub.s32 4, %v4988
        %v4990 = vrot.slane %v4959, %v4989
        %v4991 = vlaneseq
        %v4992 = vshrl.u32 %v4991, 7
        %v4993 = vsub.s32 5, %v4992
        %v4994 = vrot.slane %v4959, %v4993
        %v4995 = vlaneseq
        %v4996 = vshrl.u32 %v4995, 7
        %v4997 = vsub.s32 6, %v4996
        %v4998 = vrot.slane %v4959, %v4997
        %v4999 = vlaneseq
        %v5000 = vshrl.u32 %v4999, 7
        %v5001 = vsub.s32 7, %v5000
        %v5002 = vrot.slane %v4959, %v5001
        %v5011 = vmul.f32 %v4963, %v4974
        %v5012 = vmul.f32 %v4963, %v4978
        %v5013 = vmul.f32 %v4963, %v4982
        %v5014 = vmul.f32 %v4963, %v4986
        %v5015 = vmul.f32 %v4963, %v4990
        %v5016 = vmul.f32 %v4963, %v4994
        %v5017 = vmul.f32 %v4963, %v4998
        %v5018 = vmul.f32 %v4963, %v5002
        %v5019 = vmul.f32 %v4968, %v4974
        %v5020 = vmul.f32 %v4968, %v4978
        %v5021 = vmul.f32 %v4968, %v4982
        %v5022 = vmul.f32 %v4968, %v4986
        %v5023 = vmul.f32 %v4968, %v4990
        %v5024 = vmul.f32 %v4968, %v4994
        %v5025 = vmul.f32 %v4968, %v4998
        %v5026 = vmul.f32 %v4968, %v5002
        %v5027 = vadd.f32 %v4939, %v5011
        %v5028 = vadd.f32 %v4940, %v5012
        %v5029 = vadd.f32 %v4941, %v5013
        %v5030 = vadd.f32 %v4942, %v5014
        %v5031 = vadd.f32 %v4943, %v5015
        %v5032 = vadd.f32 %v4944, %v5016
        %v5033 = vadd.f32 %v4945, %v5017
        %v5034 = vadd.f32 %v4946, %v5018
        %v5035 = vadd.f32 %v4947, %v5019
        %v5036 = vadd.f32 %v4948, %v5020
        %v5037 = vadd.f32 %v4949, %v5021
        %v5038 = vadd.f32 %v4950, %v5022
        %v5039 = vadd.f32 %v4951, %v5023
        %v5040 = vadd.f32 %v4952, %v5024
        %v5041 = vadd.f32 %v4953, %v5025
        %v5042 = vadd.f32 %v4954, %v5026
        %s5043 = scalar_lea.vmem %s0, 256
        %v5044 = vld [vmem:[%s5043] sm:$0xff]
        %v5045 = vld [vmem:[%s5043 + $0x8] sm:$0xff]
        %v5046 = vld [vmem:[%s5043 + $0x10] sm:$0xff]
        %v5047 = vld [vmem:[%s5043 + $0x18] sm:$0xff]
        %v5048 = vld [vmem:[%s5043 + $0x20] sm:$0xff]
        %v5049 = vld [vmem:[%s5043 + $0x28] sm:$0xff]
        %v5050 = vld [vmem:[%s5043 + $0x30] sm:$0xff]
        %v5051 = vld [vmem:[%s5043 + $0x38] sm:$0xff]
        %v5052 = vld [vmem:[%s5043 + $0x40] sm:$0xff]
        %v5053 = vld [vmem:[%s5043 + $0x48] sm:$0xff]
        %v5054 = vld [vmem:[%s5043 + $0x50] sm:$0xff]
        %v5055 = vld [vmem:[%s5043 + $0x58] sm:$0xff]
        %v5056 = vld [vmem:[%s5043 + $0x60] sm:$0xff]
        %v5057 = vld [vmem:[%s5043 + $0x68] sm:$0xff]
        %v5058 = vld [vmem:[%s5043 + $0x70] sm:$0xff]
        %v5059 = vld [vmem:[%s5043 + $0x78] sm:$0xff]
        %s5060 = scalar_lea.vmem %s274, 16384 [#allocation2]
        %v5061 = vld [vmem:[%s5060] sm:$0xff]
        %v5062 = vld [vmem:[%s5060 + $0x8] sm:$0xff]
        %v5063 = vld [vmem:[%s5060 + $0x10] sm:$0xff]
        %v5064 = vld [vmem:[%s5060 + $0x18] sm:$0xff]
        %v5065 = vld [vmem:[%s5060 + $0x20] sm:$0xff]
        %v5066 = vld [vmem:[%s5060 + $0x28] sm:$0xff]
        %v5067 = vld [vmem:[%s5060 + $0x30] sm:$0xff]
        %v5068 = vld [vmem:[%s5060 + $0x38] sm:$0xff]
        %v5069 = vld [vmem:[%s5060 + $0x40] sm:$0xff]
        %v5070 = vld [vmem:[%s5060 + $0x48] sm:$0xff]
        %v5071 = vld [vmem:[%s5060 + $0x50] sm:$0xff]
        %v5072 = vld [vmem:[%s5060 + $0x58] sm:$0xff]
        %v5073 = vld [vmem:[%s5060 + $0x60] sm:$0xff]
        %v5074 = vld [vmem:[%s5060 + $0x68] sm:$0xff]
        %v5075 = vld [vmem:[%s5060 + $0x70] sm:$0xff]
        %v5076 = vld [vmem:[%s5060 + $0x78] sm:$0xff]
        %v5077 = vld [vmem:[%s5060 + $0x80] sm:$0xff]
        %v5078 = vld [vmem:[%s5060 + $0x88] sm:$0xff]
        %v5079 = vld [vmem:[%s5060 + $0x90] sm:$0xff]
        %v5080 = vld [vmem:[%s5060 + $0x98] sm:$0xff]
        %v5081 = vld [vmem:[%s5060 + $0xa0] sm:$0xff]
        %v5082 = vld [vmem:[%s5060 + $0xa8] sm:$0xff]
        %v5083 = vld [vmem:[%s5060 + $0xb0] sm:$0xff]
        %v5084 = vld [vmem:[%s5060 + $0xb8] sm:$0xff]
        %v5085 = vld [vmem:[%s5060 + $0xc0] sm:$0xff]
        %v5086 = vld [vmem:[%s5060 + $0xc8] sm:$0xff]
        %v5087 = vld [vmem:[%s5060 + $0xd0] sm:$0xff]
        %v5088 = vld [vmem:[%s5060 + $0xd8] sm:$0xff]
        %v5089 = vld [vmem:[%s5060 + $0xe0] sm:$0xff]
        %v5090 = vld [vmem:[%s5060 + $0xe8] sm:$0xff]
        %v5091 = vld [vmem:[%s5060 + $0xf0] sm:$0xff]
        %v5092 = vld [vmem:[%s5060 + $0xf8] sm:$0xff]
        %v5093 = vld [vmem:[%s5060 + $0x100] sm:$0xff]
        %v5094 = vld [vmem:[%s5060 + $0x108] sm:$0xff]
        %v5095 = vld [vmem:[%s5060 + $0x110] sm:$0xff]
        %v5096 = vld [vmem:[%s5060 + $0x118] sm:$0xff]
        %v5097 = vld [vmem:[%s5060 + $0x120] sm:$0xff]
        %v5098 = vld [vmem:[%s5060 + $0x128] sm:$0xff]
        %v5099 = vld [vmem:[%s5060 + $0x130] sm:$0xff]
        %v5100 = vld [vmem:[%s5060 + $0x138] sm:$0xff]
        %v5101 = vld [vmem:[%s5060 + $0x140] sm:$0xff]
        %v5102 = vld [vmem:[%s5060 + $0x148] sm:$0xff]
        %v5103 = vld [vmem:[%s5060 + $0x150] sm:$0xff]
        %v5104 = vld [vmem:[%s5060 + $0x158] sm:$0xff]
        %v5105 = vld [vmem:[%s5060 + $0x160] sm:$0xff]
        %v5106 = vld [vmem:[%s5060 + $0x168] sm:$0xff]
        %v5107 = vld [vmem:[%s5060 + $0x170] sm:$0xff]
        %v5108 = vld [vmem:[%s5060 + $0x178] sm:$0xff]
        %v5109 = vld [vmem:[%s5060 + $0x180] sm:$0xff]
        %v5110 = vld [vmem:[%s5060 + $0x188] sm:$0xff]
        %v5111 = vld [vmem:[%s5060 + $0x190] sm:$0xff]
        %v5112 = vld [vmem:[%s5060 + $0x198] sm:$0xff]
        %v5113 = vld [vmem:[%s5060 + $0x1a0] sm:$0xff]
        %v5114 = vld [vmem:[%s5060 + $0x1a8] sm:$0xff]
        %v5115 = vld [vmem:[%s5060 + $0x1b0] sm:$0xff]
        %v5116 = vld [vmem:[%s5060 + $0x1b8] sm:$0xff]
        %v5117 = vld [vmem:[%s5060 + $0x1c0] sm:$0xff]
        %v5118 = vld [vmem:[%s5060 + $0x1c8] sm:$0xff]
        %v5119 = vld [vmem:[%s5060 + $0x1d0] sm:$0xff]
        %v5120 = vld [vmem:[%s5060 + $0x1d8] sm:$0xff]
        %v5121 = vld [vmem:[%s5060 + $0x1e0] sm:$0xff]
        %v5122 = vld [vmem:[%s5060 + $0x1e8] sm:$0xff]
        %v5123 = vld [vmem:[%s5060 + $0x1f0] sm:$0xff]
        %v5124 = vld [vmem:[%s5060 + $0x1f8] sm:$0xff]
        %v5125 = vld [vmem:[%s5060 + $0x200] sm:$0xff]
        %v5126 = vld [vmem:[%s5060 + $0x208] sm:$0xff]
        %v5127 = vld [vmem:[%s5060 + $0x210] sm:$0xff]
        %v5128 = vld [vmem:[%s5060 + $0x218] sm:$0xff]
        %v5129 = vld [vmem:[%s5060 + $0x220] sm:$0xff]
        %v5130 = vld [vmem:[%s5060 + $0x228] sm:$0xff]
        %v5131 = vld [vmem:[%s5060 + $0x230] sm:$0xff]
        %v5132 = vld [vmem:[%s5060 + $0x238] sm:$0xff]
        %v5133 = vld [vmem:[%s5060 + $0x240] sm:$0xff]
        %v5134 = vld [vmem:[%s5060 + $0x248] sm:$0xff]
        %v5135 = vld [vmem:[%s5060 + $0x250] sm:$0xff]
        %v5136 = vld [vmem:[%s5060 + $0x258] sm:$0xff]
        %v5137 = vld [vmem:[%s5060 + $0x260] sm:$0xff]
        %v5138 = vld [vmem:[%s5060 + $0x268] sm:$0xff]
        %v5139 = vld [vmem:[%s5060 + $0x270] sm:$0xff]
        %v5140 = vld [vmem:[%s5060 + $0x278] sm:$0xff]
        %v5141 = vld [vmem:[%s5060 + $0x280] sm:$0xff]
        %v5142 = vld [vmem:[%s5060 + $0x288] sm:$0xff]
        %v5143 = vld [vmem:[%s5060 + $0x290] sm:$0xff]
        %v5144 = vld [vmem:[%s5060 + $0x298] sm:$0xff]
        %v5145 = vld [vmem:[%s5060 + $0x2a0] sm:$0xff]
        %v5146 = vld [vmem:[%s5060 + $0x2a8] sm:$0xff]
        %v5147 = vld [vmem:[%s5060 + $0x2b0] sm:$0xff]
        %v5148 = vld [vmem:[%s5060 + $0x2b8] sm:$0xff]
        %v5149 = vld [vmem:[%s5060 + $0x2c0] sm:$0xff]
        %v5150 = vld [vmem:[%s5060 + $0x2c8] sm:$0xff]
        %v5151 = vld [vmem:[%s5060 + $0x2d0] sm:$0xff]
        %v5152 = vld [vmem:[%s5060 + $0x2d8] sm:$0xff]
        %v5153 = vld [vmem:[%s5060 + $0x2e0] sm:$0xff]
        %v5154 = vld [vmem:[%s5060 + $0x2e8] sm:$0xff]
        %v5155 = vld [vmem:[%s5060 + $0x2f0] sm:$0xff]
        %v5156 = vld [vmem:[%s5060 + $0x2f8] sm:$0xff]
        %v5157 = vld [vmem:[%s5060 + $0x300] sm:$0xff]
        %v5158 = vld [vmem:[%s5060 + $0x308] sm:$0xff]
        %v5159 = vld [vmem:[%s5060 + $0x310] sm:$0xff]
        %v5160 = vld [vmem:[%s5060 + $0x318] sm:$0xff]
        %v5161 = vld [vmem:[%s5060 + $0x320] sm:$0xff]
        %v5162 = vld [vmem:[%s5060 + $0x328] sm:$0xff]
        %v5163 = vld [vmem:[%s5060 + $0x330] sm:$0xff]
        %v5164 = vld [vmem:[%s5060 + $0x338] sm:$0xff]
        %v5165 = vld [vmem:[%s5060 + $0x340] sm:$0xff]
        %v5166 = vld [vmem:[%s5060 + $0x348] sm:$0xff]
        %v5167 = vld [vmem:[%s5060 + $0x350] sm:$0xff]
        %v5168 = vld [vmem:[%s5060 + $0x358] sm:$0xff]
        %v5169 = vld [vmem:[%s5060 + $0x360] sm:$0xff]
        %v5170 = vld [vmem:[%s5060 + $0x368] sm:$0xff]
        %v5171 = vld [vmem:[%s5060 + $0x370] sm:$0xff]
        %v5172 = vld [vmem:[%s5060 + $0x378] sm:$0xff]
        %v5173 = vld [vmem:[%s5060 + $0x380] sm:$0xff]
        %v5174 = vld [vmem:[%s5060 + $0x388] sm:$0xff]
        %v5175 = vld [vmem:[%s5060 + $0x390] sm:$0xff]
        %v5176 = vld [vmem:[%s5060 + $0x398] sm:$0xff]
        %v5177 = vld [vmem:[%s5060 + $0x3a0] sm:$0xff]
        %v5178 = vld [vmem:[%s5060 + $0x3a8] sm:$0xff]
        %v5179 = vld [vmem:[%s5060 + $0x3b0] sm:$0xff]
        %v5180 = vld [vmem:[%s5060 + $0x3b8] sm:$0xff]
        %v5181 = vld [vmem:[%s5060 + $0x3c0] sm:$0xff]
        %v5182 = vld [vmem:[%s5060 + $0x3c8] sm:$0xff]
        %v5183 = vld [vmem:[%s5060 + $0x3d0] sm:$0xff]
        %v5184 = vld [vmem:[%s5060 + $0x3d8] sm:$0xff]
        %v5185 = vld [vmem:[%s5060 + $0x3e0] sm:$0xff]
        %v5186 = vld [vmem:[%s5060 + $0x3e8] sm:$0xff]
        %v5187 = vld [vmem:[%s5060 + $0x3f0] sm:$0xff]
        %v5188 = vld [vmem:[%s5060 + $0x3f8] sm:$0xff]
        %v5189 = vld [vmem:[%s5060 + $0x400] sm:$0xff]
        %v5190 = vld [vmem:[%s5060 + $0x408] sm:$0xff]
        %v5191 = vld [vmem:[%s5060 + $0x410] sm:$0xff]
        %v5192 = vld [vmem:[%s5060 + $0x418] sm:$0xff]
        %v5193 = vld [vmem:[%s5060 + $0x420] sm:$0xff]
        %v5194 = vld [vmem:[%s5060 + $0x428] sm:$0xff]
        %v5195 = vld [vmem:[%s5060 + $0x430] sm:$0xff]
        %v5196 = vld [vmem:[%s5060 + $0x438] sm:$0xff]
        %v5197 = vld [vmem:[%s5060 + $0x440] sm:$0xff]
        %v5198 = vld [vmem:[%s5060 + $0x448] sm:$0xff]
        %v5199 = vld [vmem:[%s5060 + $0x450] sm:$0xff]
        %v5200 = vld [vmem:[%s5060 + $0x458] sm:$0xff]
        %v5201 = vld [vmem:[%s5060 + $0x460] sm:$0xff]
        %v5202 = vld [vmem:[%s5060 + $0x468] sm:$0xff]
        %v5203 = vld [vmem:[%s5060 + $0x470] sm:$0xff]
        %v5204 = vld [vmem:[%s5060 + $0x478] sm:$0xff]
        %v5205 = vld [vmem:[%s5060 + $0x480] sm:$0xff]
        %v5206 = vld [vmem:[%s5060 + $0x488] sm:$0xff]
        %v5207 = vld [vmem:[%s5060 + $0x490] sm:$0xff]
        %v5208 = vld [vmem:[%s5060 + $0x498] sm:$0xff]
        %v5209 = vld [vmem:[%s5060 + $0x4a0] sm:$0xff]
        %v5210 = vld [vmem:[%s5060 + $0x4a8] sm:$0xff]
        %v5211 = vld [vmem:[%s5060 + $0x4b0] sm:$0xff]
        %v5212 = vld [vmem:[%s5060 + $0x4b8] sm:$0xff]
        %v5213 = vld [vmem:[%s5060 + $0x4c0] sm:$0xff]
        %v5214 = vld [vmem:[%s5060 + $0x4c8] sm:$0xff]
        %v5215 = vld [vmem:[%s5060 + $0x4d0] sm:$0xff]
        %v5216 = vld [vmem:[%s5060 + $0x4d8] sm:$0xff]
        %v5217 = vld [vmem:[%s5060 + $0x4e0] sm:$0xff]
        %v5218 = vld [vmem:[%s5060 + $0x4e8] sm:$0xff]
        %v5219 = vld [vmem:[%s5060 + $0x4f0] sm:$0xff]
        %v5220 = vld [vmem:[%s5060 + $0x4f8] sm:$0xff]
        %v5221 = vld [vmem:[%s5060 + $0x500] sm:$0xff]
        %v5222 = vld [vmem:[%s5060 + $0x508] sm:$0xff]
        %v5223 = vld [vmem:[%s5060 + $0x510] sm:$0xff]
        %v5224 = vld [vmem:[%s5060 + $0x518] sm:$0xff]
        %v5225 = vld [vmem:[%s5060 + $0x520] sm:$0xff]
        %v5226 = vld [vmem:[%s5060 + $0x528] sm:$0xff]
        %v5227 = vld [vmem:[%s5060 + $0x530] sm:$0xff]
        %v5228 = vld [vmem:[%s5060 + $0x538] sm:$0xff]
        %v5229 = vld [vmem:[%s5060 + $0x540] sm:$0xff]
        %v5230 = vld [vmem:[%s5060 + $0x548] sm:$0xff]
        %v5231 = vld [vmem:[%s5060 + $0x550] sm:$0xff]
        %v5232 = vld [vmem:[%s5060 + $0x558] sm:$0xff]
        %v5233 = vld [vmem:[%s5060 + $0x560] sm:$0xff]
        %v5234 = vld [vmem:[%s5060 + $0x568] sm:$0xff]
        %v5235 = vld [vmem:[%s5060 + $0x570] sm:$0xff]
        %v5236 = vld [vmem:[%s5060 + $0x578] sm:$0xff]
        %v5237 = vld [vmem:[%s5060 + $0x580] sm:$0xff]
        %v5238 = vld [vmem:[%s5060 + $0x588] sm:$0xff]
        %v5239 = vld [vmem:[%s5060 + $0x590] sm:$0xff]
        %v5240 = vld [vmem:[%s5060 + $0x598] sm:$0xff]
        %v5241 = vld [vmem:[%s5060 + $0x5a0] sm:$0xff]
        %v5242 = vld [vmem:[%s5060 + $0x5a8] sm:$0xff]
        %v5243 = vld [vmem:[%s5060 + $0x5b0] sm:$0xff]
        %v5244 = vld [vmem:[%s5060 + $0x5b8] sm:$0xff]
        %v5245 = vld [vmem:[%s5060 + $0x5c0] sm:$0xff]
        %v5246 = vld [vmem:[%s5060 + $0x5c8] sm:$0xff]
        %v5247 = vld [vmem:[%s5060 + $0x5d0] sm:$0xff]
        %v5248 = vld [vmem:[%s5060 + $0x5d8] sm:$0xff]
        %v5249 = vld [vmem:[%s5060 + $0x5e0] sm:$0xff]
        %v5250 = vld [vmem:[%s5060 + $0x5e8] sm:$0xff]
        %v5251 = vld [vmem:[%s5060 + $0x5f0] sm:$0xff]
        %v5252 = vld [vmem:[%s5060 + $0x5f8] sm:$0xff]
        %v5253 = vld [vmem:[%s5060 + $0x600] sm:$0xff]
        %v5254 = vld [vmem:[%s5060 + $0x608] sm:$0xff]
        %v5255 = vld [vmem:[%s5060 + $0x610] sm:$0xff]
        %v5256 = vld [vmem:[%s5060 + $0x618] sm:$0xff]
        %v5257 = vld [vmem:[%s5060 + $0x620] sm:$0xff]
        %v5258 = vld [vmem:[%s5060 + $0x628] sm:$0xff]
        %v5259 = vld [vmem:[%s5060 + $0x630] sm:$0xff]
        %v5260 = vld [vmem:[%s5060 + $0x638] sm:$0xff]
        %v5261 = vld [vmem:[%s5060 + $0x640] sm:$0xff]
        %v5262 = vld [vmem:[%s5060 + $0x648] sm:$0xff]
        %v5263 = vld [vmem:[%s5060 + $0x650] sm:$0xff]
        %v5264 = vld [vmem:[%s5060 + $0x658] sm:$0xff]
        %v5265 = vld [vmem:[%s5060 + $0x660] sm:$0xff]
        %v5266 = vld [vmem:[%s5060 + $0x668] sm:$0xff]
        %v5267 = vld [vmem:[%s5060 + $0x670] sm:$0xff]
        %v5268 = vld [vmem:[%s5060 + $0x678] sm:$0xff]
        %v5269 = vld [vmem:[%s5060 + $0x680] sm:$0xff]
        %v5270 = vld [vmem:[%s5060 + $0x688] sm:$0xff]
        %v5271 = vld [vmem:[%s5060 + $0x690] sm:$0xff]
        %v5272 = vld [vmem:[%s5060 + $0x698] sm:$0xff]
        %v5273 = vld [vmem:[%s5060 + $0x6a0] sm:$0xff]
        %v5274 = vld [vmem:[%s5060 + $0x6a8] sm:$0xff]
        %v5275 = vld [vmem:[%s5060 + $0x6b0] sm:$0xff]
        %v5276 = vld [vmem:[%s5060 + $0x6b8] sm:$0xff]
        %v5277 = vld [vmem:[%s5060 + $0x6c0] sm:$0xff]
        %v5278 = vld [vmem:[%s5060 + $0x6c8] sm:$0xff]
        %v5279 = vld [vmem:[%s5060 + $0x6d0] sm:$0xff]
        %v5280 = vld [vmem:[%s5060 + $0x6d8] sm:$0xff]
        %v5281 = vld [vmem:[%s5060 + $0x6e0] sm:$0xff]
        %v5282 = vld [vmem:[%s5060 + $0x6e8] sm:$0xff]
        %v5283 = vld [vmem:[%s5060 + $0x6f0] sm:$0xff]
        %v5284 = vld [vmem:[%s5060 + $0x6f8] sm:$0xff]
        %v5285 = vld [vmem:[%s5060 + $0x700] sm:$0xff]
        %v5286 = vld [vmem:[%s5060 + $0x708] sm:$0xff]
        %v5287 = vld [vmem:[%s5060 + $0x710] sm:$0xff]
        %v5288 = vld [vmem:[%s5060 + $0x718] sm:$0xff]
        %v5289 = vld [vmem:[%s5060 + $0x720] sm:$0xff]
        %v5290 = vld [vmem:[%s5060 + $0x728] sm:$0xff]
        %v5291 = vld [vmem:[%s5060 + $0x730] sm:$0xff]
        %v5292 = vld [vmem:[%s5060 + $0x738] sm:$0xff]
        %v5293 = vld [vmem:[%s5060 + $0x740] sm:$0xff]
        %v5294 = vld [vmem:[%s5060 + $0x748] sm:$0xff]
        %v5295 = vld [vmem:[%s5060 + $0x750] sm:$0xff]
        %v5296 = vld [vmem:[%s5060 + $0x758] sm:$0xff]
        %v5297 = vld [vmem:[%s5060 + $0x760] sm:$0xff]
        %v5298 = vld [vmem:[%s5060 + $0x768] sm:$0xff]
        %v5299 = vld [vmem:[%s5060 + $0x770] sm:$0xff]
        %v5300 = vld [vmem:[%s5060 + $0x778] sm:$0xff]
        %v5301 = vld [vmem:[%s5060 + $0x780] sm:$0xff]
        %v5302 = vld [vmem:[%s5060 + $0x788] sm:$0xff]
        %v5303 = vld [vmem:[%s5060 + $0x790] sm:$0xff]
        %v5304 = vld [vmem:[%s5060 + $0x798] sm:$0xff]
        %v5305 = vld [vmem:[%s5060 + $0x7a0] sm:$0xff]
        %v5306 = vld [vmem:[%s5060 + $0x7a8] sm:$0xff]
        %v5307 = vld [vmem:[%s5060 + $0x7b0] sm:$0xff]
        %v5308 = vld [vmem:[%s5060 + $0x7b8] sm:$0xff]
        %v5309 = vld [vmem:[%s5060 + $0x7c0] sm:$0xff]
        %v5310 = vld [vmem:[%s5060 + $0x7c8] sm:$0xff]
        %v5311 = vld [vmem:[%s5060 + $0x7d0] sm:$0xff]
        %v5312 = vld [vmem:[%s5060 + $0x7d8] sm:$0xff]
        %v5313 = vld [vmem:[%s5060 + $0x7e0] sm:$0xff]
        %v5314 = vld [vmem:[%s5060 + $0x7e8] sm:$0xff]
        %v5315 = vld [vmem:[%s5060 + $0x7f0] sm:$0xff]
        %v5316 = vld [vmem:[%s5060 + $0x7f8] sm:$0xff]
        %v5317 = vld [vmem:[%s5060 + $0x800] sm:$0xff]
        %v5318 = vld [vmem:[%s5060 + $0x808] sm:$0xff]
        %v5319 = vld [vmem:[%s5060 + $0x810] sm:$0xff]
        %v5320 = vld [vmem:[%s5060 + $0x818] sm:$0xff]
        %v5321 = vld [vmem:[%s5060 + $0x820] sm:$0xff]
        %v5322 = vld [vmem:[%s5060 + $0x828] sm:$0xff]
        %v5323 = vld [vmem:[%s5060 + $0x830] sm:$0xff]
        %v5324 = vld [vmem:[%s5060 + $0x838] sm:$0xff]
        %v5325 = vld [vmem:[%s5060 + $0x840] sm:$0xff]
        %v5326 = vld [vmem:[%s5060 + $0x848] sm:$0xff]
        %v5327 = vld [vmem:[%s5060 + $0x850] sm:$0xff]
        %v5328 = vld [vmem:[%s5060 + $0x858] sm:$0xff]
        %v5329 = vld [vmem:[%s5060 + $0x860] sm:$0xff]
        %v5330 = vld [vmem:[%s5060 + $0x868] sm:$0xff]
        %v5331 = vld [vmem:[%s5060 + $0x870] sm:$0xff]
        %v5332 = vld [vmem:[%s5060 + $0x878] sm:$0xff]
        %v5333 = vld [vmem:[%s5060 + $0x880] sm:$0xff]
        %v5334 = vld [vmem:[%s5060 + $0x888] sm:$0xff]
        %v5335 = vld [vmem:[%s5060 + $0x890] sm:$0xff]
        %v5336 = vld [vmem:[%s5060 + $0x898] sm:$0xff]
        %v5337 = vld [vmem:[%s5060 + $0x8a0] sm:$0xff]
        %v5338 = vld [vmem:[%s5060 + $0x8a8] sm:$0xff]
        %v5339 = vld [vmem:[%s5060 + $0x8b0] sm:$0xff]
        %v5340 = vld [vmem:[%s5060 + $0x8b8] sm:$0xff]
        %v5341 = vld [vmem:[%s5060 + $0x8c0] sm:$0xff]
        %v5342 = vld [vmem:[%s5060 + $0x8c8] sm:$0xff]
        %v5343 = vld [vmem:[%s5060 + $0x8d0] sm:$0xff]
        %v5344 = vld [vmem:[%s5060 + $0x8d8] sm:$0xff]
        %v5345 = vld [vmem:[%s5060 + $0x8e0] sm:$0xff]
        %v5346 = vld [vmem:[%s5060 + $0x8e8] sm:$0xff]
        %v5347 = vld [vmem:[%s5060 + $0x8f0] sm:$0xff]
        %v5348 = vld [vmem:[%s5060 + $0x8f8] sm:$0xff]
        %v5349 = vld [vmem:[%s5060 + $0x900] sm:$0xff]
        %v5350 = vld [vmem:[%s5060 + $0x908] sm:$0xff]
        %v5351 = vld [vmem:[%s5060 + $0x910] sm:$0xff]
        %v5352 = vld [vmem:[%s5060 + $0x918] sm:$0xff]
        %v5353 = vld [vmem:[%s5060 + $0x920] sm:$0xff]
        %v5354 = vld [vmem:[%s5060 + $0x928] sm:$0xff]
        %v5355 = vld [vmem:[%s5060 + $0x930] sm:$0xff]
        %v5356 = vld [vmem:[%s5060 + $0x938] sm:$0xff]
        %v5357 = vld [vmem:[%s5060 + $0x940] sm:$0xff]
        %v5358 = vld [vmem:[%s5060 + $0x948] sm:$0xff]
        %v5359 = vld [vmem:[%s5060 + $0x950] sm:$0xff]
        %v5360 = vld [vmem:[%s5060 + $0x958] sm:$0xff]
        %v5361 = vld [vmem:[%s5060 + $0x960] sm:$0xff]
        %v5362 = vld [vmem:[%s5060 + $0x968] sm:$0xff]
        %v5363 = vld [vmem:[%s5060 + $0x970] sm:$0xff]
        %v5364 = vld [vmem:[%s5060 + $0x978] sm:$0xff]
        %v5365 = vld [vmem:[%s5060 + $0x980] sm:$0xff]
        %v5366 = vld [vmem:[%s5060 + $0x988] sm:$0xff]
        %v5367 = vld [vmem:[%s5060 + $0x990] sm:$0xff]
        %v5368 = vld [vmem:[%s5060 + $0x998] sm:$0xff]
        %v5369 = vld [vmem:[%s5060 + $0x9a0] sm:$0xff]
        %v5370 = vld [vmem:[%s5060 + $0x9a8] sm:$0xff]
        %v5371 = vld [vmem:[%s5060 + $0x9b0] sm:$0xff]
        %v5372 = vld [vmem:[%s5060 + $0x9b8] sm:$0xff]
        %v5373 = vld [vmem:[%s5060 + $0x9c0] sm:$0xff]
        %v5374 = vld [vmem:[%s5060 + $0x9c8] sm:$0xff]
        %v5375 = vld [vmem:[%s5060 + $0x9d0] sm:$0xff]
        %v5376 = vld [vmem:[%s5060 + $0x9d8] sm:$0xff]
        %v5377 = vld [vmem:[%s5060 + $0x9e0] sm:$0xff]
        %v5378 = vld [vmem:[%s5060 + $0x9e8] sm:$0xff]
        %v5379 = vld [vmem:[%s5060 + $0x9f0] sm:$0xff]
        %v5380 = vld [vmem:[%s5060 + $0x9f8] sm:$0xff]
        %v5381 = vld [vmem:[%s5060 + $0xa00] sm:$0xff]
        %v5382 = vld [vmem:[%s5060 + $0xa08] sm:$0xff]
        %v5383 = vld [vmem:[%s5060 + $0xa10] sm:$0xff]
        %v5384 = vld [vmem:[%s5060 + $0xa18] sm:$0xff]
        %v5385 = vld [vmem:[%s5060 + $0xa20] sm:$0xff]
        %v5386 = vld [vmem:[%s5060 + $0xa28] sm:$0xff]
        %v5387 = vld [vmem:[%s5060 + $0xa30] sm:$0xff]
        %v5388 = vld [vmem:[%s5060 + $0xa38] sm:$0xff]
        %v5389 = vld [vmem:[%s5060 + $0xa40] sm:$0xff]
        %v5390 = vld [vmem:[%s5060 + $0xa48] sm:$0xff]
        %v5391 = vld [vmem:[%s5060 + $0xa50] sm:$0xff]
        %v5392 = vld [vmem:[%s5060 + $0xa58] sm:$0xff]
        %v5393 = vld [vmem:[%s5060 + $0xa60] sm:$0xff]
        %v5394 = vld [vmem:[%s5060 + $0xa68] sm:$0xff]
        %v5395 = vld [vmem:[%s5060 + $0xa70] sm:$0xff]
        %v5396 = vld [vmem:[%s5060 + $0xa78] sm:$0xff]
        %v5397 = vld [vmem:[%s5060 + $0xa80] sm:$0xff]
        %v5398 = vld [vmem:[%s5060 + $0xa88] sm:$0xff]
        %v5399 = vld [vmem:[%s5060 + $0xa90] sm:$0xff]
        %v5400 = vld [vmem:[%s5060 + $0xa98] sm:$0xff]
        %v5401 = vld [vmem:[%s5060 + $0xaa0] sm:$0xff]
        %v5402 = vld [vmem:[%s5060 + $0xaa8] sm:$0xff]
        %v5403 = vld [vmem:[%s5060 + $0xab0] sm:$0xff]
        %v5404 = vld [vmem:[%s5060 + $0xab8] sm:$0xff]
        %v5405 = vld [vmem:[%s5060 + $0xac0] sm:$0xff]
        %v5406 = vld [vmem:[%s5060 + $0xac8] sm:$0xff]
        %v5407 = vld [vmem:[%s5060 + $0xad0] sm:$0xff]
        %v5408 = vld [vmem:[%s5060 + $0xad8] sm:$0xff]
        %v5409 = vld [vmem:[%s5060 + $0xae0] sm:$0xff]
        %v5410 = vld [vmem:[%s5060 + $0xae8] sm:$0xff]
        %v5411 = vld [vmem:[%s5060 + $0xaf0] sm:$0xff]
        %v5412 = vld [vmem:[%s5060 + $0xaf8] sm:$0xff]
        %v5413 = vld [vmem:[%s5060 + $0xb00] sm:$0xff]
        %v5414 = vld [vmem:[%s5060 + $0xb08] sm:$0xff]
        %v5415 = vld [vmem:[%s5060 + $0xb10] sm:$0xff]
        %v5416 = vld [vmem:[%s5060 + $0xb18] sm:$0xff]
        %v5417 = vld [vmem:[%s5060 + $0xb20] sm:$0xff]
        %v5418 = vld [vmem:[%s5060 + $0xb28] sm:$0xff]
        %v5419 = vld [vmem:[%s5060 + $0xb30] sm:$0xff]
        %v5420 = vld [vmem:[%s5060 + $0xb38] sm:$0xff]
        %v5421 = vld [vmem:[%s5060 + $0xb40] sm:$0xff]
        %v5422 = vld [vmem:[%s5060 + $0xb48] sm:$0xff]
        %v5423 = vld [vmem:[%s5060 + $0xb50] sm:$0xff]
        %v5424 = vld [vmem:[%s5060 + $0xb58] sm:$0xff]
        %v5425 = vld [vmem:[%s5060 + $0xb60] sm:$0xff]
        %v5426 = vld [vmem:[%s5060 + $0xb68] sm:$0xff]
        %v5427 = vld [vmem:[%s5060 + $0xb70] sm:$0xff]
        %v5428 = vld [vmem:[%s5060 + $0xb78] sm:$0xff]
        %v5429 = vld [vmem:[%s5060 + $0xb80] sm:$0xff]
        %v5430 = vld [vmem:[%s5060 + $0xb88] sm:$0xff]
        %v5431 = vld [vmem:[%s5060 + $0xb90] sm:$0xff]
        %v5432 = vld [vmem:[%s5060 + $0xb98] sm:$0xff]
        %v5433 = vld [vmem:[%s5060 + $0xba0] sm:$0xff]
        %v5434 = vld [vmem:[%s5060 + $0xba8] sm:$0xff]
        %v5435 = vld [vmem:[%s5060 + $0xbb0] sm:$0xff]
        %v5436 = vld [vmem:[%s5060 + $0xbb8] sm:$0xff]
        %v5437 = vld [vmem:[%s5060 + $0xbc0] sm:$0xff]
        %v5438 = vld [vmem:[%s5060 + $0xbc8] sm:$0xff]
        %v5439 = vld [vmem:[%s5060 + $0xbd0] sm:$0xff]
        %v5440 = vld [vmem:[%s5060 + $0xbd8] sm:$0xff]
        %v5441 = vld [vmem:[%s5060 + $0xbe0] sm:$0xff]
        %v5442 = vld [vmem:[%s5060 + $0xbe8] sm:$0xff]
        %v5443 = vld [vmem:[%s5060 + $0xbf0] sm:$0xff]
        %v5444 = vld [vmem:[%s5060 + $0xbf8] sm:$0xff]
        %v5445 = vld [vmem:[%s5060 + $0xc00] sm:$0xff]
        %v5446 = vld [vmem:[%s5060 + $0xc08] sm:$0xff]
        %v5447 = vld [vmem:[%s5060 + $0xc10] sm:$0xff]
        %v5448 = vld [vmem:[%s5060 + $0xc18] sm:$0xff]
        %v5449 = vld [vmem:[%s5060 + $0xc20] sm:$0xff]
        %v5450 = vld [vmem:[%s5060 + $0xc28] sm:$0xff]
        %v5451 = vld [vmem:[%s5060 + $0xc30] sm:$0xff]
        %v5452 = vld [vmem:[%s5060 + $0xc38] sm:$0xff]
        %v5453 = vld [vmem:[%s5060 + $0xc40] sm:$0xff]
        %v5454 = vld [vmem:[%s5060 + $0xc48] sm:$0xff]
        %v5455 = vld [vmem:[%s5060 + $0xc50] sm:$0xff]
        %v5456 = vld [vmem:[%s5060 + $0xc58] sm:$0xff]
        %v5457 = vld [vmem:[%s5060 + $0xc60] sm:$0xff]
        %v5458 = vld [vmem:[%s5060 + $0xc68] sm:$0xff]
        %v5459 = vld [vmem:[%s5060 + $0xc70] sm:$0xff]
        %v5460 = vld [vmem:[%s5060 + $0xc78] sm:$0xff]
        %v5461 = vld [vmem:[%s5060 + $0xc80] sm:$0xff]
        %v5462 = vld [vmem:[%s5060 + $0xc88] sm:$0xff]
        %v5463 = vld [vmem:[%s5060 + $0xc90] sm:$0xff]
        %v5464 = vld [vmem:[%s5060 + $0xc98] sm:$0xff]
        %v5465 = vld [vmem:[%s5060 + $0xca0] sm:$0xff]
        %v5466 = vld [vmem:[%s5060 + $0xca8] sm:$0xff]
        %v5467 = vld [vmem:[%s5060 + $0xcb0] sm:$0xff]
        %v5468 = vld [vmem:[%s5060 + $0xcb8] sm:$0xff]
        %v5469 = vld [vmem:[%s5060 + $0xcc0] sm:$0xff]
        %v5470 = vld [vmem:[%s5060 + $0xcc8] sm:$0xff]
        %v5471 = vld [vmem:[%s5060 + $0xcd0] sm:$0xff]
        %v5472 = vld [vmem:[%s5060 + $0xcd8] sm:$0xff]
        %v5473 = vld [vmem:[%s5060 + $0xce0] sm:$0xff]
        %v5474 = vld [vmem:[%s5060 + $0xce8] sm:$0xff]
        %v5475 = vld [vmem:[%s5060 + $0xcf0] sm:$0xff]
        %v5476 = vld [vmem:[%s5060 + $0xcf8] sm:$0xff]
        %v5477 = vld [vmem:[%s5060 + $0xd00] sm:$0xff]
        %v5478 = vld [vmem:[%s5060 + $0xd08] sm:$0xff]
        %v5479 = vld [vmem:[%s5060 + $0xd10] sm:$0xff]
        %v5480 = vld [vmem:[%s5060 + $0xd18] sm:$0xff]
        %v5481 = vld [vmem:[%s5060 + $0xd20] sm:$0xff]
        %v5482 = vld [vmem:[%s5060 + $0xd28] sm:$0xff]
        %v5483 = vld [vmem:[%s5060 + $0xd30] sm:$0xff]
        %v5484 = vld [vmem:[%s5060 + $0xd38] sm:$0xff]
        %v5485 = vld [vmem:[%s5060 + $0xd40] sm:$0xff]
        %v5486 = vld [vmem:[%s5060 + $0xd48] sm:$0xff]
        %v5487 = vld [vmem:[%s5060 + $0xd50] sm:$0xff]
        %v5488 = vld [vmem:[%s5060 + $0xd58] sm:$0xff]
        %v5489 = vld [vmem:[%s5060 + $0xd60] sm:$0xff]
        %v5490 = vld [vmem:[%s5060 + $0xd68] sm:$0xff]
        %v5491 = vld [vmem:[%s5060 + $0xd70] sm:$0xff]
        %v5492 = vld [vmem:[%s5060 + $0xd78] sm:$0xff]
        %v5493 = vld [vmem:[%s5060 + $0xd80] sm:$0xff]
        %v5494 = vld [vmem:[%s5060 + $0xd88] sm:$0xff]
        %v5495 = vld [vmem:[%s5060 + $0xd90] sm:$0xff]
        %v5496 = vld [vmem:[%s5060 + $0xd98] sm:$0xff]
        %v5497 = vld [vmem:[%s5060 + $0xda0] sm:$0xff]
        %v5498 = vld [vmem:[%s5060 + $0xda8] sm:$0xff]
        %v5499 = vld [vmem:[%s5060 + $0xdb0] sm:$0xff]
        %v5500 = vld [vmem:[%s5060 + $0xdb8] sm:$0xff]
        %v5501 = vld [vmem:[%s5060 + $0xdc0] sm:$0xff]
        %v5502 = vld [vmem:[%s5060 + $0xdc8] sm:$0xff]
        %v5503 = vld [vmem:[%s5060 + $0xdd0] sm:$0xff]
        %v5504 = vld [vmem:[%s5060 + $0xdd8] sm:$0xff]
        %v5505 = vld [vmem:[%s5060 + $0xde0] sm:$0xff]
        %v5506 = vld [vmem:[%s5060 + $0xde8] sm:$0xff]
        %v5507 = vld [vmem:[%s5060 + $0xdf0] sm:$0xff]
        %v5508 = vld [vmem:[%s5060 + $0xdf8] sm:$0xff]
        %v5509 = vld [vmem:[%s5060 + $0xe00] sm:$0xff]
        %v5510 = vld [vmem:[%s5060 + $0xe08] sm:$0xff]
        %v5511 = vld [vmem:[%s5060 + $0xe10] sm:$0xff]
        %v5512 = vld [vmem:[%s5060 + $0xe18] sm:$0xff]
        %v5513 = vld [vmem:[%s5060 + $0xe20] sm:$0xff]
        %v5514 = vld [vmem:[%s5060 + $0xe28] sm:$0xff]
        %v5515 = vld [vmem:[%s5060 + $0xe30] sm:$0xff]
        %v5516 = vld [vmem:[%s5060 + $0xe38] sm:$0xff]
        %v5517 = vld [vmem:[%s5060 + $0xe40] sm:$0xff]
        %v5518 = vld [vmem:[%s5060 + $0xe48] sm:$0xff]
        %v5519 = vld [vmem:[%s5060 + $0xe50] sm:$0xff]
        %v5520 = vld [vmem:[%s5060 + $0xe58] sm:$0xff]
        %v5521 = vld [vmem:[%s5060 + $0xe60] sm:$0xff]
        %v5522 = vld [vmem:[%s5060 + $0xe68] sm:$0xff]
        %v5523 = vld [vmem:[%s5060 + $0xe70] sm:$0xff]
        %v5524 = vld [vmem:[%s5060 + $0xe78] sm:$0xff]
        %v5525 = vld [vmem:[%s5060 + $0xe80] sm:$0xff]
        %v5526 = vld [vmem:[%s5060 + $0xe88] sm:$0xff]
        %v5527 = vld [vmem:[%s5060 + $0xe90] sm:$0xff]
        %v5528 = vld [vmem:[%s5060 + $0xe98] sm:$0xff]
        %v5529 = vld [vmem:[%s5060 + $0xea0] sm:$0xff]
        %v5530 = vld [vmem:[%s5060 + $0xea8] sm:$0xff]
        %v5531 = vld [vmem:[%s5060 + $0xeb0] sm:$0xff]
        %v5532 = vld [vmem:[%s5060 + $0xeb8] sm:$0xff]
        %v5533 = vld [vmem:[%s5060 + $0xec0] sm:$0xff]
        %v5534 = vld [vmem:[%s5060 + $0xec8] sm:$0xff]
        %v5535 = vld [vmem:[%s5060 + $0xed0] sm:$0xff]
        %v5536 = vld [vmem:[%s5060 + $0xed8] sm:$0xff]
        %v5537 = vld [vmem:[%s5060 + $0xee0] sm:$0xff]
        %v5538 = vld [vmem:[%s5060 + $0xee8] sm:$0xff]
        %v5539 = vld [vmem:[%s5060 + $0xef0] sm:$0xff]
        %v5540 = vld [vmem:[%s5060 + $0xef8] sm:$0xff]
        %v5541 = vld [vmem:[%s5060 + $0xf00] sm:$0xff]
        %v5542 = vld [vmem:[%s5060 + $0xf08] sm:$0xff]
        %v5543 = vld [vmem:[%s5060 + $0xf10] sm:$0xff]
        %v5544 = vld [vmem:[%s5060 + $0xf18] sm:$0xff]
        %v5545 = vld [vmem:[%s5060 + $0xf20] sm:$0xff]
        %v5546 = vld [vmem:[%s5060 + $0xf28] sm:$0xff]
        %v5547 = vld [vmem:[%s5060 + $0xf30] sm:$0xff]
        %v5548 = vld [vmem:[%s5060 + $0xf38] sm:$0xff]
        %v5549 = vld [vmem:[%s5060 + $0xf40] sm:$0xff]
        %v5550 = vld [vmem:[%s5060 + $0xf48] sm:$0xff]
        %v5551 = vld [vmem:[%s5060 + $0xf50] sm:$0xff]
        %v5552 = vld [vmem:[%s5060 + $0xf58] sm:$0xff]
        %v5553 = vld [vmem:[%s5060 + $0xf60] sm:$0xff]
        %v5554 = vld [vmem:[%s5060 + $0xf68] sm:$0xff]
        %v5555 = vld [vmem:[%s5060 + $0xf70] sm:$0xff]
        %v5556 = vld [vmem:[%s5060 + $0xf78] sm:$0xff]
        %v5557 = vld [vmem:[%s5060 + $0xf80] sm:$0xff]
        %v5558 = vld [vmem:[%s5060 + $0xf88] sm:$0xff]
        %v5559 = vld [vmem:[%s5060 + $0xf90] sm:$0xff]
        %v5560 = vld [vmem:[%s5060 + $0xf98] sm:$0xff]
        %v5561 = vld [vmem:[%s5060 + $0xfa0] sm:$0xff]
        %v5562 = vld [vmem:[%s5060 + $0xfa8] sm:$0xff]
        %v5563 = vld [vmem:[%s5060 + $0xfb0] sm:$0xff]
        %v5564 = vld [vmem:[%s5060 + $0xfb8] sm:$0xff]
        %v5565 = vld [vmem:[%s5060 + $0xfc0] sm:$0xff]
        %v5566 = vld [vmem:[%s5060 + $0xfc8] sm:$0xff]
        %v5567 = vld [vmem:[%s5060 + $0xfd0] sm:$0xff]
        %v5568 = vld [vmem:[%s5060 + $0xfd8] sm:$0xff]
        %v5569 = vld [vmem:[%s5060 + $0xfe0] sm:$0xff]
        %v5570 = vld [vmem:[%s5060 + $0xfe8] sm:$0xff]
        %v5571 = vld [vmem:[%s5060 + $0xff0] sm:$0xff]
        %v5572 = vld [vmem:[%s5060 + $0xff8] sm:$0xff]
        %v5573 = vld [vmem:[%s5060 + $0x1000] sm:$0xff]
        %v5574 = vld [vmem:[%s5060 + $0x1008] sm:$0xff]
        %v5575 = vld [vmem:[%s5060 + $0x1010] sm:$0xff]
        %v5576 = vld [vmem:[%s5060 + $0x1018] sm:$0xff]
        %v5577 = vld [vmem:[%s5060 + $0x1020] sm:$0xff]
        %v5578 = vld [vmem:[%s5060 + $0x1028] sm:$0xff]
        %v5579 = vld [vmem:[%s5060 + $0x1030] sm:$0xff]
        %v5580 = vld [vmem:[%s5060 + $0x1038] sm:$0xff]
        %v5581 = vld [vmem:[%s5060 + $0x1040] sm:$0xff]
        %v5582 = vld [vmem:[%s5060 + $0x1048] sm:$0xff]
        %v5583 = vld [vmem:[%s5060 + $0x1050] sm:$0xff]
        %v5584 = vld [vmem:[%s5060 + $0x1058] sm:$0xff]
        %v5585 = vld [vmem:[%s5060 + $0x1060] sm:$0xff]
        %v5586 = vld [vmem:[%s5060 + $0x1068] sm:$0xff]
        %v5587 = vld [vmem:[%s5060 + $0x1070] sm:$0xff]
        %v5588 = vld [vmem:[%s5060 + $0x1078] sm:$0xff]
        %v5589 = vld [vmem:[%s5060 + $0x1080] sm:$0xff]
        %v5590 = vld [vmem:[%s5060 + $0x1088] sm:$0xff]
        %v5591 = vld [vmem:[%s5060 + $0x1090] sm:$0xff]
        %v5592 = vld [vmem:[%s5060 + $0x1098] sm:$0xff]
        %v5593 = vld [vmem:[%s5060 + $0x10a0] sm:$0xff]
        %v5594 = vld [vmem:[%s5060 + $0x10a8] sm:$0xff]
        %v5595 = vld [vmem:[%s5060 + $0x10b0] sm:$0xff]
        %v5596 = vld [vmem:[%s5060 + $0x10b8] sm:$0xff]
        %v5597 = vld [vmem:[%s5060 + $0x10c0] sm:$0xff]
        %v5598 = vld [vmem:[%s5060 + $0x10c8] sm:$0xff]
        %v5599 = vld [vmem:[%s5060 + $0x10d0] sm:$0xff]
        %v5600 = vld [vmem:[%s5060 + $0x10d8] sm:$0xff]
        %v5601 = vld [vmem:[%s5060 + $0x10e0] sm:$0xff]
        %v5602 = vld [vmem:[%s5060 + $0x10e8] sm:$0xff]
        %v5603 = vld [vmem:[%s5060 + $0x10f0] sm:$0xff]
        %v5604 = vld [vmem:[%s5060 + $0x10f8] sm:$0xff]
        %v5605 = vld [vmem:[%s5060 + $0x1100] sm:$0xff]
        %v5606 = vld [vmem:[%s5060 + $0x1108] sm:$0xff]
        %v5607 = vld [vmem:[%s5060 + $0x1110] sm:$0xff]
        %v5608 = vld [vmem:[%s5060 + $0x1118] sm:$0xff]
        %v5609 = vld [vmem:[%s5060 + $0x1120] sm:$0xff]
        %v5610 = vld [vmem:[%s5060 + $0x1128] sm:$0xff]
        %v5611 = vld [vmem:[%s5060 + $0x1130] sm:$0xff]
        %v5612 = vld [vmem:[%s5060 + $0x1138] sm:$0xff]
        %v5613 = vld [vmem:[%s5060 + $0x1140] sm:$0xff]
        %v5614 = vld [vmem:[%s5060 + $0x1148] sm:$0xff]
        %v5615 = vld [vmem:[%s5060 + $0x1150] sm:$0xff]
        %v5616 = vld [vmem:[%s5060 + $0x1158] sm:$0xff]
        %v5617 = vld [vmem:[%s5060 + $0x1160] sm:$0xff]
        %v5618 = vld [vmem:[%s5060 + $0x1168] sm:$0xff]
        %v5619 = vld [vmem:[%s5060 + $0x1170] sm:$0xff]
        %v5620 = vld [vmem:[%s5060 + $0x1178] sm:$0xff]
        %v5621 = vld [vmem:[%s5060 + $0x1180] sm:$0xff]
        %v5622 = vld [vmem:[%s5060 + $0x1188] sm:$0xff]
        %v5623 = vld [vmem:[%s5060 + $0x1190] sm:$0xff]
        %v5624 = vld [vmem:[%s5060 + $0x1198] sm:$0xff]
        %v5625 = vld [vmem:[%s5060 + $0x11a0] sm:$0xff]
        %v5626 = vld [vmem:[%s5060 + $0x11a8] sm:$0xff]
        %v5627 = vld [vmem:[%s5060 + $0x11b0] sm:$0xff]
        %v5628 = vld [vmem:[%s5060 + $0x11b8] sm:$0xff]
        %v5629 = vld [vmem:[%s5060 + $0x11c0] sm:$0xff]
        %v5630 = vld [vmem:[%s5060 + $0x11c8] sm:$0xff]
        %v5631 = vld [vmem:[%s5060 + $0x11d0] sm:$0xff]
        %v5632 = vld [vmem:[%s5060 + $0x11d8] sm:$0xff]
        %v5633 = vld [vmem:[%s5060 + $0x11e0] sm:$0xff]
        %v5634 = vld [vmem:[%s5060 + $0x11e8] sm:$0xff]
        %v5635 = vld [vmem:[%s5060 + $0x11f0] sm:$0xff]
        %v5636 = vld [vmem:[%s5060 + $0x11f8] sm:$0xff]
        %v5637 = vld [vmem:[%s5060 + $0x1200] sm:$0xff]
        %v5638 = vld [vmem:[%s5060 + $0x1208] sm:$0xff]
        %v5639 = vld [vmem:[%s5060 + $0x1210] sm:$0xff]
        %v5640 = vld [vmem:[%s5060 + $0x1218] sm:$0xff]
        %v5641 = vld [vmem:[%s5060 + $0x1220] sm:$0xff]
        %v5642 = vld [vmem:[%s5060 + $0x1228] sm:$0xff]
        %v5643 = vld [vmem:[%s5060 + $0x1230] sm:$0xff]
        %v5644 = vld [vmem:[%s5060 + $0x1238] sm:$0xff]
        %v5645 = vld [vmem:[%s5060 + $0x1240] sm:$0xff]
        %v5646 = vld [vmem:[%s5060 + $0x1248] sm:$0xff]
        %v5647 = vld [vmem:[%s5060 + $0x1250] sm:$0xff]
        %v5648 = vld [vmem:[%s5060 + $0x1258] sm:$0xff]
        %v5649 = vld [vmem:[%s5060 + $0x1260] sm:$0xff]
        %v5650 = vld [vmem:[%s5060 + $0x1268] sm:$0xff]
        %v5651 = vld [vmem:[%s5060 + $0x1270] sm:$0xff]
        %v5652 = vld [vmem:[%s5060 + $0x1278] sm:$0xff]
        %v5653 = vld [vmem:[%s5060 + $0x1280] sm:$0xff]
        %v5654 = vld [vmem:[%s5060 + $0x1288] sm:$0xff]
        %v5655 = vld [vmem:[%s5060 + $0x1290] sm:$0xff]
        %v5656 = vld [vmem:[%s5060 + $0x1298] sm:$0xff]
        %v5657 = vld [vmem:[%s5060 + $0x12a0] sm:$0xff]
        %v5658 = vld [vmem:[%s5060 + $0x12a8] sm:$0xff]
        %v5659 = vld [vmem:[%s5060 + $0x12b0] sm:$0xff]
        %v5660 = vld [vmem:[%s5060 + $0x12b8] sm:$0xff]
        %v5661 = vld [vmem:[%s5060 + $0x12c0] sm:$0xff]
        %v5662 = vld [vmem:[%s5060 + $0x12c8] sm:$0xff]
        %v5663 = vld [vmem:[%s5060 + $0x12d0] sm:$0xff]
        %v5664 = vld [vmem:[%s5060 + $0x12d8] sm:$0xff]
        %v5665 = vld [vmem:[%s5060 + $0x12e0] sm:$0xff]
        %v5666 = vld [vmem:[%s5060 + $0x12e8] sm:$0xff]
        %v5667 = vld [vmem:[%s5060 + $0x12f0] sm:$0xff]
        %v5668 = vld [vmem:[%s5060 + $0x12f8] sm:$0xff]
        %v5669 = vld [vmem:[%s5060 + $0x1300] sm:$0xff]
        %v5670 = vld [vmem:[%s5060 + $0x1308] sm:$0xff]
        %v5671 = vld [vmem:[%s5060 + $0x1310] sm:$0xff]
        %v5672 = vld [vmem:[%s5060 + $0x1318] sm:$0xff]
        %v5673 = vld [vmem:[%s5060 + $0x1320] sm:$0xff]
        %v5674 = vld [vmem:[%s5060 + $0x1328] sm:$0xff]
        %v5675 = vld [vmem:[%s5060 + $0x1330] sm:$0xff]
        %v5676 = vld [vmem:[%s5060 + $0x1338] sm:$0xff]
        %v5677 = vld [vmem:[%s5060 + $0x1340] sm:$0xff]
        %v5678 = vld [vmem:[%s5060 + $0x1348] sm:$0xff]
        %v5679 = vld [vmem:[%s5060 + $0x1350] sm:$0xff]
        %v5680 = vld [vmem:[%s5060 + $0x1358] sm:$0xff]
        %v5681 = vld [vmem:[%s5060 + $0x1360] sm:$0xff]
        %v5682 = vld [vmem:[%s5060 + $0x1368] sm:$0xff]
        %v5683 = vld [vmem:[%s5060 + $0x1370] sm:$0xff]
        %v5684 = vld [vmem:[%s5060 + $0x1378] sm:$0xff]
        %v5685 = vld [vmem:[%s5060 + $0x1380] sm:$0xff]
        %v5686 = vld [vmem:[%s5060 + $0x1388] sm:$0xff]
        %v5687 = vld [vmem:[%s5060 + $0x1390] sm:$0xff]
        %v5688 = vld [vmem:[%s5060 + $0x1398] sm:$0xff]
        %v5689 = vld [vmem:[%s5060 + $0x13a0] sm:$0xff]
        %v5690 = vld [vmem:[%s5060 + $0x13a8] sm:$0xff]
        %v5691 = vld [vmem:[%s5060 + $0x13b0] sm:$0xff]
        %v5692 = vld [vmem:[%s5060 + $0x13b8] sm:$0xff]
        %v5693 = vld [vmem:[%s5060 + $0x13c0] sm:$0xff]
        %v5694 = vld [vmem:[%s5060 + $0x13c8] sm:$0xff]
        %v5695 = vld [vmem:[%s5060 + $0x13d0] sm:$0xff]
        %v5696 = vld [vmem:[%s5060 + $0x13d8] sm:$0xff]
        %v5697 = vld [vmem:[%s5060 + $0x13e0] sm:$0xff]
        %v5698 = vld [vmem:[%s5060 + $0x13e8] sm:$0xff]
        %v5699 = vld [vmem:[%s5060 + $0x13f0] sm:$0xff]
        %v5700 = vld [vmem:[%s5060 + $0x13f8] sm:$0xff]
        %v5701 = vld [vmem:[%s5060 + $0x1400] sm:$0xff]
        %v5702 = vld [vmem:[%s5060 + $0x1408] sm:$0xff]
        %v5703 = vld [vmem:[%s5060 + $0x1410] sm:$0xff]
        %v5704 = vld [vmem:[%s5060 + $0x1418] sm:$0xff]
        %v5705 = vld [vmem:[%s5060 + $0x1420] sm:$0xff]
        %v5706 = vld [vmem:[%s5060 + $0x1428] sm:$0xff]
        %v5707 = vld [vmem:[%s5060 + $0x1430] sm:$0xff]
        %v5708 = vld [vmem:[%s5060 + $0x1438] sm:$0xff]
        %v5709 = vld [vmem:[%s5060 + $0x1440] sm:$0xff]
        %v5710 = vld [vmem:[%s5060 + $0x1448] sm:$0xff]
        %v5711 = vld [vmem:[%s5060 + $0x1450] sm:$0xff]
        %v5712 = vld [vmem:[%s5060 + $0x1458] sm:$0xff]
        %v5713 = vld [vmem:[%s5060 + $0x1460] sm:$0xff]
        %v5714 = vld [vmem:[%s5060 + $0x1468] sm:$0xff]
        %v5715 = vld [vmem:[%s5060 + $0x1470] sm:$0xff]
        %v5716 = vld [vmem:[%s5060 + $0x1478] sm:$0xff]
        %v5717 = vld [vmem:[%s5060 + $0x1480] sm:$0xff]
        %v5718 = vld [vmem:[%s5060 + $0x1488] sm:$0xff]
        %v5719 = vld [vmem:[%s5060 + $0x1490] sm:$0xff]
        %v5720 = vld [vmem:[%s5060 + $0x1498] sm:$0xff]
        %v5721 = vld [vmem:[%s5060 + $0x14a0] sm:$0xff]
        %v5722 = vld [vmem:[%s5060 + $0x14a8] sm:$0xff]
        %v5723 = vld [vmem:[%s5060 + $0x14b0] sm:$0xff]
        %v5724 = vld [vmem:[%s5060 + $0x14b8] sm:$0xff]
        %v5725 = vld [vmem:[%s5060 + $0x14c0] sm:$0xff]
        %v5726 = vld [vmem:[%s5060 + $0x14c8] sm:$0xff]
        %v5727 = vld [vmem:[%s5060 + $0x14d0] sm:$0xff]
        %v5728 = vld [vmem:[%s5060 + $0x14d8] sm:$0xff]
        %v5729 = vld [vmem:[%s5060 + $0x14e0] sm:$0xff]
        %v5730 = vld [vmem:[%s5060 + $0x14e8] sm:$0xff]
        %v5731 = vld [vmem:[%s5060 + $0x14f0] sm:$0xff]
        %v5732 = vld [vmem:[%s5060 + $0x14f8] sm:$0xff]
        %v5733 = vld [vmem:[%s5060 + $0x1500] sm:$0xff]
        %v5734 = vld [vmem:[%s5060 + $0x1508] sm:$0xff]
        %v5735 = vld [vmem:[%s5060 + $0x1510] sm:$0xff]
        %v5736 = vld [vmem:[%s5060 + $0x1518] sm:$0xff]
        %v5737 = vld [vmem:[%s5060 + $0x1520] sm:$0xff]
        %v5738 = vld [vmem:[%s5060 + $0x1528] sm:$0xff]
        %v5739 = vld [vmem:[%s5060 + $0x1530] sm:$0xff]
        %v5740 = vld [vmem:[%s5060 + $0x1538] sm:$0xff]
        %v5741 = vld [vmem:[%s5060 + $0x1540] sm:$0xff]
        %v5742 = vld [vmem:[%s5060 + $0x1548] sm:$0xff]
        %v5743 = vld [vmem:[%s5060 + $0x1550] sm:$0xff]
        %v5744 = vld [vmem:[%s5060 + $0x1558] sm:$0xff]
        %v5745 = vld [vmem:[%s5060 + $0x1560] sm:$0xff]
        %v5746 = vld [vmem:[%s5060 + $0x1568] sm:$0xff]
        %v5747 = vld [vmem:[%s5060 + $0x1570] sm:$0xff]
        %v5748 = vld [vmem:[%s5060 + $0x1578] sm:$0xff]
        %v5749 = vld [vmem:[%s5060 + $0x1580] sm:$0xff]
        %v5750 = vld [vmem:[%s5060 + $0x1588] sm:$0xff]
        %v5751 = vld [vmem:[%s5060 + $0x1590] sm:$0xff]
        %v5752 = vld [vmem:[%s5060 + $0x1598] sm:$0xff]
        %v5753 = vld [vmem:[%s5060 + $0x15a0] sm:$0xff]
        %v5754 = vld [vmem:[%s5060 + $0x15a8] sm:$0xff]
        %v5755 = vld [vmem:[%s5060 + $0x15b0] sm:$0xff]
        %v5756 = vld [vmem:[%s5060 + $0x15b8] sm:$0xff]
        %v5757 = vld [vmem:[%s5060 + $0x15c0] sm:$0xff]
        %v5758 = vld [vmem:[%s5060 + $0x15c8] sm:$0xff]
        %v5759 = vld [vmem:[%s5060 + $0x15d0] sm:$0xff]
        %v5760 = vld [vmem:[%s5060 + $0x15d8] sm:$0xff]
        %v5761 = vld [vmem:[%s5060 + $0x15e0] sm:$0xff]
        %v5762 = vld [vmem:[%s5060 + $0x15e8] sm:$0xff]
        %v5763 = vld [vmem:[%s5060 + $0x15f0] sm:$0xff]
        %v5764 = vld [vmem:[%s5060 + $0x15f8] sm:$0xff]
        %v5765 = vld [vmem:[%s5060 + $0x1600] sm:$0xff]
        %v5766 = vld [vmem:[%s5060 + $0x1608] sm:$0xff]
        %v5767 = vld [vmem:[%s5060 + $0x1610] sm:$0xff]
        %v5768 = vld [vmem:[%s5060 + $0x1618] sm:$0xff]
        %v5769 = vld [vmem:[%s5060 + $0x1620] sm:$0xff]
        %v5770 = vld [vmem:[%s5060 + $0x1628] sm:$0xff]
        %v5771 = vld [vmem:[%s5060 + $0x1630] sm:$0xff]
        %v5772 = vld [vmem:[%s5060 + $0x1638] sm:$0xff]
        %v5773 = vld [vmem:[%s5060 + $0x1640] sm:$0xff]
        %v5774 = vld [vmem:[%s5060 + $0x1648] sm:$0xff]
        %v5775 = vld [vmem:[%s5060 + $0x1650] sm:$0xff]
        %v5776 = vld [vmem:[%s5060 + $0x1658] sm:$0xff]
        %v5777 = vld [vmem:[%s5060 + $0x1660] sm:$0xff]
        %v5778 = vld [vmem:[%s5060 + $0x1668] sm:$0xff]
        %v5779 = vld [vmem:[%s5060 + $0x1670] sm:$0xff]
        %v5780 = vld [vmem:[%s5060 + $0x1678] sm:$0xff]
        %v5781 = vld [vmem:[%s5060 + $0x1680] sm:$0xff]
        %v5782 = vld [vmem:[%s5060 + $0x1688] sm:$0xff]
        %v5783 = vld [vmem:[%s5060 + $0x1690] sm:$0xff]
        %v5784 = vld [vmem:[%s5060 + $0x1698] sm:$0xff]
        %v5785 = vld [vmem:[%s5060 + $0x16a0] sm:$0xff]
        %v5786 = vld [vmem:[%s5060 + $0x16a8] sm:$0xff]
        %v5787 = vld [vmem:[%s5060 + $0x16b0] sm:$0xff]
        %v5788 = vld [vmem:[%s5060 + $0x16b8] sm:$0xff]
        %v5789 = vld [vmem:[%s5060 + $0x16c0] sm:$0xff]
        %v5790 = vld [vmem:[%s5060 + $0x16c8] sm:$0xff]
        %v5791 = vld [vmem:[%s5060 + $0x16d0] sm:$0xff]
        %v5792 = vld [vmem:[%s5060 + $0x16d8] sm:$0xff]
        %v5793 = vld [vmem:[%s5060 + $0x16e0] sm:$0xff]
        %v5794 = vld [vmem:[%s5060 + $0x16e8] sm:$0xff]
        %v5795 = vld [vmem:[%s5060 + $0x16f0] sm:$0xff]
        %v5796 = vld [vmem:[%s5060 + $0x16f8] sm:$0xff]
        %v5797 = vld [vmem:[%s5060 + $0x1700] sm:$0xff]
        %v5798 = vld [vmem:[%s5060 + $0x1708] sm:$0xff]
        %v5799 = vld [vmem:[%s5060 + $0x1710] sm:$0xff]
        %v5800 = vld [vmem:[%s5060 + $0x1718] sm:$0xff]
        %v5801 = vld [vmem:[%s5060 + $0x1720] sm:$0xff]
        %v5802 = vld [vmem:[%s5060 + $0x1728] sm:$0xff]
        %v5803 = vld [vmem:[%s5060 + $0x1730] sm:$0xff]
        %v5804 = vld [vmem:[%s5060 + $0x1738] sm:$0xff]
        %v5805 = vld [vmem:[%s5060 + $0x1740] sm:$0xff]
        %v5806 = vld [vmem:[%s5060 + $0x1748] sm:$0xff]
        %v5807 = vld [vmem:[%s5060 + $0x1750] sm:$0xff]
        %v5808 = vld [vmem:[%s5060 + $0x1758] sm:$0xff]
        %v5809 = vld [vmem:[%s5060 + $0x1760] sm:$0xff]
        %v5810 = vld [vmem:[%s5060 + $0x1768] sm:$0xff]
        %v5811 = vld [vmem:[%s5060 + $0x1770] sm:$0xff]
        %v5812 = vld [vmem:[%s5060 + $0x1778] sm:$0xff]
        %v5813 = vld [vmem:[%s5060 + $0x1780] sm:$0xff]
        %v5814 = vld [vmem:[%s5060 + $0x1788] sm:$0xff]
        %v5815 = vld [vmem:[%s5060 + $0x1790] sm:$0xff]
        %v5816 = vld [vmem:[%s5060 + $0x1798] sm:$0xff]
        %v5817 = vld [vmem:[%s5060 + $0x17a0] sm:$0xff]
        %v5818 = vld [vmem:[%s5060 + $0x17a8] sm:$0xff]
        %v5819 = vld [vmem:[%s5060 + $0x17b0] sm:$0xff]
        %v5820 = vld [vmem:[%s5060 + $0x17b8] sm:$0xff]
        %v5821 = vld [vmem:[%s5060 + $0x17c0] sm:$0xff]
        %v5822 = vld [vmem:[%s5060 + $0x17c8] sm:$0xff]
        %v5823 = vld [vmem:[%s5060 + $0x17d0] sm:$0xff]
        %v5824 = vld [vmem:[%s5060 + $0x17d8] sm:$0xff]
        %v5825 = vld [vmem:[%s5060 + $0x17e0] sm:$0xff]
        %v5826 = vld [vmem:[%s5060 + $0x17e8] sm:$0xff]
        %v5827 = vld [vmem:[%s5060 + $0x17f0] sm:$0xff]
        %v5828 = vld [vmem:[%s5060 + $0x17f8] sm:$0xff]
        %v5829 = vld [vmem:[%s5060 + $0x1800] sm:$0xff]
        %v5830 = vld [vmem:[%s5060 + $0x1808] sm:$0xff]
        %v5831 = vld [vmem:[%s5060 + $0x1810] sm:$0xff]
        %v5832 = vld [vmem:[%s5060 + $0x1818] sm:$0xff]
        %v5833 = vld [vmem:[%s5060 + $0x1820] sm:$0xff]
        %v5834 = vld [vmem:[%s5060 + $0x1828] sm:$0xff]
        %v5835 = vld [vmem:[%s5060 + $0x1830] sm:$0xff]
        %v5836 = vld [vmem:[%s5060 + $0x1838] sm:$0xff]
        %v5837 = vld [vmem:[%s5060 + $0x1840] sm:$0xff]
        %v5838 = vld [vmem:[%s5060 + $0x1848] sm:$0xff]
        %v5839 = vld [vmem:[%s5060 + $0x1850] sm:$0xff]
        %v5840 = vld [vmem:[%s5060 + $0x1858] sm:$0xff]
        %v5841 = vld [vmem:[%s5060 + $0x1860] sm:$0xff]
        %v5842 = vld [vmem:[%s5060 + $0x1868] sm:$0xff]
        %v5843 = vld [vmem:[%s5060 + $0x1870] sm:$0xff]
        %v5844 = vld [vmem:[%s5060 + $0x1878] sm:$0xff]
        %v5845 = vld [vmem:[%s5060 + $0x1880] sm:$0xff]
        %v5846 = vld [vmem:[%s5060 + $0x1888] sm:$0xff]
        %v5847 = vld [vmem:[%s5060 + $0x1890] sm:$0xff]
        %v5848 = vld [vmem:[%s5060 + $0x1898] sm:$0xff]
        %v5849 = vld [vmem:[%s5060 + $0x18a0] sm:$0xff]
        %v5850 = vld [vmem:[%s5060 + $0x18a8] sm:$0xff]
        %v5851 = vld [vmem:[%s5060 + $0x18b0] sm:$0xff]
        %v5852 = vld [vmem:[%s5060 + $0x18b8] sm:$0xff]
        %v5853 = vld [vmem:[%s5060 + $0x18c0] sm:$0xff]
        %v5854 = vld [vmem:[%s5060 + $0x18c8] sm:$0xff]
        %v5855 = vld [vmem:[%s5060 + $0x18d0] sm:$0xff]
        %v5856 = vld [vmem:[%s5060 + $0x18d8] sm:$0xff]
        %v5857 = vld [vmem:[%s5060 + $0x18e0] sm:$0xff]
        %v5858 = vld [vmem:[%s5060 + $0x18e8] sm:$0xff]
        %v5859 = vld [vmem:[%s5060 + $0x18f0] sm:$0xff]
        %v5860 = vld [vmem:[%s5060 + $0x18f8] sm:$0xff]
        %v5861 = vld [vmem:[%s5060 + $0x1900] sm:$0xff]
        %v5862 = vld [vmem:[%s5060 + $0x1908] sm:$0xff]
        %v5863 = vld [vmem:[%s5060 + $0x1910] sm:$0xff]
        %v5864 = vld [vmem:[%s5060 + $0x1918] sm:$0xff]
        %v5865 = vld [vmem:[%s5060 + $0x1920] sm:$0xff]
        %v5866 = vld [vmem:[%s5060 + $0x1928] sm:$0xff]
        %v5867 = vld [vmem:[%s5060 + $0x1930] sm:$0xff]
        %v5868 = vld [vmem:[%s5060 + $0x1938] sm:$0xff]
        %v5869 = vld [vmem:[%s5060 + $0x1940] sm:$0xff]
        %v5870 = vld [vmem:[%s5060 + $0x1948] sm:$0xff]
        %v5871 = vld [vmem:[%s5060 + $0x1950] sm:$0xff]
        %v5872 = vld [vmem:[%s5060 + $0x1958] sm:$0xff]
        %v5873 = vld [vmem:[%s5060 + $0x1960] sm:$0xff]
        %v5874 = vld [vmem:[%s5060 + $0x1968] sm:$0xff]
        %v5875 = vld [vmem:[%s5060 + $0x1970] sm:$0xff]
        %v5876 = vld [vmem:[%s5060 + $0x1978] sm:$0xff]
        %v5877 = vld [vmem:[%s5060 + $0x1980] sm:$0xff]
        %v5878 = vld [vmem:[%s5060 + $0x1988] sm:$0xff]
        %v5879 = vld [vmem:[%s5060 + $0x1990] sm:$0xff]
        %v5880 = vld [vmem:[%s5060 + $0x1998] sm:$0xff]
        %v5881 = vld [vmem:[%s5060 + $0x19a0] sm:$0xff]
        %v5882 = vld [vmem:[%s5060 + $0x19a8] sm:$0xff]
        %v5883 = vld [vmem:[%s5060 + $0x19b0] sm:$0xff]
        %v5884 = vld [vmem:[%s5060 + $0x19b8] sm:$0xff]
        %v5885 = vld [vmem:[%s5060 + $0x19c0] sm:$0xff]
        %v5886 = vld [vmem:[%s5060 + $0x19c8] sm:$0xff]
        %v5887 = vld [vmem:[%s5060 + $0x19d0] sm:$0xff]
        %v5888 = vld [vmem:[%s5060 + $0x19d8] sm:$0xff]
        %v5889 = vld [vmem:[%s5060 + $0x19e0] sm:$0xff]
        %v5890 = vld [vmem:[%s5060 + $0x19e8] sm:$0xff]
        %v5891 = vld [vmem:[%s5060 + $0x19f0] sm:$0xff]
        %v5892 = vld [vmem:[%s5060 + $0x19f8] sm:$0xff]
        %v5893 = vld [vmem:[%s5060 + $0x1a00] sm:$0xff]
        %v5894 = vld [vmem:[%s5060 + $0x1a08] sm:$0xff]
        %v5895 = vld [vmem:[%s5060 + $0x1a10] sm:$0xff]
        %v5896 = vld [vmem:[%s5060 + $0x1a18] sm:$0xff]
        %v5897 = vld [vmem:[%s5060 + $0x1a20] sm:$0xff]
        %v5898 = vld [vmem:[%s5060 + $0x1a28] sm:$0xff]
        %v5899 = vld [vmem:[%s5060 + $0x1a30] sm:$0xff]
        %v5900 = vld [vmem:[%s5060 + $0x1a38] sm:$0xff]
        %v5901 = vld [vmem:[%s5060 + $0x1a40] sm:$0xff]
        %v5902 = vld [vmem:[%s5060 + $0x1a48] sm:$0xff]
        %v5903 = vld [vmem:[%s5060 + $0x1a50] sm:$0xff]
        %v5904 = vld [vmem:[%s5060 + $0x1a58] sm:$0xff]
        %v5905 = vld [vmem:[%s5060 + $0x1a60] sm:$0xff]
        %v5906 = vld [vmem:[%s5060 + $0x1a68] sm:$0xff]
        %v5907 = vld [vmem:[%s5060 + $0x1a70] sm:$0xff]
        %v5908 = vld [vmem:[%s5060 + $0x1a78] sm:$0xff]
        %v5909 = vld [vmem:[%s5060 + $0x1a80] sm:$0xff]
        %v5910 = vld [vmem:[%s5060 + $0x1a88] sm:$0xff]
        %v5911 = vld [vmem:[%s5060 + $0x1a90] sm:$0xff]
        %v5912 = vld [vmem:[%s5060 + $0x1a98] sm:$0xff]
        %v5913 = vld [vmem:[%s5060 + $0x1aa0] sm:$0xff]
        %v5914 = vld [vmem:[%s5060 + $0x1aa8] sm:$0xff]
        %v5915 = vld [vmem:[%s5060 + $0x1ab0] sm:$0xff]
        %v5916 = vld [vmem:[%s5060 + $0x1ab8] sm:$0xff]
        %v5917 = vld [vmem:[%s5060 + $0x1ac0] sm:$0xff]
        %v5918 = vld [vmem:[%s5060 + $0x1ac8] sm:$0xff]
        %v5919 = vld [vmem:[%s5060 + $0x1ad0] sm:$0xff]
        %v5920 = vld [vmem:[%s5060 + $0x1ad8] sm:$0xff]
        %v5921 = vld [vmem:[%s5060 + $0x1ae0] sm:$0xff]
        %v5922 = vld [vmem:[%s5060 + $0x1ae8] sm:$0xff]
        %v5923 = vld [vmem:[%s5060 + $0x1af0] sm:$0xff]
        %v5924 = vld [vmem:[%s5060 + $0x1af8] sm:$0xff]
        %v5925 = vld [vmem:[%s5060 + $0x1b00] sm:$0xff]
        %v5926 = vld [vmem:[%s5060 + $0x1b08] sm:$0xff]
        %v5927 = vld [vmem:[%s5060 + $0x1b10] sm:$0xff]
        %v5928 = vld [vmem:[%s5060 + $0x1b18] sm:$0xff]
        %v5929 = vld [vmem:[%s5060 + $0x1b20] sm:$0xff]
        %v5930 = vld [vmem:[%s5060 + $0x1b28] sm:$0xff]
        %v5931 = vld [vmem:[%s5060 + $0x1b30] sm:$0xff]
        %v5932 = vld [vmem:[%s5060 + $0x1b38] sm:$0xff]
        %v5933 = vld [vmem:[%s5060 + $0x1b40] sm:$0xff]
        %v5934 = vld [vmem:[%s5060 + $0x1b48] sm:$0xff]
        %v5935 = vld [vmem:[%s5060 + $0x1b50] sm:$0xff]
        %v5936 = vld [vmem:[%s5060 + $0x1b58] sm:$0xff]
        %v5937 = vld [vmem:[%s5060 + $0x1b60] sm:$0xff]
        %v5938 = vld [vmem:[%s5060 + $0x1b68] sm:$0xff]
        %v5939 = vld [vmem:[%s5060 + $0x1b70] sm:$0xff]
        %v5940 = vld [vmem:[%s5060 + $0x1b78] sm:$0xff]
        %v5941 = vld [vmem:[%s5060 + $0x1b80] sm:$0xff]
        %v5942 = vld [vmem:[%s5060 + $0x1b88] sm:$0xff]
        %v5943 = vld [vmem:[%s5060 + $0x1b90] sm:$0xff]
        %v5944 = vld [vmem:[%s5060 + $0x1b98] sm:$0xff]
        %v5945 = vld [vmem:[%s5060 + $0x1ba0] sm:$0xff]
        %v5946 = vld [vmem:[%s5060 + $0x1ba8] sm:$0xff]
        %v5947 = vld [vmem:[%s5060 + $0x1bb0] sm:$0xff]
        %v5948 = vld [vmem:[%s5060 + $0x1bb8] sm:$0xff]
        %v5949 = vld [vmem:[%s5060 + $0x1bc0] sm:$0xff]
        %v5950 = vld [vmem:[%s5060 + $0x1bc8] sm:$0xff]
        %v5951 = vld [vmem:[%s5060 + $0x1bd0] sm:$0xff]
        %v5952 = vld [vmem:[%s5060 + $0x1bd8] sm:$0xff]
        %v5953 = vld [vmem:[%s5060 + $0x1be0] sm:$0xff]
        %v5954 = vld [vmem:[%s5060 + $0x1be8] sm:$0xff]
        %v5955 = vld [vmem:[%s5060 + $0x1bf0] sm:$0xff]
        %v5956 = vld [vmem:[%s5060 + $0x1bf8] sm:$0xff]
        %v5957 = vld [vmem:[%s5060 + $0x1c00] sm:$0xff]
        %v5958 = vld [vmem:[%s5060 + $0x1c08] sm:$0xff]
        %v5959 = vld [vmem:[%s5060 + $0x1c10] sm:$0xff]
        %v5960 = vld [vmem:[%s5060 + $0x1c18] sm:$0xff]
        %v5961 = vld [vmem:[%s5060 + $0x1c20] sm:$0xff]
        %v5962 = vld [vmem:[%s5060 + $0x1c28] sm:$0xff]
        %v5963 = vld [vmem:[%s5060 + $0x1c30] sm:$0xff]
        %v5964 = vld [vmem:[%s5060 + $0x1c38] sm:$0xff]
        %v5965 = vld [vmem:[%s5060 + $0x1c40] sm:$0xff]
        %v5966 = vld [vmem:[%s5060 + $0x1c48] sm:$0xff]
        %v5967 = vld [vmem:[%s5060 + $0x1c50] sm:$0xff]
        %v5968 = vld [vmem:[%s5060 + $0x1c58] sm:$0xff]
        %v5969 = vld [vmem:[%s5060 + $0x1c60] sm:$0xff]
        %v5970 = vld [vmem:[%s5060 + $0x1c68] sm:$0xff]
        %v5971 = vld [vmem:[%s5060 + $0x1c70] sm:$0xff]
        %v5972 = vld [vmem:[%s5060 + $0x1c78] sm:$0xff]
        %v5973 = vld [vmem:[%s5060 + $0x1c80] sm:$0xff]
        %v5974 = vld [vmem:[%s5060 + $0x1c88] sm:$0xff]
        %v5975 = vld [vmem:[%s5060 + $0x1c90] sm:$0xff]
        %v5976 = vld [vmem:[%s5060 + $0x1c98] sm:$0xff]
        %v5977 = vld [vmem:[%s5060 + $0x1ca0] sm:$0xff]
        %v5978 = vld [vmem:[%s5060 + $0x1ca8] sm:$0xff]
        %v5979 = vld [vmem:[%s5060 + $0x1cb0] sm:$0xff]
        %v5980 = vld [vmem:[%s5060 + $0x1cb8] sm:$0xff]
        %v5981 = vld [vmem:[%s5060 + $0x1cc0] sm:$0xff]
        %v5982 = vld [vmem:[%s5060 + $0x1cc8] sm:$0xff]
        %v5983 = vld [vmem:[%s5060 + $0x1cd0] sm:$0xff]
        %v5984 = vld [vmem:[%s5060 + $0x1cd8] sm:$0xff]
        %v5985 = vld [vmem:[%s5060 + $0x1ce0] sm:$0xff]
        %v5986 = vld [vmem:[%s5060 + $0x1ce8] sm:$0xff]
        %v5987 = vld [vmem:[%s5060 + $0x1cf0] sm:$0xff]
        %v5988 = vld [vmem:[%s5060 + $0x1cf8] sm:$0xff]
        %v5989 = vld [vmem:[%s5060 + $0x1d00] sm:$0xff]
        %v5990 = vld [vmem:[%s5060 + $0x1d08] sm:$0xff]
        %v5991 = vld [vmem:[%s5060 + $0x1d10] sm:$0xff]
        %v5992 = vld [vmem:[%s5060 + $0x1d18] sm:$0xff]
        %v5993 = vld [vmem:[%s5060 + $0x1d20] sm:$0xff]
        %v5994 = vld [vmem:[%s5060 + $0x1d28] sm:$0xff]
        %v5995 = vld [vmem:[%s5060 + $0x1d30] sm:$0xff]
        %v5996 = vld [vmem:[%s5060 + $0x1d38] sm:$0xff]
        %v5997 = vld [vmem:[%s5060 + $0x1d40] sm:$0xff]
        %v5998 = vld [vmem:[%s5060 + $0x1d48] sm:$0xff]
        %v5999 = vld [vmem:[%s5060 + $0x1d50] sm:$0xff]
        %v6000 = vld [vmem:[%s5060 + $0x1d58] sm:$0xff]
        %v6001 = vld [vmem:[%s5060 + $0x1d60] sm:$0xff]
        %v6002 = vld [vmem:[%s5060 + $0x1d68] sm:$0xff]
        %v6003 = vld [vmem:[%s5060 + $0x1d70] sm:$0xff]
        %v6004 = vld [vmem:[%s5060 + $0x1d78] sm:$0xff]
        %v6005 = vld [vmem:[%s5060 + $0x1d80] sm:$0xff]
        %v6006 = vld [vmem:[%s5060 + $0x1d88] sm:$0xff]
        %v6007 = vld [vmem:[%s5060 + $0x1d90] sm:$0xff]
        %v6008 = vld [vmem:[%s5060 + $0x1d98] sm:$0xff]
        %v6009 = vld [vmem:[%s5060 + $0x1da0] sm:$0xff]
        %v6010 = vld [vmem:[%s5060 + $0x1da8] sm:$0xff]
        %v6011 = vld [vmem:[%s5060 + $0x1db0] sm:$0xff]
        %v6012 = vld [vmem:[%s5060 + $0x1db8] sm:$0xff]
        %v6013 = vld [vmem:[%s5060 + $0x1dc0] sm:$0xff]
        %v6014 = vld [vmem:[%s5060 + $0x1dc8] sm:$0xff]
        %v6015 = vld [vmem:[%s5060 + $0x1dd0] sm:$0xff]
        %v6016 = vld [vmem:[%s5060 + $0x1dd8] sm:$0xff]
        %v6017 = vld [vmem:[%s5060 + $0x1de0] sm:$0xff]
        %v6018 = vld [vmem:[%s5060 + $0x1de8] sm:$0xff]
        %v6019 = vld [vmem:[%s5060 + $0x1df0] sm:$0xff]
        %v6020 = vld [vmem:[%s5060 + $0x1df8] sm:$0xff]
        %v6021 = vld [vmem:[%s5060 + $0x1e00] sm:$0xff]
        %v6022 = vld [vmem:[%s5060 + $0x1e08] sm:$0xff]
        %v6023 = vld [vmem:[%s5060 + $0x1e10] sm:$0xff]
        %v6024 = vld [vmem:[%s5060 + $0x1e18] sm:$0xff]
        %v6025 = vld [vmem:[%s5060 + $0x1e20] sm:$0xff]
        %v6026 = vld [vmem:[%s5060 + $0x1e28] sm:$0xff]
        %v6027 = vld [vmem:[%s5060 + $0x1e30] sm:$0xff]
        %v6028 = vld [vmem:[%s5060 + $0x1e38] sm:$0xff]
        %v6029 = vld [vmem:[%s5060 + $0x1e40] sm:$0xff]
        %v6030 = vld [vmem:[%s5060 + $0x1e48] sm:$0xff]
        %v6031 = vld [vmem:[%s5060 + $0x1e50] sm:$0xff]
        %v6032 = vld [vmem:[%s5060 + $0x1e58] sm:$0xff]
        %v6033 = vld [vmem:[%s5060 + $0x1e60] sm:$0xff]
        %v6034 = vld [vmem:[%s5060 + $0x1e68] sm:$0xff]
        %v6035 = vld [vmem:[%s5060 + $0x1e70] sm:$0xff]
        %v6036 = vld [vmem:[%s5060 + $0x1e78] sm:$0xff]
        %v6037 = vld [vmem:[%s5060 + $0x1e80] sm:$0xff]
        %v6038 = vld [vmem:[%s5060 + $0x1e88] sm:$0xff]
        %v6039 = vld [vmem:[%s5060 + $0x1e90] sm:$0xff]
        %v6040 = vld [vmem:[%s5060 + $0x1e98] sm:$0xff]
        %v6041 = vld [vmem:[%s5060 + $0x1ea0] sm:$0xff]
        %v6042 = vld [vmem:[%s5060 + $0x1ea8] sm:$0xff]
        %v6043 = vld [vmem:[%s5060 + $0x1eb0] sm:$0xff]
        %v6044 = vld [vmem:[%s5060 + $0x1eb8] sm:$0xff]
        %v6045 = vld [vmem:[%s5060 + $0x1ec0] sm:$0xff]
        %v6046 = vld [vmem:[%s5060 + $0x1ec8] sm:$0xff]
        %v6047 = vld [vmem:[%s5060 + $0x1ed0] sm:$0xff]
        %v6048 = vld [vmem:[%s5060 + $0x1ed8] sm:$0xff]
        %v6049 = vld [vmem:[%s5060 + $0x1ee0] sm:$0xff]
        %v6050 = vld [vmem:[%s5060 + $0x1ee8] sm:$0xff]
        %v6051 = vld [vmem:[%s5060 + $0x1ef0] sm:$0xff]
        %v6052 = vld [vmem:[%s5060 + $0x1ef8] sm:$0xff]
        %v6053 = vld [vmem:[%s5060 + $0x1f00] sm:$0xff]
        %v6054 = vld [vmem:[%s5060 + $0x1f08] sm:$0xff]
        %v6055 = vld [vmem:[%s5060 + $0x1f10] sm:$0xff]
        %v6056 = vld [vmem:[%s5060 + $0x1f18] sm:$0xff]
        %v6057 = vld [vmem:[%s5060 + $0x1f20] sm:$0xff]
        %v6058 = vld [vmem:[%s5060 + $0x1f28] sm:$0xff]
        %v6059 = vld [vmem:[%s5060 + $0x1f30] sm:$0xff]
        %v6060 = vld [vmem:[%s5060 + $0x1f38] sm:$0xff]
        %v6061 = vld [vmem:[%s5060 + $0x1f40] sm:$0xff]
        %v6062 = vld [vmem:[%s5060 + $0x1f48] sm:$0xff]
        %v6063 = vld [vmem:[%s5060 + $0x1f50] sm:$0xff]
        %v6064 = vld [vmem:[%s5060 + $0x1f58] sm:$0xff]
        %v6065 = vld [vmem:[%s5060 + $0x1f60] sm:$0xff]
        %v6066 = vld [vmem:[%s5060 + $0x1f68] sm:$0xff]
        %v6067 = vld [vmem:[%s5060 + $0x1f70] sm:$0xff]
        %v6068 = vld [vmem:[%s5060 + $0x1f78] sm:$0xff]
        %v6069 = vld [vmem:[%s5060 + $0x1f80] sm:$0xff]
        %v6070 = vld [vmem:[%s5060 + $0x1f88] sm:$0xff]
        %v6071 = vld [vmem:[%s5060 + $0x1f90] sm:$0xff]
        %v6072 = vld [vmem:[%s5060 + $0x1f98] sm:$0xff]
        %v6073 = vld [vmem:[%s5060 + $0x1fa0] sm:$0xff]
        %v6074 = vld [vmem:[%s5060 + $0x1fa8] sm:$0xff]
        %v6075 = vld [vmem:[%s5060 + $0x1fb0] sm:$0xff]
        %v6076 = vld [vmem:[%s5060 + $0x1fb8] sm:$0xff]
        %v6077 = vld [vmem:[%s5060 + $0x1fc0] sm:$0xff]
        %v6078 = vld [vmem:[%s5060 + $0x1fc8] sm:$0xff]
        %v6079 = vld [vmem:[%s5060 + $0x1fd0] sm:$0xff]
        %v6080 = vld [vmem:[%s5060 + $0x1fd8] sm:$0xff]
        %v6081 = vld [vmem:[%s5060 + $0x1fe0] sm:$0xff]
        %v6082 = vld [vmem:[%s5060 + $0x1fe8] sm:$0xff]
        %v6083 = vld [vmem:[%s5060 + $0x1ff0] sm:$0xff]
        %v6084 = vld [vmem:[%s5060 + $0x1ff8] sm:$0xff]
        %6085 = vmatprep.subr.mxu0 %v5062
        %6086 = vmatpush1.msra.mxu0 %v5061
        %6087 = vmatprep.subr.mxu0 %v5070
        %6088 = vmatpush1.msra.mxu0 %v5069
        %6089 = vmatprep.subr.mxu0 %v5078
        %6090 = vmatpush1.msra.mxu0 %v5077
        %6091 = vmatprep.subr.mxu0 %v5086
        %6092 = vmatpush1.msra.mxu0 %v5085
        %6093 = vmatprep.subr.mxu0 %v5094
        %6094 = vmatpush1.msra.mxu0 %v5093
        %6095 = vmatprep.subr.mxu0 %v5102
        %6096 = vmatpush1.msra.mxu0 %v5101
        %6097 = vmatprep.subr.mxu0 %v5110
        %6098 = vmatpush1.msra.mxu0 %v5109
        %6099 = vmatprep.subr.mxu0 %v5118
        %6100 = vmatpush1.msra.mxu0 %v5117
        %6101 = vmatprep.subr.mxu0 %v5126
        %6102 = vmatpush1.msra.mxu0 %v5125
        %6103 = vmatprep.subr.mxu0 %v5134
        %6104 = vmatpush1.msra.mxu0 %v5133
        %6105 = vmatprep.subr.mxu0 %v5142
        %6106 = vmatpush1.msra.mxu0 %v5141
        %6107 = vmatprep.subr.mxu0 %v5150
        %6108 = vmatpush1.msra.mxu0 %v5149
        %6109 = vmatprep.subr.mxu0 %v5158
        %6110 = vmatpush1.msra.mxu0 %v5157
        %6111 = vmatprep.subr.mxu0 %v5166
        %6112 = vmatpush1.msra.mxu0 %v5165
        %6113 = vmatprep.subr.mxu0 %v5174
        %6114 = vmatpush1.msra.mxu0 %v5173
        %6115 = vmatprep.subr.mxu0 %v5182
        %6116 = vmatpush1.msra.mxu0 %v5181
        %6117 = vmatprep.subr.mxu0 %v5190
        %6118 = vmatpush1.msra.mxu0 %v5189
        %6119 = vmatprep.subr.mxu0 %v5198
        %6120 = vmatpush1.msra.mxu0 %v5197
        %6121 = vmatprep.subr.mxu0 %v5206
        %6122 = vmatpush1.msra.mxu0 %v5205
        %6123 = vmatprep.subr.mxu0 %v5214
        %6124 = vmatpush1.msra.mxu0 %v5213
        %6125 = vmatprep.subr.mxu0 %v5222
        %6126 = vmatpush1.msra.mxu0 %v5221
        %6127 = vmatprep.subr.mxu0 %v5230
        %6128 = vmatpush1.msra.mxu0 %v5229
        %6129 = vmatprep.subr.mxu0 %v5238
        %6130 = vmatpush1.msra.mxu0 %v5237
        %6131 = vmatprep.subr.mxu0 %v5246
        %6132 = vmatpush1.msra.mxu0 %v5245
        %6133 = vmatprep.subr.mxu0 %v5254
        %6134 = vmatpush1.msra.mxu0 %v5253
        %6135 = vmatprep.subr.mxu0 %v5262
        %6136 = vmatpush1.msra.mxu0 %v5261
        %6137 = vmatprep.subr.mxu0 %v5270
        %6138 = vmatpush1.msra.mxu0 %v5269
        %6139 = vmatprep.subr.mxu0 %v5278
        %6140 = vmatpush1.msra.mxu0 %v5277
        %6141 = vmatprep.subr.mxu0 %v5286
        %6142 = vmatpush1.msra.mxu0 %v5285
        %6143 = vmatprep.subr.mxu0 %v5294
        %6144 = vmatpush1.msra.mxu0 %v5293
        %6145 = vmatprep.subr.mxu0 %v5302
        %6146 = vmatpush1.msra.mxu0 %v5301
        %6147 = vmatprep.subr.mxu0 %v5310
        %6148 = vmatpush1.msra.mxu0 %v5309
        %6149 = vmatprep.mubr.f32.mxu0 %v5045
        %6150 = vmatmul.mubr.f32.gmra.mrb[0].mxu0 %v5044
        %v6151 = vpop.f32.mrb[0].mxu0
        %v6152 = vadd.f32 0.0, %v6151
        %v6153 = vpop.f32.mrb[0].mxu0
        %v6154 = vadd.f32 0.0, %v6153
        %6155 = vmatprep.mubr.f32.mxu0 %v5053
        %6156 = vmatmul.mubr.f32.gmra.mrb[0].mxu0 %v5052
        %v6157 = vpop.f32.mrb[0].mxu0
        %v6158 = vadd.f32 0.0, %v6157
        %v6159 = vpop.f32.mrb[0].mxu0
        %v6160 = vadd.f32 0.0, %v6159
        %6161 = vdwg.mxu0
        %6162 = vmatprep.subr.mxu0 %v5318
        %6163 = vmatpush1.msra.mxu0 %v5317
        %6164 = vmatprep.subr.mxu0 %v5326
        %6165 = vmatpush1.msra.mxu0 %v5325
        %6166 = vmatprep.subr.mxu0 %v5334
        %6167 = vmatpush1.msra.mxu0 %v5333
        %6168 = vmatprep.subr.mxu0 %v5342
        %6169 = vmatpush1.msra.mxu0 %v5341
        %6170 = vmatprep.subr.mxu0 %v5350
        %6171 = vmatpush1.msra.mxu0 %v5349
        %6172 = vmatprep.subr.mxu0 %v5358
        %6173 = vmatpush1.msra.mxu0 %v5357
        %6174 = vmatprep.subr.mxu0 %v5366
        %6175 = vmatpush1.msra.mxu0 %v5365
        %6176 = vmatprep.subr.mxu0 %v5374
        %6177 = vmatpush1.msra.mxu0 %v5373
        %6178 = vmatprep.subr.mxu0 %v5382
        %6179 = vmatpush1.msra.mxu0 %v5381
        %6180 = vmatprep.subr.mxu0 %v5390
        %6181 = vmatpush1.msra.mxu0 %v5389
        %6182 = vmatprep.subr.mxu0 %v5398
        %6183 = vmatpush1.msra.mxu0 %v5397
        %6184 = vmatprep.subr.mxu0 %v5406
        %6185 = vmatpush1.msra.mxu0 %v5405
        %6186 = vmatprep.subr.mxu0 %v5414
        %6187 = vmatpush1.msra.mxu0 %v5413
        %6188 = vmatprep.subr.mxu0 %v5422
        %6189 = vmatpush1.msra.mxu0 %v5421
        %6190 = vmatprep.subr.mxu0 %v5430
        %6191 = vmatpush1.msra.mxu0 %v5429
        %6192 = vmatprep.subr.mxu0 %v5438
        %6193 = vmatpush1.msra.mxu0 %v5437
        %6194 = vmatprep.subr.mxu0 %v5446
        %6195 = vmatpush1.msra.mxu0 %v5445
        %6196 = vmatprep.subr.mxu0 %v5454
        %6197 = vmatpush1.msra.mxu0 %v5453
        %6198 = vmatprep.subr.mxu0 %v5462
        %6199 = vmatpush1.msra.mxu0 %v5461
        %6200 = vmatprep.subr.mxu0 %v5470
        %6201 = vmatpush1.msra.mxu0 %v5469
        %6202 = vmatprep.subr.mxu0 %v5478
        %6203 = vmatpush1.msra.mxu0 %v5477
        %6204 = vmatprep.subr.mxu0 %v5486
        %6205 = vmatpush1.msra.mxu0 %v5485
        %6206 = vmatprep.subr.mxu0 %v5494
        %6207 = vmatpush1.msra.mxu0 %v5493
        %6208 = vmatprep.subr.mxu0 %v5502
        %6209 = vmatpush1.msra.mxu0 %v5501
        %6210 = vmatprep.subr.mxu0 %v5510
        %6211 = vmatpush1.msra.mxu0 %v5509
        %6212 = vmatprep.subr.mxu0 %v5518
        %6213 = vmatpush1.msra.mxu0 %v5517
        %6214 = vmatprep.subr.mxu0 %v5526
        %6215 = vmatpush1.msra.mxu0 %v5525
        %6216 = vmatprep.subr.mxu0 %v5534
        %6217 = vmatpush1.msra.mxu0 %v5533
        %6218 = vmatprep.subr.mxu0 %v5542
        %6219 = vmatpush1.msra.mxu0 %v5541
        %6220 = vmatprep.subr.mxu0 %v5550
        %6221 = vmatpush1.msra.mxu0 %v5549
        %6222 = vmatprep.subr.mxu0 %v5558
        %6223 = vmatpush1.msra.mxu0 %v5557
        %6224 = vmatprep.subr.mxu0 %v5566
        %6225 = vmatpush1.msra.mxu0 %v5565
        %6226 = vmatprep.mubr.f32.mxu0 %v5047
        %6227 = vmatmul.mubr.f32.gmra.mrb[0].mxu0 %v5046
        %v6228 = vpop.f32.mrb[0].mxu0
        %v6229 = vadd.f32 %v6152, %v6228
        %v6230 = vpop.f32.mrb[0].mxu0
        %v6231 = vadd.f32 %v6154, %v6230
        %6232 = vmatprep.mubr.f32.mxu0 %v5055
        %6233 = vmatmul.mubr.f32.gmra.mrb[0].mxu0 %v5054
        %v6234 = vpop.f32.mrb[0].mxu0
        %v6235 = vadd.f32 %v6158, %v6234
        %v6236 = vpop.f32.mrb[0].mxu0
        %v6237 = vadd.f32 %v6160, %v6236
        %6238 = vdwg.mxu0
        %6239 = vmatprep.subr.mxu0 %v5574
        %6240 = vmatpush1.msra.mxu0 %v5573
        %6241 = vmatprep.subr.mxu0 %v5582
        %6242 = vmatpush1.msra.mxu0 %v5581
        %6243 = vmatprep.subr.mxu0 %v5590
        %6244 = vmatpush1.msra.mxu0 %v5589
        %6245 = vmatprep.subr.mxu0 %v5598
        %6246 = vmatpush1.msra.mxu0 %v5597
        %6247 = vmatprep.subr.mxu0 %v5606
        %6248 = vmatpush1.msra.mxu0 %v5605
        %6249 = vmatprep.subr.mxu0 %v5614
        %6250 = vmatpush1.msra.mxu0 %v5613
        %6251 = vmatprep.subr.mxu0 %v5622
        %6252 = vmatpush1.msra.mxu0 %v5621
        %6253 = vmatprep.subr.mxu0 %v5630
        %6254 = vmatpush1.msra.mxu0 %v5629
        %6255 = vmatprep.subr.mxu0 %v5638
        %6256 = vmatpush1.msra.mxu0 %v5637
        %6257 = vmatprep.subr.mxu0 %v5646
        %6258 = vmatpush1.msra.mxu0 %v5645
        %6259 = vmatprep.subr.mxu0 %v5654
        %6260 = vmatpush1.msra.mxu0 %v5653
        %6261 = vmatprep.subr.mxu0 %v5662
        %6262 = vmatpush1.msra.mxu0 %v5661
        %6263 = vmatprep.subr.mxu0 %v5670
        %6264 = vmatpush1.msra.mxu0 %v5669
        %6265 = vmatprep.subr.mxu0 %v5678
        %6266 = vmatpush1.msra.mxu0 %v5677
        %6267 = vmatprep.subr.mxu0 %v5686
        %6268 = vmatpush1.msra.mxu0 %v5685
        %6269 = vmatprep.subr.mxu0 %v5694
        %6270 = vmatpush1.msra.mxu0 %v5693
        %6271 = vmatprep.subr.mxu0 %v5702
        %6272 = vmatpush1.msra.mxu0 %v5701
        %6273 = vmatprep.subr.mxu0 %v5710
        %6274 = vmatpush1.msra.mxu0 %v5709
        %6275 = vmatprep.subr.mxu0 %v5718
        %6276 = vmatpush1.msra.mxu0 %v5717
        %6277 = vmatprep.subr.mxu0 %v5726
        %6278 = vmatpush1.msra.mxu0 %v5725
        %6279 = vmatprep.subr.mxu0 %v5734
        %6280 = vmatpush1.msra.mxu0 %v5733
        %6281 = vmatprep.subr.mxu0 %v5742
        %6282 = vmatpush1.msra.mxu0 %v5741
        %6283 = vmatprep.subr.mxu0 %v5750
        %6284 = vmatpush1.msra.mxu0 %v5749
        %6285 = vmatprep.subr.mxu0 %v5758
        %6286 = vmatpush1.msra.mxu0 %v5757
        %6287 = vmatprep.subr.mxu0 %v5766
        %6288 = vmatpush1.msra.mxu0 %v5765
        %6289 = vmatprep.subr.mxu0 %v5774
        %6290 = vmatpush1.msra.mxu0 %v5773
        %6291 = vmatprep.subr.mxu0 %v5782
        %6292 = vmatpush1.msra.mxu0 %v5781
        %6293 = vmatprep.subr.mxu0 %v5790
        %6294 = vmatpush1.msra.mxu0 %v5789
        %6295 = vmatprep.subr.mxu0 %v5798
        %6296 = vmatpush1.msra.mxu0 %v5797
        %6297 = vmatprep.subr.mxu0 %v5806
        %6298 = vmatpush1.msra.mxu0 %v5805
        %6299 = vmatprep.subr.mxu0 %v5814
        %6300 = vmatpush1.msra.mxu0 %v5813
        %6301 = vmatprep.subr.mxu0 %v5822
        %6302 = vmatpush1.msra.mxu0 %v5821
        %6303 = vmatprep.mubr.f32.mxu0 %v5049
        %6304 = vmatmul.mubr.f32.gmra.mrb[0].mxu0 %v5048
        %v6305 = vpop.f32.mrb[0].mxu0
        %v6306 = vadd.f32 %v6229, %v6305
        %v6307 = vpop.f32.mrb[0].mxu0
        %v6308 = vadd.f32 %v6231, %v6307
        %6309 = vmatprep.mubr.f32.mxu0 %v5057
        %6310 = vmatmul.mubr.f32.gmra.mrb[0].mxu0 %v5056
        %v6311 = vpop.f32.mrb[0].mxu0
        %v6312 = vadd.f32 %v6235, %v6311
        %v6313 = vpop.f32.mrb[0].mxu0
        %v6314 = vadd.f32 %v6237, %v6313
        %6315 = vdwg.mxu0
        %6316 = vmatprep.subr.mxu0 %v5830
        %6317 = vmatpush1.msra.mxu0 %v5829
        %6318 = vmatprep.subr.mxu0 %v5838
        %6319 = vmatpush1.msra.mxu0 %v5837
        %6320 = vmatprep.subr.mxu0 %v5846
        %6321 = vmatpush1.msra.mxu0 %v5845
        %6322 = vmatprep.subr.mxu0 %v5854
        %6323 = vmatpush1.msra.mxu0 %v5853
        %6324 = vmatprep.subr.mxu0 %v5862
        %6325 = vmatpush1.msra.mxu0 %v5861
        %6326 = vmatprep.subr.mxu0 %v5870
        %6327 = vmatpush1.msra.mxu0 %v5869
        %6328 = vmatprep.subr.mxu0 %v5878
        %6329 = vmatpush1.msra.mxu0 %v5877
        %6330 = vmatprep.subr.mxu0 %v5886
        %6331 = vmatpush1.msra.mxu0 %v5885
        %6332 = vmatprep.subr.mxu0 %v5894
        %6333 = vmatpush1.msra.mxu0 %v5893
        %6334 = vmatprep.subr.mxu0 %v5902
        %6335 = vmatpush1.msra.mxu0 %v5901
        %6336 = vmatprep.subr.mxu0 %v5910
        %6337 = vmatpush1.msra.mxu0 %v5909
        %6338 = vmatprep.subr.mxu0 %v5918
        %6339 = vmatpush1.msra.mxu0 %v5917
        %6340 = vmatprep.subr.mxu0 %v5926
        %6341 = vmatpush1.msra.mxu0 %v5925
        %6342 = vmatprep.subr.mxu0 %v5934
        %6343 = vmatpush1.msra.mxu0 %v5933
        %6344 = vmatprep.subr.mxu0 %v5942
        %6345 = vmatpush1.msra.mxu0 %v5941
        %6346 = vmatprep.subr.mxu0 %v5950
        %6347 = vmatpush1.msra.mxu0 %v5949
        %6348 = vmatprep.subr.mxu0 %v5958
        %6349 = vmatpush1.msra.mxu0 %v5957
        %6350 = vmatprep.subr.mxu0 %v5966
        %6351 = vmatpush1.msra.mxu0 %v5965
        %6352 = vmatprep.subr.mxu0 %v5974
        %6353 = vmatpush1.msra.mxu0 %v5973
        %6354 = vmatprep.subr.mxu0 %v5982
        %6355 = vmatpush1.msra.mxu0 %v5981
        %6356 = vmatprep.subr.mxu0 %v5990
        %6357 = vmatpush1.msra.mxu0 %v5989
        %6358 = vmatprep.subr.mxu0 %v5998
        %6359 = vmatpush1.msra.mxu0 %v5997
        %6360 = vmatprep.subr.mxu0 %v6006
        %6361 = vmatpush1.msra.mxu0 %v6005
        %6362 = vmatprep.subr.mxu0 %v6014
        %6363 = vmatpush1.msra.mxu0 %v6013
        %6364 = vmatprep.subr.mxu0 %v6022
        %6365 = vmatpush1.msra.mxu0 %v6021
        %6366 = vmatprep.subr.mxu0 %v6030
        %6367 = vmatpush1.msra.mxu0 %v6029
        %6368 = vmatprep.subr.mxu0 %v6038
        %6369 = vmatpush1.msra.mxu0 %v6037
        %6370 = vmatprep.subr.mxu0 %v6046
        %6371 = vmatpush1.msra.mxu0 %v6045
        %6372 = vmatprep.subr.mxu0 %v6054
        %6373 = vmatpush1.msra.mxu0 %v6053
        %6374 = vmatprep.subr.mxu0 %v6062
        %6375 = vmatpush1.msra.mxu0 %v6061
        %6376 = vmatprep.subr.mxu0 %v6070
        %6377 = vmatpush1.msra.mxu0 %v6069
        %6378 = vmatprep.subr.mxu0 %v6078
        %6379 = vmatpush1.msra.mxu0 %v6077
        %6380 = vmatprep.mubr.f32.mxu0 %v5051
        %6381 = vmatmul.mubr.f32.gmra.mrb[0].mxu0 %v5050
        %v6382 = vpop.f32.mrb[0].mxu0
        %v6383 = vadd.f32 %v6306, %v6382
        %v6384 = vpop.f32.mrb[0].mxu0
        %v6385 = vadd.f32 %v6308, %v6384
        %6386 = vmatprep.mubr.f32.mxu0 %v5059
        %6387 = vmatmul.mubr.f32.gmra.mrb[0].mxu0 %v5058
        %v6388 = vpop.f32.mrb[0].mxu0
        %v6389 = vadd.f32 %v6312, %v6388
        %v6390 = vpop.f32.mrb[0].mxu0
        %v6391 = vadd.f32 %v6314, %v6390
        %6392 = vdwg.mxu0
        %6393 = vmatprep.subr.mxu0 %v5064
        %6394 = vmatpush1.msra.mxu0 %v5063
        %6395 = vmatprep.subr.mxu0 %v5072
        %6396 = vmatpush1.msra.mxu0 %v5071
        %6397 = vmatprep.subr.mxu0 %v5080
        %6398 = vmatpush1.msra.mxu0 %v5079
        %6399 = vmatprep.subr.mxu0 %v5088
        %6400 = vmatpush1.msra.mxu0 %v5087
        %6401 = vmatprep.subr.mxu0 %v5096
        %6402 = vmatpush1.msra.mxu0 %v5095
        %6403 = vmatprep.subr.mxu0 %v5104
        %6404 = vmatpush1.msra.mxu0 %v5103
        %6405 = vmatprep.subr.mxu0 %v5112
        %6406 = vmatpush1.msra.mxu0 %v5111
        %6407 = vmatprep.subr.mxu0 %v5120
        %6408 = vmatpush1.msra.mxu0 %v5119
        %6409 = vmatprep.subr.mxu0 %v5128
        %6410 = vmatpush1.msra.mxu0 %v5127
        %6411 = vmatprep.subr.mxu0 %v5136
        %6412 = vmatpush1.msra.mxu0 %v5135
        %6413 = vmatprep.subr.mxu0 %v5144
        %6414 = vmatpush1.msra.mxu0 %v5143
        %6415 = vmatprep.subr.mxu0 %v5152
        %6416 = vmatpush1.msra.mxu0 %v5151
        %6417 = vmatprep.subr.mxu0 %v5160
        %6418 = vmatpush1.msra.mxu0 %v5159
        %6419 = vmatprep.subr.mxu0 %v5168
        %6420 = vmatpush1.msra.mxu0 %v5167
        %6421 = vmatprep.subr.mxu0 %v5176
        %6422 = vmatpush1.msra.mxu0 %v5175
        %6423 = vmatprep.subr.mxu0 %v5184
        %6424 = vmatpush1.msra.mxu0 %v5183
        %6425 = vmatprep.subr.mxu0 %v5192
        %6426 = vmatpush1.msra.mxu0 %v5191
        %6427 = vmatprep.subr.mxu0 %v5200
        %6428 = vmatpush1.msra.mxu0 %v5199
        %6429 = vmatprep.subr.mxu0 %v5208
        %6430 = vmatpush1.msra.mxu0 %v5207
        %6431 = vmatprep.subr.mxu0 %v5216
        %6432 = vmatpush1.msra.mxu0 %v5215
        %6433 = vmatprep.subr.mxu0 %v5224
        %6434 = vmatpush1.msra.mxu0 %v5223
        %6435 = vmatprep.subr.mxu0 %v5232
        %6436 = vmatpush1.msra.mxu0 %v5231
        %6437 = vmatprep.subr.mxu0 %v5240
        %6438 = vmatpush1.msra.mxu0 %v5239
        %6439 = vmatprep.subr.mxu0 %v5248
        %6440 = vmatpush1.msra.mxu0 %v5247
        %6441 = vmatprep.subr.mxu0 %v5256
        %6442 = vmatpush1.msra.mxu0 %v5255
        %6443 = vmatprep.subr.mxu0 %v5264
        %6444 = vmatpush1.msra.mxu0 %v5263
        %6445 = vmatprep.subr.mxu0 %v5272
        %6446 = vmatpush1.msra.mxu0 %v5271
        %6447 = vmatprep.subr.mxu0 %v5280
        %6448 = vmatpush1.msra.mxu0 %v5279
        %6449 = vmatprep.subr.mxu0 %v5288
        %6450 = vmatpush1.msra.mxu0 %v5287
        %6451 = vmatprep.subr.mxu0 %v5296
        %6452 = vmatpush1.msra.mxu0 %v5295
        %6453 = vmatprep.subr.mxu0 %v5304
        %6454 = vmatpush1.msra.mxu0 %v5303
        %6455 = vmatprep.subr.mxu0 %v5312
        %6456 = vmatpush1.msra.mxu0 %v5311
        %6457 = vmatprep.mubr.f32.mxu0 %v5045
        %6458 = vmatmul.mubr.f32.gmra.mrb[0].mxu0 %v5044
        %v6459 = vpop.f32.mrb[0].mxu0
        %v6460 = vadd.f32 0.0, %v6459
        %v6461 = vpop.f32.mrb[0].mxu0
        %v6462 = vadd.f32 0.0, %v6461
        %6463 = vmatprep.mubr.f32.mxu0 %v5053
        %6464 = vmatmul.mubr.f32.gmra.mrb[0].mxu0 %v5052
        %v6465 = vpop.f32.mrb[0].mxu0
        %v6466 = vadd.f32 0.0, %v6465
        %v6467 = vpop.f32.mrb[0].mxu0
        %v6468 = vadd.f32 0.0, %v6467
        %6469 = vdwg.mxu0
        %6470 = vmatprep.subr.mxu0 %v5320
        %6471 = vmatpush1.msra.mxu0 %v5319
        %6472 = vmatprep.subr.mxu0 %v5328
        %6473 = vmatpush1.msra.mxu0 %v5327
        %6474 = vmatprep.subr.mxu0 %v5336
        %6475 = vmatpush1.msra.mxu0 %v5335
        %6476 = vmatprep.subr.mxu0 %v5344
        %6477 = vmatpush1.msra.mxu0 %v5343
        %6478 = vmatprep.subr.mxu0 %v5352
        %6479 = vmatpush1.msra.mxu0 %v5351
        %6480 = vmatprep.subr.mxu0 %v5360
        %6481 = vmatpush1.msra.mxu0 %v5359
        %6482 = vmatprep.subr.mxu0 %v5368
        %6483 = vmatpush1.msra.mxu0 %v5367
        %6484 = vmatprep.subr.mxu0 %v5376
        %6485 = vmatpush1.msra.mxu0 %v5375
        %6486 = vmatprep.subr.mxu0 %v5384
        %6487 = vmatpush1.msra.mxu0 %v5383
        %6488 = vmatprep.subr.mxu0 %v5392
        %6489 = vmatpush1.msra.mxu0 %v5391
        %6490 = vmatprep.subr.mxu0 %v5400
        %6491 = vmatpush1.msra.mxu0 %v5399
        %6492 = vmatprep.subr.mxu0 %v5408
        %6493 = vmatpush1.msra.mxu0 %v5407
        %6494 = vmatprep.subr.mxu0 %v5416
        %6495 = vmatpush1.msra.mxu0 %v5415
        %6496 = vmatprep.subr.mxu0 %v5424
        %6497 = vmatpush1.msra.mxu0 %v5423
        %6498 = vmatprep.subr.mxu0 %v5432
        %6499 = vmatpush1.msra.mxu0 %v5431
        %6500 = vmatprep.subr.mxu0 %v5440
        %6501 = vmatpush1.msra.mxu0 %v5439
        %6502 = vmatprep.subr.mxu0 %v5448
        %6503 = vmatpush1.msra.mxu0 %v5447
        %6504 = vmatprep.subr.mxu0 %v5456
        %6505 = vmatpush1.msra.mxu0 %v5455
        %6506 = vmatprep.subr.mxu0 %v5464
        %6507 = vmatpush1.msra.mxu0 %v5463
        %6508 = vmatprep.subr.mxu0 %v5472
        %6509 = vmatpush1.msra.mxu0 %v5471
        %6510 = vmatprep.subr.mxu0 %v5480
        %6511 = vmatpush1.msra.mxu0 %v5479
        %6512 = vmatprep.subr.mxu0 %v5488
        %6513 = vmatpush1.msra.mxu0 %v5487
        %6514 = vmatprep.subr.mxu0 %v5496
        %6515 = vmatpush1.msra.mxu0 %v5495
        %6516 = vmatprep.subr.mxu0 %v5504
        %6517 = vmatpush1.msra.mxu0 %v5503
        %6518 = vmatprep.subr.mxu0 %v5512
        %6519 = vmatpush1.msra.mxu0 %v5511
        %6520 = vmatprep.subr.mxu0 %v5520
        %6521 = vmatpush1.msra.mxu0 %v5519
        %6522 = vmatprep.subr.mxu0 %v5528
        %6523 = vmatpush1.msra.mxu0 %v5527
        %6524 = vmatprep.subr.mxu0 %v5536
        %6525 = vmatpush1.msra.mxu0 %v5535
        %6526 = vmatprep.subr.mxu0 %v5544
        %6527 = vmatpush1.msra.mxu0 %v5543
        %6528 = vmatprep.subr.mxu0 %v5552
        %6529 = vmatpush1.msra.mxu0 %v5551
        %6530 = vmatprep.subr.mxu0 %v5560
        %6531 = vmatpush1.msra.mxu0 %v5559
        %6532 = vmatprep.subr.mxu0 %v5568
        %6533 = vmatpush1.msra.mxu0 %v5567
        %6534 = vmatprep.mubr.f32.mxu0 %v5047
        %6535 = vmatmul.mubr.f32.gmra.mrb[0].mxu0 %v5046
        %v6536 = vpop.f32.mrb[0].mxu0
        %v6537 = vadd.f32 %v6460, %v6536
        %v6538 = vpop.f32.mrb[0].mxu0
        %v6539 = vadd.f32 %v6462, %v6538
        %6540 = vmatprep.mubr.f32.mxu0 %v5055
        %6541 = vmatmul.mubr.f32.gmra.mrb[0].mxu0 %v5054
        %v6542 = vpop.f32.mrb[0].mxu0
        %v6543 = vadd.f32 %v6466, %v6542
        %v6544 = vpop.f32.mrb[0].mxu0
        %v6545 = vadd.f32 %v6468, %v6544
        %6546 = vdwg.mxu0
        %6547 = vmatprep.subr.mxu0 %v5576
        %6548 = vmatpush1.msra.mxu0 %v5575
        %6549 = vmatprep.subr.mxu0 %v5584
        %6550 = vmatpush1.msra.mxu0 %v5583
        %6551 = vmatprep.subr.mxu0 %v5592
        %6552 = vmatpush1.msra.mxu0 %v5591
        %6553 = vmatprep.subr.mxu0 %v5600
        %6554 = vmatpush1.msra.mxu0 %v5599
        %6555 = vmatprep.subr.mxu0 %v5608
        %6556 = vmatpush1.msra.mxu0 %v5607
        %6557 = vmatprep.subr.mxu0 %v5616
        %6558 = vmatpush1.msra.mxu0 %v5615
        %6559 = vmatprep.subr.mxu0 %v5624
        %6560 = vmatpush1.msra.mxu0 %v5623
        %6561 = vmatprep.subr.mxu0 %v5632
        %6562 = vmatpush1.msra.mxu0 %v5631
        %6563 = vmatprep.subr.mxu0 %v5640
        %6564 = vmatpush1.msra.mxu0 %v5639
        %6565 = vmatprep.subr.mxu0 %v5648
        %6566 = vmatpush1.msra.mxu0 %v5647
        %6567 = vmatprep.subr.mxu0 %v5656
        %6568 = vmatpush1.msra.mxu0 %v5655
        %6569 = vmatprep.subr.mxu0 %v5664
        %6570 = vmatpush1.msra.mxu0 %v5663
        %6571 = vmatprep.subr.mxu0 %v5672
        %6572 = vmatpush1.msra.mxu0 %v5671
        %6573 = vmatprep.subr.mxu0 %v5680
        %6574 = vmatpush1.msra.mxu0 %v5679
        %6575 = vmatprep.subr.mxu0 %v5688
        %6576 = vmatpush1.msra.mxu0 %v5687
        %6577 = vmatprep.subr.mxu0 %v5696
        %6578 = vmatpush1.msra.mxu0 %v5695
        %6579 = vmatprep.subr.mxu0 %v5704
        %6580 = vmatpush1.msra.mxu0 %v5703
        %6581 = vmatprep.subr.mxu0 %v5712
        %6582 = vmatpush1.msra.mxu0 %v5711
        %6583 = vmatprep.subr.mxu0 %v5720
        %6584 = vmatpush1.msra.mxu0 %v5719
        %6585 = vmatprep.subr.mxu0 %v5728
        %6586 = vmatpush1.msra.mxu0 %v5727
        %6587 = vmatprep.subr.mxu0 %v5736
        %6588 = vmatpush1.msra.mxu0 %v5735
        %6589 = vmatprep.subr.mxu0 %v5744
        %6590 = vmatpush1.msra.mxu0 %v5743
        %6591 = vmatprep.subr.mxu0 %v5752
        %6592 = vmatpush1.msra.mxu0 %v5751
        %6593 = vmatprep.subr.mxu0 %v5760
        %6594 = vmatpush1.msra.mxu0 %v5759
        %6595 = vmatprep.subr.mxu0 %v5768
        %6596 = vmatpush1.msra.mxu0 %v5767
        %6597 = vmatprep.subr.mxu0 %v5776
        %6598 = vmatpush1.msra.mxu0 %v5775
        %6599 = vmatprep.subr.mxu0 %v5784
        %6600 = vmatpush1.msra.mxu0 %v5783
        %6601 = vmatprep.subr.mxu0 %v5792
        %6602 = vmatpush1.msra.mxu0 %v5791
        %6603 = vmatprep.subr.mxu0 %v5800
        %6604 = vmatpush1.msra.mxu0 %v5799
        %6605 = vmatprep.subr.mxu0 %v5808
        %6606 = vmatpush1.msra.mxu0 %v5807
        %6607 = vmatprep.subr.mxu0 %v5816
        %6608 = vmatpush1.msra.mxu0 %v5815
        %6609 = vmatprep.subr.mxu0 %v5824
        %6610 = vmatpush1.msra.mxu0 %v5823
        %6611 = vmatprep.mubr.f32.mxu0 %v5049
        %6612 = vmatmul.mubr.f32.gmra.mrb[0].mxu0 %v5048
        %v6613 = vpop.f32.mrb[0].mxu0
        %v6614 = vadd.f32 %v6537, %v6613
        %v6615 = vpop.f32.mrb[0].mxu0
        %v6616 = vadd.f32 %v6539, %v6615
        %6617 = vmatprep.mubr.f32.mxu0 %v5057
        %6618 = vmatmul.mubr.f32.gmra.mrb[0].mxu0 %v5056
        %v6619 = vpop.f32.mrb[0].mxu0
        %v6620 = vadd.f32 %v6543, %v6619
        %v6621 = vpop.f32.mrb[0].mxu0
        %v6622 = vadd.f32 %v6545, %v6621
        %6623 = vdwg.mxu0
        %6624 = vmatprep.subr.mxu0 %v5832
        %6625 = vmatpush1.msra.mxu0 %v5831
        %6626 = vmatprep.subr.mxu0 %v5840
        %6627 = vmatpush1.msra.mxu0 %v5839
        %6628 = vmatprep.subr.mxu0 %v5848
        %6629 = vmatpush1.msra.mxu0 %v5847
        %6630 = vmatprep.subr.mxu0 %v5856
        %6631 = vmatpush1.msra.mxu0 %v5855
        %6632 = vmatprep.subr.mxu0 %v5864
        %6633 = vmatpush1.msra.mxu0 %v5863
        %6634 = vmatprep.subr.mxu0 %v5872
        %6635 = vmatpush1.msra.mxu0 %v5871
        %6636 = vmatprep.subr.mxu0 %v5880
        %6637 = vmatpush1.msra.mxu0 %v5879
        %6638 = vmatprep.subr.mxu0 %v5888
        %6639 = vmatpush1.msra.mxu0 %v5887
        %6640 = vmatprep.subr.mxu0 %v5896
        %6641 = vmatpush1.msra.mxu0 %v5895
        %6642 = vmatprep.subr.mxu0 %v5904
        %6643 = vmatpush1.msra.mxu0 %v5903
        %6644 = vmatprep.subr.mxu0 %v5912
        %6645 = vmatpush1.msra.mxu0 %v5911
        %6646 = vmatprep.subr.mxu0 %v5920
        %6647 = vmatpush1.msra.mxu0 %v5919
        %6648 = vmatprep.subr.mxu0 %v5928
        %6649 = vmatpush1.msra.mxu0 %v5927
        %6650 = vmatprep.subr.mxu0 %v5936
        %6651 = vmatpush1.msra.mxu0 %v5935
        %6652 = vmatprep.subr.mxu0 %v5944
        %6653 = vmatpush1.msra.mxu0 %v5943
        %6654 = vmatprep.subr.mxu0 %v5952
        %6655 = vmatpush1.msra.mxu0 %v5951
        %6656 = vmatprep.subr.mxu0 %v5960
        %6657 = vmatpush1.msra.mxu0 %v5959
        %6658 = vmatprep.subr.mxu0 %v5968
        %6659 = vmatpush1.msra.mxu0 %v5967
        %6660 = vmatprep.subr.mxu0 %v5976
        %6661 = vmatpush1.msra.mxu0 %v5975
        %6662 = vmatprep.subr.mxu0 %v5984
        %6663 = vmatpush1.msra.mxu0 %v5983
        %6664 = vmatprep.subr.mxu0 %v5992
        %6665 = vmatpush1.msra.mxu0 %v5991
        %6666 = vmatprep.subr.mxu0 %v6000
        %6667 = vmatpush1.msra.mxu0 %v5999
        %6668 = vmatprep.subr.mxu0 %v6008
        %6669 = vmatpush1.msra.mxu0 %v6007
        %6670 = vmatprep.subr.mxu0 %v6016
        %6671 = vmatpush1.msra.mxu0 %v6015
        %6672 = vmatprep.subr.mxu0 %v6024
        %6673 = vmatpush1.msra.mxu0 %v6023
        %6674 = vmatprep.subr.mxu0 %v6032
        %6675 = vmatpush1.msra.mxu0 %v6031
        %6676 = vmatprep.subr.mxu0 %v6040
        %6677 = vmatpush1.msra.mxu0 %v6039
        %6678 = vmatprep.subr.mxu0 %v6048
        %6679 = vmatpush1.msra.mxu0 %v6047
        %6680 = vmatprep.subr.mxu0 %v6056
        %6681 = vmatpush1.msra.mxu0 %v6055
        %6682 = vmatprep.subr.mxu0 %v6064
        %6683 = vmatpush1.msra.mxu0 %v6063
        %6684 = vmatprep.subr.mxu0 %v6072
        %6685 = vmatpush1.msra.mxu0 %v6071
        %6686 = vmatprep.subr.mxu0 %v6080
        %6687 = vmatpush1.msra.mxu0 %v6079
        %6688 = vmatprep.mubr.f32.mxu0 %v5051
        %6689 = vmatmul.mubr.f32.gmra.mrb[0].mxu0 %v5050
        %v6690 = vpop.f32.mrb[0].mxu0
        %v6691 = vadd.f32 %v6614, %v6690
        %v6692 = vpop.f32.mrb[0].mxu0
        %v6693 = vadd.f32 %v6616, %v6692
        %6694 = vmatprep.mubr.f32.mxu0 %v5059
        %6695 = vmatmul.mubr.f32.gmra.mrb[0].mxu0 %v5058
        %v6696 = vpop.f32.mrb[0].mxu0
        %v6697 = vadd.f32 %v6620, %v6696
        %v6698 = vpop.f32.mrb[0].mxu0
        %v6699 = vadd.f32 %v6622, %v6698
        %6700 = vdwg.mxu0
        %6701 = vmatprep.subr.mxu0 %v5066
        %6702 = vmatpush1.msra.mxu0 %v5065
        %6703 = vmatprep.subr.mxu0 %v5074
        %6704 = vmatpush1.msra.mxu0 %v5073
        %6705 = vmatprep.subr.mxu0 %v5082
        %6706 = vmatpush1.msra.mxu0 %v5081
        %6707 = vmatprep.subr.mxu0 %v5090
        %6708 = vmatpush1.msra.mxu0 %v5089
        %6709 = vmatprep.subr.mxu0 %v5098
        %6710 = vmatpush1.msra.mxu0 %v5097
        %6711 = vmatprep.subr.mxu0 %v5106
        %6712 = vmatpush1.msra.mxu0 %v5105
        %6713 = vmatprep.subr.mxu0 %v5114
        %6714 = vmatpush1.msra.mxu0 %v5113
        %6715 = vmatprep.subr.mxu0 %v5122
        %6716 = vmatpush1.msra.mxu0 %v5121
        %6717 = vmatprep.subr.mxu0 %v5130
        %6718 = vmatpush1.msra.mxu0 %v5129
        %6719 = vmatprep.subr.mxu0 %v5138
        %6720 = vmatpush1.msra.mxu0 %v5137
        %6721 = vmatprep.subr.mxu0 %v5146
        %6722 = vmatpush1.msra.mxu0 %v5145
        %6723 = vmatprep.subr.mxu0 %v5154
        %6724 = vmatpush1.msra.mxu0 %v5153
        %6725 = vmatprep.subr.mxu0 %v5162
        %6726 = vmatpush1.msra.mxu0 %v5161
        %6727 = vmatprep.subr.mxu0 %v5170
        %6728 = vmatpush1.msra.mxu0 %v5169
        %6729 = vmatprep.subr.mxu0 %v5178
        %6730 = vmatpush1.msra.mxu0 %v5177
        %6731 = vmatprep.subr.mxu0 %v5186
        %6732 = vmatpush1.msra.mxu0 %v5185
        %6733 = vmatprep.subr.mxu0 %v5194
        %6734 = vmatpush1.msra.mxu0 %v5193
        %6735 = vmatprep.subr.mxu0 %v5202
        %6736 = vmatpush1.msra.mxu0 %v5201
        %6737 = vmatprep.subr.mxu0 %v5210
        %6738 = vmatpush1.msra.mxu0 %v5209
        %6739 = vmatprep.subr.mxu0 %v5218
        %6740 = vmatpush1.msra.mxu0 %v5217
        %6741 = vmatprep.subr.mxu0 %v5226
        %6742 = vmatpush1.msra.mxu0 %v5225
        %6743 = vmatprep.subr.mxu0 %v5234
        %6744 = vmatpush1.msra.mxu0 %v5233
        %6745 = vmatprep.subr.mxu0 %v5242
        %6746 = vmatpush1.msra.mxu0 %v5241
        %6747 = vmatprep.subr.mxu0 %v5250
        %6748 = vmatpush1.msra.mxu0 %v5249
        %6749 = vmatprep.subr.mxu0 %v5258
        %6750 = vmatpush1.msra.mxu0 %v5257
        %6751 = vmatprep.subr.mxu0 %v5266
        %6752 = vmatpush1.msra.mxu0 %v5265
        %6753 = vmatprep.subr.mxu0 %v5274
        %6754 = vmatpush1.msra.mxu0 %v5273
        %6755 = vmatprep.subr.mxu0 %v5282
        %6756 = vmatpush1.msra.mxu0 %v5281
        %6757 = vmatprep.subr.mxu0 %v5290
        %6758 = vmatpush1.msra.mxu0 %v5289
        %6759 = vmatprep.subr.mxu0 %v5298
        %6760 = vmatpush1.msra.mxu0 %v5297
        %6761 = vmatprep.subr.mxu0 %v5306
        %6762 = vmatpush1.msra.mxu0 %v5305
        %6763 = vmatprep.subr.mxu0 %v5314
        %6764 = vmatpush1.msra.mxu0 %v5313
        %6765 = vmatprep.mubr.f32.mxu0 %v5045
        %6766 = vmatmul.mubr.f32.gmra.mrb[0].mxu0 %v5044
        %v6767 = vpop.f32.mrb[0].mxu0
        %v6768 = vadd.f32 0.0, %v6767
        %v6769 = vpop.f32.mrb[0].mxu0
        %v6770 = vadd.f32 0.0, %v6769
        %6771 = vmatprep.mubr.f32.mxu0 %v5053
        %6772 = vmatmul.mubr.f32.gmra.mrb[0].mxu0 %v5052
        %v6773 = vpop.f32.mrb[0].mxu0
        %v6774 = vadd.f32 0.0, %v6773
        %v6775 = vpop.f32.mrb[0].mxu0
        %v6776 = vadd.f32 0.0, %v6775
        %6777 = vdwg.mxu0
        %6778 = vmatprep.subr.mxu0 %v5322
        %6779 = vmatpush1.msra.mxu0 %v5321
        %6780 = vmatprep.subr.mxu0 %v5330
        %6781 = vmatpush1.msra.mxu0 %v5329
        %6782 = vmatprep.subr.mxu0 %v5338
        %6783 = vmatpush1.msra.mxu0 %v5337
        %6784 = vmatprep.subr.mxu0 %v5346
        %6785 = vmatpush1.msra.mxu0 %v5345
        %6786 = vmatprep.subr.mxu0 %v5354
        %6787 = vmatpush1.msra.mxu0 %v5353
        %6788 = vmatprep.subr.mxu0 %v5362
        %6789 = vmatpush1.msra.mxu0 %v5361
        %6790 = vmatprep.subr.mxu0 %v5370
        %6791 = vmatpush1.msra.mxu0 %v5369
        %6792 = vmatprep.subr.mxu0 %v5378
        %6793 = vmatpush1.msra.mxu0 %v5377
        %6794 = vmatprep.subr.mxu0 %v5386
        %6795 = vmatpush1.msra.mxu0 %v5385
        %6796 = vmatprep.subr.mxu0 %v5394
        %6797 = vmatpush1.msra.mxu0 %v5393
        %6798 = vmatprep.subr.mxu0 %v5402
        %6799 = vmatpush1.msra.mxu0 %v5401
        %6800 = vmatprep.subr.mxu0 %v5410
        %6801 = vmatpush1.msra.mxu0 %v5409
        %6802 = vmatprep.subr.mxu0 %v5418
        %6803 = vmatpush1.msra.mxu0 %v5417
        %6804 = vmatprep.subr.mxu0 %v5426
        %6805 = vmatpush1.msra.mxu0 %v5425
        %6806 = vmatprep.subr.mxu0 %v5434
        %6807 = vmatpush1.msra.mxu0 %v5433
        %6808 = vmatprep.subr.mxu0 %v5442
        %6809 = vmatpush1.msra.mxu0 %v5441
        %6810 = vmatprep.subr.mxu0 %v5450
        %6811 = vmatpush1.msra.mxu0 %v5449
        %6812 = vmatprep.subr.mxu0 %v5458
        %6813 = vmatpush1.msra.mxu0 %v5457
        %6814 = vmatprep.subr.mxu0 %v5466
        %6815 = vmatpush1.msra.mxu0 %v5465
        %6816 = vmatprep.subr.mxu0 %v5474
        %6817 = vmatpush1.msra.mxu0 %v5473
        %6818 = vmatprep.subr.mxu0 %v5482
        %6819 = vmatpush1.msra.mxu0 %v5481
        %6820 = vmatprep.subr.mxu0 %v5490
        %6821 = vmatpush1.msra.mxu0 %v5489
        %6822 = vmatprep.subr.mxu0 %v5498
        %6823 = vmatpush1.msra.mxu0 %v5497
        %6824 = vmatprep.subr.mxu0 %v5506
        %6825 = vmatpush1.msra.mxu0 %v5505
        %6826 = vmatprep.subr.mxu0 %v5514
        %6827 = vmatpush1.msra.mxu0 %v5513
        %6828 = vmatprep.subr.mxu0 %v5522
        %6829 = vmatpush1.msra.mxu0 %v5521
        %6830 = vmatprep.subr.mxu0 %v5530
        %6831 = vmatpush1.msra.mxu0 %v5529
        %6832 = vmatprep.subr.mxu0 %v5538
        %6833 = vmatpush1.msra.mxu0 %v5537
        %6834 = vmatprep.subr.mxu0 %v5546
        %6835 = vmatpush1.msra.mxu0 %v5545
        %6836 = vmatprep.subr.mxu0 %v5554
        %6837 = vmatpush1.msra.mxu0 %v5553
        %6838 = vmatprep.subr.mxu0 %v5562
        %6839 = vmatpush1.msra.mxu0 %v5561
        %6840 = vmatprep.subr.mxu0 %v5570
        %6841 = vmatpush1.msra.mxu0 %v5569
        %6842 = vmatprep.mubr.f32.mxu0 %v5047
        %6843 = vmatmul.mubr.f32.gmra.mrb[0].mxu0 %v5046
        %v6844 = vpop.f32.mrb[0].mxu0
        %v6845 = vadd.f32 %v6768, %v6844
        %v6846 = vpop.f32.mrb[0].mxu0
        %v6847 = vadd.f32 %v6770, %v6846
        %6848 = vmatprep.mubr.f32.mxu0 %v5055
        %6849 = vmatmul.mubr.f32.gmra.mrb[0].mxu0 %v5054
        %v6850 = vpop.f32.mrb[0].mxu0
        %v6851 = vadd.f32 %v6774, %v6850
        %v6852 = vpop.f32.mrb[0].mxu0
        %v6853 = vadd.f32 %v6776, %v6852
        %6854 = vdwg.mxu0
        %6855 = vmatprep.subr.mxu0 %v5578
        %6856 = vmatpush1.msra.mxu0 %v5577
        %6857 = vmatprep.subr.mxu0 %v5586
        %6858 = vmatpush1.msra.mxu0 %v5585
        %6859 = vmatprep.subr.mxu0 %v5594
        %6860 = vmatpush1.msra.mxu0 %v5593
        %6861 = vmatprep.subr.mxu0 %v5602
        %6862 = vmatpush1.msra.mxu0 %v5601
        %6863 = vmatprep.subr.mxu0 %v5610
        %6864 = vmatpush1.msra.mxu0 %v5609
        %6865 = vmatprep.subr.mxu0 %v5618
        %6866 = vmatpush1.msra.mxu0 %v5617
        %6867 = vmatprep.subr.mxu0 %v5626
        %6868 = vmatpush1.msra.mxu0 %v5625
        %6869 = vmatprep.subr.mxu0 %v5634
        %6870 = vmatpush1.msra.mxu0 %v5633
        %6871 = vmatprep.subr.mxu0 %v5642
        %6872 = vmatpush1.msra.mxu0 %v5641
        %6873 = vmatprep.subr.mxu0 %v5650
        %6874 = vmatpush1.msra.mxu0 %v5649
        %6875 = vmatprep.subr.mxu0 %v5658
        %6876 = vmatpush1.msra.mxu0 %v5657
        %6877 = vmatprep.subr.mxu0 %v5666
        %6878 = vmatpush1.msra.mxu0 %v5665
        %6879 = vmatprep.subr.mxu0 %v5674
        %6880 = vmatpush1.msra.mxu0 %v5673
        %6881 = vmatprep.subr.mxu0 %v5682
        %6882 = vmatpush1.msra.mxu0 %v5681
        %6883 = vmatprep.subr.mxu0 %v5690
        %6884 = vmatpush1.msra.mxu0 %v5689
        %6885 = vmatprep.subr.mxu0 %v5698
        %6886 = vmatpush1.msra.mxu0 %v5697
        %6887 = vmatprep.subr.mxu0 %v5706
        %6888 = vmatpush1.msra.mxu0 %v5705
        %6889 = vmatprep.subr.mxu0 %v5714
        %6890 = vmatpush1.msra.mxu0 %v5713
        %6891 = vmatprep.subr.mxu0 %v5722
        %6892 = vmatpush1.msra.mxu0 %v5721
        %6893 = vmatprep.subr.mxu0 %v5730
        %6894 = vmatpush1.msra.mxu0 %v5729
        %6895 = vmatprep.subr.mxu0 %v5738
        %6896 = vmatpush1.msra.mxu0 %v5737
        %6897 = vmatprep.subr.mxu0 %v5746
        %6898 = vmatpush1.msra.mxu0 %v5745
        %6899 = vmatprep.subr.mxu0 %v5754
        %6900 = vmatpush1.msra.mxu0 %v5753
        %6901 = vmatprep.subr.mxu0 %v5762
        %6902 = vmatpush1.msra.mxu0 %v5761
        %6903 = vmatprep.subr.mxu0 %v5770
        %6904 = vmatpush1.msra.mxu0 %v5769
        %6905 = vmatprep.subr.mxu0 %v5778
        %6906 = vmatpush1.msra.mxu0 %v5777
        %6907 = vmatprep.subr.mxu0 %v5786
        %6908 = vmatpush1.msra.mxu0 %v5785
        %6909 = vmatprep.subr.mxu0 %v5794
        %6910 = vmatpush1.msra.mxu0 %v5793
        %6911 = vmatprep.subr.mxu0 %v5802
        %6912 = vmatpush1.msra.mxu0 %v5801
        %6913 = vmatprep.subr.mxu0 %v5810
        %6914 = vmatpush1.msra.mxu0 %v5809
        %6915 = vmatprep.subr.mxu0 %v5818
        %6916 = vmatpush1.msra.mxu0 %v5817
        %6917 = vmatprep.subr.mxu0 %v5826
        %6918 = vmatpush1.msra.mxu0 %v5825
        %6919 = vmatprep.mubr.f32.mxu0 %v5049
        %6920 = vmatmul.mubr.f32.gmra.mrb[0].mxu0 %v5048
        %v6921 = vpop.f32.mrb[0].mxu0
        %v6922 = vadd.f32 %v6845, %v6921
        %v6923 = vpop.f32.mrb[0].mxu0
        %v6924 = vadd.f32 %v6847, %v6923
        %6925 = vmatprep.mubr.f32.mxu0 %v5057
        %6926 = vmatmul.mubr.f32.gmra.mrb[0].mxu0 %v5056
        %v6927 = vpop.f32.mrb[0].mxu0
        %v6928 = vadd.f32 %v6851, %v6927
        %v6929 = vpop.f32.mrb[0].mxu0
        %v6930 = vadd.f32 %v6853, %v6929
        %6931 = vdwg.mxu0
        %6932 = vmatprep.subr.mxu0 %v5834
        %6933 = vmatpush1.msra.mxu0 %v5833
        %6934 = vmatprep.subr.mxu0 %v5842
        %6935 = vmatpush1.msra.mxu0 %v5841
        %6936 = vmatprep.subr.mxu0 %v5850
        %6937 = vmatpush1.msra.mxu0 %v5849
        %6938 = vmatprep.subr.mxu0 %v5858
        %6939 = vmatpush1.msra.mxu0 %v5857
        %6940 = vmatprep.subr.mxu0 %v5866
        %6941 = vmatpush1.msra.mxu0 %v5865
        %6942 = vmatprep.subr.mxu0 %v5874
        %6943 = vmatpush1.msra.mxu0 %v5873
        %6944 = vmatprep.subr.mxu0 %v5882
        %6945 = vmatpush1.msra.mxu0 %v5881
        %6946 = vmatprep.subr.mxu0 %v5890
        %6947 = vmatpush1.msra.mxu0 %v5889
        %6948 = vmatprep.subr.mxu0 %v5898
        %6949 = vmatpush1.msra.mxu0 %v5897
        %6950 = vmatprep.subr.mxu0 %v5906
        %6951 = vmatpush1.msra.mxu0 %v5905
        %6952 = vmatprep.subr.mxu0 %v5914
        %6953 = vmatpush1.msra.mxu0 %v5913
        %6954 = vmatprep.subr.mxu0 %v5922
        %6955 = vmatpush1.msra.mxu0 %v5921
        %6956 = vmatprep.subr.mxu0 %v5930
        %6957 = vmatpush1.msra.mxu0 %v5929
        %6958 = vmatprep.subr.mxu0 %v5938
        %6959 = vmatpush1.msra.mxu0 %v5937
        %6960 = vmatprep.subr.mxu0 %v5946
        %6961 = vmatpush1.msra.mxu0 %v5945
        %6962 = vmatprep.subr.mxu0 %v5954
        %6963 = vmatpush1.msra.mxu0 %v5953
        %6964 = vmatprep.subr.mxu0 %v5962
        %6965 = vmatpush1.msra.mxu0 %v5961
        %6966 = vmatprep.subr.mxu0 %v5970
        %6967 = vmatpush1.msra.mxu0 %v5969
        %6968 = vmatprep.subr.mxu0 %v5978
        %6969 = vmatpush1.msra.mxu0 %v5977
        %6970 = vmatprep.subr.mxu0 %v5986
        %6971 = vmatpush1.msra.mxu0 %v5985
        %6972 = vmatprep.subr.mxu0 %v5994
        %6973 = vmatpush1.msra.mxu0 %v5993
        %6974 = vmatprep.subr.mxu0 %v6002
        %6975 = vmatpush1.msra.mxu0 %v6001
        %6976 = vmatprep.subr.mxu0 %v6010
        %6977 = vmatpush1.msra.mxu0 %v6009
        %6978 = vmatprep.subr.mxu0 %v6018
        %6979 = vmatpush1.msra.mxu0 %v6017
        %6980 = vmatprep.subr.mxu0 %v6026
        %6981 = vmatpush1.msra.mxu0 %v6025
        %6982 = vmatprep.subr.mxu0 %v6034
        %6983 = vmatpush1.msra.mxu0 %v6033
        %6984 = vmatprep.subr.mxu0 %v6042
        %6985 = vmatpush1.msra.mxu0 %v6041
        %6986 = vmatprep.subr.mxu0 %v6050
        %6987 = vmatpush1.msra.mxu0 %v6049
        %6988 = vmatprep.subr.mxu0 %v6058
        %6989 = vmatpush1.msra.mxu0 %v6057
        %6990 = vmatprep.subr.mxu0 %v6066
        %6991 = vmatpush1.msra.mxu0 %v6065
        %6992 = vmatprep.subr.mxu0 %v6074
        %6993 = vmatpush1.msra.mxu0 %v6073
        %6994 = vmatprep.subr.mxu0 %v6082
        %6995 = vmatpush1.msra.mxu0 %v6081
        %6996 = vmatprep.mubr.f32.mxu0 %v5051
        %6997 = vmatmul.mubr.f32.gmra.mrb[0].mxu0 %v5050
        %v6998 = vpop.f32.mrb[0].mxu0
        %v6999 = vadd.f32 %v6922, %v6998
        %v7000 = vpop.f32.mrb[0].mxu0
        %v7001 = vadd.f32 %v6924, %v7000
        %7002 = vmatprep.mubr.f32.mxu0 %v5059
        %7003 = vmatmul.mubr.f32.gmra.mrb[0].mxu0 %v5058
        %v7004 = vpop.f32.mrb[0].mxu0
        %v7005 = vadd.f32 %v6928, %v7004
        %v7006 = vpop.f32.mrb[0].mxu0
        %v7007 = vadd.f32 %v6930, %v7006
        %7008 = vdwg.mxu0
        %7009 = vmatprep.subr.mxu0 %v5068
        %7010 = vmatpush1.msra.mxu0 %v5067
        %7011 = vmatprep.subr.mxu0 %v5076
        %7012 = vmatpush1.msra.mxu0 %v5075
        %7013 = vmatprep.subr.mxu0 %v5084
        %7014 = vmatpush1.msra.mxu0 %v5083
        %7015 = vmatprep.subr.mxu0 %v5092
        %7016 = vmatpush1.msra.mxu0 %v5091
        %7017 = vmatprep.subr.mxu0 %v5100
        %7018 = vmatpush1.msra.mxu0 %v5099
        %7019 = vmatprep.subr.mxu0 %v5108
        %7020 = vmatpush1.msra.mxu0 %v5107
        %7021 = vmatprep.subr.mxu0 %v5116
        %7022 = vmatpush1.msra.mxu0 %v5115
        %7023 = vmatprep.subr.mxu0 %v5124
        %7024 = vmatpush1.msra.mxu0 %v5123
        %7025 = vmatprep.subr.mxu0 %v5132
        %7026 = vmatpush1.msra.mxu0 %v5131
        %7027 = vmatprep.subr.mxu0 %v5140
        %7028 = vmatpush1.msra.mxu0 %v5139
        %7029 = vmatprep.subr.mxu0 %v5148
        %7030 = vmatpush1.msra.mxu0 %v5147
        %7031 = vmatprep.subr.mxu0 %v5156
        %7032 = vmatpush1.msra.mxu0 %v5155
        %7033 = vmatprep.subr.mxu0 %v5164
        %7034 = vmatpush1.msra.mxu0 %v5163
        %7035 = vmatprep.subr.mxu0 %v5172
        %7036 = vmatpush1.msra.mxu0 %v5171
        %7037 = vmatprep.subr.mxu0 %v5180
        %7038 = vmatpush1.msra.mxu0 %v5179
        %7039 = vmatprep.subr.mxu0 %v5188
        %7040 = vmatpush1.msra.mxu0 %v5187
        %7041 = vmatprep.subr.mxu0 %v5196
        %7042 = vmatpush1.msra.mxu0 %v5195
        %7043 = vmatprep.subr.mxu0 %v5204
        %7044 = vmatpush1.msra.mxu0 %v5203
        %7045 = vmatprep.subr.mxu0 %v5212
        %7046 = vmatpush1.msra.mxu0 %v5211
        %7047 = vmatprep.subr.mxu0 %v5220
        %7048 = vmatpush1.msra.mxu0 %v5219
        %7049 = vmatprep.subr.mxu0 %v5228
        %7050 = vmatpush1.msra.mxu0 %v5227
        %7051 = vmatprep.subr.mxu0 %v5236
        %7052 = vmatpush1.msra.mxu0 %v5235
        %7053 = vmatprep.subr.mxu0 %v5244
        %7054 = vmatpush1.msra.mxu0 %v5243
        %7055 = vmatprep.subr.mxu0 %v5252
        %7056 = vmatpush1.msra.mxu0 %v5251
        %7057 = vmatprep.subr.mxu0 %v5260
        %7058 = vmatpush1.msra.mxu0 %v5259
        %7059 = vmatprep.subr.mxu0 %v5268
        %7060 = vmatpush1.msra.mxu0 %v5267
        %7061 = vmatprep.subr.mxu0 %v5276
        %7062 = vmatpush1.msra.mxu0 %v5275
        %7063 = vmatprep.subr.mxu0 %v5284
        %7064 = vmatpush1.msra.mxu0 %v5283
        %7065 = vmatprep.subr.mxu0 %v5292
        %7066 = vmatpush1.msra.mxu0 %v5291
        %7067 = vmatprep.subr.mxu0 %v5300
        %7068 = vmatpush1.msra.mxu0 %v5299
        %7069 = vmatprep.subr.mxu0 %v5308
        %7070 = vmatpush1.msra.mxu0 %v5307
        %7071 = vmatprep.subr.mxu0 %v5316
        %7072 = vmatpush1.msra.mxu0 %v5315
        %7073 = vmatprep.mubr.f32.mxu0 %v5045
        %7074 = vmatmul.mubr.f32.gmra.mrb[0].mxu0 %v5044
        %v7075 = vpop.f32.mrb[0].mxu0
        %v7076 = vadd.f32 0.0, %v7075
        %v7077 = vpop.f32.mrb[0].mxu0
        %v7078 = vadd.f32 0.0, %v7077
        %7079 = vmatprep.mubr.f32.mxu0 %v5053
        %7080 = vmatmul.mubr.f32.gmra.mrb[0].mxu0 %v5052
        %v7081 = vpop.f32.mrb[0].mxu0
        %v7082 = vadd.f32 0.0, %v7081
        %v7083 = vpop.f32.mrb[0].mxu0
        %v7084 = vadd.f32 0.0, %v7083
        %7085 = vdwg.mxu0
        %7086 = vmatprep.subr.mxu0 %v5324
        %7087 = vmatpush1.msra.mxu0 %v5323
        %7088 = vmatprep.subr.mxu0 %v5332
        %7089 = vmatpush1.msra.mxu0 %v5331
        %7090 = vmatprep.subr.mxu0 %v5340
        %7091 = vmatpush1.msra.mxu0 %v5339
        %7092 = vmatprep.subr.mxu0 %v5348
        %7093 = vmatpush1.msra.mxu0 %v5347
        %7094 = vmatprep.subr.mxu0 %v5356
        %7095 = vmatpush1.msra.mxu0 %v5355
        %7096 = vmatprep.subr.mxu0 %v5364
        %7097 = vmatpush1.msra.mxu0 %v5363
        %7098 = vmatprep.subr.mxu0 %v5372
        %7099 = vmatpush1.msra.mxu0 %v5371
        %7100 = vmatprep.subr.mxu0 %v5380
        %7101 = vmatpush1.msra.mxu0 %v5379
        %7102 = vmatprep.subr.mxu0 %v5388
        %7103 = vmatpush1.msra.mxu0 %v5387
        %7104 = vmatprep.subr.mxu0 %v5396
        %7105 = vmatpush1.msra.mxu0 %v5395
        %7106 = vmatprep.subr.mxu0 %v5404
        %7107 = vmatpush1.msra.mxu0 %v5403
        %7108 = vmatprep.subr.mxu0 %v5412
        %7109 = vmatpush1.msra.mxu0 %v5411
        %7110 = vmatprep.subr.mxu0 %v5420
        %7111 = vmatpush1.msra.mxu0 %v5419
        %7112 = vmatprep.subr.mxu0 %v5428
        %7113 = vmatpush1.msra.mxu0 %v5427
        %7114 = vmatprep.subr.mxu0 %v5436
        %7115 = vmatpush1.msra.mxu0 %v5435
        %7116 = vmatprep.subr.mxu0 %v5444
        %7117 = vmatpush1.msra.mxu0 %v5443
        %7118 = vmatprep.subr.mxu0 %v5452
        %7119 = vmatpush1.msra.mxu0 %v5451
        %7120 = vmatprep.subr.mxu0 %v5460
        %7121 = vmatpush1.msra.mxu0 %v5459
        %7122 = vmatprep.subr.mxu0 %v5468
        %7123 = vmatpush1.msra.mxu0 %v5467
        %7124 = vmatprep.subr.mxu0 %v5476
        %7125 = vmatpush1.msra.mxu0 %v5475
        %7126 = vmatprep.subr.mxu0 %v5484
        %7127 = vmatpush1.msra.mxu0 %v5483
        %7128 = vmatprep.subr.mxu0 %v5492
        %7129 = vmatpush1.msra.mxu0 %v5491
        %7130 = vmatprep.subr.mxu0 %v5500
        %7131 = vmatpush1.msra.mxu0 %v5499
        %7132 = vmatprep.subr.mxu0 %v5508
        %7133 = vmatpush1.msra.mxu0 %v5507
        %7134 = vmatprep.subr.mxu0 %v5516
        %7135 = vmatpush1.msra.mxu0 %v5515
        %7136 = vmatprep.subr.mxu0 %v5524
        %7137 = vmatpush1.msra.mxu0 %v5523
        %7138 = vmatprep.subr.mxu0 %v5532
        %7139 = vmatpush1.msra.mxu0 %v5531
        %7140 = vmatprep.subr.mxu0 %v5540
        %7141 = vmatpush1.msra.mxu0 %v5539
        %7142 = vmatprep.subr.mxu0 %v5548
        %7143 = vmatpush1.msra.mxu0 %v5547
        %7144 = vmatprep.subr.mxu0 %v5556
        %7145 = vmatpush1.msra.mxu0 %v5555
        %7146 = vmatprep.subr.mxu0 %v5564
        %7147 = vmatpush1.msra.mxu0 %v5563
        %7148 = vmatprep.subr.mxu0 %v5572
        %7149 = vmatpush1.msra.mxu0 %v5571
        %7150 = vmatprep.mubr.f32.mxu0 %v5047
        %7151 = vmatmul.mubr.f32.gmra.mrb[0].mxu0 %v5046
        %v7152 = vpop.f32.mrb[0].mxu0
        %v7153 = vadd.f32 %v7076, %v7152
        %v7154 = vpop.f32.mrb[0].mxu0
        %v7155 = vadd.f32 %v7078, %v7154
        %7156 = vmatprep.mubr.f32.mxu0 %v5055
        %7157 = vmatmul.mubr.f32.gmra.mrb[0].mxu0 %v5054
        %v7158 = vpop.f32.mrb[0].mxu0
        %v7159 = vadd.f32 %v7082, %v7158
        %v7160 = vpop.f32.mrb[0].mxu0
        %v7161 = vadd.f32 %v7084, %v7160
        %7162 = vdwg.mxu0
        %7163 = vmatprep.subr.mxu0 %v5580
        %7164 = vmatpush1.msra.mxu0 %v5579
        %7165 = vmatprep.subr.mxu0 %v5588
        %7166 = vmatpush1.msra.mxu0 %v5587
        %7167 = vmatprep.subr.mxu0 %v5596
        %7168 = vmatpush1.msra.mxu0 %v5595
        %7169 = vmatprep.subr.mxu0 %v5604
        %7170 = vmatpush1.msra.mxu0 %v5603
        %7171 = vmatprep.subr.mxu0 %v5612
        %7172 = vmatpush1.msra.mxu0 %v5611
        %7173 = vmatprep.subr.mxu0 %v5620
        %7174 = vmatpush1.msra.mxu0 %v5619
        %7175 = vmatprep.subr.mxu0 %v5628
        %7176 = vmatpush1.msra.mxu0 %v5627
        %7177 = vmatprep.subr.mxu0 %v5636
        %7178 = vmatpush1.msra.mxu0 %v5635
        %7179 = vmatprep.subr.mxu0 %v5644
        %7180 = vmatpush1.msra.mxu0 %v5643
        %7181 = vmatprep.subr.mxu0 %v5652
        %7182 = vmatpush1.msra.mxu0 %v5651
        %7183 = vmatprep.subr.mxu0 %v5660
        %7184 = vmatpush1.msra.mxu0 %v5659
        %7185 = vmatprep.subr.mxu0 %v5668
        %7186 = vmatpush1.msra.mxu0 %v5667
        %7187 = vmatprep.subr.mxu0 %v5676
        %7188 = vmatpush1.msra.mxu0 %v5675
        %7189 = vmatprep.subr.mxu0 %v5684
        %7190 = vmatpush1.msra.mxu0 %v5683
        %7191 = vmatprep.subr.mxu0 %v5692
        %7192 = vmatpush1.msra.mxu0 %v5691
        %7193 = vmatprep.subr.mxu0 %v5700
        %7194 = vmatpush1.msra.mxu0 %v5699
        %7195 = vmatprep.subr.mxu0 %v5708
        %7196 = vmatpush1.msra.mxu0 %v5707
        %7197 = vmatprep.subr.mxu0 %v5716
        %7198 = vmatpush1.msra.mxu0 %v5715
        %7199 = vmatprep.subr.mxu0 %v5724
        %7200 = vmatpush1.msra.mxu0 %v5723
        %7201 = vmatprep.subr.mxu0 %v5732
        %7202 = vmatpush1.msra.mxu0 %v5731
        %7203 = vmatprep.subr.mxu0 %v5740
        %7204 = vmatpush1.msra.mxu0 %v5739
        %7205 = vmatprep.subr.mxu0 %v5748
        %7206 = vmatpush1.msra.mxu0 %v5747
        %7207 = vmatprep.subr.mxu0 %v5756
        %7208 = vmatpush1.msra.mxu0 %v5755
        %7209 = vmatprep.subr.mxu0 %v5764
        %7210 = vmatpush1.msra.mxu0 %v5763
        %7211 = vmatprep.subr.mxu0 %v5772
        %7212 = vmatpush1.msra.mxu0 %v5771
        %7213 = vmatprep.subr.mxu0 %v5780
        %7214 = vmatpush1.msra.mxu0 %v5779
        %7215 = vmatprep.subr.mxu0 %v5788
        %7216 = vmatpush1.msra.mxu0 %v5787
        %7217 = vmatprep.subr.mxu0 %v5796
        %7218 = vmatpush1.msra.mxu0 %v5795
        %7219 = vmatprep.subr.mxu0 %v5804
        %7220 = vmatpush1.msra.mxu0 %v5803
        %7221 = vmatprep.subr.mxu0 %v5812
        %7222 = vmatpush1.msra.mxu0 %v5811
        %7223 = vmatprep.subr.mxu0 %v5820
        %7224 = vmatpush1.msra.mxu0 %v5819
        %7225 = vmatprep.subr.mxu0 %v5828
        %7226 = vmatpush1.msra.mxu0 %v5827
        %7227 = vmatprep.mubr.f32.mxu0 %v5049
        %7228 = vmatmul.mubr.f32.gmra.mrb[0].mxu0 %v5048
        %v7229 = vpop.f32.mrb[0].mxu0
        %v7230 = vadd.f32 %v7153, %v7229
        %v7231 = vpop.f32.mrb[0].mxu0
        %v7232 = vadd.f32 %v7155, %v7231
        %7233 = vmatprep.mubr.f32.mxu0 %v5057
        %7234 = vmatmul.mubr.f32.gmra.mrb[0].mxu0 %v5056
        %v7235 = vpop.f32.mrb[0].mxu0
        %v7236 = vadd.f32 %v7159, %v7235
        %v7237 = vpop.f32.mrb[0].mxu0
        %v7238 = vadd.f32 %v7161, %v7237
        %7239 = vdwg.mxu0
        %7240 = vmatprep.subr.mxu0 %v5836
        %7241 = vmatpush1.msra.mxu0 %v5835
        %7242 = vmatprep.subr.mxu0 %v5844
        %7243 = vmatpush1.msra.mxu0 %v5843
        %7244 = vmatprep.subr.mxu0 %v5852
        %7245 = vmatpush1.msra.mxu0 %v5851
        %7246 = vmatprep.subr.mxu0 %v5860
        %7247 = vmatpush1.msra.mxu0 %v5859
        %7248 = vmatprep.subr.mxu0 %v5868
        %7249 = vmatpush1.msra.mxu0 %v5867
        %7250 = vmatprep.subr.mxu0 %v5876
        %7251 = vmatpush1.msra.mxu0 %v5875
        %7252 = vmatprep.subr.mxu0 %v5884
        %7253 = vmatpush1.msra.mxu0 %v5883
        %7254 = vmatprep.subr.mxu0 %v5892
        %7255 = vmatpush1.msra.mxu0 %v5891
        %7256 = vmatprep.subr.mxu0 %v5900
        %7257 = vmatpush1.msra.mxu0 %v5899
        %7258 = vmatprep.subr.mxu0 %v5908
        %7259 = vmatpush1.msra.mxu0 %v5907
        %7260 = vmatprep.subr.mxu0 %v5916
        %7261 = vmatpush1.msra.mxu0 %v5915
        %7262 = vmatprep.subr.mxu0 %v5924
        %7263 = vmatpush1.msra.mxu0 %v5923
        %7264 = vmatprep.subr.mxu0 %v5932
        %7265 = vmatpush1.msra.mxu0 %v5931
        %7266 = vmatprep.subr.mxu0 %v5940
        %7267 = vmatpush1.msra.mxu0 %v5939
        %7268 = vmatprep.subr.mxu0 %v5948
        %7269 = vmatpush1.msra.mxu0 %v5947
        %7270 = vmatprep.subr.mxu0 %v5956
        %7271 = vmatpush1.msra.mxu0 %v5955
        %7272 = vmatprep.subr.mxu0 %v5964
        %7273 = vmatpush1.msra.mxu0 %v5963
        %7274 = vmatprep.subr.mxu0 %v5972
        %7275 = vmatpush1.msra.mxu0 %v5971
        %7276 = vmatprep.subr.mxu0 %v5980
        %7277 = vmatpush1.msra.mxu0 %v5979
        %7278 = vmatprep.subr.mxu0 %v5988
        %7279 = vmatpush1.msra.mxu0 %v5987
        %7280 = vmatprep.subr.mxu0 %v5996
        %7281 = vmatpush1.msra.mxu0 %v5995
        %7282 = vmatprep.subr.mxu0 %v6004
        %7283 = vmatpush1.msra.mxu0 %v6003
        %7284 = vmatprep.subr.mxu0 %v6012
        %7285 = vmatpush1.msra.mxu0 %v6011
        %7286 = vmatprep.subr.mxu0 %v6020
        %7287 = vmatpush1.msra.mxu0 %v6019
        %7288 = vmatprep.subr.mxu0 %v6028
        %7289 = vmatpush1.msra.mxu0 %v6027
        %7290 = vmatprep.subr.mxu0 %v6036
        %7291 = vmatpush1.msra.mxu0 %v6035
        %7292 = vmatprep.subr.mxu0 %v6044
        %7293 = vmatpush1.msra.mxu0 %v6043
        %7294 = vmatprep.subr.mxu0 %v6052
        %7295 = vmatpush1.msra.mxu0 %v6051
        %7296 = vmatprep.subr.mxu0 %v6060
        %7297 = vmatpush1.msra.mxu0 %v6059
        %7298 = vmatprep.subr.mxu0 %v6068
        %7299 = vmatpush1.msra.mxu0 %v6067
        %7300 = vmatprep.subr.mxu0 %v6076
        %7301 = vmatpush1.msra.mxu0 %v6075
        %7302 = vmatprep.subr.mxu0 %v6084
        %7303 = vmatpush1.msra.mxu0 %v6083
        %7304 = vmatprep.mubr.f32.mxu0 %v5051
        %7305 = vmatmul.mubr.f32.gmra.mrb[0].mxu0 %v5050
        %v7306 = vpop.f32.mrb[0].mxu0
        %v7307 = vadd.f32 %v7230, %v7306
        %v7308 = vpop.f32.mrb[0].mxu0
        %v7309 = vadd.f32 %v7232, %v7308
        %7310 = vmatprep.mubr.f32.mxu0 %v5059
        %7311 = vmatmul.mubr.f32.gmra.mrb[0].mxu0 %v5058
        %v7312 = vpop.f32.mrb[0].mxu0
        %v7313 = vadd.f32 %v7236, %v7312
        %v7314 = vpop.f32.mrb[0].mxu0
        %v7315 = vadd.f32 %v7238, %v7314
        %7316 = vdwg.mxu0
        %v7317 = vadd.f32 %v5027, %v6383
        %v7318 = vadd.f32 %v5028, %v6385
        %v7319 = vadd.f32 %v5029, %v6691
        %v7320 = vadd.f32 %v5030, %v6693
        %v7321 = vadd.f32 %v5031, %v6999
        %v7322 = vadd.f32 %v5032, %v7001
        %v7323 = vadd.f32 %v5033, %v7307
        %v7324 = vadd.f32 %v5034, %v7309
        %v7325 = vadd.f32 %v5035, %v6389
        %v7326 = vadd.f32 %v5036, %v6391
        %v7327 = vadd.f32 %v5037, %v6697
        %v7328 = vadd.f32 %v5038, %v6699
        %v7329 = vadd.f32 %v5039, %v7005
        %v7330 = vadd.f32 %v5040, %v7007
        %v7331 = vadd.f32 %v5041, %v7313
        %v7332 = vadd.f32 %v5042, %v7315
        %s7333 = scalar_lea.vmem %s1, 32
        %v7334 = vld [vmem:[%s7333] sm:$0xff]
        %v7335 = vld [vmem:[%s7333 + $0x8] sm:$0xff]
        %s7336 = scalar_lea.vmem %s282, 16 [#allocation4]
        %v7337 = vld [vmem:[%s7336] sm:$0xff]
        %7339 = vset.pattern.permute.xlu0 0
        %7340 = vperm.xlu0 %7339, %v7334
        %v7341 = vpop.permute.xlu0 %7340
        %7344 = vset.pattern.permute.xlu0 0
        %7345 = vperm.xlu0 %7344, %v7335
        %v7346 = vpop.permute.xlu0 %7345
        %v7349 = vlaneseq
        %v7350 = vshrl.u32 %v7349, 7
        %v7351 = vsub.s32 0, %v7350
        %v7352 = vrot.slane %v7337, %v7351
        %v7353 = vlaneseq
        %v7354 = vshrl.u32 %v7353, 7
        %v7355 = vsub.s32 1, %v7354
        %v7356 = vrot.slane %v7337, %v7355
        %v7357 = vlaneseq
        %v7358 = vshrl.u32 %v7357, 7
        %v7359 = vsub.s32 2, %v7358
        %v7360 = vrot.slane %v7337, %v7359
        %v7361 = vlaneseq
        %v7362 = vshrl.u32 %v7361, 7
        %v7363 = vsub.s32 3, %v7362
        %v7364 = vrot.slane %v7337, %v7363
        %v7365 = vlaneseq
        %v7366 = vshrl.u32 %v7365, 7
        %v7367 = vsub.s32 4, %v7366
        %v7368 = vrot.slane %v7337, %v7367
        %v7369 = vlaneseq
        %v7370 = vshrl.u32 %v7369, 7
        %v7371 = vsub.s32 5, %v7370
        %v7372 = vrot.slane %v7337, %v7371
        %v7373 = vlaneseq
        %v7374 = vshrl.u32 %v7373, 7
        %v7375 = vsub.s32 6, %v7374
        %v7376 = vrot.slane %v7337, %v7375
        %v7377 = vlaneseq
        %v7378 = vshrl.u32 %v7377, 7
        %v7379 = vsub.s32 7, %v7378
        %v7380 = vrot.slane %v7337, %v7379
        %v7389 = vmul.f32 %v7341, %v7352
        %v7390 = vmul.f32 %v7341, %v7356
        %v7391 = vmul.f32 %v7341, %v7360
        %v7392 = vmul.f32 %v7341, %v7364
        %v7393 = vmul.f32 %v7341, %v7368
        %v7394 = vmul.f32 %v7341, %v7372
        %v7395 = vmul.f32 %v7341, %v7376
        %v7396 = vmul.f32 %v7341, %v7380
        %v7397 = vmul.f32 %v7346, %v7352
        %v7398 = vmul.f32 %v7346, %v7356
        %v7399 = vmul.f32 %v7346, %v7360
        %v7400 = vmul.f32 %v7346, %v7364
        %v7401 = vmul.f32 %v7346, %v7368
        %v7402 = vmul.f32 %v7346, %v7372
        %v7403 = vmul.f32 %v7346, %v7376
        %v7404 = vmul.f32 %v7346, %v7380
        %v7405 = vadd.f32 %v7317, %v7389
        %v7406 = vadd.f32 %v7318, %v7390
        %v7407 = vadd.f32 %v7319, %v7391
        %v7408 = vadd.f32 %v7320, %v7392
        %v7409 = vadd.f32 %v7321, %v7393
        %v7410 = vadd.f32 %v7322, %v7394
        %v7411 = vadd.f32 %v7323, %v7395
        %v7412 = vadd.f32 %v7324, %v7396
        %v7413 = vadd.f32 %v7325, %v7397
        %v7414 = vadd.f32 %v7326, %v7398
        %v7415 = vadd.f32 %v7327, %v7399
        %v7416 = vadd.f32 %v7328, %v7400
        %v7417 = vadd.f32 %v7329, %v7401
        %v7418 = vadd.f32 %v7330, %v7402
        %v7419 = vadd.f32 %v7331, %v7403
        %v7420 = vadd.f32 %v7332, %v7404
        %v7421 = vld [vmem:[%s320] sm:$0xff]
        %v7423 = vlaneseq
        %v7424 = vshrl.u32 %v7423, 7
        %v7425 = vsub.s32 0, %v7424
        %v7426 = vrot.slane %v7421, %v7425
        %v7427 = vlaneseq
        %v7428 = vshrl.u32 %v7427, 7
        %v7429 = vsub.s32 1, %v7428
        %v7430 = vrot.slane %v7421, %v7429
        %v7431 = vlaneseq
        %v7432 = vshrl.u32 %v7431, 7
        %v7433 = vsub.s32 2, %v7432
        %v7434 = vrot.slane %v7421, %v7433
        %v7435 = vlaneseq
        %v7436 = vshrl.u32 %v7435, 7
        %v7437 = vsub.s32 3, %v7436
        %v7438 = vrot.slane %v7421, %v7437
        %v7439 = vlaneseq
        %v7440 = vshrl.u32 %v7439, 7
        %v7441 = vsub.s32 4, %v7440
        %v7442 = vrot.slane %v7421, %v7441
        %v7443 = vlaneseq
        %v7444 = vshrl.u32 %v7443, 7
        %v7445 = vsub.s32 5, %v7444
        %v7446 = vrot.slane %v7421, %v7445
        %v7447 = vlaneseq
        %v7448 = vshrl.u32 %v7447, 7
        %v7449 = vsub.s32 6, %v7448
        %v7450 = vrot.slane %v7421, %v7449
        %v7451 = vlaneseq
        %v7452 = vshrl.u32 %v7451, 7
        %v7453 = vsub.s32 7, %v7452
        %v7454 = vrot.slane %v7421, %v7453
        %v7463 = vadd.f32 %v7405, %v7426
        %v7464 = vadd.f32 %v7406, %v7430
        %v7465 = vadd.f32 %v7407, %v7434
        %v7466 = vadd.f32 %v7408, %v7438
        %v7467 = vadd.f32 %v7409, %v7442
        %v7468 = vadd.f32 %v7410, %v7446
        %v7469 = vadd.f32 %v7411, %v7450
        %v7470 = vadd.f32 %v7412, %v7454
        %v7471 = vadd.f32 %v7413, %v7426
        %v7472 = vadd.f32 %v7414, %v7430
        %v7473 = vadd.f32 %v7415, %v7434
        %v7474 = vadd.f32 %v7416, %v7438
        %v7475 = vadd.f32 %v7417, %v7442
        %v7476 = vadd.f32 %v7418, %v7446
        %v7477 = vadd.f32 %v7419, %v7450
        %v7478 = vadd.f32 %v7420, %v7454
        %7479 = vst [vmem:[%s314] sm:$0xff] %v7463
        %7480 = vst [vmem:[%s314 + $0x8] sm:$0xff] %v7464
        %7481 = vst [vmem:[%s314 + $0x10] sm:$0xff] %v7465
        %7482 = vst [vmem:[%s314 + $0x18] sm:$0xff] %v7466
        %7483 = vst [vmem:[%s314 + $0x20] sm:$0xff] %v7467
        %7484 = vst [vmem:[%s314 + $0x28] sm:$0xff] %v7468
        %7485 = vst [vmem:[%s314 + $0x30] sm:$0xff] %v7469
        %7486 = vst [vmem:[%s314 + $0x38] sm:$0xff] %v7470
        %7487 = vst [vmem:[%s314 + $0x40] sm:$0xff] %v7471
        %7488 = vst [vmem:[%s314 + $0x48] sm:$0xff] %v7472
        %7489 = vst [vmem:[%s314 + $0x50] sm:$0xff] %v7473
        %7490 = vst [vmem:[%s314 + $0x58] sm:$0xff] %v7474
        %7491 = vst [vmem:[%s314 + $0x60] sm:$0xff] %v7475
        %7492 = vst [vmem:[%s314 + $0x68] sm:$0xff] %v7476
        %7493 = vst [vmem:[%s314 + $0x70] sm:$0xff] %v7477
        %7494 = vst [vmem:[%s314 + $0x78] sm:$0xff] %v7478
        %s7495 = sand.u32 %s147, 1
        %s7496 = sand.u32 %s147, 1
        %s7497 = smul.addr %s7496, 128
        %s7498 = scalar_lea.vmem [#allocation5], %s7497
        // Predicated region
        $region83: #{cnn_model_forward.1} parent=73 // pred_check
          %p7499 = pneg %p157
        $region84: #{cnn_model_forward.1} parent=73 // pred_check_branch
          %7501 = sbr.rel (%p7499) target = $region86
        $region85: #{cnn_model_forward.1} parent=73 // pred_region
          %s7502 = smul.u32 8, %s19
          %s7503 = smul.addr %s7502, 8
          %s7504 = scalar_lea.vmem %s5, %s7503
          // Predicated region
          $region87: #{cnn_model_forward.1} parent=85 // pred_check
            _
          $region88: #{cnn_model_forward.1} parent=85 // pred_check_branch
            %7506 = sbr.rel (0) target = $region90
          $region89: #{cnn_model_forward.1} parent=85 // pred_region
            // Predicated region
            $region91: #{cnn_model_forward.1} parent=89 // pred_check
              _
            $region92: #{cnn_model_forward.1} parent=89 // pred_check_branch
              %7508 = sbr.rel (0) target = $region94
            $region93: #{cnn_model_forward.1} parent=89 // pred_region
              loop: start=0, step=1, limit=1
              $region95: #{cnn_model_forward.1} parent=93 // loop_pre_header
                _
              $region96: #{cnn_model_forward.1} parent=93 // loop_header
                %s7510 = sphi 0, %s7514
                %p7511 = scmp.ge.s32.totalorder %s7510, 1
                %s7515 = sphi %s7498, %s7498
                %s7516 = sphi %s7504, %s7504
              $region97: #{cnn_model_forward.1} parent=93 // loop_header_branch
                %7513 = sbr.rel (%p7511) target = $region101
              $region98: #{cnn_model_forward.1} parent=93 // loop_body
                %v7517 = vld [vmem:[%s7515] sm:$0xff]
                %7518 = vst [vmem:[%s7516] sm:$0xff] %v7517
                %v7519 = vld [vmem:[%s7515 + $0x8] sm:$0xff]
                %7520 = vst [vmem:[%s7516 + $0x8] sm:$0xff] %v7519
                %v7521 = vld [vmem:[%s7515 + $0x10] sm:$0xff]
                %7522 = vst [vmem:[%s7516 + $0x10] sm:$0xff] %v7521
                %v7523 = vld [vmem:[%s7515 + $0x18] sm:$0xff]
                %7524 = vst [vmem:[%s7516 + $0x18] sm:$0xff] %v7523
                %v7525 = vld [vmem:[%s7515 + $0x20] sm:$0xff]
                %7526 = vst [vmem:[%s7516 + $0x20] sm:$0xff] %v7525
                %v7527 = vld [vmem:[%s7515 + $0x28] sm:$0xff]
                %7528 = vst [vmem:[%s7516 + $0x28] sm:$0xff] %v7527
                %v7529 = vld [vmem:[%s7515 + $0x30] sm:$0xff]
                %7530 = vst [vmem:[%s7516 + $0x30] sm:$0xff] %v7529
                %v7531 = vld [vmem:[%s7515 + $0x38] sm:$0xff]
                %7532 = vst [vmem:[%s7516 + $0x38] sm:$0xff] %v7531
                %v7533 = vld [vmem:[%s7515 + $0x40] sm:$0xff]
                %7534 = vst [vmem:[%s7516 + $0x100] sm:$0xff] %v7533
                %v7535 = vld [vmem:[%s7515 + $0x48] sm:$0xff]
                %7536 = vst [vmem:[%s7516 + $0x108] sm:$0xff] %v7535
                %v7537 = vld [vmem:[%s7515 + $0x50] sm:$0xff]
                %7538 = vst [vmem:[%s7516 + $0x110] sm:$0xff] %v7537
                %v7539 = vld [vmem:[%s7515 + $0x58] sm:$0xff]
                %7540 = vst [vmem:[%s7516 + $0x118] sm:$0xff] %v7539
                %v7541 = vld [vmem:[%s7515 + $0x60] sm:$0xff]
                %7542 = vst [vmem:[%s7516 + $0x120] sm:$0xff] %v7541
                %v7543 = vld [vmem:[%s7515 + $0x68] sm:$0xff]
                %7544 = vst [vmem:[%s7516 + $0x128] sm:$0xff] %v7543
                %v7545 = vld [vmem:[%s7515 + $0x70] sm:$0xff]
                %7546 = vst [vmem:[%s7516 + $0x130] sm:$0xff] %v7545
                %v7547 = vld [vmem:[%s7515 + $0x78] sm:$0xff]
                %7548 = vst [vmem:[%s7516 + $0x138] sm:$0xff] %v7547
              $region99: #{cnn_model_forward.1} parent=93 // loop_footer
                %s7514 = sadd.s32 1, %s7510
              $region100: #{cnn_model_forward.1} parent=93 // loop_footer_branch
                %7509 = sbr.rel target = $region96
              $region101: #{cnn_model_forward.1} parent=93 // loop_exit
                _
            $region94: #{cnn_model_forward.1} parent=89 // pred_fallthru
              _
            // Predicated region
            $region102: #{cnn_model_forward.1} parent=89 // pred_check
              _
            $region103: #{cnn_model_forward.1} parent=89 // pred_check_branch
              %7550 = sbr.rel target = $region105
            $region104: #{cnn_model_forward.1} parent=89 // pred_region
              _
            $region105: #{cnn_model_forward.1} parent=89 // pred_fallthru
              _
          $region90: #{cnn_model_forward.1} parent=85 // pred_fallthru
            _
          %7551 = vnop
        $region86: #{cnn_model_forward.1} parent=73 // pred_fallthru
          _
      $region74: #{cnn_model_forward.1} parent=5 // pred_fallthru
        _
      %p7552 = scmp.le.s32.totalorder 2, %s14
      // Predicated region
      $region106: #{cnn_model_forward.1} parent=5 // pred_check
        %p7553 = pneg %p7552
      $region107: #{cnn_model_forward.1} parent=5 // pred_check_branch
        %7555 = sbr.rel (%p7553) target = $region109
      $region108: #{cnn_model_forward.1} parent=5 // pred_region
        %s7556 = ssub.s32 %s14, 2
        // Predicated region
        $region110: #{cnn_model_forward.1} parent=108 // pred_check
          %p7557 = pneg %p163
        $region111: #{cnn_model_forward.1} parent=108 // pred_check_branch
          %7559 = sbr.rel (%p7557) target = $region113
        $region112: #{cnn_model_forward.1} parent=108 // pred_region
          %s7560 = sand.u32 %s148, 1
          %s7561 = sand.u32 %s148, 1
          %s7562 = smul.addr %s7561, 128
          %s7563 = scalar_lea.vmem [#allocation5], %s7562
        $region113: #{cnn_model_forward.1} parent=108 // pred_fallthru
          _
      $region109: #{cnn_model_forward.1} parent=5 // pred_fallthru
        _
    $region6: #{cnn_model_forward.1} parent=1 // loop_footer
      %s18 = sadd.s32 1, %s14
    $region7: #{cnn_model_forward.1} parent=1 // loop_footer_branch
      %13 = sbr.rel target = $region3
    $region8: #{cnn_model_forward.1} parent=1 // loop_exit
      _
    %7564 = vsyncpa [#allocation3], 1
    %s7565 = scalar_lea.sflag [#allocation3], 1
    %7566 = vsyncpa %s7565, 1

</llo_original>
